<compile_context>
chip_gen: v6e
topology: v6e:2x2x1
jax: 0.10.0
libtpu: 0.0.40
codegen_flags: <defaults>
</compile_context>

<pallas_src>
import math
from functools import partial

import jax
import jax.numpy as jnp
from jax.experimental import pallas as pl
from jax.experimental.pallas import tpu as pltpu


# ----------------------------- in-kernel math -----------------------------

def _layernorm(x, g, eps=1e-5):
    # CT-CLIP LayerNorm over the full last dim (used for the GEGLU mid-norm,
    # whose width is exactly ff_inner, i.e. unpadded).
    mean = jnp.mean(x, axis=-1, keepdims=True)
    diff = x - mean
    var = jnp.mean(diff * diff, axis=-1, keepdims=True)
    return diff * jax.lax.rsqrt(var + eps) * g


def _layernorm_masked(x, g, lane_mask, d, eps=1e-5):
    # LayerNorm over a lane-padded feature axis: statistics use only the first
    # `d` lanes (divide by d, not the padded width) and the pad lanes of the
    # output are forced to zero so the residual stream keeps zero pads.
    inv_d = 1.0 / d
    mean = jnp.sum(x * lane_mask, axis=-1, keepdims=True) * inv_d
    diff = (x - mean) * lane_mask
    var = jnp.sum(diff * diff, axis=-1, keepdims=True) * inv_d
    return diff * jax.lax.rsqrt(var + eps) * g


def _erf(x):
    # Abramowitz & Stegun 7.1.26 (max abs err ~1.5e-7): Pallas-safe erf so the
    # exact (erf-based) GELU of torch.nn.functional.gelu is reproduced to f32
    # rounding noise using only exp on the EUP.
    p = 0.3275911
    a1, a2, a3, a4, a5 = (0.254829592, -0.284496736, 1.421413741,
                          -1.453152027, 1.061405429)
    sgn = jnp.where(x >= 0, 1.0, -1.0).astype(x.dtype)
    ax = jnp.abs(x)
    t = 1.0 / (1.0 + p * ax)   # exact divide kept for GELU accuracy
    poly = ((((a5 * t + a4) * t + a3) * t + a2) * t + a1) * t
    return sgn * (1.0 - poly * jnp.exp(-ax * ax))


def _gelu_exact(x):
    # TODO(synk): on v5e a tanh-approx GELU (EUP tanh) would offload more of
    #             the elementwise chain if the exact-erf requirement is relaxed.
    return 0.5 * x * (1.0 + _erf(x * (1.0 / math.sqrt(2.0))))


def _softmax_lastdim(s):
    m = jnp.max(s, axis=-1, keepdims=True)
    e = jnp.exp(s - m)
    denom = jnp.sum(e, axis=-1, keepdims=True)
    return e * pl.reciprocal(denom, approx=True)   # divide -> EUP slot


# ------------------------------- fused layer kernel ------------------------

def _layer_kernel(x_ref,
                  g_in_ref, g_attn_pre_ref, wq_ref, wk_ref, wv_ref, wout_ref,
                  g_attn_out_ref, g_ff_pre_ref, w1_ref, g_mid_ref, w2_ref,
                  g_fin_ref,
                  o_ref,
                  *, d_model, fuse_norm_in, fuse_norm_out):
    """One transformer layer:
         x (+norm_in if first layer)
         x = x + LN_out( Attention( LN_pre(x) ) )        # PreNorm(Attention)
         x = x + FeedForward( LN_pre(x) )                # PreNorm(FeedForward)
         (+norm_out if last layer)
       All activations carry a zero-padded lane axis of width Dp (=128k)."""
    B, N, Dp = x_ref.shape
    BN = B * N
    heads = wq_ref.shape[0]
    f32 = jnp.float32
    bf16 = jnp.bfloat16

    lane_mask = (jax.lax.broadcasted_iota(jnp.int32, (1, 1, Dp), 2)
                 < d_model).astype(f32)                       # (1, 1, Dp)

    x = x_ref[...].astype(f32)                                # (B, N, Dp), pad lanes == 0
    if fuse_norm_in:                                          # transformer norm_in (first layer only)
        x = _layernorm_masked(x, g_in_ref[...], lane_mask, d_model)

    # ---------------- PreNorm(Attention) + residual ----------------
    xn = _layernorm_masked(x, g_attn_pre_ref[...], lane_mask, d_model)
    xn2 = xn.reshape(BN, Dp).astype(bf16)
    # Heads-batched MXU operand (hoisted broadcast, done once per layer).
    xb = jnp.broadcast_to(xn2[None], (heads, BN, Dp))

    # Q projection already carries the 1/sqrt(dh) scale (folded offline).
    q = jnp.einsum('hnd,hdf->hnf', xb, wq_ref[...],
                   preferred_element_type=f32).astype(bf16)   # (H, BN, dh)
    k = jnp.einsum('hnd,hdf->hnf', xb, wk_ref[...],
                   preferred_element_type=f32).astype(bf16)
    v = jnp.einsum('hnd,hdf->hnf', xb, wv_ref[...],
                   preferred_element_type=f32).astype(bf16)

    outs = []
    # Batch unroll (B is tiny); attention itself is heads-batched einsums.
    # TODO(synk): for large B / N move batch and a KV axis onto the pallas grid
    #             (flash-style online softmax) instead of this unroll.
    for b in range(B):
        lo = b * N
        qb = q[:, lo:lo + N, :]
        kb = k[:, lo:lo + N, :]
        vb = v[:, lo:lo + N, :]
        sim = jnp.einsum('hnd,hmd->hnm', qb, kb,
                         preferred_element_type=f32)          # (H, N, N)
        p = _softmax_lastdim(sim).astype(bf16)
        outs.append(jnp.einsum('hnm,hmd->hnd', p, vb,
                               preferred_element_type=f32))   # (H, N, dh)
    out = jnp.concatenate(outs, axis=1).astype(bf16)          # (H, BN, dh)

    # Output projection per head, then sum over heads
    # (== concat_heads(out) @ W_out, but with no lane relayout).
    yh = jnp.einsum('hnd,hdf->hnf', out, wout_ref[...],
                    preferred_element_type=f32)               # (H, BN, Dp)
    y = jnp.sum(yh, axis=0).reshape(B, N, Dp)
    y = _layernorm_masked(y, g_attn_out_ref[...], lane_mask, d_model)  # to_out LayerNorm
    x = x + y                                                 # residual

    # ---------------- PreNorm(FeedForward) + residual ----------------
    xn = _layernorm_masked(x, g_ff_pre_ref[...], lane_mask, d_model)
    xf = xn.reshape(BN, Dp).astype(bf16)
    hid = jnp.dot(xf, w1_ref[...], preferred_element_type=f32)   # (BN, 2*ff_inner)
    ff_inner = w2_ref.shape[0]
    a = hid[:, :ff_inner]
    gate = hid[:, ff_inner:]
    u = a * _gelu_exact(gate)                                  # GEGLU
    u = _layernorm(u, g_mid_ref[...])                          # LayerNorm(ff_inner)
    y = jnp.dot(u.astype(bf16), w2_ref[...], preferred_element_type=f32)
    x = x + y.reshape(B, N, Dp)                                # residual

    if fuse_norm_out:                                          # transformer norm_out (last layer only)
        x = _layernorm_masked(x, g_fin_ref[...], lane_mask, d_model)

    o_ref[...] = x.astype(o_ref.dtype)                         # lane-dense (Dp-wide) store


# ----------------------------- pallas wrapper ------------------------------

def _full_block(shape):
    zeros = (0,) * len(shape)
    return pl.BlockSpec(shape, lambda i, _z=zeros: _z)


def layer_block_pallas(x, lyr, g_in, g_fin, *, d_model, fuse_norm_in,
                       fuse_norm_out):
    B, N, Dp = x.shape
    kernel = partial(_layer_kernel, d_model=d_model,
                     fuse_norm_in=fuse_norm_in, fuse_norm_out=fuse_norm_out)
    inputs = (x, g_in, lyr["g_attn_pre"], lyr["wq"], lyr["wk"], lyr["wv"],
              lyr["w_out"], lyr["g_attn_out"], lyr["g_ff_pre"], lyr["w1"],
              lyr["g_ff_mid"], lyr["w2"], g_fin)
    return pl.pallas_call(
        kernel,
        out_shape=jax.ShapeDtypeStruct((B, N, Dp), x.dtype),
        grid=(1,),   # whole (tiny) batch in one step; tile rows for real sizes
        in_specs=[_full_block(a.shape) for a in inputs],
        out_specs=_full_block((B, N, Dp)),
        compiler_params=pltpu.CompilerParams(
            dimension_semantics=("arbitrary",)),
    )(*inputs)


# ------------------------- parameters & offline prep -----------------------

def init_params(key, *, num_tokens, max_seq_len, dim, depth, heads, dim_head,
                ff_mult):
    """Raw (PyTorch-layout, f32, unpadded) parameters."""
    inner = heads * dim_head
    ff_inner = dim * ff_mult
    ks = iter(jax.random.split(key, 3 + 4 * depth))
    std = 0.02

    def rnd(k, shape):
        return jax.random.normal(k, shape, jnp.float32) * std

    params = {
        "token_emb": rnd(next(ks), (num_tokens, dim)),
        "abs_pos_emb": rnd(next(ks), (max_seq_len, dim)),
        "cls_token": rnd(next(ks), (dim,)),
        "norm_in_g": jnp.ones((1, dim), jnp.float32),
        "norm_out_g": jnp.ones((1, dim), jnp.float32),
        "layers": [],
    }
    for _ in range(depth):
        k1, k2, k3, k4 = (next(ks), next(ks), next(ks), next(ks))
        params["layers"].append({
            # PreNorm(Attention)
            "attn_g_pre": jnp.ones((1, dim), jnp.float32),
            "w_qkv": rnd(k1, (dim, 3 * inner)),        # to_qkv (no bias)
            "w_out": rnd(k2, (inner, dim)),            # to_out Linear (no bias)
            "attn_g_out": jnp.ones((1, dim), jnp.float32),  # to_out LayerNorm
            # PreNorm(FeedForward)
            "ff_g_pre": jnp.ones((1, dim), jnp.float32),
            "w_ff1": rnd(k3, (dim, 2 * ff_inner)),     # Linear -> GEGLU
            "ff_g_mid": jnp.ones((1, ff_inner), jnp.float32),
            "w_ff2": rnd(k4, (ff_inner, dim)),
        })
    return params


def prepare_params(params, *, heads, dim_head, lane=128):
    """Offline transform into kernel-ready layout:
       - zero-pad the feature dim D -> Dp (multiple of 128) on weight in/out dims,
       - repack QKV / out-proj into per-head stacks (H, Dp, dh) / (H, dh, Dp),
       - fold the attention scale into the Q projection,
       - cast weights to bf16 (MXU-native)."""
    D = params["token_emb"].shape[1]
    Dp = ((D + lane - 1) // lane) * lane
    inner = heads * dim_head
    scale = dim_head ** -0.5
    bf16 = jnp.bfloat16

    def pad_rows(w):   # (D, F) -> (Dp, F), zero rows
        return jnp.pad(w, ((0, Dp - D), (0, 0)))

    def pad_cols(w):   # (F, D) -> (F, Dp), zero cols
        return jnp.pad(w, ((0, 0), (0, Dp - D)))

    def pad_g(g):      # (1, D) -> (1, Dp); pad value irrelevant (masked)
        return jnp.pad(g, ((0, 0), (0, Dp - D)), constant_values=1.0)

    def headstack(w):  # (D, inner) -> (H, Dp, dh)
        w = w.reshape(D, heads, dim_head)
        w = jnp.transpose(w, (1, 0, 2))
        return jnp.pad(w, ((0, 0), (0, Dp - D), (0, 0))).astype(bf16)

    prepped = {
        "token_emb": params["token_emb"],
        "abs_pos_emb": params["abs_pos_emb"],
        "cls_token": params["cls_token"],
        "norm_in_g": pad_g(params["norm_in_g"]),
        "norm_out_g": pad_g(params["norm_out_g"]),
        "layers": [],
    }
    for lyr in params["layers"]:
        w_qkv = lyr["w_qkv"]
        wq = w_qkv[:, :inner] * scale              # fold softmax scale into Wq
        wk = w_qkv[:, inner:2 * inner]
        wv = w_qkv[:, 2 * inner:]
        w_out = lyr["w_out"].reshape(heads, dim_head, D)      # (H, dh, D)
        w_out = jnp.pad(w_out, ((0, 0), (0, 0), (0, Dp - D))).astype(bf16)
        prepped["layers"].append({
            "g_attn_pre": pad_g(lyr["attn_g_pre"]),
            "wq": headstack(wq),
            "wk": headstack(wk),
            "wv": headstack(wv),
            "w_out": w_out,
            "g_attn_out": pad_g(lyr["attn_g_out"]),
            "g_ff_pre": pad_g(lyr["ff_g_pre"]),
            "w1": pad_rows(lyr["w_ff1"]).astype(bf16),
            "g_ff_mid": lyr["ff_g_mid"],
            "w2": pad_cols(lyr["w_ff2"]).astype(bf16),
        })
    return prepped


# --------------------------------- forward ---------------------------------

def text_transformer_forward(prepped, tokens):
    B, n = tokens.shape
    D = prepped["token_emb"].shape[1]
    Dp = prepped["norm_in_g"].shape[1]

    # ---- glue: embeddings, positional add, CLS prepend, lane pad (plain JAX) ----
    x = jnp.take(prepped["token_emb"], tokens, axis=0)             # (B, n, D)
    x = x + prepped["abs_pos_emb"][:n][None, :, :]
    cls = jnp.broadcast_to(prepped["cls_token"][None, None, :], (B, 1, D))
    x = jnp.concatenate([cls, x], axis=1)                          # (B, n+1, D)
    x = jnp.pad(x, ((0, 0), (0, 0), (0, Dp - D)))                  # lane-dense

    # ---- transformer (Pallas hot path): one fused kernel per layer ----
    n_layers = len(prepped["layers"])
    for li, lyr in enumerate(prepped["layers"]):
        x = layer_block_pallas(
            x, lyr,
            g_in=prepped["norm_in_g"], g_fin=prepped["norm_out_g"],
            d_model=D,
            fuse_norm_in=(li == 0),                  # norm_in fused here
            fuse_norm_out=(li == n_layers - 1))      # norm_out fused here
    return x[..., :D]


# ---------------------------------- main -----------------------------------

if __name__ == "__main__":
    # Small config consistent with TextTransformer.__init__:
    dim = 32
    num_tokens = 100
    max_seq_len = 16
    dim_head = 16
    heads = 4
    depth = 2
    ff_mult = 4

    batch = 2
    seq = 7   # becomes 8 after the CLS token is prepended

    key = jax.random.PRNGKey(0)
    pkey, tkey = jax.random.split(key)
    raw_params = init_params(pkey, num_tokens=num_tokens,
                             max_seq_len=max_seq_len, dim=dim, depth=depth,
                             heads=heads, dim_head=dim_head, ff_mult=ff_mult)
    prepped = prepare_params(raw_params, heads=heads, dim_head=dim_head)
    tokens = jax.random.randint(tkey, (batch, seq), 0, num_tokens, jnp.int32)

    fwd = jax.jit(text_transformer_forward)
    out = fwd(prepped, tokens)
    out = jax.block_until_ready(out)

    assert out.shape == (batch, seq + 1, dim), out.shape
    assert bool(jnp.all(jnp.isfinite(out)))
    print("KERNEL_OK")
</pallas_src>

<mosaic_0001>
module attributes {stable_mosaic.version = 11 : i64} {
  func.func @_layer_kernel(%arg0: i32, %arg1: memref<2x8x128xf32, #tpu.memory_space<vmem>>, %arg2: memref<1x128xf32, #tpu.memory_space<vmem>>, %arg3: memref<1x128xf32, #tpu.memory_space<vmem>>, %arg4: memref<4x128x16xbf16, #tpu.memory_space<vmem>>, %arg5: memref<4x128x16xbf16, #tpu.memory_space<vmem>>, %arg6: memref<4x128x16xbf16, #tpu.memory_space<vmem>>, %arg7: memref<4x16x128xbf16, #tpu.memory_space<vmem>>, %arg8: memref<1x128xf32, #tpu.memory_space<vmem>>, %arg9: memref<1x128xf32, #tpu.memory_space<vmem>>, %arg10: memref<128x256xbf16, #tpu.memory_space<vmem>>, %arg11: memref<1x128xf32, #tpu.memory_space<vmem>>, %arg12: memref<128x128xbf16, #tpu.memory_space<vmem>>, %arg13: memref<1x128xf32, #tpu.memory_space<vmem>>, %arg14: memref<2x8x128xf32, #tpu.memory_space<vmem>>) attributes {dimension_semantics = [#tpu.dimension_semantics<arbitrary>], iteration_bounds = array<i64: 1>, scalar_prefetch = 0 : i64, scratch_operands = 0 : i64, tpu.core_type = #tpu.core_type<tc>, window_params = [{pipeline_mode = #tpu.pipeline_mode<synchronous>, transform_indices = @transform_0, window_bounds = array<i64: 2, 8, 128>}, {pipeline_mode = #tpu.pipeline_mode<synchronous>, transform_indices = @transform_1, window_bounds = array<i64: 1, 128>}, {pipeline_mode = #tpu.pipeline_mode<synchronous>, transform_indices = @transform_2, window_bounds = array<i64: 1, 128>}, {pipeline_mode = #tpu.pipeline_mode<synchronous>, transform_indices = @transform_3, window_bounds = array<i64: 4, 128, 16>}, {pipeline_mode = #tpu.pipeline_mode<synchronous>, transform_indices = @transform_4, window_bounds = array<i64: 4, 128, 16>}, {pipeline_mode = #tpu.pipeline_mode<synchronous>, transform_indices = @transform_5, window_bounds = array<i64: 4, 128, 16>}, {pipeline_mode = #tpu.pipeline_mode<synchronous>, transform_indices = @transform_6, window_bounds = array<i64: 4, 16, 128>}, {pipeline_mode = #tpu.pipeline_mode<synchronous>, transform_indices = @transform_7, window_bounds = array<i64: 1, 128>}, {pipeline_mode = #tpu.pipeline_mode<synchronous>, transform_indices = @transform_8, window_bounds = array<i64: 1, 128>}, {pipeline_mode = #tpu.pipeline_mode<synchronous>, transform_indices = @transform_9, window_bounds = array<i64: 128, 256>}, {pipeline_mode = #tpu.pipeline_mode<synchronous>, transform_indices = @transform_10, window_bounds = array<i64: 1, 128>}, {pipeline_mode = #tpu.pipeline_mode<synchronous>, transform_indices = @transform_11, window_bounds = array<i64: 128, 128>}, {pipeline_mode = #tpu.pipeline_mode<synchronous>, transform_indices = @transform_12, window_bounds = array<i64: 1, 128>}, {pipeline_mode = #tpu.pipeline_mode<synchronous>, transform_indices = @transform_13, window_bounds = array<i64: 2, 8, 128>}]} {
    %0 = tpu.iota {dimensions = array<i32: 2>} : vector<1x1x128xi32>
    %c32_i32 = arith.constant 32 : i32
    %1 = vector.broadcast %c32_i32 : i32 to vector<1x1x128xi32>
    %2 = arith.cmpi slt, %0, %1 : vector<1x1x128xi32>
    %3 = arith.extui %2 : vector<1x1x128xi1> to vector<1x1x128xi32>
    %4 = arith.sitofp %3 : vector<1x1x128xi32> to vector<1x1x128xf32>
    %c0 = arith.constant 0 : index
    %c0_0 = arith.constant 0 : index
    %c0_1 = arith.constant 0 : index
    %5 = vector.load %arg1[%c0, %c0_0, %c0_1] : memref<2x8x128xf32, #tpu.memory_space<vmem>>, vector<2x8x128xf32>
    %c0_2 = arith.constant 0 : index
    %c0_3 = arith.constant 0 : index
    %6 = vector.load %arg2[%c0_2, %c0_3] : memref<1x128xf32, #tpu.memory_space<vmem>>, vector<1x128xf32>
    %7 = vector.broadcast %4 : vector<1x1x128xf32> to vector<2x8x128xf32>
    %8 = arith.mulf %5, %7 : vector<2x8x128xf32>
    %cst = arith.constant dense<0.000000e+00> : vector<2x8xf32>
    %9 = vector.multi_reduction <add>, %8, %cst [2] : vector<2x8x128xf32> to vector<2x8xf32>
    %10 = vector.shape_cast %9 : vector<2x8xf32> to vector<2x8x1xf32>
    %cst_4 = arith.constant 3.125000e-02 : f32
    %11 = vector.broadcast %cst_4 : f32 to vector<2x8x1xf32>
    %12 = arith.mulf %10, %11 : vector<2x8x1xf32>
    %13 = vector.broadcast %12 : vector<2x8x1xf32> to vector<2x8x128xf32>
    %14 = arith.subf %5, %13 : vector<2x8x128xf32>
    %15 = vector.broadcast %4 : vector<1x1x128xf32> to vector<2x8x128xf32>
    %16 = arith.mulf %14, %15 : vector<2x8x128xf32>
    %17 = arith.mulf %16, %16 : vector<2x8x128xf32>
    %cst_5 = arith.constant dense<0.000000e+00> : vector<2x8xf32>
    %18 = vector.multi_reduction <add>, %17, %cst_5 [2] : vector<2x8x128xf32> to vector<2x8xf32>
    %19 = vector.shape_cast %18 : vector<2x8xf32> to vector<2x8x1xf32>
    %cst_6 = arith.constant 3.125000e-02 : f32
    %20 = vector.broadcast %cst_6 : f32 to vector<2x8x1xf32>
    %21 = arith.mulf %19, %20 : vector<2x8x1xf32>
    %cst_7 = arith.constant 9.99999974E-6 : f32
    %22 = vector.broadcast %cst_7 : f32 to vector<2x8x1xf32>
    %23 = arith.addf %21, %22 : vector<2x8x1xf32>
    %24 = math.rsqrt %23 : vector<2x8x1xf32>
    %25 = vector.broadcast %24 : vector<2x8x1xf32> to vector<2x8x128xf32>
    %26 = arith.mulf %16, %25 : vector<2x8x128xf32>
    %27 = vector.shape_cast %6 : vector<1x128xf32> to vector<1x1x128xf32>
    %28 = vector.broadcast %27 : vector<1x1x128xf32> to vector<2x8x128xf32>
    %29 = arith.mulf %26, %28 : vector<2x8x128xf32>
    %c0_8 = arith.constant 0 : index
    %c0_9 = arith.constant 0 : index
    %30 = vector.load %arg3[%c0_8, %c0_9] : memref<1x128xf32, #tpu.memory_space<vmem>>, vector<1x128xf32>
    %31 = vector.broadcast %4 : vector<1x1x128xf32> to vector<2x8x128xf32>
    %32 = arith.mulf %29, %31 : vector<2x8x128xf32>
    %cst_10 = arith.constant dense<0.000000e+00> : vector<2x8xf32>
    %33 = vector.multi_reduction <add>, %32, %cst_10 [2] : vector<2x8x128xf32> to vector<2x8xf32>
    %34 = vector.shape_cast %33 : vector<2x8xf32> to vector<2x8x1xf32>
    %cst_11 = arith.constant 3.125000e-02 : f32
    %35 = vector.broadcast %cst_11 : f32 to vector<2x8x1xf32>
    %36 = arith.mulf %34, %35 : vector<2x8x1xf32>
    %37 = vector.broadcast %36 : vector<2x8x1xf32> to vector<2x8x128xf32>
    %38 = arith.subf %29, %37 : vector<2x8x128xf32>
    %39 = vector.broadcast %4 : vector<1x1x128xf32> to vector<2x8x128xf32>
    %40 = arith.mulf %38, %39 : vector<2x8x128xf32>
    %41 = arith.mulf %40, %40 : vector<2x8x128xf32>
    %cst_12 = arith.constant dense<0.000000e+00> : vector<2x8xf32>
    %42 = vector.multi_reduction <add>, %41, %cst_12 [2] : vector<2x8x128xf32> to vector<2x8xf32>
    %43 = vector.shape_cast %42 : vector<2x8xf32> to vector<2x8x1xf32>
    %cst_13 = arith.constant 3.125000e-02 : f32
    %44 = vector.broadcast %cst_13 : f32 to vector<2x8x1xf32>
    %45 = arith.mulf %43, %44 : vector<2x8x1xf32>
    %cst_14 = arith.constant 9.99999974E-6 : f32
    %46 = vector.broadcast %cst_14 : f32 to vector<2x8x1xf32>
    %47 = arith.addf %45, %46 : vector<2x8x1xf32>
    %48 = math.rsqrt %47 : vector<2x8x1xf32>
    %49 = vector.broadcast %48 : vector<2x8x1xf32> to vector<2x8x128xf32>
    %50 = arith.mulf %40, %49 : vector<2x8x128xf32>
    %51 = vector.shape_cast %30 : vector<1x128xf32> to vector<1x1x128xf32>
    %52 = vector.broadcast %51 : vector<1x1x128xf32> to vector<2x8x128xf32>
    %53 = arith.mulf %50, %52 : vector<2x8x128xf32>
    %54 = vector.shape_cast %53 : vector<2x8x128xf32> to vector<16x128xf32>
    %55 = arith.truncf %54 : vector<16x128xf32> to vector<16x128xbf16>
    %56 = vector.shape_cast %55 : vector<16x128xbf16> to vector<1x16x128xbf16>
    %57 = vector.shape_cast %56 : vector<1x16x128xbf16> to vector<1x16x128xbf16>
    %58 = vector.broadcast %57 : vector<1x16x128xbf16> to vector<4x16x128xbf16>
    %c0_15 = arith.constant 0 : index
    %c0_16 = arith.constant 0 : index
    %c0_17 = arith.constant 0 : index
    %59 = vector.load %arg4[%c0_15, %c0_16, %c0_17] : memref<4x128x16xbf16, #tpu.memory_space<vmem>>, vector<4x128x16xbf16>
    "tpu.trace_start"() <{level = 10 : i32, message = "hnd,hdf->hnf"}> : () -> ()
    %cst_18 = arith.constant dense<0.000000e+00> : vector<4x16x16xf32>
    %60 = tpu.matmul %58, %59, %cst_18 {dimension_numbers = #tpu.dot_dimension_numbers<[2], [1], [1], [2], [0, 0, 0, 1, 1, 2], [0], [0]>} : vector<4x16x128xbf16>, vector<4x128x16xbf16>, vector<4x16x16xf32> -> vector<4x16x16xf32>
    "tpu.trace_stop"() : () -> ()
    %61 = arith.truncf %60 : vector<4x16x16xf32> to vector<4x16x16xbf16>
    %c0_19 = arith.constant 0 : index
    %c0_20 = arith.constant 0 : index
    %c0_21 = arith.constant 0 : index
    %62 = vector.load %arg5[%c0_19, %c0_20, %c0_21] : memref<4x128x16xbf16, #tpu.memory_space<vmem>>, vector<4x128x16xbf16>
    "tpu.trace_start"() <{level = 10 : i32, message = "hnd,hdf->hnf"}> : () -> ()
    %cst_22 = arith.constant dense<0.000000e+00> : vector<4x16x16xf32>
    %63 = tpu.matmul %58, %62, %cst_22 {dimension_numbers = #tpu.dot_dimension_numbers<[2], [1], [1], [2], [0, 0, 0, 1, 1, 2], [0], [0]>} : vector<4x16x128xbf16>, vector<4x128x16xbf16>, vector<4x16x16xf32> -> vector<4x16x16xf32>
    "tpu.trace_stop"() : () -> ()
    %64 = arith.truncf %63 : vector<4x16x16xf32> to vector<4x16x16xbf16>
    %c0_23 = arith.constant 0 : index
    %c0_24 = arith.constant 0 : index
    %c0_25 = arith.constant 0 : index
    %65 = vector.load %arg6[%c0_23, %c0_24, %c0_25] : memref<4x128x16xbf16, #tpu.memory_space<vmem>>, vector<4x128x16xbf16>
    "tpu.trace_start"() <{level = 10 : i32, message = "hnd,hdf->hnf"}> : () -> ()
    %cst_26 = arith.constant dense<0.000000e+00> : vector<4x16x16xf32>
    %66 = tpu.matmul %58, %65, %cst_26 {dimension_numbers = #tpu.dot_dimension_numbers<[2], [1], [1], [2], [0, 0, 0, 1, 1, 2], [0], [0]>} : vector<4x16x128xbf16>, vector<4x128x16xbf16>, vector<4x16x16xf32> -> vector<4x16x16xf32>
    "tpu.trace_stop"() : () -> ()
    %67 = arith.truncf %66 : vector<4x16x16xf32> to vector<4x16x16xbf16>
    %68 = vector.extract_strided_slice %61 {offsets = [0, 0, 0], sizes = [4, 8, 16], strides = [1, 1, 1]} : vector<4x16x16xbf16> to vector<4x8x16xbf16>
    %69 = vector.extract_strided_slice %64 {offsets = [0, 0, 0], sizes = [4, 8, 16], strides = [1, 1, 1]} : vector<4x16x16xbf16> to vector<4x8x16xbf16>
    %70 = vector.extract_strided_slice %67 {offsets = [0, 0, 0], sizes = [4, 8, 16], strides = [1, 1, 1]} : vector<4x16x16xbf16> to vector<4x8x16xbf16>
    "tpu.trace_start"() <{level = 10 : i32, message = "hnd,hmd->hnm"}> : () -> ()
    %cst_27 = arith.constant dense<0.000000e+00> : vector<4x8x8xf32>
    %71 = tpu.matmul %68, %69, %cst_27 {dimension_numbers = #tpu.dot_dimension_numbers<[2], [2], [1], [1], [0, 0, 0, 1, 1, 1], [0], [0]>} : vector<4x8x16xbf16>, vector<4x8x16xbf16>, vector<4x8x8xf32> -> vector<4x8x8xf32>
    "tpu.trace_stop"() : () -> ()
    %cst_28 = arith.constant dense<0xFF800000> : vector<4x8xf32>
    %72 = vector.multi_reduction <maximumf>, %71, %cst_28 [2] : vector<4x8x8xf32> to vector<4x8xf32>
    %73 = vector.shape_cast %72 : vector<4x8xf32> to vector<4x8x1xf32>
    %74 = vector.broadcast %73 : vector<4x8x1xf32> to vector<4x8x8xf32>
    %75 = arith.subf %71, %74 : vector<4x8x8xf32>
    %76 = math.exp %75 : vector<4x8x8xf32>
    %cst_29 = arith.constant dense<0.000000e+00> : vector<4x8xf32>
    %77 = vector.multi_reduction <add>, %76, %cst_29 [2] : vector<4x8x8xf32> to vector<4x8xf32>
    %78 = vector.shape_cast %77 : vector<4x8xf32> to vector<4x8x1xf32>
    %79 = tpu.reciprocal %78 {approx = true} : vector<4x8x1xf32> -> vector<4x8x1xf32>
    %80 = vector.broadcast %79 : vector<4x8x1xf32> to vector<4x8x8xf32>
    %81 = arith.mulf %76, %80 : vector<4x8x8xf32>
    %82 = arith.truncf %81 : vector<4x8x8xf32> to vector<4x8x8xbf16>
    "tpu.trace_start"() <{level = 10 : i32, message = "hnm,hmd->hnd"}> : () -> ()
    %cst_30 = arith.constant dense<0.000000e+00> : vector<4x8x16xf32>
    %83 = tpu.matmul %82, %70, %cst_30 {dimension_numbers = #tpu.dot_dimension_numbers<[2], [1], [1], [2], [0, 0, 0, 1, 1, 2], [0], [0]>} : vector<4x8x8xbf16>, vector<4x8x16xbf16>, vector<4x8x16xf32> -> vector<4x8x16xf32>
    "tpu.trace_stop"() : () -> ()
    %84 = vector.extract_strided_slice %61 {offsets = [0, 8, 0], sizes = [4, 8, 16], strides = [1, 1, 1]} : vector<4x16x16xbf16> to vector<4x8x16xbf16>
    %85 = vector.extract_strided_slice %64 {offsets = [0, 8, 0], sizes = [4, 8, 16], strides = [1, 1, 1]} : vector<4x16x16xbf16> to vector<4x8x16xbf16>
    %86 = vector.extract_strided_slice %67 {offsets = [0, 8, 0], sizes = [4, 8, 16], strides = [1, 1, 1]} : vector<4x16x16xbf16> to vector<4x8x16xbf16>
    "tpu.trace_start"() <{level = 10 : i32, message = "hnd,hmd->hnm"}> : () -> ()
    %cst_31 = arith.constant dense<0.000000e+00> : vector<4x8x8xf32>
    %87 = tpu.matmul %84, %85, %cst_31 {dimension_numbers = #tpu.dot_dimension_numbers<[2], [2], [1], [1], [0, 0, 0, 1, 1, 1], [0], [0]>} : vector<4x8x16xbf16>, vector<4x8x16xbf16>, vector<4x8x8xf32> -> vector<4x8x8xf32>
    "tpu.trace_stop"() : () -> ()
    %cst_32 = arith.constant dense<0xFF800000> : vector<4x8xf32>
    %88 = vector.multi_reduction <maximumf>, %87, %cst_32 [2] : vector<4x8x8xf32> to vector<4x8xf32>
    %89 = vector.shape_cast %88 : vector<4x8xf32> to vector<4x8x1xf32>
    %90 = vector.broadcast %89 : vector<4x8x1xf32> to vector<4x8x8xf32>
    %91 = arith.subf %87, %90 : vector<4x8x8xf32>
    %92 = math.exp %91 : vector<4x8x8xf32>
    %cst_33 = arith.constant dense<0.000000e+00> : vector<4x8xf32>
    %93 = vector.multi_reduction <add>, %92, %cst_33 [2] : vector<4x8x8xf32> to vector<4x8xf32>
    %94 = vector.shape_cast %93 : vector<4x8xf32> to vector<4x8x1xf32>
    %95 = tpu.reciprocal %94 {approx = true} : vector<4x8x1xf32> -> vector<4x8x1xf32>
    %96 = vector.broadcast %95 : vector<4x8x1xf32> to vector<4x8x8xf32>
    %97 = arith.mulf %92, %96 : vector<4x8x8xf32>
    %98 = arith.truncf %97 : vector<4x8x8xf32> to vector<4x8x8xbf16>
    "tpu.trace_start"() <{level = 10 : i32, message = "hnm,hmd->hnd"}> : () -> ()
    %cst_34 = arith.constant dense<0.000000e+00> : vector<4x8x16xf32>
    %99 = tpu.matmul %98, %86, %cst_34 {dimension_numbers = #tpu.dot_dimension_numbers<[2], [1], [1], [2], [0, 0, 0, 1, 1, 2], [0], [0]>} : vector<4x8x8xbf16>, vector<4x8x16xbf16>, vector<4x8x16xf32> -> vector<4x8x16xf32>
    "tpu.trace_stop"() : () -> ()
    %100 = tpu.concatenate %83, %99 in 1 : vector<4x8x16xf32>, vector<4x8x16xf32> -> vector<4x16x16xf32>
    %101 = arith.truncf %100 : vector<4x16x16xf32> to vector<4x16x16xbf16>
    %c0_35 = arith.constant 0 : index
    %c0_36 = arith.constant 0 : index
    %c0_37 = arith.constant 0 : index
    %102 = vector.load %arg7[%c0_35, %c0_36, %c0_37] : memref<4x16x128xbf16, #tpu.memory_space<vmem>>, vector<4x16x128xbf16>
    "tpu.trace_start"() <{level = 10 : i32, message = "hnd,hdf->hnf"}> : () -> ()
    %cst_38 = arith.constant dense<0.000000e+00> : vector<4x16x128xf32>
    %103 = tpu.matmul %101, %102, %cst_38 {dimension_numbers = #tpu.dot_dimension_numbers<[2], [1], [1], [2], [0, 0, 0, 1, 1, 2], [0], [0]>} : vector<4x16x16xbf16>, vector<4x16x128xbf16>, vector<4x16x128xf32> -> vector<4x16x128xf32>
    "tpu.trace_stop"() : () -> ()
    %cst_39 = arith.constant dense<0.000000e+00> : vector<16x128xf32>
    %104 = vector.multi_reduction <add>, %103, %cst_39 [0] : vector<4x16x128xf32> to vector<16x128xf32>
    %105 = vector.shape_cast %104 : vector<16x128xf32> to vector<2x8x128xf32>
    %c0_40 = arith.constant 0 : index
    %c0_41 = arith.constant 0 : index
    %106 = vector.load %arg8[%c0_40, %c0_41] : memref<1x128xf32, #tpu.memory_space<vmem>>, vector<1x128xf32>
    %107 = vector.broadcast %4 : vector<1x1x128xf32> to vector<2x8x128xf32>
    %108 = arith.mulf %105, %107 : vector<2x8x128xf32>
    %cst_42 = arith.constant dense<0.000000e+00> : vector<2x8xf32>
    %109 = vector.multi_reduction <add>, %108, %cst_42 [2] : vector<2x8x128xf32> to vector<2x8xf32>
    %110 = vector.shape_cast %109 : vector<2x8xf32> to vector<2x8x1xf32>
    %cst_43 = arith.constant 3.125000e-02 : f32
    %111 = vector.broadcast %cst_43 : f32 to vector<2x8x1xf32>
    %112 = arith.mulf %110, %111 : vector<2x8x1xf32>
    %113 = vector.broadcast %112 : vector<2x8x1xf32> to vector<2x8x128xf32>
    %114 = arith.subf %105, %113 : vector<2x8x128xf32>
    %115 = vector.broadcast %4 : vector<1x1x128xf32> to vector<2x8x128xf32>
    %116 = arith.mulf %114, %115 : vector<2x8x128xf32>
    %117 = arith.mulf %116, %116 : vector<2x8x128xf32>
    %cst_44 = arith.constant dense<0.000000e+00> : vector<2x8xf32>
    %118 = vector.multi_reduction <add>, %117, %cst_44 [2] : vector<2x8x128xf32> to vector<2x8xf32>
    %119 = vector.shape_cast %118 : vector<2x8xf32> to vector<2x8x1xf32>
    %cst_45 = arith.constant 3.125000e-02 : f32
    %120 = vector.broadcast %cst_45 : f32 to vector<2x8x1xf32>
    %121 = arith.mulf %119, %120 : vector<2x8x1xf32>
    %cst_46 = arith.constant 9.99999974E-6 : f32
    %122 = vector.broadcast %cst_46 : f32 to vector<2x8x1xf32>
    %123 = arith.addf %121, %122 : vector<2x8x1xf32>
    %124 = math.rsqrt %123 : vector<2x8x1xf32>
    %125 = vector.broadcast %124 : vector<2x8x1xf32> to vector<2x8x128xf32>
    %126 = arith.mulf %116, %125 : vector<2x8x128xf32>
    %127 = vector.shape_cast %106 : vector<1x128xf32> to vector<1x1x128xf32>
    %128 = vector.broadcast %127 : vector<1x1x128xf32> to vector<2x8x128xf32>
    %129 = arith.mulf %126, %128 : vector<2x8x128xf32>
    %130 = arith.addf %29, %129 : vector<2x8x128xf32>
    %c0_47 = arith.constant 0 : index
    %c0_48 = arith.constant 0 : index
    %131 = vector.load %arg9[%c0_47, %c0_48] : memref<1x128xf32, #tpu.memory_space<vmem>>, vector<1x128xf32>
    %132 = vector.broadcast %4 : vector<1x1x128xf32> to vector<2x8x128xf32>
    %133 = arith.mulf %130, %132 : vector<2x8x128xf32>
    %cst_49 = arith.constant dense<0.000000e+00> : vector<2x8xf32>
    %134 = vector.multi_reduction <add>, %133, %cst_49 [2] : vector<2x8x128xf32> to vector<2x8xf32>
    %135 = vector.shape_cast %134 : vector<2x8xf32> to vector<2x8x1xf32>
    %cst_50 = arith.constant 3.125000e-02 : f32
    %136 = vector.broadcast %cst_50 : f32 to vector<2x8x1xf32>
    %137 = arith.mulf %135, %136 : vector<2x8x1xf32>
    %138 = vector.broadcast %137 : vector<2x8x1xf32> to vector<2x8x128xf32>
    %139 = arith.subf %130, %138 : vector<2x8x128xf32>
    %140 = vector.broadcast %4 : vector<1x1x128xf32> to vector<2x8x128xf32>
    %141 = arith.mulf %139, %140 : vector<2x8x128xf32>
    %142 = arith.mulf %141, %141 : vector<2x8x128xf32>
    %cst_51 = arith.constant dense<0.000000e+00> : vector<2x8xf32>
    %143 = vector.multi_reduction <add>, %142, %cst_51 [2] : vector<2x8x128xf32> to vector<2x8xf32>
    %144 = vector.shape_cast %143 : vector<2x8xf32> to vector<2x8x1xf32>
    %cst_52 = arith.constant 3.125000e-02 : f32
    %145 = vector.broadcast %cst_52 : f32 to vector<2x8x1xf32>
    %146 = arith.mulf %144, %145 : vector<2x8x1xf32>
    %cst_53 = arith.constant 9.99999974E-6 : f32
    %147 = vector.broadcast %cst_53 : f32 to vector<2x8x1xf32>
    %148 = arith.addf %146, %147 : vector<2x8x1xf32>
    %149 = math.rsqrt %148 : vector<2x8x1xf32>
    %150 = vector.broadcast %149 : vector<2x8x1xf32> to vector<2x8x128xf32>
    %151 = arith.mulf %141, %150 : vector<2x8x128xf32>
    %152 = vector.shape_cast %131 : vector<1x128xf32> to vector<1x1x128xf32>
    %153 = vector.broadcast %152 : vector<1x1x128xf32> to vector<2x8x128xf32>
    %154 = arith.mulf %151, %153 : vector<2x8x128xf32>
    %155 = vector.shape_cast %154 : vector<2x8x128xf32> to vector<16x128xf32>
    %156 = arith.truncf %155 : vector<16x128xf32> to vector<16x128xbf16>
    %c0_54 = arith.constant 0 : index
    %c0_55 = arith.constant 0 : index
    %157 = vector.load %arg10[%c0_54, %c0_55] : memref<128x256xbf16, #tpu.memory_space<vmem>>, vector<128x256xbf16>
    %cst_56 = arith.constant dense<0.000000e+00> : vector<16x256xf32>
    %158 = tpu.matmul %156, %157, %cst_56 {dimension_numbers = #tpu.dot_dimension_numbers<[1], [0], [0], [1], [0, 0, 1, 1], [], []>} : vector<16x128xbf16>, vector<128x256xbf16>, vector<16x256xf32> -> vector<16x256xf32>
    %159 = vector.extract_strided_slice %158 {offsets = [0, 0], sizes = [16, 128], strides = [1, 1]} : vector<16x256xf32> to vector<16x128xf32>
    %160 = vector.extract_strided_slice %158 {offsets = [0, 128], sizes = [16, 128], strides = [1, 1]} : vector<16x256xf32> to vector<16x128xf32>
    %cst_57 = arith.constant 5.000000e-01 : f32
    %161 = vector.broadcast %cst_57 : f32 to vector<16x128xf32>
    %162 = arith.mulf %161, %160 : vector<16x128xf32>
    %cst_58 = arith.constant 0.707106769 : f32
    %163 = vector.broadcast %cst_58 : f32 to vector<16x128xf32>
    %164 = arith.mulf %160, %163 : vector<16x128xf32>
    %cst_59 = arith.constant 0.000000e+00 : f32
    %165 = vector.broadcast %cst_59 : f32 to vector<16x128xf32>
    %166 = arith.cmpf oge, %164, %165 : vector<16x128xf32>
    %cst_60 = arith.constant 1.000000e+00 : f32
    %cst_61 = arith.constant -1.000000e+00 : f32
    %167 = vector.broadcast %cst_60 : f32 to vector<16x128xf32>
    %168 = vector.broadcast %cst_61 : f32 to vector<16x128xf32>
    %169 = arith.select %166, %167, %168 : vector<16x128xi1>, vector<16x128xf32>
    %170 = math.absf %164 : vector<16x128xf32>
    %cst_62 = arith.constant 0.327591091 : f32
    %171 = vector.broadcast %cst_62 : f32 to vector<16x128xf32>
    %172 = arith.mulf %171, %170 : vector<16x128xf32>
    %cst_63 = arith.constant 1.000000e+00 : f32
    %173 = vector.broadcast %cst_63 : f32 to vector<16x128xf32>
    %174 = arith.addf %173, %172 : vector<16x128xf32>
    %cst_64 = arith.constant 1.000000e+00 : f32
    %175 = vector.broadcast %cst_64 : f32 to vector<16x128xf32>
    %176 = arith.divf %175, %174 : vector<16x128xf32>
    %cst_65 = arith.constant 1.06140542 : f32
    %177 = vector.broadcast %cst_65 : f32 to vector<16x128xf32>
    %178 = arith.mulf %177, %176 : vector<16x128xf32>
    %cst_66 = arith.constant -1.45315206 : f32
    %179 = vector.broadcast %cst_66 : f32 to vector<16x128xf32>
    %180 = arith.addf %178, %179 : vector<16x128xf32>
    %181 = arith.mulf %180, %176 : vector<16x128xf32>
    %cst_67 = arith.constant 1.42141378 : f32
    %182 = vector.broadcast %cst_67 : f32 to vector<16x128xf32>
    %183 = arith.addf %181, %182 : vector<16x128xf32>
    %184 = arith.mulf %183, %176 : vector<16x128xf32>
    %cst_68 = arith.constant -0.284496725 : f32
    %185 = vector.broadcast %cst_68 : f32 to vector<16x128xf32>
    %186 = arith.addf %184, %185 : vector<16x128xf32>
    %187 = arith.mulf %186, %176 : vector<16x128xf32>
    %cst_69 = arith.constant 0.254829586 : f32
    %188 = vector.broadcast %cst_69 : f32 to vector<16x128xf32>
    %189 = arith.addf %187, %188 : vector<16x128xf32>
    %190 = arith.mulf %189, %176 : vector<16x128xf32>
    %cst_70 = arith.constant 0.000000e+00 : f32
    %191 = vector.broadcast %cst_70 : f32 to vector<16x128xf32>
    %192 = arith.subf %191, %170 : vector<16x128xf32>
    %193 = arith.mulf %192, %170 : vector<16x128xf32>
    %194 = math.exp %193 : vector<16x128xf32>
    %195 = arith.mulf %190, %194 : vector<16x128xf32>
    %cst_71 = arith.constant 1.000000e+00 : f32
    %196 = vector.broadcast %cst_71 : f32 to vector<16x128xf32>
    %197 = arith.subf %196, %195 : vector<16x128xf32>
    %198 = arith.mulf %169, %197 : vector<16x128xf32>
    %cst_72 = arith.constant 1.000000e+00 : f32
    %199 = vector.broadcast %cst_72 : f32 to vector<16x128xf32>
    %200 = arith.addf %199, %198 : vector<16x128xf32>
    %201 = arith.mulf %162, %200 : vector<16x128xf32>
    %202 = arith.mulf %159, %201 : vector<16x128xf32>
    %c0_73 = arith.constant 0 : index
    %c0_74 = arith.constant 0 : index
    %203 = vector.load %arg11[%c0_73, %c0_74] : memref<1x128xf32, #tpu.memory_space<vmem>>, vector<1x128xf32>
    %cst_75 = arith.constant dense<0.000000e+00> : vector<16xf32>
    %204 = vector.multi_reduction <add>, %202, %cst_75 [1] : vector<16x128xf32> to vector<16xf32>
    %205 = vector.shape_cast %204 : vector<16xf32> to vector<16x1xf32>
    %cst_76 = arith.constant 1.280000e+02 : f32
    %206 = vector.broadcast %cst_76 : f32 to vector<16x1xf32>
    %207 = arith.divf %205, %206 : vector<16x1xf32>
    %208 = vector.broadcast %207 : vector<16x1xf32> to vector<16x128xf32>
    %209 = arith.subf %202, %208 : vector<16x128xf32>
    %210 = arith.mulf %209, %209 : vector<16x128xf32>
    %cst_77 = arith.constant dense<0.000000e+00> : vector<16xf32>
    %211 = vector.multi_reduction <add>, %210, %cst_77 [1] : vector<16x128xf32> to vector<16xf32>
    %212 = vector.shape_cast %211 : vector<16xf32> to vector<16x1xf32>
    %cst_78 = arith.constant 1.280000e+02 : f32
    %213 = vector.broadcast %cst_78 : f32 to vector<16x1xf32>
    %214 = arith.divf %212, %213 : vector<16x1xf32>
    %cst_79 = arith.constant 9.99999974E-6 : f32
    %215 = vector.broadcast %cst_79 : f32 to vector<16x1xf32>
    %216 = arith.addf %214, %215 : vector<16x1xf32>
    %217 = math.rsqrt %216 : vector<16x1xf32>
    %218 = vector.broadcast %217 : vector<16x1xf32> to vector<16x128xf32>
    %219 = arith.mulf %209, %218 : vector<16x128xf32>
    %220 = vector.broadcast %203 : vector<1x128xf32> to vector<16x128xf32>
    %221 = arith.mulf %219, %220 : vector<16x128xf32>
    %222 = arith.truncf %221 : vector<16x128xf32> to vector<16x128xbf16>
    %c0_80 = arith.constant 0 : index
    %c0_81 = arith.constant 0 : index
    %223 = vector.load %arg12[%c0_80, %c0_81] : memref<128x128xbf16, #tpu.memory_space<vmem>>, vector<128x128xbf16>
    %cst_82 = arith.constant dense<0.000000e+00> : vector<16x128xf32>
    %224 = tpu.matmul %222, %223, %cst_82 {dimension_numbers = #tpu.dot_dimension_numbers<[1], [0], [0], [1], [0, 0, 1, 1], [], []>} : vector<16x128xbf16>, vector<128x128xbf16>, vector<16x128xf32> -> vector<16x128xf32>
    %225 = vector.shape_cast %224 : vector<16x128xf32> to vector<2x8x128xf32>
    %226 = arith.addf %130, %225 : vector<2x8x128xf32>
    %c0_83 = arith.constant 0 : index
    %c0_84 = arith.constant 0 : index
    %c0_85 = arith.constant 0 : index
    %227 = vector.load %arg14[%c0_83, %c0_84, %c0_85] : memref<2x8x128xf32, #tpu.memory_space<vmem>>, vector<2x8x128xf32>
    tpu.vector_store %arg14[%c0_83, %c0_84, %c0_85], %226 {strides = array<i32>} : memref<2x8x128xf32, #tpu.memory_space<vmem>>, vector<2x8x128xf32>,
    return
  }
  func.func @transform_0(%arg0: i32) -> (i32, i32, i32) {
    %c0_i32 = arith.constant 0 : i32
    %c0_i32_0 = arith.constant 0 : i32
    %c0_i32_1 = arith.constant 0 : i32
    %c0_i32_2 = arith.constant 0 : i32
    return %c0_i32, %c0_i32_0, %c0_i32_1 : i32, i32, i32
  }
  func.func @transform_1(%arg0: i32) -> (i32, i32) {
    %c0_i32 = arith.constant 0 : i32
    %c0_i32_0 = arith.constant 0 : i32
    %c0_i32_1 = arith.constant 0 : i32
    return %c0_i32, %c0_i32_0 : i32, i32
  }
  func.func @transform_2(%arg0: i32) -> (i32, i32) {
    %c0_i32 = arith.constant 0 : i32
    %c0_i32_0 = arith.constant 0 : i32
    %c0_i32_1 = arith.constant 0 : i32
    return %c0_i32, %c0_i32_0 : i32, i32
  }
  func.func @transform_3(%arg0: i32) -> (i32, i32, i32) {
    %c0_i32 = arith.constant 0 : i32
    %c0_i32_0 = arith.constant 0 : i32
    %c0_i32_1 = arith.constant 0 : i32
    %c0_i32_2 = arith.constant 0 : i32
    return %c0_i32, %c0_i32_0, %c0_i32_1 : i32, i32, i32
  }
  func.func @transform_4(%arg0: i32) -> (i32, i32, i32) {
    %c0_i32 = arith.constant 0 : i32
    %c0_i32_0 = arith.constant 0 : i32
    %c0_i32_1 = arith.constant 0 : i32
    %c0_i32_2 = arith.constant 0 : i32
    return %c0_i32, %c0_i32_0, %c0_i32_1 : i32, i32, i32
  }
  func.func @transform_5(%arg0: i32) -> (i32, i32, i32) {
    %c0_i32 = arith.constant 0 : i32
    %c0_i32_0 = arith.constant 0 : i32
    %c0_i32_1 = arith.constant 0 : i32
    %c0_i32_2 = arith.constant 0 : i32
    return %c0_i32, %c0_i32_0, %c0_i32_1 : i32, i32, i32
  }
  func.func @transform_6(%arg0: i32) -> (i32, i32, i32) {
    %c0_i32 = arith.constant 0 : i32
    %c0_i32_0 = arith.constant 0 : i32
    %c0_i32_1 = arith.constant 0 : i32
    %c0_i32_2 = arith.constant 0 : i32
    return %c0_i32, %c0_i32_0, %c0_i32_1 : i32, i32, i32
  }
  func.func @transform_7(%arg0: i32) -> (i32, i32) {
    %c0_i32 = arith.constant 0 : i32
    %c0_i32_0 = arith.constant 0 : i32
    %c0_i32_1 = arith.constant 0 : i32
    return %c0_i32, %c0_i32_0 : i32, i32
  }
  func.func @transform_8(%arg0: i32) -> (i32, i32) {
    %c0_i32 = arith.constant 0 : i32
    %c0_i32_0 = arith.constant 0 : i32
    %c0_i32_1 = arith.constant 0 : i32
    return %c0_i32, %c0_i32_0 : i32, i32
  }
  func.func @transform_9(%arg0: i32) -> (i32, i32) {
    %c0_i32 = arith.constant 0 : i32
    %c0_i32_0 = arith.constant 0 : i32
    %c0_i32_1 = arith.constant 0 : i32
    return %c0_i32, %c0_i32_0 : i32, i32
  }
  func.func @transform_10(%arg0: i32) -> (i32, i32) {
    %c0_i32 = arith.constant 0 : i32
    %c0_i32_0 = arith.constant 0 : i32
    %c0_i32_1 = arith.constant 0 : i32
    return %c0_i32, %c0_i32_0 : i32, i32
  }
  func.func @transform_11(%arg0: i32) -> (i32, i32) {
    %c0_i32 = arith.constant 0 : i32
    %c0_i32_0 = arith.constant 0 : i32
    %c0_i32_1 = arith.constant 0 : i32
    return %c0_i32, %c0_i32_0 : i32, i32
  }
  func.func @transform_12(%arg0: i32) -> (i32, i32) {
    %c0_i32 = arith.constant 0 : i32
    %c0_i32_0 = arith.constant 0 : i32
    %c0_i32_1 = arith.constant 0 : i32
    return %c0_i32, %c0_i32_0 : i32, i32
  }
  func.func @transform_13(%arg0: i32) -> (i32, i32, i32) {
    %c0_i32 = arith.constant 0 : i32
    %c0_i32_0 = arith.constant 0 : i32
    %c0_i32_1 = arith.constant 0 : i32
    %c0_i32_2 = arith.constant 0 : i32
    return %c0_i32, %c0_i32_0, %c0_i32_1 : i32, i32, i32
  }
}

module attributes {stable_mosaic.version = 11 : i64} {
  func.func @_layer_kernel(%arg0: i32, %arg1: memref<2x8x128xf32, #tpu.memory_space<vmem>>, %arg2: memref<1x128xf32, #tpu.memory_space<vmem>>, %arg3: memref<1x128xf32, #tpu.memory_space<vmem>>, %arg4: memref<4x128x16xbf16, #tpu.memory_space<vmem>>, %arg5: memref<4x128x16xbf16, #tpu.memory_space<vmem>>, %arg6: memref<4x128x16xbf16, #tpu.memory_space<vmem>>, %arg7: memref<4x16x128xbf16, #tpu.memory_space<vmem>>, %arg8: memref<1x128xf32, #tpu.memory_space<vmem>>, %arg9: memref<1x128xf32, #tpu.memory_space<vmem>>, %arg10: memref<128x256xbf16, #tpu.memory_space<vmem>>, %arg11: memref<1x128xf32, #tpu.memory_space<vmem>>, %arg12: memref<128x128xbf16, #tpu.memory_space<vmem>>, %arg13: memref<1x128xf32, #tpu.memory_space<vmem>>, %arg14: memref<2x8x128xf32, #tpu.memory_space<vmem>>) attributes {dimension_semantics = [#tpu.dimension_semantics<arbitrary>], iteration_bounds = array<i64: 1>, scalar_prefetch = 0 : i64, scratch_operands = 0 : i64, tpu.core_type = #tpu.core_type<tc>, window_params = [{pipeline_mode = #tpu.pipeline_mode<synchronous>, transform_indices = @transform_0, window_bounds = array<i64: 2, 8, 128>}, {pipeline_mode = #tpu.pipeline_mode<synchronous>, transform_indices = @transform_1, window_bounds = array<i64: 1, 128>}, {pipeline_mode = #tpu.pipeline_mode<synchronous>, transform_indices = @transform_2, window_bounds = array<i64: 1, 128>}, {pipeline_mode = #tpu.pipeline_mode<synchronous>, transform_indices = @transform_3, window_bounds = array<i64: 4, 128, 16>}, {pipeline_mode = #tpu.pipeline_mode<synchronous>, transform_indices = @transform_4, window_bounds = array<i64: 4, 128, 16>}, {pipeline_mode = #tpu.pipeline_mode<synchronous>, transform_indices = @transform_5, window_bounds = array<i64: 4, 128, 16>}, {pipeline_mode = #tpu.pipeline_mode<synchronous>, transform_indices = @transform_6, window_bounds = array<i64: 4, 16, 128>}, {pipeline_mode = #tpu.pipeline_mode<synchronous>, transform_indices = @transform_7, window_bounds = array<i64: 1, 128>}, {pipeline_mode = #tpu.pipeline_mode<synchronous>, transform_indices = @transform_8, window_bounds = array<i64: 1, 128>}, {pipeline_mode = #tpu.pipeline_mode<synchronous>, transform_indices = @transform_9, window_bounds = array<i64: 128, 256>}, {pipeline_mode = #tpu.pipeline_mode<synchronous>, transform_indices = @transform_10, window_bounds = array<i64: 1, 128>}, {pipeline_mode = #tpu.pipeline_mode<synchronous>, transform_indices = @transform_11, window_bounds = array<i64: 128, 128>}, {pipeline_mode = #tpu.pipeline_mode<synchronous>, transform_indices = @transform_12, window_bounds = array<i64: 1, 128>}, {pipeline_mode = #tpu.pipeline_mode<synchronous>, transform_indices = @transform_13, window_bounds = array<i64: 2, 8, 128>}]} {
    %0 = tpu.iota {dimensions = array<i32: 2>} : vector<1x1x128xi32>
    %c32_i32 = arith.constant 32 : i32
    %1 = vector.broadcast %c32_i32 : i32 to vector<1x1x128xi32>
    %2 = arith.cmpi slt, %0, %1 : vector<1x1x128xi32>
    %3 = arith.extui %2 : vector<1x1x128xi1> to vector<1x1x128xi32>
    %4 = arith.sitofp %3 : vector<1x1x128xi32> to vector<1x1x128xf32>
    %c0 = arith.constant 0 : index
    %c0_0 = arith.constant 0 : index
    %c0_1 = arith.constant 0 : index
    %5 = vector.load %arg1[%c0, %c0_0, %c0_1] : memref<2x8x128xf32, #tpu.memory_space<vmem>>, vector<2x8x128xf32>
    %c0_2 = arith.constant 0 : index
    %c0_3 = arith.constant 0 : index
    %6 = vector.load %arg3[%c0_2, %c0_3] : memref<1x128xf32, #tpu.memory_space<vmem>>, vector<1x128xf32>
    %7 = vector.broadcast %4 : vector<1x1x128xf32> to vector<2x8x128xf32>
    %8 = arith.mulf %5, %7 : vector<2x8x128xf32>
    %cst = arith.constant dense<0.000000e+00> : vector<2x8xf32>
    %9 = vector.multi_reduction <add>, %8, %cst [2] : vector<2x8x128xf32> to vector<2x8xf32>
    %10 = vector.shape_cast %9 : vector<2x8xf32> to vector<2x8x1xf32>
    %cst_4 = arith.constant 3.125000e-02 : f32
    %11 = vector.broadcast %cst_4 : f32 to vector<2x8x1xf32>
    %12 = arith.mulf %10, %11 : vector<2x8x1xf32>
    %13 = vector.broadcast %12 : vector<2x8x1xf32> to vector<2x8x128xf32>
    %14 = arith.subf %5, %13 : vector<2x8x128xf32>
    %15 = vector.broadcast %4 : vector<1x1x128xf32> to vector<2x8x128xf32>
    %16 = arith.mulf %14, %15 : vector<2x8x128xf32>
    %17 = arith.mulf %16, %16 : vector<2x8x128xf32>
    %cst_5 = arith.constant dense<0.000000e+00> : vector<2x8xf32>
    %18 = vector.multi_reduction <add>, %17, %cst_5 [2] : vector<2x8x128xf32> to vector<2x8xf32>
    %19 = vector.shape_cast %18 : vector<2x8xf32> to vector<2x8x1xf32>
    %cst_6 = arith.constant 3.125000e-02 : f32
    %20 = vector.broadcast %cst_6 : f32 to vector<2x8x1xf32>
    %21 = arith.mulf %19, %20 : vector<2x8x1xf32>
    %cst_7 = arith.constant 9.99999974E-6 : f32
    %22 = vector.broadcast %cst_7 : f32 to vector<2x8x1xf32>
    %23 = arith.addf %21, %22 : vector<2x8x1xf32>
    %24 = math.rsqrt %23 : vector<2x8x1xf32>
    %25 = vector.broadcast %24 : vector<2x8x1xf32> to vector<2x8x128xf32>
    %26 = arith.mulf %16, %25 : vector<2x8x128xf32>
    %27 = vector.shape_cast %6 : vector<1x128xf32> to vector<1x1x128xf32>
    %28 = vector.broadcast %27 : vector<1x1x128xf32> to vector<2x8x128xf32>
    %29 = arith.mulf %26, %28 : vector<2x8x128xf32>
    %30 = vector.shape_cast %29 : vector<2x8x128xf32> to vector<16x128xf32>
    %31 = arith.truncf %30 : vector<16x128xf32> to vector<16x128xbf16>
    %32 = vector.shape_cast %31 : vector<16x128xbf16> to vector<1x16x128xbf16>
    %33 = vector.shape_cast %32 : vector<1x16x128xbf16> to vector<1x16x128xbf16>
    %34 = vector.broadcast %33 : vector<1x16x128xbf16> to vector<4x16x128xbf16>
    %c0_8 = arith.constant 0 : index
    %c0_9 = arith.constant 0 : index
    %c0_10 = arith.constant 0 : index
    %35 = vector.load %arg4[%c0_8, %c0_9, %c0_10] : memref<4x128x16xbf16, #tpu.memory_space<vmem>>, vector<4x128x16xbf16>
    "tpu.trace_start"() <{level = 10 : i32, message = "hnd,hdf->hnf"}> : () -> ()
    %cst_11 = arith.constant dense<0.000000e+00> : vector<4x16x16xf32>
    %36 = tpu.matmul %34, %35, %cst_11 {dimension_numbers = #tpu.dot_dimension_numbers<[2], [1], [1], [2], [0, 0, 0, 1, 1, 2], [0], [0]>} : vector<4x16x128xbf16>, vector<4x128x16xbf16>, vector<4x16x16xf32> -> vector<4x16x16xf32>
    "tpu.trace_stop"() : () -> ()
    %37 = arith.truncf %36 : vector<4x16x16xf32> to vector<4x16x16xbf16>
    %c0_12 = arith.constant 0 : index
    %c0_13 = arith.constant 0 : index
    %c0_14 = arith.constant 0 : index
    %38 = vector.load %arg5[%c0_12, %c0_13, %c0_14] : memref<4x128x16xbf16, #tpu.memory_space<vmem>>, vector<4x128x16xbf16>
    "tpu.trace_start"() <{level = 10 : i32, message = "hnd,hdf->hnf"}> : () -> ()
    %cst_15 = arith.constant dense<0.000000e+00> : vector<4x16x16xf32>
    %39 = tpu.matmul %34, %38, %cst_15 {dimension_numbers = #tpu.dot_dimension_numbers<[2], [1], [1], [2], [0, 0, 0, 1, 1, 2], [0], [0]>} : vector<4x16x128xbf16>, vector<4x128x16xbf16>, vector<4x16x16xf32> -> vector<4x16x16xf32>
    "tpu.trace_stop"() : () -> ()
    %40 = arith.truncf %39 : vector<4x16x16xf32> to vector<4x16x16xbf16>
    %c0_16 = arith.constant 0 : index
    %c0_17 = arith.constant 0 : index
    %c0_18 = arith.constant 0 : index
    %41 = vector.load %arg6[%c0_16, %c0_17, %c0_18] : memref<4x128x16xbf16, #tpu.memory_space<vmem>>, vector<4x128x16xbf16>
    "tpu.trace_start"() <{level = 10 : i32, message = "hnd,hdf->hnf"}> : () -> ()
    %cst_19 = arith.constant dense<0.000000e+00> : vector<4x16x16xf32>
    %42 = tpu.matmul %34, %41, %cst_19 {dimension_numbers = #tpu.dot_dimension_numbers<[2], [1], [1], [2], [0, 0, 0, 1, 1, 2], [0], [0]>} : vector<4x16x128xbf16>, vector<4x128x16xbf16>, vector<4x16x16xf32> -> vector<4x16x16xf32>
    "tpu.trace_stop"() : () -> ()
    %43 = arith.truncf %42 : vector<4x16x16xf32> to vector<4x16x16xbf16>
    %44 = vector.extract_strided_slice %37 {offsets = [0, 0, 0], sizes = [4, 8, 16], strides = [1, 1, 1]} : vector<4x16x16xbf16> to vector<4x8x16xbf16>
    %45 = vector.extract_strided_slice %40 {offsets = [0, 0, 0], sizes = [4, 8, 16], strides = [1, 1, 1]} : vector<4x16x16xbf16> to vector<4x8x16xbf16>
    %46 = vector.extract_strided_slice %43 {offsets = [0, 0, 0], sizes = [4, 8, 16], strides = [1, 1, 1]} : vector<4x16x16xbf16> to vector<4x8x16xbf16>
    "tpu.trace_start"() <{level = 10 : i32, message = "hnd,hmd->hnm"}> : () -> ()
    %cst_20 = arith.constant dense<0.000000e+00> : vector<4x8x8xf32>
    %47 = tpu.matmul %44, %45, %cst_20 {dimension_numbers = #tpu.dot_dimension_numbers<[2], [2], [1], [1], [0, 0, 0, 1, 1, 1], [0], [0]>} : vector<4x8x16xbf16>, vector<4x8x16xbf16>, vector<4x8x8xf32> -> vector<4x8x8xf32>
    "tpu.trace_stop"() : () -> ()
    %cst_21 = arith.constant dense<0xFF800000> : vector<4x8xf32>
    %48 = vector.multi_reduction <maximumf>, %47, %cst_21 [2] : vector<4x8x8xf32> to vector<4x8xf32>
    %49 = vector.shape_cast %48 : vector<4x8xf32> to vector<4x8x1xf32>
    %50 = vector.broadcast %49 : vector<4x8x1xf32> to vector<4x8x8xf32>
    %51 = arith.subf %47, %50 : vector<4x8x8xf32>
    %52 = math.exp %51 : vector<4x8x8xf32>
    %cst_22 = arith.constant dense<0.000000e+00> : vector<4x8xf32>
    %53 = vector.multi_reduction <add>, %52, %cst_22 [2] : vector<4x8x8xf32> to vector<4x8xf32>
    %54 = vector.shape_cast %53 : vector<4x8xf32> to vector<4x8x1xf32>
    %55 = tpu.reciprocal %54 {approx = true} : vector<4x8x1xf32> -> vector<4x8x1xf32>
    %56 = vector.broadcast %55 : vector<4x8x1xf32> to vector<4x8x8xf32>
    %57 = arith.mulf %52, %56 : vector<4x8x8xf32>
    %58 = arith.truncf %57 : vector<4x8x8xf32> to vector<4x8x8xbf16>
    "tpu.trace_start"() <{level = 10 : i32, message = "hnm,hmd->hnd"}> : () -> ()
    %cst_23 = arith.constant dense<0.000000e+00> : vector<4x8x16xf32>
    %59 = tpu.matmul %58, %46, %cst_23 {dimension_numbers = #tpu.dot_dimension_numbers<[2], [1], [1], [2], [0, 0, 0, 1, 1, 2], [0], [0]>} : vector<4x8x8xbf16>, vector<4x8x16xbf16>, vector<4x8x16xf32> -> vector<4x8x16xf32>
    "tpu.trace_stop"() : () -> ()
    %60 = vector.extract_strided_slice %37 {offsets = [0, 8, 0], sizes = [4, 8, 16], strides = [1, 1, 1]} : vector<4x16x16xbf16> to vector<4x8x16xbf16>
    %61 = vector.extract_strided_slice %40 {offsets = [0, 8, 0], sizes = [4, 8, 16], strides = [1, 1, 1]} : vector<4x16x16xbf16> to vector<4x8x16xbf16>
    %62 = vector.extract_strided_slice %43 {offsets = [0, 8, 0], sizes = [4, 8, 16], strides = [1, 1, 1]} : vector<4x16x16xbf16> to vector<4x8x16xbf16>
    "tpu.trace_start"() <{level = 10 : i32, message = "hnd,hmd->hnm"}> : () -> ()
    %cst_24 = arith.constant dense<0.000000e+00> : vector<4x8x8xf32>
    %63 = tpu.matmul %60, %61, %cst_24 {dimension_numbers = #tpu.dot_dimension_numbers<[2], [2], [1], [1], [0, 0, 0, 1, 1, 1], [0], [0]>} : vector<4x8x16xbf16>, vector<4x8x16xbf16>, vector<4x8x8xf32> -> vector<4x8x8xf32>
    "tpu.trace_stop"() : () -> ()
    %cst_25 = arith.constant dense<0xFF800000> : vector<4x8xf32>
    %64 = vector.multi_reduction <maximumf>, %63, %cst_25 [2] : vector<4x8x8xf32> to vector<4x8xf32>
    %65 = vector.shape_cast %64 : vector<4x8xf32> to vector<4x8x1xf32>
    %66 = vector.broadcast %65 : vector<4x8x1xf32> to vector<4x8x8xf32>
    %67 = arith.subf %63, %66 : vector<4x8x8xf32>
    %68 = math.exp %67 : vector<4x8x8xf32>
    %cst_26 = arith.constant dense<0.000000e+00> : vector<4x8xf32>
    %69 = vector.multi_reduction <add>, %68, %cst_26 [2] : vector<4x8x8xf32> to vector<4x8xf32>
    %70 = vector.shape_cast %69 : vector<4x8xf32> to vector<4x8x1xf32>
    %71 = tpu.reciprocal %70 {approx = true} : vector<4x8x1xf32> -> vector<4x8x1xf32>
    %72 = vector.broadcast %71 : vector<4x8x1xf32> to vector<4x8x8xf32>
    %73 = arith.mulf %68, %72 : vector<4x8x8xf32>
    %74 = arith.truncf %73 : vector<4x8x8xf32> to vector<4x8x8xbf16>
    "tpu.trace_start"() <{level = 10 : i32, message = "hnm,hmd->hnd"}> : () -> ()
    %cst_27 = arith.constant dense<0.000000e+00> : vector<4x8x16xf32>
    %75 = tpu.matmul %74, %62, %cst_27 {dimension_numbers = #tpu.dot_dimension_numbers<[2], [1], [1], [2], [0, 0, 0, 1, 1, 2], [0], [0]>} : vector<4x8x8xbf16>, vector<4x8x16xbf16>, vector<4x8x16xf32> -> vector<4x8x16xf32>
    "tpu.trace_stop"() : () -> ()
    %76 = tpu.concatenate %59, %75 in 1 : vector<4x8x16xf32>, vector<4x8x16xf32> -> vector<4x16x16xf32>
    %77 = arith.truncf %76 : vector<4x16x16xf32> to vector<4x16x16xbf16>
    %c0_28 = arith.constant 0 : index
    %c0_29 = arith.constant 0 : index
    %c0_30 = arith.constant 0 : index
    %78 = vector.load %arg7[%c0_28, %c0_29, %c0_30] : memref<4x16x128xbf16, #tpu.memory_space<vmem>>, vector<4x16x128xbf16>
    "tpu.trace_start"() <{level = 10 : i32, message = "hnd,hdf->hnf"}> : () -> ()
    %cst_31 = arith.constant dense<0.000000e+00> : vector<4x16x128xf32>
    %79 = tpu.matmul %77, %78, %cst_31 {dimension_numbers = #tpu.dot_dimension_numbers<[2], [1], [1], [2], [0, 0, 0, 1, 1, 2], [0], [0]>} : vector<4x16x16xbf16>, vector<4x16x128xbf16>, vector<4x16x128xf32> -> vector<4x16x128xf32>
    "tpu.trace_stop"() : () -> ()
    %cst_32 = arith.constant dense<0.000000e+00> : vector<16x128xf32>
    %80 = vector.multi_reduction <add>, %79, %cst_32 [0] : vector<4x16x128xf32> to vector<16x128xf32>
    %81 = vector.shape_cast %80 : vector<16x128xf32> to vector<2x8x128xf32>
    %c0_33 = arith.constant 0 : index
    %c0_34 = arith.constant 0 : index
    %82 = vector.load %arg8[%c0_33, %c0_34] : memref<1x128xf32, #tpu.memory_space<vmem>>, vector<1x128xf32>
    %83 = vector.broadcast %4 : vector<1x1x128xf32> to vector<2x8x128xf32>
    %84 = arith.mulf %81, %83 : vector<2x8x128xf32>
    %cst_35 = arith.constant dense<0.000000e+00> : vector<2x8xf32>
    %85 = vector.multi_reduction <add>, %84, %cst_35 [2] : vector<2x8x128xf32> to vector<2x8xf32>
    %86 = vector.shape_cast %85 : vector<2x8xf32> to vector<2x8x1xf32>
    %cst_36 = arith.constant 3.125000e-02 : f32
    %87 = vector.broadcast %cst_36 : f32 to vector<2x8x1xf32>
    %88 = arith.mulf %86, %87 : vector<2x8x1xf32>
    %89 = vector.broadcast %88 : vector<2x8x1xf32> to vector<2x8x128xf32>
    %90 = arith.subf %81, %89 : vector<2x8x128xf32>
    %91 = vector.broadcast %4 : vector<1x1x128xf32> to vector<2x8x128xf32>
    %92 = arith.mulf %90, %91 : vector<2x8x128xf32>
    %93 = arith.mulf %92, %92 : vector<2x8x128xf32>
    %cst_37 = arith.constant dense<0.000000e+00> : vector<2x8xf32>
    %94 = vector.multi_reduction <add>, %93, %cst_37 [2] : vector<2x8x128xf32> to vector<2x8xf32>
    %95 = vector.shape_cast %94 : vector<2x8xf32> to vector<2x8x1xf32>
    %cst_38 = arith.constant 3.125000e-02 : f32
    %96 = vector.broadcast %cst_38 : f32 to vector<2x8x1xf32>
    %97 = arith.mulf %95, %96 : vector<2x8x1xf32>
    %cst_39 = arith.constant 9.99999974E-6 : f32
    %98 = vector.broadcast %cst_39 : f32 to vector<2x8x1xf32>
    %99 = arith.addf %97, %98 : vector<2x8x1xf32>
    %100 = math.rsqrt %99 : vector<2x8x1xf32>
    %101 = vector.broadcast %100 : vector<2x8x1xf32> to vector<2x8x128xf32>
    %102 = arith.mulf %92, %101 : vector<2x8x128xf32>
    %103 = vector.shape_cast %82 : vector<1x128xf32> to vector<1x1x128xf32>
    %104 = vector.broadcast %103 : vector<1x1x128xf32> to vector<2x8x128xf32>
    %105 = arith.mulf %102, %104 : vector<2x8x128xf32>
    %106 = arith.addf %5, %105 : vector<2x8x128xf32>
    %c0_40 = arith.constant 0 : index
    %c0_41 = arith.constant 0 : index
    %107 = vector.load %arg9[%c0_40, %c0_41] : memref<1x128xf32, #tpu.memory_space<vmem>>, vector<1x128xf32>
    %108 = vector.broadcast %4 : vector<1x1x128xf32> to vector<2x8x128xf32>
    %109 = arith.mulf %106, %108 : vector<2x8x128xf32>
    %cst_42 = arith.constant dense<0.000000e+00> : vector<2x8xf32>
    %110 = vector.multi_reduction <add>, %109, %cst_42 [2] : vector<2x8x128xf32> to vector<2x8xf32>
    %111 = vector.shape_cast %110 : vector<2x8xf32> to vector<2x8x1xf32>
    %cst_43 = arith.constant 3.125000e-02 : f32
    %112 = vector.broadcast %cst_43 : f32 to vector<2x8x1xf32>
    %113 = arith.mulf %111, %112 : vector<2x8x1xf32>
    %114 = vector.broadcast %113 : vector<2x8x1xf32> to vector<2x8x128xf32>
    %115 = arith.subf %106, %114 : vector<2x8x128xf32>
    %116 = vector.broadcast %4 : vector<1x1x128xf32> to vector<2x8x128xf32>
    %117 = arith.mulf %115, %116 : vector<2x8x128xf32>
    %118 = arith.mulf %117, %117 : vector<2x8x128xf32>
    %cst_44 = arith.constant dense<0.000000e+00> : vector<2x8xf32>
    %119 = vector.multi_reduction <add>, %118, %cst_44 [2] : vector<2x8x128xf32> to vector<2x8xf32>
    %120 = vector.shape_cast %119 : vector<2x8xf32> to vector<2x8x1xf32>
    %cst_45 = arith.constant 3.125000e-02 : f32
    %121 = vector.broadcast %cst_45 : f32 to vector<2x8x1xf32>
    %122 = arith.mulf %120, %121 : vector<2x8x1xf32>
    %cst_46 = arith.constant 9.99999974E-6 : f32
    %123 = vector.broadcast %cst_46 : f32 to vector<2x8x1xf32>
    %124 = arith.addf %122, %123 : vector<2x8x1xf32>
    %125 = math.rsqrt %124 : vector<2x8x1xf32>
    %126 = vector.broadcast %125 : vector<2x8x1xf32> to vector<2x8x128xf32>
    %127 = arith.mulf %117, %126 : vector<2x8x128xf32>
    %128 = vector.shape_cast %107 : vector<1x128xf32> to vector<1x1x128xf32>
    %129 = vector.broadcast %128 : vector<1x1x128xf32> to vector<2x8x128xf32>
    %130 = arith.mulf %127, %129 : vector<2x8x128xf32>
    %131 = vector.shape_cast %130 : vector<2x8x128xf32> to vector<16x128xf32>
    %132 = arith.truncf %131 : vector<16x128xf32> to vector<16x128xbf16>
    %c0_47 = arith.constant 0 : index
    %c0_48 = arith.constant 0 : index
    %133 = vector.load %arg10[%c0_47, %c0_48] : memref<128x256xbf16, #tpu.memory_space<vmem>>, vector<128x256xbf16>
    %cst_49 = arith.constant dense<0.000000e+00> : vector<16x256xf32>
    %134 = tpu.matmul %132, %133, %cst_49 {dimension_numbers = #tpu.dot_dimension_numbers<[1], [0], [0], [1], [0, 0, 1, 1], [], []>} : vector<16x128xbf16>, vector<128x256xbf16>, vector<16x256xf32> -> vector<16x256xf32>
    %135 = vector.extract_strided_slice %134 {offsets = [0, 0], sizes = [16, 128], strides = [1, 1]} : vector<16x256xf32> to vector<16x128xf32>
    %136 = vector.extract_strided_slice %134 {offsets = [0, 128], sizes = [16, 128], strides = [1, 1]} : vector<16x256xf32> to vector<16x128xf32>
    %cst_50 = arith.constant 5.000000e-01 : f32
    %137 = vector.broadcast %cst_50 : f32 to vector<16x128xf32>
    %138 = arith.mulf %137, %136 : vector<16x128xf32>
    %cst_51 = arith.constant 0.707106769 : f32
    %139 = vector.broadcast %cst_51 : f32 to vector<16x128xf32>
    %140 = arith.mulf %136, %139 : vector<16x128xf32>
    %cst_52 = arith.constant 0.000000e+00 : f32
    %141 = vector.broadcast %cst_52 : f32 to vector<16x128xf32>
    %142 = arith.cmpf oge, %140, %141 : vector<16x128xf32>
    %cst_53 = arith.constant 1.000000e+00 : f32
    %cst_54 = arith.constant -1.000000e+00 : f32
    %143 = vector.broadcast %cst_53 : f32 to vector<16x128xf32>
    %144 = vector.broadcast %cst_54 : f32 to vector<16x128xf32>
    %145 = arith.select %142, %143, %144 : vector<16x128xi1>, vector<16x128xf32>
    %146 = math.absf %140 : vector<16x128xf32>
    %cst_55 = arith.constant 0.327591091 : f32
    %147 = vector.broadcast %cst_55 : f32 to vector<16x128xf32>
    %148 = arith.mulf %147, %146 : vector<16x128xf32>
    %cst_56 = arith.constant 1.000000e+00 : f32
    %149 = vector.broadcast %cst_56 : f32 to vector<16x128xf32>
    %150 = arith.addf %149, %148 : vector<16x128xf32>
    %cst_57 = arith.constant 1.000000e+00 : f32
    %151 = vector.broadcast %cst_57 : f32 to vector<16x128xf32>
    %152 = arith.divf %151, %150 : vector<16x128xf32>
    %cst_58 = arith.constant 1.06140542 : f32
    %153 = vector.broadcast %cst_58 : f32 to vector<16x128xf32>
    %154 = arith.mulf %153, %152 : vector<16x128xf32>
    %cst_59 = arith.constant -1.45315206 : f32
    %155 = vector.broadcast %cst_59 : f32 to vector<16x128xf32>
    %156 = arith.addf %154, %155 : vector<16x128xf32>
    %157 = arith.mulf %156, %152 : vector<16x128xf32>
    %cst_60 = arith.constant 1.42141378 : f32
    %158 = vector.broadcast %cst_60 : f32 to vector<16x128xf32>
    %159 = arith.addf %157, %158 : vector<16x128xf32>
    %160 = arith.mulf %159, %152 : vector<16x128xf32>
    %cst_61 = arith.constant -0.284496725 : f32
    %161 = vector.broadcast %cst_61 : f32 to vector<16x128xf32>
    %162 = arith.addf %160, %161 : vector<16x128xf32>
    %163 = arith.mulf %162, %152 : vector<16x128xf32>
    %cst_62 = arith.constant 0.254829586 : f32
    %164 = vector.broadcast %cst_62 : f32 to vector<16x128xf32>
    %165 = arith.addf %163, %164 : vector<16x128xf32>
    %166 = arith.mulf %165, %152 : vector<16x128xf32>
    %cst_63 = arith.constant 0.000000e+00 : f32
    %167 = vector.broadcast %cst_63 : f32 to vector<16x128xf32>
    %168 = arith.subf %167, %146 : vector<16x128xf32>
    %169 = arith.mulf %168, %146 : vector<16x128xf32>
    %170 = math.exp %169 : vector<16x128xf32>
    %171 = arith.mulf %166, %170 : vector<16x128xf32>
    %cst_64 = arith.constant 1.000000e+00 : f32
    %172 = vector.broadcast %cst_64 : f32 to vector<16x128xf32>
    %173 = arith.subf %172, %171 : vector<16x128xf32>
    %174 = arith.mulf %145, %173 : vector<16x128xf32>
    %cst_65 = arith.constant 1.000000e+00 : f32
    %175 = vector.broadcast %cst_65 : f32 to vector<16x128xf32>
    %176 = arith.addf %175, %174 : vector<16x128xf32>
    %177 = arith.mulf %138, %176 : vector<16x128xf32>
    %178 = arith.mulf %135, %177 : vector<16x128xf32>
    %c0_66 = arith.constant 0 : index
    %c0_67 = arith.constant 0 : index
    %179 = vector.load %arg11[%c0_66, %c0_67] : memref<1x128xf32, #tpu.memory_space<vmem>>, vector<1x128xf32>
    %cst_68 = arith.constant dense<0.000000e+00> : vector<16xf32>
    %180 = vector.multi_reduction <add>, %178, %cst_68 [1] : vector<16x128xf32> to vector<16xf32>
    %181 = vector.shape_cast %180 : vector<16xf32> to vector<16x1xf32>
    %cst_69 = arith.constant 1.280000e+02 : f32
    %182 = vector.broadcast %cst_69 : f32 to vector<16x1xf32>
    %183 = arith.divf %181, %182 : vector<16x1xf32>
    %184 = vector.broadcast %183 : vector<16x1xf32> to vector<16x128xf32>
    %185 = arith.subf %178, %184 : vector<16x128xf32>
    %186 = arith.mulf %185, %185 : vector<16x128xf32>
    %cst_70 = arith.constant dense<0.000000e+00> : vector<16xf32>
    %187 = vector.multi_reduction <add>, %186, %cst_70 [1] : vector<16x128xf32> to vector<16xf32>
    %188 = vector.shape_cast %187 : vector<16xf32> to vector<16x1xf32>
    %cst_71 = arith.constant 1.280000e+02 : f32
    %189 = vector.broadcast %cst_71 : f32 to vector<16x1xf32>
    %190 = arith.divf %188, %189 : vector<16x1xf32>
    %cst_72 = arith.constant 9.99999974E-6 : f32
    %191 = vector.broadcast %cst_72 : f32 to vector<16x1xf32>
    %192 = arith.addf %190, %191 : vector<16x1xf32>
    %193 = math.rsqrt %192 : vector<16x1xf32>
    %194 = vector.broadcast %193 : vector<16x1xf32> to vector<16x128xf32>
    %195 = arith.mulf %185, %194 : vector<16x128xf32>
    %196 = vector.broadcast %179 : vector<1x128xf32> to vector<16x128xf32>
    %197 = arith.mulf %195, %196 : vector<16x128xf32>
    %198 = arith.truncf %197 : vector<16x128xf32> to vector<16x128xbf16>
    %c0_73 = arith.constant 0 : index
    %c0_74 = arith.constant 0 : index
    %199 = vector.load %arg12[%c0_73, %c0_74] : memref<128x128xbf16, #tpu.memory_space<vmem>>, vector<128x128xbf16>
    %cst_75 = arith.constant dense<0.000000e+00> : vector<16x128xf32>
    %200 = tpu.matmul %198, %199, %cst_75 {dimension_numbers = #tpu.dot_dimension_numbers<[1], [0], [0], [1], [0, 0, 1, 1], [], []>} : vector<16x128xbf16>, vector<128x128xbf16>, vector<16x128xf32> -> vector<16x128xf32>
    %201 = vector.shape_cast %200 : vector<16x128xf32> to vector<2x8x128xf32>
    %202 = arith.addf %106, %201 : vector<2x8x128xf32>
    %c0_76 = arith.constant 0 : index
    %c0_77 = arith.constant 0 : index
    %203 = vector.load %arg13[%c0_76, %c0_77] : memref<1x128xf32, #tpu.memory_space<vmem>>, vector<1x128xf32>
    %204 = vector.broadcast %4 : vector<1x1x128xf32> to vector<2x8x128xf32>
    %205 = arith.mulf %202, %204 : vector<2x8x128xf32>
    %cst_78 = arith.constant dense<0.000000e+00> : vector<2x8xf32>
    %206 = vector.multi_reduction <add>, %205, %cst_78 [2] : vector<2x8x128xf32> to vector<2x8xf32>
    %207 = vector.shape_cast %206 : vector<2x8xf32> to vector<2x8x1xf32>
    %cst_79 = arith.constant 3.125000e-02 : f32
    %208 = vector.broadcast %cst_79 : f32 to vector<2x8x1xf32>
    %209 = arith.mulf %207, %208 : vector<2x8x1xf32>
    %210 = vector.broadcast %209 : vector<2x8x1xf32> to vector<2x8x128xf32>
    %211 = arith.subf %202, %210 : vector<2x8x128xf32>
    %212 = vector.broadcast %4 : vector<1x1x128xf32> to vector<2x8x128xf32>
    %213 = arith.mulf %211, %212 : vector<2x8x128xf32>
    %214 = arith.mulf %213, %213 : vector<2x8x128xf32>
    %cst_80 = arith.constant dense<0.000000e+00> : vector<2x8xf32>
    %215 = vector.multi_reduction <add>, %214, %cst_80 [2] : vector<2x8x128xf32> to vector<2x8xf32>
    %216 = vector.shape_cast %215 : vector<2x8xf32> to vector<2x8x1xf32>
    %cst_81 = arith.constant 3.125000e-02 : f32
    %217 = vector.broadcast %cst_81 : f32 to vector<2x8x1xf32>
    %218 = arith.mulf %216, %217 : vector<2x8x1xf32>
    %cst_82 = arith.constant 9.99999974E-6 : f32
    %219 = vector.broadcast %cst_82 : f32 to vector<2x8x1xf32>
    %220 = arith.addf %218, %219 : vector<2x8x1xf32>
    %221 = math.rsqrt %220 : vector<2x8x1xf32>
    %222 = vector.broadcast %221 : vector<2x8x1xf32> to vector<2x8x128xf32>
    %223 = arith.mulf %213, %222 : vector<2x8x128xf32>
    %224 = vector.shape_cast %203 : vector<1x128xf32> to vector<1x1x128xf32>
    %225 = vector.broadcast %224 : vector<1x1x128xf32> to vector<2x8x128xf32>
    %226 = arith.mulf %223, %225 : vector<2x8x128xf32>
    %c0_83 = arith.constant 0 : index
    %c0_84 = arith.constant 0 : index
    %c0_85 = arith.constant 0 : index
    %227 = vector.load %arg14[%c0_83, %c0_84, %c0_85] : memref<2x8x128xf32, #tpu.memory_space<vmem>>, vector<2x8x128xf32>
    tpu.vector_store %arg14[%c0_83, %c0_84, %c0_85], %226 {strides = array<i32>} : memref<2x8x128xf32, #tpu.memory_space<vmem>>, vector<2x8x128xf32>,
    return
  }
  func.func @transform_0(%arg0: i32) -> (i32, i32, i32) {
    %c0_i32 = arith.constant 0 : i32
    %c0_i32_0 = arith.constant 0 : i32
    %c0_i32_1 = arith.constant 0 : i32
    %c0_i32_2 = arith.constant 0 : i32
    return %c0_i32, %c0_i32_0, %c0_i32_1 : i32, i32, i32
  }
  func.func @transform_1(%arg0: i32) -> (i32, i32) {
    %c0_i32 = arith.constant 0 : i32
    %c0_i32_0 = arith.constant 0 : i32
    %c0_i32_1 = arith.constant 0 : i32
    return %c0_i32, %c0_i32_0 : i32, i32
  }
  func.func @transform_2(%arg0: i32) -> (i32, i32) {
    %c0_i32 = arith.constant 0 : i32
    %c0_i32_0 = arith.constant 0 : i32
    %c0_i32_1 = arith.constant 0 : i32
    return %c0_i32, %c0_i32_0 : i32, i32
  }
  func.func @transform_3(%arg0: i32) -> (i32, i32, i32) {
    %c0_i32 = arith.constant 0 : i32
    %c0_i32_0 = arith.constant 0 : i32
    %c0_i32_1 = arith.constant 0 : i32
    %c0_i32_2 = arith.constant 0 : i32
    return %c0_i32, %c0_i32_0, %c0_i32_1 : i32, i32, i32
  }
  func.func @transform_4(%arg0: i32) -> (i32, i32, i32) {
    %c0_i32 = arith.constant 0 : i32
    %c0_i32_0 = arith.constant 0 : i32
    %c0_i32_1 = arith.constant 0 : i32
    %c0_i32_2 = arith.constant 0 : i32
    return %c0_i32, %c0_i32_0, %c0_i32_1 : i32, i32, i32
  }
  func.func @transform_5(%arg0: i32) -> (i32, i32, i32) {
    %c0_i32 = arith.constant 0 : i32
    %c0_i32_0 = arith.constant 0 : i32
    %c0_i32_1 = arith.constant 0 : i32
    %c0_i32_2 = arith.constant 0 : i32
    return %c0_i32, %c0_i32_0, %c0_i32_1 : i32, i32, i32
  }
  func.func @transform_6(%arg0: i32) -> (i32, i32, i32) {
    %c0_i32 = arith.constant 0 : i32
    %c0_i32_0 = arith.constant 0 : i32
    %c0_i32_1 = arith.constant 0 : i32
    %c0_i32_2 = arith.constant 0 : i32
    return %c0_i32, %c0_i32_0, %c0_i32_1 : i32, i32, i32
  }
  func.func @transform_7(%arg0: i32) -> (i32, i32) {
    %c0_i32 = arith.constant 0 : i32
    %c0_i32_0 = arith.constant 0 : i32
    %c0_i32_1 = arith.constant 0 : i32
    return %c0_i32, %c0_i32_0 : i32, i32
  }
  func.func @transform_8(%arg0: i32) -> (i32, i32) {
    %c0_i32 = arith.constant 0 : i32
    %c0_i32_0 = arith.constant 0 : i32
    %c0_i32_1 = arith.constant 0 : i32
    return %c0_i32, %c0_i32_0 : i32, i32
  }
  func.func @transform_9(%arg0: i32) -> (i32, i32) {
    %c0_i32 = arith.constant 0 : i32
    %c0_i32_0 = arith.constant 0 : i32
    %c0_i32_1 = arith.constant 0 : i32
    return %c0_i32, %c0_i32_0 : i32, i32
  }
  func.func @transform_10(%arg0: i32) -> (i32, i32) {
    %c0_i32 = arith.constant 0 : i32
    %c0_i32_0 = arith.constant 0 : i32
    %c0_i32_1 = arith.constant 0 : i32
    return %c0_i32, %c0_i32_0 : i32, i32
  }
  func.func @transform_11(%arg0: i32) -> (i32, i32) {
    %c0_i32 = arith.constant 0 : i32
    %c0_i32_0 = arith.constant 0 : i32
    %c0_i32_1 = arith.constant 0 : i32
    return %c0_i32, %c0_i32_0 : i32, i32
  }
  func.func @transform_12(%arg0: i32) -> (i32, i32) {
    %c0_i32 = arith.constant 0 : i32
    %c0_i32_0 = arith.constant 0 : i32
    %c0_i32_1 = arith.constant 0 : i32
    return %c0_i32, %c0_i32_0 : i32, i32
  }
  func.func @transform_13(%arg0: i32) -> (i32, i32, i32) {
    %c0_i32 = arith.constant 0 : i32
    %c0_i32_0 = arith.constant 0 : i32
    %c0_i32_1 = arith.constant 0 : i32
    %c0_i32_2 = arith.constant 0 : i32
    return %c0_i32, %c0_i32_0, %c0_i32_1 : i32, i32, i32
  }
}

</mosaic_0001>

<llo_original>
// kernel: text_transformer_forward.2
$region0: #{text_transformer_forward.2}
  #allocation0 [shape = 'u32[]', space=smem, size = 0x4, offset = 0x4, fixed_abs, tag = 'smem constant byte address 0x4 - core index']
  #allocation1 [shape = 'u32[144,128]{1,0:T(1,128)}', space=vmem, size = 0x12000, scoped, tag = 'internal scratch']
  %s0 = inlined_call_operand.vmem [shape: f32[2,8,128], index: 0, kind: input, shape index: {}]
  %s1 = inlined_call_operand.vmem [shape: f32[1,128], index: 1, kind: input, shape index: {}]
  %s2 = inlined_call_operand.vmem [shape: f32[1,128], index: 2, kind: input, shape index: {}]
  %s3 = inlined_call_operand.vmem [shape: bf16[4,128,16], index: 3, kind: input, shape index: {}]
  %s4 = inlined_call_operand.vmem [shape: bf16[4,128,16], index: 4, kind: input, shape index: {}]
  %s5 = inlined_call_operand.vmem [shape: bf16[4,128,16], index: 5, kind: input, shape index: {}]
  %s6 = inlined_call_operand.vmem [shape: bf16[4,16,128], index: 6, kind: input, shape index: {}]
  %s7 = inlined_call_operand.vmem [shape: f32[1,128], index: 7, kind: input, shape index: {}]
  %s8 = inlined_call_operand.vmem [shape: f32[1,128], index: 8, kind: input, shape index: {}]
  %s9 = inlined_call_operand.vmem [shape: bf16[128,256], index: 9, kind: input, shape index: {}]
  %s10 = inlined_call_operand.vmem [shape: f32[1,128], index: 10, kind: input, shape index: {}]
  %s11 = inlined_call_operand.vmem [shape: bf16[128,128], index: 11, kind: input, shape index: {}]
  %s12 = inlined_call_operand.vmem [shape: f32[1,128], index: 12, kind: input, shape index: {}]
  %s13 = inlined_call_operand.vmem [shape: f32[2,8,128], index: 13, kind: output, shape index: {}]
  %s14 = sld [smem:[#allocation0]]
  $region62: #{text_transformer_forward.2} parent=0
    _
  %s16 = ssub.s32 1, %s14
  %s17 = scalar_select 0, %s16, %s14
  // Predicated region
  $region2: #{text_transformer_forward.2} parent=0 // pred_check
    _
  $region3: #{text_transformer_forward.2} parent=0 // pred_check_branch
    %19 = sbr.rel (0) target = $region5
  $region4: #{text_transformer_forward.2} parent=0 // pred_region
    _
  $region5: #{text_transformer_forward.2} parent=0 // pred_fallthru
    _
  // Predicated region
  $region6: #{text_transformer_forward.2} parent=0 // pred_check
    _
  $region7: #{text_transformer_forward.2} parent=0 // pred_check_branch
    %21 = sbr.rel (0) target = $region9
  $region8: #{text_transformer_forward.2} parent=0 // pred_region
    _
  $region9: #{text_transformer_forward.2} parent=0 // pred_fallthru
    _
  // Predicated region
  $region10: #{text_transformer_forward.2} parent=0 // pred_check
    _
  $region11: #{text_transformer_forward.2} parent=0 // pred_check_branch
    %23 = sbr.rel (0) target = $region13
  $region12: #{text_transformer_forward.2} parent=0 // pred_region
    _
  $region13: #{text_transformer_forward.2} parent=0 // pred_fallthru
    _
  // Predicated region
  $region14: #{text_transformer_forward.2} parent=0 // pred_check
    _
  $region15: #{text_transformer_forward.2} parent=0 // pred_check_branch
    %25 = sbr.rel (0) target = $region17
  $region16: #{text_transformer_forward.2} parent=0 // pred_region
    _
  $region17: #{text_transformer_forward.2} parent=0 // pred_fallthru
    _
  // Predicated region
  $region18: #{text_transformer_forward.2} parent=0 // pred_check
    _
  $region19: #{text_transformer_forward.2} parent=0 // pred_check_branch
    %27 = sbr.rel (0) target = $region21
  $region20: #{text_transformer_forward.2} parent=0 // pred_region
    _
  $region21: #{text_transformer_forward.2} parent=0 // pred_fallthru
    _
  // Predicated region
  $region22: #{text_transformer_forward.2} parent=0 // pred_check
    _
  $region23: #{text_transformer_forward.2} parent=0 // pred_check_branch
    %29 = sbr.rel (0) target = $region25
  $region24: #{text_transformer_forward.2} parent=0 // pred_region
    _
  $region25: #{text_transformer_forward.2} parent=0 // pred_fallthru
    _
  // Predicated region
  $region26: #{text_transformer_forward.2} parent=0 // pred_check
    _
  $region27: #{text_transformer_forward.2} parent=0 // pred_check_branch
    %31 = sbr.rel (0) target = $region29
  $region28: #{text_transformer_forward.2} parent=0 // pred_region
    _
  $region29: #{text_transformer_forward.2} parent=0 // pred_fallthru
    _
  // Predicated region
  $region30: #{text_transformer_forward.2} parent=0 // pred_check
    _
  $region31: #{text_transformer_forward.2} parent=0 // pred_check_branch
    %33 = sbr.rel (0) target = $region33
  $region32: #{text_transformer_forward.2} parent=0 // pred_region
    _
  $region33: #{text_transformer_forward.2} parent=0 // pred_fallthru
    _
  // Predicated region
  $region34: #{text_transformer_forward.2} parent=0 // pred_check
    _
  $region35: #{text_transformer_forward.2} parent=0 // pred_check_branch
    %35 = sbr.rel (0) target = $region37
  $region36: #{text_transformer_forward.2} parent=0 // pred_region
    _
  $region37: #{text_transformer_forward.2} parent=0 // pred_fallthru
    _
  // Predicated region
  $region38: #{text_transformer_forward.2} parent=0 // pred_check
    _
  $region39: #{text_transformer_forward.2} parent=0 // pred_check_branch
    %37 = sbr.rel (0) target = $region41
  $region40: #{text_transformer_forward.2} parent=0 // pred_region
    _
  $region41: #{text_transformer_forward.2} parent=0 // pred_fallthru
    _
  // Predicated region
  $region42: #{text_transformer_forward.2} parent=0 // pred_check
    _
  $region43: #{text_transformer_forward.2} parent=0 // pred_check_branch
    %39 = sbr.rel (0) target = $region45
  $region44: #{text_transformer_forward.2} parent=0 // pred_region
    _
  $region45: #{text_transformer_forward.2} parent=0 // pred_fallthru
    _
  // Predicated region
  $region46: #{text_transformer_forward.2} parent=0 // pred_check
    _
  $region47: #{text_transformer_forward.2} parent=0 // pred_check_branch
    %41 = sbr.rel (0) target = $region49
  $region48: #{text_transformer_forward.2} parent=0 // pred_region
    _
  $region49: #{text_transformer_forward.2} parent=0 // pred_fallthru
    _
  // Predicated region
  $region50: #{text_transformer_forward.2} parent=0 // pred_check
    _
  $region51: #{text_transformer_forward.2} parent=0 // pred_check_branch
    %43 = sbr.rel (0) target = $region53
  $region52: #{text_transformer_forward.2} parent=0 // pred_region
    _
  $region53: #{text_transformer_forward.2} parent=0 // pred_fallthru
    _
  %v45 = vlaneseq
  %v46 = vand.u32 %v45, 127
  %vm47 = vcmp.lt.s32.totalorder %v46, 32
  %v48 = vsel %vm47, 1, 0
  %v49 = vcvt.s32.f32 %v48
  %v50 = vld [vmem:[%s0] sm:$0xff]
  %v51 = vld [vmem:[%s0 + $0x8] sm:$0xff]
  %v52 = vld [vmem:[%s1] sm:$0x1]
  %v53 = vmul.f32 %v50, %v49
  %v54 = vmul.f32 %v51, %v49
  %55 = vadd.xlane.f32.xlu0 %v53
  %v56 = vpop.xlane.xlu0 %55
  %57 = vadd.xlane.f32.xlu0 %v54
  %v58 = vpop.xlane.xlu0 %57
  %v59 = vmul.f32 %v56, 0.03125
  %v60 = vmul.f32 %v58, 0.03125
  %v61 = vsub.f32 %v50, %v59
  %v62 = vsub.f32 %v51, %v60
  %v63 = vmul.f32 %v61, %v49
  %v64 = vmul.f32 %v62, %v49
  %v65 = vmul.f32 %v63, %v63
  %v66 = vmul.f32 %v64, %v64
  %67 = vadd.xlane.f32.xlu0 %v65
  %v68 = vpop.xlane.xlu0 %67
  %69 = vadd.xlane.f32.xlu0 %v66
  %v70 = vpop.xlane.xlu0 %69
  %v71 = vmul.f32 %v68, 0.03125
  %v72 = vmul.f32 %v70, 0.03125
  %v73 = vadd.f32 %v71, 1e-05
  %v74 = vadd.f32 %v72, 1e-05
  %v75 = vrsqrt.pop %v73
  %v76 = vrsqrt.pop %v74
  %v77 = vmul.f32 %v63, %v75
  %v78 = vmul.f32 %v64, %v76
  %v80 = vlaneseq
  %v81 = vshrl.u32 %v80, 7
  %v82 = vsub.s32 0, %v81
  %v83 = vrot.slane %v52, %v82
  %v85 = vmul.f32 %v77, %v83
  %v86 = vmul.f32 %v78, %v83
  %v87 = vld [vmem:[%s2] sm:$0x1]
  %v88 = vmul.f32 %v85, %v49
  %v89 = vmul.f32 %v86, %v49
  %90 = vadd.xlane.f32.xlu0 %v88
  %v91 = vpop.xlane.xlu0 %90
  %92 = vadd.xlane.f32.xlu0 %v89
  %v93 = vpop.xlane.xlu0 %92
  %v94 = vmul.f32 %v91, 0.03125
  %v95 = vmul.f32 %v93, 0.03125
  %v96 = vsub.f32 %v85, %v94
  %v97 = vsub.f32 %v86, %v95
  %v98 = vmul.f32 %v96, %v49
  %v99 = vmul.f32 %v97, %v49
  %v100 = vmul.f32 %v98, %v98
  %v101 = vmul.f32 %v99, %v99
  %102 = vadd.xlane.f32.xlu0 %v100
  %v103 = vpop.xlane.xlu0 %102
  %104 = vadd.xlane.f32.xlu0 %v101
  %v105 = vpop.xlane.xlu0 %104
  %v106 = vmul.f32 %v103, 0.03125
  %v107 = vmul.f32 %v105, 0.03125
  %v108 = vadd.f32 %v106, 1e-05
  %v109 = vadd.f32 %v107, 1e-05
  %v110 = vrsqrt.pop %v108
  %v111 = vrsqrt.pop %v109
  %v112 = vmul.f32 %v98, %v110
  %v113 = vmul.f32 %v99, %v111
  %v115 = vlaneseq
  %v116 = vshrl.u32 %v115, 7
  %v117 = vsub.s32 0, %v116
  %v118 = vrot.slane %v87, %v117
  %v120 = vmul.f32 %v112, %v118
  %v121 = vmul.f32 %v113, %v118
  %v122 = vpack.c.bf16 %v121, %v120
  %v123 = vld [vmem:[%s3] sm:$0xf]
  %v124 = vld [vmem:[%s3 + $0x4] sm:$0xf]
  %v125 = vld [vmem:[%s3 + $0x8] sm:$0xf]
  %v126 = vld [vmem:[%s3 + $0xc] sm:$0xf]
  %v127 = vld [vmem:[%s3 + $0x10] sm:$0xf]
  %v128 = vld [vmem:[%s3 + $0x14] sm:$0xf]
  %v129 = vld [vmem:[%s3 + $0x18] sm:$0xf]
  %v130 = vld [vmem:[%s3 + $0x1c] sm:$0xf]
  %v131 = vld [vmem:[%s3 + $0x20] sm:$0xf]
  %v132 = vld [vmem:[%s3 + $0x24] sm:$0xf]
  %v133 = vld [vmem:[%s3 + $0x28] sm:$0xf]
  %v134 = vld [vmem:[%s3 + $0x2c] sm:$0xf]
  %v135 = vld [vmem:[%s3 + $0x30] sm:$0xf]
  %v136 = vld [vmem:[%s3 + $0x34] sm:$0xf]
  %v137 = vld [vmem:[%s3 + $0x38] sm:$0xf]
  %v138 = vld [vmem:[%s3 + $0x3c] sm:$0xf]
  %v139 = vld [vmem:[%s3 + $0x40] sm:$0xf]
  %v140 = vld [vmem:[%s3 + $0x44] sm:$0xf]
  %v141 = vld [vmem:[%s3 + $0x48] sm:$0xf]
  %v142 = vld [vmem:[%s3 + $0x4c] sm:$0xf]
  %v143 = vld [vmem:[%s3 + $0x50] sm:$0xf]
  %v144 = vld [vmem:[%s3 + $0x54] sm:$0xf]
  %v145 = vld [vmem:[%s3 + $0x58] sm:$0xf]
  %v146 = vld [vmem:[%s3 + $0x5c] sm:$0xf]
  %v147 = vld [vmem:[%s3 + $0x60] sm:$0xf]
  %v148 = vld [vmem:[%s3 + $0x64] sm:$0xf]
  %v149 = vld [vmem:[%s3 + $0x68] sm:$0xf]
  %v150 = vld [vmem:[%s3 + $0x6c] sm:$0xf]
  %v151 = vld [vmem:[%s3 + $0x70] sm:$0xf]
  %v152 = vld [vmem:[%s3 + $0x74] sm:$0xf]
  %v153 = vld [vmem:[%s3 + $0x78] sm:$0xf]
  %v154 = vld [vmem:[%s3 + $0x7c] sm:$0xf]
  %v155 = vld [vmem:[%s3 + $0x80] sm:$0xf]
  %v156 = vld [vmem:[%s3 + $0x84] sm:$0xf]
  %v157 = vld [vmem:[%s3 + $0x88] sm:$0xf]
  %v158 = vld [vmem:[%s3 + $0x8c] sm:$0xf]
  %v159 = vld [vmem:[%s3 + $0x90] sm:$0xf]
  %v160 = vld [vmem:[%s3 + $0x94] sm:$0xf]
  %v161 = vld [vmem:[%s3 + $0x98] sm:$0xf]
  %v162 = vld [vmem:[%s3 + $0x9c] sm:$0xf]
  %v163 = vld [vmem:[%s3 + $0xa0] sm:$0xf]
  %v164 = vld [vmem:[%s3 + $0xa4] sm:$0xf]
  %v165 = vld [vmem:[%s3 + $0xa8] sm:$0xf]
  %v166 = vld [vmem:[%s3 + $0xac] sm:$0xf]
  %v167 = vld [vmem:[%s3 + $0xb0] sm:$0xf]
  %v168 = vld [vmem:[%s3 + $0xb4] sm:$0xf]
  %v169 = vld [vmem:[%s3 + $0xb8] sm:$0xf]
  %v170 = vld [vmem:[%s3 + $0xbc] sm:$0xf]
  %v171 = vld [vmem:[%s3 + $0xc0] sm:$0xf]
  %v172 = vld [vmem:[%s3 + $0xc4] sm:$0xf]
  %v173 = vld [vmem:[%s3 + $0xc8] sm:$0xf]
  %v174 = vld [vmem:[%s3 + $0xcc] sm:$0xf]
  %v175 = vld [vmem:[%s3 + $0xd0] sm:$0xf]
  %v176 = vld [vmem:[%s3 + $0xd4] sm:$0xf]
  %v177 = vld [vmem:[%s3 + $0xd8] sm:$0xf]
  %v178 = vld [vmem:[%s3 + $0xdc] sm:$0xf]
  %v179 = vld [vmem:[%s3 + $0xe0] sm:$0xf]
  %v180 = vld [vmem:[%s3 + $0xe4] sm:$0xf]
  %v181 = vld [vmem:[%s3 + $0xe8] sm:$0xf]
  %v182 = vld [vmem:[%s3 + $0xec] sm:$0xf]
  %v183 = vld [vmem:[%s3 + $0xf0] sm:$0xf]
  %v184 = vld [vmem:[%s3 + $0xf4] sm:$0xf]
  %v185 = vld [vmem:[%s3 + $0xf8] sm:$0xf]
  %v186 = vld [vmem:[%s3 + $0xfc] sm:$0xf]
  %v203 = vunpack.c.l.b16 %v123
  %v204 = vunpack.c.l.b16 %v124
  %v205 = vunpack.c.l.b16 %v125
  %v206 = vunpack.c.l.b16 %v126
  %v207 = vunpack.c.l.b16 %v127
  %v208 = vunpack.c.l.b16 %v128
  %v209 = vunpack.c.l.b16 %v129
  %v210 = vunpack.c.l.b16 %v130
  %v211 = vunpack.c.l.b16 %v131
  %v212 = vunpack.c.l.b16 %v132
  %v213 = vunpack.c.l.b16 %v133
  %v214 = vunpack.c.l.b16 %v134
  %v215 = vunpack.c.l.b16 %v135
  %v216 = vunpack.c.l.b16 %v136
  %v217 = vunpack.c.l.b16 %v137
  %v218 = vunpack.c.l.b16 %v138
  %v219 = vpack.c.b16 %v204, %v203
  %v220 = vpack.c.b16 %v206, %v205
  %v221 = vpack.c.b16 %v208, %v207
  %v222 = vpack.c.b16 %v210, %v209
  %v223 = vpack.c.b16 %v212, %v211
  %v224 = vpack.c.b16 %v214, %v213
  %v225 = vpack.c.b16 %v216, %v215
  %v226 = vpack.c.b16 %v218, %v217
  %235 = vmatprep.subr.bf16.mxu0 0
  %236 = vmatpush1.bf16.msra.mxu0 %v226
  %237 = vmatprep.subr.bf16.mxu0 0
  %238 = vmatpush1.bf16.msra.mxu0 %v225
  %239 = vmatprep.subr.bf16.mxu0 0
  %240 = vmatpush1.bf16.msra.mxu0 %v224
  %241 = vmatprep.subr.bf16.mxu0 0
  %242 = vmatpush1.bf16.msra.mxu0 %v223
  %243 = vmatprep.subr.bf16.mxu0 0
  %244 = vmatpush1.bf16.msra.mxu0 %v222
  %245 = vmatprep.subr.bf16.mxu0 0
  %246 = vmatpush1.bf16.msra.mxu0 %v221
  %247 = vmatprep.subr.bf16.mxu0 0
  %248 = vmatpush1.bf16.msra.mxu0 %v220
  %249 = vmatprep.subr.bf16.mxu0 0
  %250 = vmatpush1.bf16.msra.mxu0 %v219
  %251 = vmatprep.subr.bf16.mxu0 0
  %252 = vmatpush2.bf16.msra.mxu0 0
  %253 = vmatprep.subr.bf16.mxu0 0
  %254 = vmatpush2.bf16.msra.mxu0 0
  %255 = vmatprep.subr.bf16.mxu0 0
  %256 = vmatpush2.bf16.msra.mxu0 0
  %257 = vmatprep.subr.bf16.mxu0 0
  %258 = vmatpush2.bf16.msra.mxu0 0
  %259 = vmatprep.subr.bf16.mxu0 0
  %260 = vmatpush2.bf16.msra.mxu0 0
  %261 = vmatprep.subr.bf16.mxu0 0
  %262 = vmatpush2.bf16.msra.mxu0 0
  %263 = vmatprep.subr.bf16.mxu0 0
  %264 = vmatpush2.bf16.msra.mxu0 0
  %265 = vmatprep.subr.bf16.mxu0 0
  %266 = vmatpush2.bf16.msra.mxu0 0
  %267 = vmatprep.mubr.bf16.mxu0 0
  %268 = vmatmul.mubr.bf16.gmra.mxu0 %v122
  %v269 = vpop.f32.mrf.mxu0
  %v270 = vadd.f32 0.0, %v269
  %v271 = vpop.f32.mrf.mxu0
  %v272 = vpop.f32.mrf.mxu0
  %v273 = vadd.f32 0.0, %v272
  %v274 = vpop.f32.mrf.mxu0
  %275 = vdwg.mxu0
  %v292 = vunpack.c.l.b16 %v139
  %v293 = vunpack.c.l.b16 %v140
  %v294 = vunpack.c.l.b16 %v141
  %v295 = vunpack.c.l.b16 %v142
  %v296 = vunpack.c.l.b16 %v143
  %v297 = vunpack.c.l.b16 %v144
  %v298 = vunpack.c.l.b16 %v145
  %v299 = vunpack.c.l.b16 %v146
  %v300 = vunpack.c.l.b16 %v147
  %v301 = vunpack.c.l.b16 %v148
  %v302 = vunpack.c.l.b16 %v149
  %v303 = vunpack.c.l.b16 %v150
  %v304 = vunpack.c.l.b16 %v151
  %v305 = vunpack.c.l.b16 %v152
  %v306 = vunpack.c.l.b16 %v153
  %v307 = vunpack.c.l.b16 %v154
  %v308 = vpack.c.b16 %v293, %v292
  %v309 = vpack.c.b16 %v295, %v294
  %v310 = vpack.c.b16 %v297, %v296
  %v311 = vpack.c.b16 %v299, %v298
  %v312 = vpack.c.b16 %v301, %v300
  %v313 = vpack.c.b16 %v303, %v302
  %v314 = vpack.c.b16 %v305, %v304
  %v315 = vpack.c.b16 %v307, %v306
  %324 = vmatprep.subr.bf16.mxu0 0
  %325 = vmatpush1.bf16.msra.mxu0 %v315
  %326 = vmatprep.subr.bf16.mxu0 0
  %327 = vmatpush1.bf16.msra.mxu0 %v314
  %328 = vmatprep.subr.bf16.mxu0 0
  %329 = vmatpush1.bf16.msra.mxu0 %v313
  %330 = vmatprep.subr.bf16.mxu0 0
  %331 = vmatpush1.bf16.msra.mxu0 %v312
  %332 = vmatprep.subr.bf16.mxu0 0
  %333 = vmatpush1.bf16.msra.mxu0 %v311
  %334 = vmatprep.subr.bf16.mxu0 0
  %335 = vmatpush1.bf16.msra.mxu0 %v310
  %336 = vmatprep.subr.bf16.mxu0 0
  %337 = vmatpush1.bf16.msra.mxu0 %v309
  %338 = vmatprep.subr.bf16.mxu0 0
  %339 = vmatpush1.bf16.msra.mxu0 %v308
  %340 = vmatprep.subr.bf16.mxu0 0
  %341 = vmatpush2.bf16.msra.mxu0 0
  %342 = vmatprep.subr.bf16.mxu0 0
  %343 = vmatpush2.bf16.msra.mxu0 0
  %344 = vmatprep.subr.bf16.mxu0 0
  %345 = vmatpush2.bf16.msra.mxu0 0
  %346 = vmatprep.subr.bf16.mxu0 0
  %347 = vmatpush2.bf16.msra.mxu0 0
  %348 = vmatprep.subr.bf16.mxu0 0
  %349 = vmatpush2.bf16.msra.mxu0 0
  %350 = vmatprep.subr.bf16.mxu0 0
  %351 = vmatpush2.bf16.msra.mxu0 0
  %352 = vmatprep.subr.bf16.mxu0 0
  %353 = vmatpush2.bf16.msra.mxu0 0
  %354 = vmatprep.subr.bf16.mxu0 0
  %355 = vmatpush2.bf16.msra.mxu0 0
  %356 = vmatprep.mubr.bf16.mxu0 0
  %357 = vmatmul.mubr.bf16.gmra.mxu0 %v122
  %v358 = vpop.f32.mrf.mxu0
  %v359 = vadd.f32 0.0, %v358
  %v360 = vpop.f32.mrf.mxu0
  %v361 = vpop.f32.mrf.mxu0
  %v362 = vadd.f32 0.0, %v361
  %v363 = vpop.f32.mrf.mxu0
  %364 = vdwg.mxu0
  %v381 = vunpack.c.l.b16 %v155
  %v382 = vunpack.c.l.b16 %v156
  %v383 = vunpack.c.l.b16 %v157
  %v384 = vunpack.c.l.b16 %v158
  %v385 = vunpack.c.l.b16 %v159
  %v386 = vunpack.c.l.b16 %v160
  %v387 = vunpack.c.l.b16 %v161
  %v388 = vunpack.c.l.b16 %v162
  %v389 = vunpack.c.l.b16 %v163
  %v390 = vunpack.c.l.b16 %v164
  %v391 = vunpack.c.l.b16 %v165
  %v392 = vunpack.c.l.b16 %v166
  %v393 = vunpack.c.l.b16 %v167
  %v394 = vunpack.c.l.b16 %v168
  %v395 = vunpack.c.l.b16 %v169
  %v396 = vunpack.c.l.b16 %v170
  %v397 = vpack.c.b16 %v382, %v381
  %v398 = vpack.c.b16 %v384, %v383
  %v399 = vpack.c.b16 %v386, %v385
  %v400 = vpack.c.b16 %v388, %v387
  %v401 = vpack.c.b16 %v390, %v389
  %v402 = vpack.c.b16 %v392, %v391
  %v403 = vpack.c.b16 %v394, %v393
  %v404 = vpack.c.b16 %v396, %v395
  %413 = vmatprep.subr.bf16.mxu0 0
  %414 = vmatpush1.bf16.msra.mxu0 %v404
  %415 = vmatprep.subr.bf16.mxu0 0
  %416 = vmatpush1.bf16.msra.mxu0 %v403
  %417 = vmatprep.subr.bf16.mxu0 0
  %418 = vmatpush1.bf16.msra.mxu0 %v402
  %419 = vmatprep.subr.bf16.mxu0 0
  %420 = vmatpush1.bf16.msra.mxu0 %v401
  %421 = vmatprep.subr.bf16.mxu0 0
  %422 = vmatpush1.bf16.msra.mxu0 %v400
  %423 = vmatprep.subr.bf16.mxu0 0
  %424 = vmatpush1.bf16.msra.mxu0 %v399
  %425 = vmatprep.subr.bf16.mxu0 0
  %426 = vmatpush1.bf16.msra.mxu0 %v398
  %427 = vmatprep.subr.bf16.mxu0 0
  %428 = vmatpush1.bf16.msra.mxu0 %v397
  %429 = vmatprep.subr.bf16.mxu0 0
  %430 = vmatpush2.bf16.msra.mxu0 0
  %431 = vmatprep.subr.bf16.mxu0 0
  %432 = vmatpush2.bf16.msra.mxu0 0
  %433 = vmatprep.subr.bf16.mxu0 0
  %434 = vmatpush2.bf16.msra.mxu0 0
  %435 = vmatprep.subr.bf16.mxu0 0
  %436 = vmatpush2.bf16.msra.mxu0 0
  %437 = vmatprep.subr.bf16.mxu0 0
  %438 = vmatpush2.bf16.msra.mxu0 0
  %439 = vmatprep.subr.bf16.mxu0 0
  %440 = vmatpush2.bf16.msra.mxu0 0
  %441 = vmatprep.subr.bf16.mxu0 0
  %442 = vmatpush2.bf16.msra.mxu0 0
  %443 = vmatprep.subr.bf16.mxu0 0
  %444 = vmatpush2.bf16.msra.mxu0 0
  %445 = vmatprep.mubr.bf16.mxu0 0
  %446 = vmatmul.mubr.bf16.gmra.mxu0 %v122
  %v447 = vpop.f32.mrf.mxu0
  %v448 = vadd.f32 0.0, %v447
  %v449 = vpop.f32.mrf.mxu0
  %v450 = vpop.f32.mrf.mxu0
  %v451 = vadd.f32 0.0, %v450
  %v452 = vpop.f32.mrf.mxu0
  %453 = vdwg.mxu0
  %v470 = vunpack.c.l.b16 %v171
  %v471 = vunpack.c.l.b16 %v172
  %v472 = vunpack.c.l.b16 %v173
  %v473 = vunpack.c.l.b16 %v174
  %v474 = vunpack.c.l.b16 %v175
  %v475 = vunpack.c.l.b16 %v176
  %v476 = vunpack.c.l.b16 %v177
  %v477 = vunpack.c.l.b16 %v178
  %v478 = vunpack.c.l.b16 %v179
  %v479 = vunpack.c.l.b16 %v180
  %v480 = vunpack.c.l.b16 %v181
  %v481 = vunpack.c.l.b16 %v182
  %v482 = vunpack.c.l.b16 %v183
  %v483 = vunpack.c.l.b16 %v184
  %v484 = vunpack.c.l.b16 %v185
  %v485 = vunpack.c.l.b16 %v186
  %v486 = vpack.c.b16 %v471, %v470
  %v487 = vpack.c.b16 %v473, %v472
  %v488 = vpack.c.b16 %v475, %v474
  %v489 = vpack.c.b16 %v477, %v476
  %v490 = vpack.c.b16 %v479, %v478
  %v491 = vpack.c.b16 %v481, %v480
  %v492 = vpack.c.b16 %v483, %v482
  %v493 = vpack.c.b16 %v485, %v484
  %502 = vmatprep.subr.bf16.mxu0 0
  %503 = vmatpush1.bf16.msra.mxu0 %v493
  %504 = vmatprep.subr.bf16.mxu0 0
  %505 = vmatpush1.bf16.msra.mxu0 %v492
  %506 = vmatprep.subr.bf16.mxu0 0
  %507 = vmatpush1.bf16.msra.mxu0 %v491
  %508 = vmatprep.subr.bf16.mxu0 0
  %509 = vmatpush1.bf16.msra.mxu0 %v490
  %510 = vmatprep.subr.bf16.mxu0 0
  %511 = vmatpush1.bf16.msra.mxu0 %v489
  %512 = vmatprep.subr.bf16.mxu0 0
  %513 = vmatpush1.bf16.msra.mxu0 %v488
  %514 = vmatprep.subr.bf16.mxu0 0
  %515 = vmatpush1.bf16.msra.mxu0 %v487
  %516 = vmatprep.subr.bf16.mxu0 0
  %517 = vmatpush1.bf16.msra.mxu0 %v486
  %518 = vmatprep.subr.bf16.mxu0 0
  %519 = vmatpush2.bf16.msra.mxu0 0
  %520 = vmatprep.subr.bf16.mxu0 0
  %521 = vmatpush2.bf16.msra.mxu0 0
  %522 = vmatprep.subr.bf16.mxu0 0
  %523 = vmatpush2.bf16.msra.mxu0 0
  %524 = vmatprep.subr.bf16.mxu0 0
  %525 = vmatpush2.bf16.msra.mxu0 0
  %526 = vmatprep.subr.bf16.mxu0 0
  %527 = vmatpush2.bf16.msra.mxu0 0
  %528 = vmatprep.subr.bf16.mxu0 0
  %529 = vmatpush2.bf16.msra.mxu0 0
  %530 = vmatprep.subr.bf16.mxu0 0
  %531 = vmatpush2.bf16.msra.mxu0 0
  %532 = vmatprep.subr.bf16.mxu0 0
  %533 = vmatpush2.bf16.msra.mxu0 0
  %534 = vmatprep.mubr.bf16.mxu0 0
  %535 = vmatmul.mubr.bf16.gmra.mxu0 %v122
  %v536 = vpop.f32.mrf.mxu0
  %v537 = vadd.f32 0.0, %v536
  %v538 = vpop.f32.mrf.mxu0
  %v539 = vpop.f32.mrf.mxu0
  %v540 = vadd.f32 0.0, %v539
  %v541 = vpop.f32.mrf.mxu0
  %542 = vdwg.mxu0
  %v543 = vpack.c.bf16 %v273, %v270
  %v544 = vpack.c.bf16 %v362, %v359
  %v545 = vpack.c.bf16 %v451, %v448
  %v546 = vpack.c.bf16 %v540, %v537
  %v547 = vld [vmem:[%s4] sm:$0xf]
  %v548 = vld [vmem:[%s4 + $0x4] sm:$0xf]
  %v549 = vld [vmem:[%s4 + $0x8] sm:$0xf]
  %v550 = vld [vmem:[%s4 + $0xc] sm:$0xf]
  %v551 = vld [vmem:[%s4 + $0x10] sm:$0xf]
  %v552 = vld [vmem:[%s4 + $0x14] sm:$0xf]
  %v553 = vld [vmem:[%s4 + $0x18] sm:$0xf]
  %v554 = vld [vmem:[%s4 + $0x1c] sm:$0xf]
  %v555 = vld [vmem:[%s4 + $0x20] sm:$0xf]
  %v556 = vld [vmem:[%s4 + $0x24] sm:$0xf]
  %v557 = vld [vmem:[%s4 + $0x28] sm:$0xf]
  %v558 = vld [vmem:[%s4 + $0x2c] sm:$0xf]
  %v559 = vld [vmem:[%s4 + $0x30] sm:$0xf]
  %v560 = vld [vmem:[%s4 + $0x34] sm:$0xf]
  %v561 = vld [vmem:[%s4 + $0x38] sm:$0xf]
  %v562 = vld [vmem:[%s4 + $0x3c] sm:$0xf]
  %v563 = vld [vmem:[%s4 + $0x40] sm:$0xf]
  %v564 = vld [vmem:[%s4 + $0x44] sm:$0xf]
  %v565 = vld [vmem:[%s4 + $0x48] sm:$0xf]
  %v566 = vld [vmem:[%s4 + $0x4c] sm:$0xf]
  %v567 = vld [vmem:[%s4 + $0x50] sm:$0xf]
  %v568 = vld [vmem:[%s4 + $0x54] sm:$0xf]
  %v569 = vld [vmem:[%s4 + $0x58] sm:$0xf]
  %v570 = vld [vmem:[%s4 + $0x5c] sm:$0xf]
  %v571 = vld [vmem:[%s4 + $0x60] sm:$0xf]
  %v572 = vld [vmem:[%s4 + $0x64] sm:$0xf]
  %v573 = vld [vmem:[%s4 + $0x68] sm:$0xf]
  %v574 = vld [vmem:[%s4 + $0x6c] sm:$0xf]
  %v575 = vld [vmem:[%s4 + $0x70] sm:$0xf]
  %v576 = vld [vmem:[%s4 + $0x74] sm:$0xf]
  %v577 = vld [vmem:[%s4 + $0x78] sm:$0xf]
  %v578 = vld [vmem:[%s4 + $0x7c] sm:$0xf]
  %v579 = vld [vmem:[%s4 + $0x80] sm:$0xf]
  %v580 = vld [vmem:[%s4 + $0x84] sm:$0xf]
  %v581 = vld [vmem:[%s4 + $0x88] sm:$0xf]
  %v582 = vld [vmem:[%s4 + $0x8c] sm:$0xf]
  %v583 = vld [vmem:[%s4 + $0x90] sm:$0xf]
  %v584 = vld [vmem:[%s4 + $0x94] sm:$0xf]
  %v585 = vld [vmem:[%s4 + $0x98] sm:$0xf]
  %v586 = vld [vmem:[%s4 + $0x9c] sm:$0xf]
  %v587 = vld [vmem:[%s4 + $0xa0] sm:$0xf]
  %v588 = vld [vmem:[%s4 + $0xa4] sm:$0xf]
  %v589 = vld [vmem:[%s4 + $0xa8] sm:$0xf]
  %v590 = vld [vmem:[%s4 + $0xac] sm:$0xf]
  %v591 = vld [vmem:[%s4 + $0xb0] sm:$0xf]
  %v592 = vld [vmem:[%s4 + $0xb4] sm:$0xf]
  %v593 = vld [vmem:[%s4 + $0xb8] sm:$0xf]
  %v594 = vld [vmem:[%s4 + $0xbc] sm:$0xf]
  %v595 = vld [vmem:[%s4 + $0xc0] sm:$0xf]
  %v596 = vld [vmem:[%s4 + $0xc4] sm:$0xf]
  %v597 = vld [vmem:[%s4 + $0xc8] sm:$0xf]
  %v598 = vld [vmem:[%s4 + $0xcc] sm:$0xf]
  %v599 = vld [vmem:[%s4 + $0xd0] sm:$0xf]
  %v600 = vld [vmem:[%s4 + $0xd4] sm:$0xf]
  %v601 = vld [vmem:[%s4 + $0xd8] sm:$0xf]
  %v602 = vld [vmem:[%s4 + $0xdc] sm:$0xf]
  %v603 = vld [vmem:[%s4 + $0xe0] sm:$0xf]
  %v604 = vld [vmem:[%s4 + $0xe4] sm:$0xf]
  %v605 = vld [vmem:[%s4 + $0xe8] sm:$0xf]
  %v606 = vld [vmem:[%s4 + $0xec] sm:$0xf]
  %v607 = vld [vmem:[%s4 + $0xf0] sm:$0xf]
  %v608 = vld [vmem:[%s4 + $0xf4] sm:$0xf]
  %v609 = vld [vmem:[%s4 + $0xf8] sm:$0xf]
  %v610 = vld [vmem:[%s4 + $0xfc] sm:$0xf]
  %v627 = vunpack.c.l.b16 %v547
  %v628 = vunpack.c.l.b16 %v548
  %v629 = vunpack.c.l.b16 %v549
  %v630 = vunpack.c.l.b16 %v550
  %v631 = vunpack.c.l.b16 %v551
  %v632 = vunpack.c.l.b16 %v552
  %v633 = vunpack.c.l.b16 %v553
  %v634 = vunpack.c.l.b16 %v554
  %v635 = vunpack.c.l.b16 %v555
  %v636 = vunpack.c.l.b16 %v556
  %v637 = vunpack.c.l.b16 %v557
  %v638 = vunpack.c.l.b16 %v558
  %v639 = vunpack.c.l.b16 %v559
  %v640 = vunpack.c.l.b16 %v560
  %v641 = vunpack.c.l.b16 %v561
  %v642 = vunpack.c.l.b16 %v562
  %v643 = vpack.c.b16 %v628, %v627
  %v644 = vpack.c.b16 %v630, %v629
  %v645 = vpack.c.b16 %v632, %v631
  %v646 = vpack.c.b16 %v634, %v633
  %v647 = vpack.c.b16 %v636, %v635
  %v648 = vpack.c.b16 %v638, %v637
  %v649 = vpack.c.b16 %v640, %v639
  %v650 = vpack.c.b16 %v642, %v641
  %659 = vmatprep.subr.bf16.mxu0 0
  %660 = vmatpush1.bf16.msra.mxu0 %v650
  %661 = vmatprep.subr.bf16.mxu0 0
  %662 = vmatpush1.bf16.msra.mxu0 %v649
  %663 = vmatprep.subr.bf16.mxu0 0
  %664 = vmatpush1.bf16.msra.mxu0 %v648
  %665 = vmatprep.subr.bf16.mxu0 0
  %666 = vmatpush1.bf16.msra.mxu0 %v647
  %667 = vmatprep.subr.bf16.mxu0 0
  %668 = vmatpush1.bf16.msra.mxu0 %v646
  %669 = vmatprep.subr.bf16.mxu0 0
  %670 = vmatpush1.bf16.msra.mxu0 %v645
  %671 = vmatprep.subr.bf16.mxu0 0
  %672 = vmatpush1.bf16.msra.mxu0 %v644
  %673 = vmatprep.subr.bf16.mxu0 0
  %674 = vmatpush1.bf16.msra.mxu0 %v643
  %675 = vmatprep.subr.bf16.mxu0 0
  %676 = vmatpush2.bf16.msra.mxu0 0
  %677 = vmatprep.subr.bf16.mxu0 0
  %678 = vmatpush2.bf16.msra.mxu0 0
  %679 = vmatprep.subr.bf16.mxu0 0
  %680 = vmatpush2.bf16.msra.mxu0 0
  %681 = vmatprep.subr.bf16.mxu0 0
  %682 = vmatpush2.bf16.msra.mxu0 0
  %683 = vmatprep.subr.bf16.mxu0 0
  %684 = vmatpush2.bf16.msra.mxu0 0
  %685 = vmatprep.subr.bf16.mxu0 0
  %686 = vmatpush2.bf16.msra.mxu0 0
  %687 = vmatprep.subr.bf16.mxu0 0
  %688 = vmatpush2.bf16.msra.mxu0 0
  %689 = vmatprep.subr.bf16.mxu0 0
  %690 = vmatpush2.bf16.msra.mxu0 0
  %691 = vmatprep.mubr.bf16.mxu0 0
  %692 = vmatmul.mubr.bf16.gmra.mxu0 %v122
  %v693 = vpop.f32.mrf.mxu0
  %v694 = vadd.f32 0.0, %v693
  %v695 = vpop.f32.mrf.mxu0
  %v696 = vpop.f32.mrf.mxu0
  %v697 = vadd.f32 0.0, %v696
  %v698 = vpop.f32.mrf.mxu0
  %699 = vdwg.mxu0
  %v716 = vunpack.c.l.b16 %v563
  %v717 = vunpack.c.l.b16 %v564
  %v718 = vunpack.c.l.b16 %v565
  %v719 = vunpack.c.l.b16 %v566
  %v720 = vunpack.c.l.b16 %v567
  %v721 = vunpack.c.l.b16 %v568
  %v722 = vunpack.c.l.b16 %v569
  %v723 = vunpack.c.l.b16 %v570
  %v724 = vunpack.c.l.b16 %v571
  %v725 = vunpack.c.l.b16 %v572
  %v726 = vunpack.c.l.b16 %v573
  %v727 = vunpack.c.l.b16 %v574
  %v728 = vunpack.c.l.b16 %v575
  %v729 = vunpack.c.l.b16 %v576
  %v730 = vunpack.c.l.b16 %v577
  %v731 = vunpack.c.l.b16 %v578
  %v732 = vpack.c.b16 %v717, %v716
  %v733 = vpack.c.b16 %v719, %v718
  %v734 = vpack.c.b16 %v721, %v720
  %v735 = vpack.c.b16 %v723, %v722
  %v736 = vpack.c.b16 %v725, %v724
  %v737 = vpack.c.b16 %v727, %v726
  %v738 = vpack.c.b16 %v729, %v728
  %v739 = vpack.c.b16 %v731, %v730
  %748 = vmatprep.subr.bf16.mxu0 0
  %749 = vmatpush1.bf16.msra.mxu0 %v739
  %750 = vmatprep.subr.bf16.mxu0 0
  %751 = vmatpush1.bf16.msra.mxu0 %v738
  %752 = vmatprep.subr.bf16.mxu0 0
  %753 = vmatpush1.bf16.msra.mxu0 %v737
  %754 = vmatprep.subr.bf16.mxu0 0
  %755 = vmatpush1.bf16.msra.mxu0 %v736
  %756 = vmatprep.subr.bf16.mxu0 0
  %757 = vmatpush1.bf16.msra.mxu0 %v735
  %758 = vmatprep.subr.bf16.mxu0 0
  %759 = vmatpush1.bf16.msra.mxu0 %v734
  %760 = vmatprep.subr.bf16.mxu0 0
  %761 = vmatpush1.bf16.msra.mxu0 %v733
  %762 = vmatprep.subr.bf16.mxu0 0
  %763 = vmatpush1.bf16.msra.mxu0 %v732
  %764 = vmatprep.subr.bf16.mxu0 0
  %765 = vmatpush2.bf16.msra.mxu0 0
  %766 = vmatprep.subr.bf16.mxu0 0
  %767 = vmatpush2.bf16.msra.mxu0 0
  %768 = vmatprep.subr.bf16.mxu0 0
  %769 = vmatpush2.bf16.msra.mxu0 0
  %770 = vmatprep.subr.bf16.mxu0 0
  %771 = vmatpush2.bf16.msra.mxu0 0
  %772 = vmatprep.subr.bf16.mxu0 0
  %773 = vmatpush2.bf16.msra.mxu0 0
  %774 = vmatprep.subr.bf16.mxu0 0
  %775 = vmatpush2.bf16.msra.mxu0 0
  %776 = vmatprep.subr.bf16.mxu0 0
  %777 = vmatpush2.bf16.msra.mxu0 0
  %778 = vmatprep.subr.bf16.mxu0 0
  %779 = vmatpush2.bf16.msra.mxu0 0
  %780 = vmatprep.mubr.bf16.mxu0 0
  %781 = vmatmul.mubr.bf16.gmra.mxu0 %v122
  %v782 = vpop.f32.mrf.mxu0
  %v783 = vadd.f32 0.0, %v782
  %v784 = vpop.f32.mrf.mxu0
  %v785 = vpop.f32.mrf.mxu0
  %v786 = vadd.f32 0.0, %v785
  %v787 = vpop.f32.mrf.mxu0
  %788 = vdwg.mxu0
  %v805 = vunpack.c.l.b16 %v579
  %v806 = vunpack.c.l.b16 %v580
  %v807 = vunpack.c.l.b16 %v581
  %v808 = vunpack.c.l.b16 %v582
  %v809 = vunpack.c.l.b16 %v583
  %v810 = vunpack.c.l.b16 %v584
  %v811 = vunpack.c.l.b16 %v585
  %v812 = vunpack.c.l.b16 %v586
  %v813 = vunpack.c.l.b16 %v587
  %v814 = vunpack.c.l.b16 %v588
  %v815 = vunpack.c.l.b16 %v589
  %v816 = vunpack.c.l.b16 %v590
  %v817 = vunpack.c.l.b16 %v591
  %v818 = vunpack.c.l.b16 %v592
  %v819 = vunpack.c.l.b16 %v593
  %v820 = vunpack.c.l.b16 %v594
  %v821 = vpack.c.b16 %v806, %v805
  %v822 = vpack.c.b16 %v808, %v807
  %v823 = vpack.c.b16 %v810, %v809
  %v824 = vpack.c.b16 %v812, %v811
  %v825 = vpack.c.b16 %v814, %v813
  %v826 = vpack.c.b16 %v816, %v815
  %v827 = vpack.c.b16 %v818, %v817
  %v828 = vpack.c.b16 %v820, %v819
  %837 = vmatprep.subr.bf16.mxu0 0
  %838 = vmatpush1.bf16.msra.mxu0 %v828
  %839 = vmatprep.subr.bf16.mxu0 0
  %840 = vmatpush1.bf16.msra.mxu0 %v827
  %841 = vmatprep.subr.bf16.mxu0 0
  %842 = vmatpush1.bf16.msra.mxu0 %v826
  %843 = vmatprep.subr.bf16.mxu0 0
  %844 = vmatpush1.bf16.msra.mxu0 %v825
  %845 = vmatprep.subr.bf16.mxu0 0
  %846 = vmatpush1.bf16.msra.mxu0 %v824
  %847 = vmatprep.subr.bf16.mxu0 0
  %848 = vmatpush1.bf16.msra.mxu0 %v823
  %849 = vmatprep.subr.bf16.mxu0 0
  %850 = vmatpush1.bf16.msra.mxu0 %v822
  %851 = vmatprep.subr.bf16.mxu0 0
  %852 = vmatpush1.bf16.msra.mxu0 %v821
  %853 = vmatprep.subr.bf16.mxu0 0
  %854 = vmatpush2.bf16.msra.mxu0 0
  %855 = vmatprep.subr.bf16.mxu0 0
  %856 = vmatpush2.bf16.msra.mxu0 0
  %857 = vmatprep.subr.bf16.mxu0 0
  %858 = vmatpush2.bf16.msra.mxu0 0
  %859 = vmatprep.subr.bf16.mxu0 0
  %860 = vmatpush2.bf16.msra.mxu0 0
  %861 = vmatprep.subr.bf16.mxu0 0
  %862 = vmatpush2.bf16.msra.mxu0 0
  %863 = vmatprep.subr.bf16.mxu0 0
  %864 = vmatpush2.bf16.msra.mxu0 0
  %865 = vmatprep.subr.bf16.mxu0 0
  %866 = vmatpush2.bf16.msra.mxu0 0
  %867 = vmatprep.subr.bf16.mxu0 0
  %868 = vmatpush2.bf16.msra.mxu0 0
  %869 = vmatprep.mubr.bf16.mxu0 0
  %870 = vmatmul.mubr.bf16.gmra.mxu0 %v122
  %v871 = vpop.f32.mrf.mxu0
  %v872 = vadd.f32 0.0, %v871
  %v873 = vpop.f32.mrf.mxu0
  %v874 = vpop.f32.mrf.mxu0
  %v875 = vadd.f32 0.0, %v874
  %v876 = vpop.f32.mrf.mxu0
  %877 = vdwg.mxu0
  %v894 = vunpack.c.l.b16 %v595
  %v895 = vunpack.c.l.b16 %v596
  %v896 = vunpack.c.l.b16 %v597
  %v897 = vunpack.c.l.b16 %v598
  %v898 = vunpack.c.l.b16 %v599
  %v899 = vunpack.c.l.b16 %v600
  %v900 = vunpack.c.l.b16 %v601
  %v901 = vunpack.c.l.b16 %v602
  %v902 = vunpack.c.l.b16 %v603
  %v903 = vunpack.c.l.b16 %v604
  %v904 = vunpack.c.l.b16 %v605
  %v905 = vunpack.c.l.b16 %v606
  %v906 = vunpack.c.l.b16 %v607
  %v907 = vunpack.c.l.b16 %v608
  %v908 = vunpack.c.l.b16 %v609
  %v909 = vunpack.c.l.b16 %v610
  %v910 = vpack.c.b16 %v895, %v894
  %v911 = vpack.c.b16 %v897, %v896
  %v912 = vpack.c.b16 %v899, %v898
  %v913 = vpack.c.b16 %v901, %v900
  %v914 = vpack.c.b16 %v903, %v902
  %v915 = vpack.c.b16 %v905, %v904
  %v916 = vpack.c.b16 %v907, %v906
  %v917 = vpack.c.b16 %v909, %v908
  %926 = vmatprep.subr.bf16.mxu0 0
  %927 = vmatpush1.bf16.msra.mxu0 %v917
  %928 = vmatprep.subr.bf16.mxu0 0
  %929 = vmatpush1.bf16.msra.mxu0 %v916
  %930 = vmatprep.subr.bf16.mxu0 0
  %931 = vmatpush1.bf16.msra.mxu0 %v915
  %932 = vmatprep.subr.bf16.mxu0 0
  %933 = vmatpush1.bf16.msra.mxu0 %v914
  %934 = vmatprep.subr.bf16.mxu0 0
  %935 = vmatpush1.bf16.msra.mxu0 %v913
  %936 = vmatprep.subr.bf16.mxu0 0
  %937 = vmatpush1.bf16.msra.mxu0 %v912
  %938 = vmatprep.subr.bf16.mxu0 0
  %939 = vmatpush1.bf16.msra.mxu0 %v911
  %940 = vmatprep.subr.bf16.mxu0 0
  %941 = vmatpush1.bf16.msra.mxu0 %v910
  %942 = vmatprep.subr.bf16.mxu0 0
  %943 = vmatpush2.bf16.msra.mxu0 0
  %944 = vmatprep.subr.bf16.mxu0 0
  %945 = vmatpush2.bf16.msra.mxu0 0
  %946 = vmatprep.subr.bf16.mxu0 0
  %947 = vmatpush2.bf16.msra.mxu0 0
  %948 = vmatprep.subr.bf16.mxu0 0
  %949 = vmatpush2.bf16.msra.mxu0 0
  %950 = vmatprep.subr.bf16.mxu0 0
  %951 = vmatpush2.bf16.msra.mxu0 0
  %952 = vmatprep.subr.bf16.mxu0 0
  %953 = vmatpush2.bf16.msra.mxu0 0
  %954 = vmatprep.subr.bf16.mxu0 0
  %955 = vmatpush2.bf16.msra.mxu0 0
  %956 = vmatprep.subr.bf16.mxu0 0
  %957 = vmatpush2.bf16.msra.mxu0 0
  %958 = vmatprep.mubr.bf16.mxu0 0
  %959 = vmatmul.mubr.bf16.gmra.mxu0 %v122
  %v960 = vpop.f32.mrf.mxu0
  %v961 = vadd.f32 0.0, %v960
  %v962 = vpop.f32.mrf.mxu0
  %v963 = vpop.f32.mrf.mxu0
  %v964 = vadd.f32 0.0, %v963
  %v965 = vpop.f32.mrf.mxu0
  %966 = vdwg.mxu0
  %v967 = vpack.c.bf16 %v697, %v694
  %v968 = vpack.c.bf16 %v786, %v783
  %v969 = vpack.c.bf16 %v875, %v872
  %v970 = vpack.c.bf16 %v964, %v961
  %v971 = vld [vmem:[%s5] sm:$0xf]
  %v972 = vld [vmem:[%s5 + $0x4] sm:$0xf]
  %v973 = vld [vmem:[%s5 + $0x8] sm:$0xf]
  %v974 = vld [vmem:[%s5 + $0xc] sm:$0xf]
  %v975 = vld [vmem:[%s5 + $0x10] sm:$0xf]
  %v976 = vld [vmem:[%s5 + $0x14] sm:$0xf]
  %v977 = vld [vmem:[%s5 + $0x18] sm:$0xf]
  %v978 = vld [vmem:[%s5 + $0x1c] sm:$0xf]
  %v979 = vld [vmem:[%s5 + $0x20] sm:$0xf]
  %v980 = vld [vmem:[%s5 + $0x24] sm:$0xf]
  %v981 = vld [vmem:[%s5 + $0x28] sm:$0xf]
  %v982 = vld [vmem:[%s5 + $0x2c] sm:$0xf]
  %v983 = vld [vmem:[%s5 + $0x30] sm:$0xf]
  %v984 = vld [vmem:[%s5 + $0x34] sm:$0xf]
  %v985 = vld [vmem:[%s5 + $0x38] sm:$0xf]
  %v986 = vld [vmem:[%s5 + $0x3c] sm:$0xf]
  %v987 = vld [vmem:[%s5 + $0x40] sm:$0xf]
  %v988 = vld [vmem:[%s5 + $0x44] sm:$0xf]
  %v989 = vld [vmem:[%s5 + $0x48] sm:$0xf]
  %v990 = vld [vmem:[%s5 + $0x4c] sm:$0xf]
  %v991 = vld [vmem:[%s5 + $0x50] sm:$0xf]
  %v992 = vld [vmem:[%s5 + $0x54] sm:$0xf]
  %v993 = vld [vmem:[%s5 + $0x58] sm:$0xf]
  %v994 = vld [vmem:[%s5 + $0x5c] sm:$0xf]
  %v995 = vld [vmem:[%s5 + $0x60] sm:$0xf]
  %v996 = vld [vmem:[%s5 + $0x64] sm:$0xf]
  %v997 = vld [vmem:[%s5 + $0x68] sm:$0xf]
  %v998 = vld [vmem:[%s5 + $0x6c] sm:$0xf]
  %v999 = vld [vmem:[%s5 + $0x70] sm:$0xf]
  %v1000 = vld [vmem:[%s5 + $0x74] sm:$0xf]
  %v1001 = vld [vmem:[%s5 + $0x78] sm:$0xf]
  %v1002 = vld [vmem:[%s5 + $0x7c] sm:$0xf]
  %v1003 = vld [vmem:[%s5 + $0x80] sm:$0xf]
  %v1004 = vld [vmem:[%s5 + $0x84] sm:$0xf]
  %v1005 = vld [vmem:[%s5 + $0x88] sm:$0xf]
  %v1006 = vld [vmem:[%s5 + $0x8c] sm:$0xf]
  %v1007 = vld [vmem:[%s5 + $0x90] sm:$0xf]
  %v1008 = vld [vmem:[%s5 + $0x94] sm:$0xf]
  %v1009 = vld [vmem:[%s5 + $0x98] sm:$0xf]
  %v1010 = vld [vmem:[%s5 + $0x9c] sm:$0xf]
  %v1011 = vld [vmem:[%s5 + $0xa0] sm:$0xf]
  %v1012 = vld [vmem:[%s5 + $0xa4] sm:$0xf]
  %v1013 = vld [vmem:[%s5 + $0xa8] sm:$0xf]
  %v1014 = vld [vmem:[%s5 + $0xac] sm:$0xf]
  %v1015 = vld [vmem:[%s5 + $0xb0] sm:$0xf]
  %v1016 = vld [vmem:[%s5 + $0xb4] sm:$0xf]
  %v1017 = vld [vmem:[%s5 + $0xb8] sm:$0xf]
  %v1018 = vld [vmem:[%s5 + $0xbc] sm:$0xf]
  %v1019 = vld [vmem:[%s5 + $0xc0] sm:$0xf]
  %v1020 = vld [vmem:[%s5 + $0xc4] sm:$0xf]
  %v1021 = vld [vmem:[%s5 + $0xc8] sm:$0xf]
  %v1022 = vld [vmem:[%s5 + $0xcc] sm:$0xf]
  %v1023 = vld [vmem:[%s5 + $0xd0] sm:$0xf]
  %v1024 = vld [vmem:[%s5 + $0xd4] sm:$0xf]
  %v1025 = vld [vmem:[%s5 + $0xd8] sm:$0xf]
  %v1026 = vld [vmem:[%s5 + $0xdc] sm:$0xf]
  %v1027 = vld [vmem:[%s5 + $0xe0] sm:$0xf]
  %v1028 = vld [vmem:[%s5 + $0xe4] sm:$0xf]
  %v1029 = vld [vmem:[%s5 + $0xe8] sm:$0xf]
  %v1030 = vld [vmem:[%s5 + $0xec] sm:$0xf]
  %v1031 = vld [vmem:[%s5 + $0xf0] sm:$0xf]
  %v1032 = vld [vmem:[%s5 + $0xf4] sm:$0xf]
  %v1033 = vld [vmem:[%s5 + $0xf8] sm:$0xf]
  %v1034 = vld [vmem:[%s5 + $0xfc] sm:$0xf]
  %v1051 = vunpack.c.l.b16 %v971
  %v1052 = vunpack.c.l.b16 %v972
  %v1053 = vunpack.c.l.b16 %v973
  %v1054 = vunpack.c.l.b16 %v974
  %v1055 = vunpack.c.l.b16 %v975
  %v1056 = vunpack.c.l.b16 %v976
  %v1057 = vunpack.c.l.b16 %v977
  %v1058 = vunpack.c.l.b16 %v978
  %v1059 = vunpack.c.l.b16 %v979
  %v1060 = vunpack.c.l.b16 %v980
  %v1061 = vunpack.c.l.b16 %v981
  %v1062 = vunpack.c.l.b16 %v982
  %v1063 = vunpack.c.l.b16 %v983
  %v1064 = vunpack.c.l.b16 %v984
  %v1065 = vunpack.c.l.b16 %v985
  %v1066 = vunpack.c.l.b16 %v986
  %v1067 = vpack.c.b16 %v1052, %v1051
  %v1068 = vpack.c.b16 %v1054, %v1053
  %v1069 = vpack.c.b16 %v1056, %v1055
  %v1070 = vpack.c.b16 %v1058, %v1057
  %v1071 = vpack.c.b16 %v1060, %v1059
  %v1072 = vpack.c.b16 %v1062, %v1061
  %v1073 = vpack.c.b16 %v1064, %v1063
  %v1074 = vpack.c.b16 %v1066, %v1065
  %1083 = vmatprep.subr.bf16.mxu0 0
  %1084 = vmatpush1.bf16.msra.mxu0 %v1074
  %1085 = vmatprep.subr.bf16.mxu0 0
  %1086 = vmatpush1.bf16.msra.mxu0 %v1073
  %1087 = vmatprep.subr.bf16.mxu0 0
  %1088 = vmatpush1.bf16.msra.mxu0 %v1072
  %1089 = vmatprep.subr.bf16.mxu0 0
  %1090 = vmatpush1.bf16.msra.mxu0 %v1071
  %1091 = vmatprep.subr.bf16.mxu0 0
  %1092 = vmatpush1.bf16.msra.mxu0 %v1070
  %1093 = vmatprep.subr.bf16.mxu0 0
  %1094 = vmatpush1.bf16.msra.mxu0 %v1069
  %1095 = vmatprep.subr.bf16.mxu0 0
  %1096 = vmatpush1.bf16.msra.mxu0 %v1068
  %1097 = vmatprep.subr.bf16.mxu0 0
  %1098 = vmatpush1.bf16.msra.mxu0 %v1067
  %1099 = vmatprep.subr.bf16.mxu0 0
  %1100 = vmatpush2.bf16.msra.mxu0 0
  %1101 = vmatprep.subr.bf16.mxu0 0
  %1102 = vmatpush2.bf16.msra.mxu0 0
  %1103 = vmatprep.subr.bf16.mxu0 0
  %1104 = vmatpush2.bf16.msra.mxu0 0
  %1105 = vmatprep.subr.bf16.mxu0 0
  %1106 = vmatpush2.bf16.msra.mxu0 0
  %1107 = vmatprep.subr.bf16.mxu0 0
  %1108 = vmatpush2.bf16.msra.mxu0 0
  %1109 = vmatprep.subr.bf16.mxu0 0
  %1110 = vmatpush2.bf16.msra.mxu0 0
  %1111 = vmatprep.subr.bf16.mxu0 0
  %1112 = vmatpush2.bf16.msra.mxu0 0
  %1113 = vmatprep.subr.bf16.mxu0 0
  %1114 = vmatpush2.bf16.msra.mxu0 0
  %1115 = vmatprep.mubr.bf16.mxu0 0
  %1116 = vmatmul.mubr.bf16.gmra.mxu0 %v122
  %v1117 = vpop.f32.mrf.mxu0
  %v1118 = vadd.f32 0.0, %v1117
  %v1119 = vpop.f32.mrf.mxu0
  %v1120 = vpop.f32.mrf.mxu0
  %v1121 = vadd.f32 0.0, %v1120
  %v1122 = vpop.f32.mrf.mxu0
  %1123 = vdwg.mxu0
  %v1140 = vunpack.c.l.b16 %v987
  %v1141 = vunpack.c.l.b16 %v988
  %v1142 = vunpack.c.l.b16 %v989
  %v1143 = vunpack.c.l.b16 %v990
  %v1144 = vunpack.c.l.b16 %v991
  %v1145 = vunpack.c.l.b16 %v992
  %v1146 = vunpack.c.l.b16 %v993
  %v1147 = vunpack.c.l.b16 %v994
  %v1148 = vunpack.c.l.b16 %v995
  %v1149 = vunpack.c.l.b16 %v996
  %v1150 = vunpack.c.l.b16 %v997
  %v1151 = vunpack.c.l.b16 %v998
  %v1152 = vunpack.c.l.b16 %v999
  %v1153 = vunpack.c.l.b16 %v1000
  %v1154 = vunpack.c.l.b16 %v1001
  %v1155 = vunpack.c.l.b16 %v1002
  %v1156 = vpack.c.b16 %v1141, %v1140
  %v1157 = vpack.c.b16 %v1143, %v1142
  %v1158 = vpack.c.b16 %v1145, %v1144
  %v1159 = vpack.c.b16 %v1147, %v1146
  %v1160 = vpack.c.b16 %v1149, %v1148
  %v1161 = vpack.c.b16 %v1151, %v1150
  %v1162 = vpack.c.b16 %v1153, %v1152
  %v1163 = vpack.c.b16 %v1155, %v1154
  %1172 = vmatprep.subr.bf16.mxu0 0
  %1173 = vmatpush1.bf16.msra.mxu0 %v1163
  %1174 = vmatprep.subr.bf16.mxu0 0
  %1175 = vmatpush1.bf16.msra.mxu0 %v1162
  %1176 = vmatprep.subr.bf16.mxu0 0
  %1177 = vmatpush1.bf16.msra.mxu0 %v1161
  %1178 = vmatprep.subr.bf16.mxu0 0
  %1179 = vmatpush1.bf16.msra.mxu0 %v1160
  %1180 = vmatprep.subr.bf16.mxu0 0
  %1181 = vmatpush1.bf16.msra.mxu0 %v1159
  %1182 = vmatprep.subr.bf16.mxu0 0
  %1183 = vmatpush1.bf16.msra.mxu0 %v1158
  %1184 = vmatprep.subr.bf16.mxu0 0
  %1185 = vmatpush1.bf16.msra.mxu0 %v1157
  %1186 = vmatprep.subr.bf16.mxu0 0
  %1187 = vmatpush1.bf16.msra.mxu0 %v1156
  %1188 = vmatprep.subr.bf16.mxu0 0
  %1189 = vmatpush2.bf16.msra.mxu0 0
  %1190 = vmatprep.subr.bf16.mxu0 0
  %1191 = vmatpush2.bf16.msra.mxu0 0
  %1192 = vmatprep.subr.bf16.mxu0 0
  %1193 = vmatpush2.bf16.msra.mxu0 0
  %1194 = vmatprep.subr.bf16.mxu0 0
  %1195 = vmatpush2.bf16.msra.mxu0 0
  %1196 = vmatprep.subr.bf16.mxu0 0
  %1197 = vmatpush2.bf16.msra.mxu0 0
  %1198 = vmatprep.subr.bf16.mxu0 0
  %1199 = vmatpush2.bf16.msra.mxu0 0
  %1200 = vmatprep.subr.bf16.mxu0 0
  %1201 = vmatpush2.bf16.msra.mxu0 0
  %1202 = vmatprep.subr.bf16.mxu0 0
  %1203 = vmatpush2.bf16.msra.mxu0 0
  %1204 = vmatprep.mubr.bf16.mxu0 0
  %1205 = vmatmul.mubr.bf16.gmra.mxu0 %v122
  %v1206 = vpop.f32.mrf.mxu0
  %v1207 = vadd.f32 0.0, %v1206
  %v1208 = vpop.f32.mrf.mxu0
  %v1209 = vpop.f32.mrf.mxu0
  %v1210 = vadd.f32 0.0, %v1209
  %v1211 = vpop.f32.mrf.mxu0
  %1212 = vdwg.mxu0
  %v1229 = vunpack.c.l.b16 %v1003
  %v1230 = vunpack.c.l.b16 %v1004
  %v1231 = vunpack.c.l.b16 %v1005
  %v1232 = vunpack.c.l.b16 %v1006
  %v1233 = vunpack.c.l.b16 %v1007
  %v1234 = vunpack.c.l.b16 %v1008
  %v1235 = vunpack.c.l.b16 %v1009
  %v1236 = vunpack.c.l.b16 %v1010
  %v1237 = vunpack.c.l.b16 %v1011
  %v1238 = vunpack.c.l.b16 %v1012
  %v1239 = vunpack.c.l.b16 %v1013
  %v1240 = vunpack.c.l.b16 %v1014
  %v1241 = vunpack.c.l.b16 %v1015
  %v1242 = vunpack.c.l.b16 %v1016
  %v1243 = vunpack.c.l.b16 %v1017
  %v1244 = vunpack.c.l.b16 %v1018
  %v1245 = vpack.c.b16 %v1230, %v1229
  %v1246 = vpack.c.b16 %v1232, %v1231
  %v1247 = vpack.c.b16 %v1234, %v1233
  %v1248 = vpack.c.b16 %v1236, %v1235
  %v1249 = vpack.c.b16 %v1238, %v1237
  %v1250 = vpack.c.b16 %v1240, %v1239
  %v1251 = vpack.c.b16 %v1242, %v1241
  %v1252 = vpack.c.b16 %v1244, %v1243
  %1261 = vmatprep.subr.bf16.mxu0 0
  %1262 = vmatpush1.bf16.msra.mxu0 %v1252
  %1263 = vmatprep.subr.bf16.mxu0 0
  %1264 = vmatpush1.bf16.msra.mxu0 %v1251
  %1265 = vmatprep.subr.bf16.mxu0 0
  %1266 = vmatpush1.bf16.msra.mxu0 %v1250
  %1267 = vmatprep.subr.bf16.mxu0 0
  %1268 = vmatpush1.bf16.msra.mxu0 %v1249
  %1269 = vmatprep.subr.bf16.mxu0 0
  %1270 = vmatpush1.bf16.msra.mxu0 %v1248
  %1271 = vmatprep.subr.bf16.mxu0 0
  %1272 = vmatpush1.bf16.msra.mxu0 %v1247
  %1273 = vmatprep.subr.bf16.mxu0 0
  %1274 = vmatpush1.bf16.msra.mxu0 %v1246
  %1275 = vmatprep.subr.bf16.mxu0 0
  %1276 = vmatpush1.bf16.msra.mxu0 %v1245
  %1277 = vmatprep.subr.bf16.mxu0 0
  %1278 = vmatpush2.bf16.msra.mxu0 0
  %1279 = vmatprep.subr.bf16.mxu0 0
  %1280 = vmatpush2.bf16.msra.mxu0 0
  %1281 = vmatprep.subr.bf16.mxu0 0
  %1282 = vmatpush2.bf16.msra.mxu0 0
  %1283 = vmatprep.subr.bf16.mxu0 0
  %1284 = vmatpush2.bf16.msra.mxu0 0
  %1285 = vmatprep.subr.bf16.mxu0 0
  %1286 = vmatpush2.bf16.msra.mxu0 0
  %1287 = vmatprep.subr.bf16.mxu0 0
  %1288 = vmatpush2.bf16.msra.mxu0 0
  %1289 = vmatprep.subr.bf16.mxu0 0
  %1290 = vmatpush2.bf16.msra.mxu0 0
  %1291 = vmatprep.subr.bf16.mxu0 0
  %1292 = vmatpush2.bf16.msra.mxu0 0
  %1293 = vmatprep.mubr.bf16.mxu0 0
  %1294 = vmatmul.mubr.bf16.gmra.mxu0 %v122
  %v1295 = vpop.f32.mrf.mxu0
  %v1296 = vadd.f32 0.0, %v1295
  %v1297 = vpop.f32.mrf.mxu0
  %v1298 = vpop.f32.mrf.mxu0
  %v1299 = vadd.f32 0.0, %v1298
  %v1300 = vpop.f32.mrf.mxu0
  %1301 = vdwg.mxu0
  %v1318 = vunpack.c.l.b16 %v1019
  %v1319 = vunpack.c.l.b16 %v1020
  %v1320 = vunpack.c.l.b16 %v1021
  %v1321 = vunpack.c.l.b16 %v1022
  %v1322 = vunpack.c.l.b16 %v1023
  %v1323 = vunpack.c.l.b16 %v1024
  %v1324 = vunpack.c.l.b16 %v1025
  %v1325 = vunpack.c.l.b16 %v1026
  %v1326 = vunpack.c.l.b16 %v1027
  %v1327 = vunpack.c.l.b16 %v1028
  %v1328 = vunpack.c.l.b16 %v1029
  %v1329 = vunpack.c.l.b16 %v1030
  %v1330 = vunpack.c.l.b16 %v1031
  %v1331 = vunpack.c.l.b16 %v1032
  %v1332 = vunpack.c.l.b16 %v1033
  %v1333 = vunpack.c.l.b16 %v1034
  %v1334 = vpack.c.b16 %v1319, %v1318
  %v1335 = vpack.c.b16 %v1321, %v1320
  %v1336 = vpack.c.b16 %v1323, %v1322
  %v1337 = vpack.c.b16 %v1325, %v1324
  %v1338 = vpack.c.b16 %v1327, %v1326
  %v1339 = vpack.c.b16 %v1329, %v1328
  %v1340 = vpack.c.b16 %v1331, %v1330
  %v1341 = vpack.c.b16 %v1333, %v1332
  %1350 = vmatprep.subr.bf16.mxu0 0
  %1351 = vmatpush1.bf16.msra.mxu0 %v1341
  %1352 = vmatprep.subr.bf16.mxu0 0
  %1353 = vmatpush1.bf16.msra.mxu0 %v1340
  %1354 = vmatprep.subr.bf16.mxu0 0
  %1355 = vmatpush1.bf16.msra.mxu0 %v1339
  %1356 = vmatprep.subr.bf16.mxu0 0
  %1357 = vmatpush1.bf16.msra.mxu0 %v1338
  %1358 = vmatprep.subr.bf16.mxu0 0
  %1359 = vmatpush1.bf16.msra.mxu0 %v1337
  %1360 = vmatprep.subr.bf16.mxu0 0
  %1361 = vmatpush1.bf16.msra.mxu0 %v1336
  %1362 = vmatprep.subr.bf16.mxu0 0
  %1363 = vmatpush1.bf16.msra.mxu0 %v1335
  %1364 = vmatprep.subr.bf16.mxu0 0
  %1365 = vmatpush1.bf16.msra.mxu0 %v1334
  %1366 = vmatprep.subr.bf16.mxu0 0
  %1367 = vmatpush2.bf16.msra.mxu0 0
  %1368 = vmatprep.subr.bf16.mxu0 0
  %1369 = vmatpush2.bf16.msra.mxu0 0
  %1370 = vmatprep.subr.bf16.mxu0 0
  %1371 = vmatpush2.bf16.msra.mxu0 0
  %1372 = vmatprep.subr.bf16.mxu0 0
  %1373 = vmatpush2.bf16.msra.mxu0 0
  %1374 = vmatprep.subr.bf16.mxu0 0
  %1375 = vmatpush2.bf16.msra.mxu0 0
  %1376 = vmatprep.subr.bf16.mxu0 0
  %1377 = vmatpush2.bf16.msra.mxu0 0
  %1378 = vmatprep.subr.bf16.mxu0 0
  %1379 = vmatpush2.bf16.msra.mxu0 0
  %1380 = vmatprep.subr.bf16.mxu0 0
  %1381 = vmatpush2.bf16.msra.mxu0 0
  %1382 = vmatprep.mubr.bf16.mxu0 0
  %1383 = vmatmul.mubr.bf16.gmra.mxu0 %v122
  %v1384 = vpop.f32.mrf.mxu0
  %v1385 = vadd.f32 0.0, %v1384
  %v1386 = vpop.f32.mrf.mxu0
  %v1387 = vpop.f32.mrf.mxu0
  %v1388 = vadd.f32 0.0, %v1387
  %v1389 = vpop.f32.mrf.mxu0
  %1390 = vdwg.mxu0
  %v1391 = vpack.c.bf16 %v1121, %v1118
  %v1392 = vpack.c.bf16 %v1210, %v1207
  %v1393 = vpack.c.bf16 %v1299, %v1296
  %v1394 = vpack.c.bf16 %v1388, %v1385
  %vm1395 = vcmask 130048
  %v1397 = vsel %vm1395, %v543, 0
  %v1400 = vsel %vm1395, %v967, 0
  %1402 = vmatprep.subr.bf16.mxu0 0
  %1403 = vmatpush1.bf16.xpose.msra.mxu0 0
  %1404 = vmatprep.subr.bf16.mxu0 0
  %1405 = vmatpush1.bf16.xpose.msra.mxu0 0
  %1406 = vmatprep.subr.bf16.mxu0 0
  %1407 = vmatpush1.bf16.xpose.msra.mxu0 0
  %1408 = vmatprep.subr.bf16.mxu0 0
  %1409 = vmatpush1.bf16.xpose.msra.mxu0 0
  %1410 = vmatprep.subr.bf16.mxu0 0
  %1411 = vmatpush1.bf16.xpose.msra.mxu0 0
  %1412 = vmatprep.subr.bf16.mxu0 0
  %1413 = vmatpush1.bf16.xpose.msra.mxu0 0
  %1414 = vmatprep.subr.bf16.mxu0 0
  %1415 = vmatpush1.bf16.xpose.msra.mxu0 0
  %1416 = vmatprep.subr.bf16.mxu0 0
  %1417 = vmatpush1.bf16.xpose.msra.mxu0 %v1400
  %1418 = vmatprep.subr.bf16.mxu0 0
  %1419 = vmatpush2.bf16.xpose.msra.mxu0 0
  %1420 = vmatprep.subr.bf16.mxu0 0
  %1421 = vmatpush2.bf16.xpose.msra.mxu0 0
  %1422 = vmatprep.subr.bf16.mxu0 0
  %1423 = vmatpush2.bf16.xpose.msra.mxu0 0
  %1424 = vmatprep.subr.bf16.mxu0 0
  %1425 = vmatpush2.bf16.xpose.msra.mxu0 0
  %1426 = vmatprep.subr.bf16.mxu0 0
  %1427 = vmatpush2.bf16.xpose.msra.mxu0 0
  %1428 = vmatprep.subr.bf16.mxu0 0
  %1429 = vmatpush2.bf16.xpose.msra.mxu0 0
  %1430 = vmatprep.subr.bf16.mxu0 0
  %1431 = vmatpush2.bf16.xpose.msra.mxu0 0
  %1432 = vmatprep.subr.bf16.mxu0 0
  %1433 = vmatpush2.bf16.xpose.msra.mxu0 0
  %1434 = vmatprep.mubr.bf16.mxu0 0
  %1435 = vmatmul.mubr.bf16.gmra.mxu0 %v1397
  %v1436 = vpop.f32.mrf.mxu0
  %v1437 = vadd.f32 0.0, %v1436
  %v1438 = vpop.f32.mrf.mxu0
  %v1439 = vpop.f32.mrf.mxu0
  %v1440 = vpop.f32.mrf.mxu0
  %1441 = vdwg.mxu0
  %v1443 = vsel %vm1395, %v544, 0
  %v1446 = vsel %vm1395, %v968, 0
  %1448 = vmatprep.subr.bf16.mxu0 0
  %1449 = vmatpush1.bf16.xpose.msra.mxu0 0
  %1450 = vmatprep.subr.bf16.mxu0 0
  %1451 = vmatpush1.bf16.xpose.msra.mxu0 0
  %1452 = vmatprep.subr.bf16.mxu0 0
  %1453 = vmatpush1.bf16.xpose.msra.mxu0 0
  %1454 = vmatprep.subr.bf16.mxu0 0
  %1455 = vmatpush1.bf16.xpose.msra.mxu0 0
  %1456 = vmatprep.subr.bf16.mxu0 0
  %1457 = vmatpush1.bf16.xpose.msra.mxu0 0
  %1458 = vmatprep.subr.bf16.mxu0 0
  %1459 = vmatpush1.bf16.xpose.msra.mxu0 0
  %1460 = vmatprep.subr.bf16.mxu0 0
  %1461 = vmatpush1.bf16.xpose.msra.mxu0 0
  %1462 = vmatprep.subr.bf16.mxu0 0
  %1463 = vmatpush1.bf16.xpose.msra.mxu0 %v1446
  %1464 = vmatprep.subr.bf16.mxu0 0
  %1465 = vmatpush2.bf16.xpose.msra.mxu0 0
  %1466 = vmatprep.subr.bf16.mxu0 0
  %1467 = vmatpush2.bf16.xpose.msra.mxu0 0
  %1468 = vmatprep.subr.bf16.mxu0 0
  %1469 = vmatpush2.bf16.xpose.msra.mxu0 0
  %1470 = vmatprep.subr.bf16.mxu0 0
  %1471 = vmatpush2.bf16.xpose.msra.mxu0 0
  %1472 = vmatprep.subr.bf16.mxu0 0
  %1473 = vmatpush2.bf16.xpose.msra.mxu0 0
  %1474 = vmatprep.subr.bf16.mxu0 0
  %1475 = vmatpush2.bf16.xpose.msra.mxu0 0
  %1476 = vmatprep.subr.bf16.mxu0 0
  %1477 = vmatpush2.bf16.xpose.msra.mxu0 0
  %1478 = vmatprep.subr.bf16.mxu0 0
  %1479 = vmatpush2.bf16.xpose.msra.mxu0 0
  %1480 = vmatprep.mubr.bf16.mxu0 0
  %1481 = vmatmul.mubr.bf16.gmra.mxu0 %v1443
  %v1482 = vpop.f32.mrf.mxu0
  %v1483 = vadd.f32 0.0, %v1482
  %v1484 = vpop.f32.mrf.mxu0
  %v1485 = vpop.f32.mrf.mxu0
  %v1486 = vpop.f32.mrf.mxu0
  %1487 = vdwg.mxu0
  %v1489 = vsel %vm1395, %v545, 0
  %v1492 = vsel %vm1395, %v969, 0
  %1494 = vmatprep.subr.bf16.mxu0 0
  %1495 = vmatpush1.bf16.xpose.msra.mxu0 0
  %1496 = vmatprep.subr.bf16.mxu0 0
  %1497 = vmatpush1.bf16.xpose.msra.mxu0 0
  %1498 = vmatprep.subr.bf16.mxu0 0
  %1499 = vmatpush1.bf16.xpose.msra.mxu0 0
  %1500 = vmatprep.subr.bf16.mxu0 0
  %1501 = vmatpush1.bf16.xpose.msra.mxu0 0
  %1502 = vmatprep.subr.bf16.mxu0 0
  %1503 = vmatpush1.bf16.xpose.msra.mxu0 0
  %1504 = vmatprep.subr.bf16.mxu0 0
  %1505 = vmatpush1.bf16.xpose.msra.mxu0 0
  %1506 = vmatprep.subr.bf16.mxu0 0
  %1507 = vmatpush1.bf16.xpose.msra.mxu0 0
  %1508 = vmatprep.subr.bf16.mxu0 0
  %1509 = vmatpush1.bf16.xpose.msra.mxu0 %v1492
  %1510 = vmatprep.subr.bf16.mxu0 0
  %1511 = vmatpush2.bf16.xpose.msra.mxu0 0
  %1512 = vmatprep.subr.bf16.mxu0 0
  %1513 = vmatpush2.bf16.xpose.msra.mxu0 0
  %1514 = vmatprep.subr.bf16.mxu0 0
  %1515 = vmatpush2.bf16.xpose.msra.mxu0 0
  %1516 = vmatprep.subr.bf16.mxu0 0
  %1517 = vmatpush2.bf16.xpose.msra.mxu0 0
  %1518 = vmatprep.subr.bf16.mxu0 0
  %1519 = vmatpush2.bf16.xpose.msra.mxu0 0
  %1520 = vmatprep.subr.bf16.mxu0 0
  %1521 = vmatpush2.bf16.xpose.msra.mxu0 0
  %1522 = vmatprep.subr.bf16.mxu0 0
  %1523 = vmatpush2.bf16.xpose.msra.mxu0 0
  %1524 = vmatprep.subr.bf16.mxu0 0
  %1525 = vmatpush2.bf16.xpose.msra.mxu0 0
  %1526 = vmatprep.mubr.bf16.mxu0 0
  %1527 = vmatmul.mubr.bf16.gmra.mxu0 %v1489
  %v1528 = vpop.f32.mrf.mxu0
  %v1529 = vadd.f32 0.0, %v1528
  %v1530 = vpop.f32.mrf.mxu0
  %v1531 = vpop.f32.mrf.mxu0
  %v1532 = vpop.f32.mrf.mxu0
  %1533 = vdwg.mxu0
  %v1535 = vsel %vm1395, %v546, 0
  %v1538 = vsel %vm1395, %v970, 0
  %1540 = vmatprep.subr.bf16.mxu0 0
  %1541 = vmatpush1.bf16.xpose.msra.mxu0 0
  %1542 = vmatprep.subr.bf16.mxu0 0
  %1543 = vmatpush1.bf16.xpose.msra.mxu0 0
  %1544 = vmatprep.subr.bf16.mxu0 0
  %1545 = vmatpush1.bf16.xpose.msra.mxu0 0
  %1546 = vmatprep.subr.bf16.mxu0 0
  %1547 = vmatpush1.bf16.xpose.msra.mxu0 0
  %1548 = vmatprep.subr.bf16.mxu0 0
  %1549 = vmatpush1.bf16.xpose.msra.mxu0 0
  %1550 = vmatprep.subr.bf16.mxu0 0
  %1551 = vmatpush1.bf16.xpose.msra.mxu0 0
  %1552 = vmatprep.subr.bf16.mxu0 0
  %1553 = vmatpush1.bf16.xpose.msra.mxu0 0
  %1554 = vmatprep.subr.bf16.mxu0 0
  %1555 = vmatpush1.bf16.xpose.msra.mxu0 %v1538
  %1556 = vmatprep.subr.bf16.mxu0 0
  %1557 = vmatpush2.bf16.xpose.msra.mxu0 0
  %1558 = vmatprep.subr.bf16.mxu0 0
  %1559 = vmatpush2.bf16.xpose.msra.mxu0 0
  %1560 = vmatprep.subr.bf16.mxu0 0
  %1561 = vmatpush2.bf16.xpose.msra.mxu0 0
  %1562 = vmatprep.subr.bf16.mxu0 0
  %1563 = vmatpush2.bf16.xpose.msra.mxu0 0
  %1564 = vmatprep.subr.bf16.mxu0 0
  %1565 = vmatpush2.bf16.xpose.msra.mxu0 0
  %1566 = vmatprep.subr.bf16.mxu0 0
  %1567 = vmatpush2.bf16.xpose.msra.mxu0 0
  %1568 = vmatprep.subr.bf16.mxu0 0
  %1569 = vmatpush2.bf16.xpose.msra.mxu0 0
  %1570 = vmatprep.subr.bf16.mxu0 0
  %1571 = vmatpush2.bf16.xpose.msra.mxu0 0
  %1572 = vmatprep.mubr.bf16.mxu0 0
  %1573 = vmatmul.mubr.bf16.gmra.mxu0 %v1535
  %v1574 = vpop.f32.mrf.mxu0
  %v1575 = vadd.f32 0.0, %v1574
  %v1576 = vpop.f32.mrf.mxu0
  %v1577 = vpop.f32.mrf.mxu0
  %v1578 = vpop.f32.mrf.mxu0
  %1579 = vdwg.mxu0
  %vm1580 = vcmask 64512
  %v1581 = vsel %vm1580, %v1437, -inf
  %1582 = vmax.xlane.f32.xlu0 %v1581
  %v1583 = vpop.xlane.xlu0 %1582
  %v1584 = vsel %vm1580, %v1483, -inf
  %1585 = vmax.xlane.f32.xlu0 %v1584
  %v1586 = vpop.xlane.xlu0 %1585
  %v1587 = vsel %vm1580, %v1529, -inf
  %1588 = vmax.xlane.f32.xlu0 %v1587
  %v1589 = vpop.xlane.xlu0 %1588
  %v1590 = vsel %vm1580, %v1575, -inf
  %1591 = vmax.xlane.f32.xlu0 %v1590
  %v1592 = vpop.xlane.xlu0 %1591
  %v1593 = vsub.f32 %v1437, %v1583
  %v1594 = vsub.f32 %v1483, %v1586
  %v1595 = vsub.f32 %v1529, %v1589
  %v1596 = vsub.f32 %v1575, %v1592
  %v1597 = vmul.f32 %v1593, 1.442695
  %v1598 = vpow.pop %v1597
  %v1599 = vmul.f32 %v1594, 1.442695
  %v1600 = vpow.pop %v1599
  %v1601 = vmul.f32 %v1595, 1.442695
  %v1602 = vpow.pop %v1601
  %v1603 = vmul.f32 %v1596, 1.442695
  %v1604 = vpow.pop %v1603
  %v1605 = vsel %vm1580, %v1598, 0.0
  %1606 = vadd.xlane.f32.xlu0 %v1605
  %v1607 = vpop.xlane.xlu0 %1606
  %v1608 = vsel %vm1580, %v1600, 0.0
  %1609 = vadd.xlane.f32.xlu0 %v1608
  %v1610 = vpop.xlane.xlu0 %1609
  %v1611 = vsel %vm1580, %v1602, 0.0
  %1612 = vadd.xlane.f32.xlu0 %v1611
  %v1613 = vpop.xlane.xlu0 %1612
  %v1614 = vsel %vm1580, %v1604, 0.0
  %1615 = vadd.xlane.f32.xlu0 %v1614
  %v1616 = vpop.xlane.xlu0 %1615
  %v1617 = vrcp.pop %v1607
  %v1618 = vrcp.pop %v1610
  %v1619 = vrcp.pop %v1613
  %v1620 = vrcp.pop %v1616
  %v1621 = vmul.f32 %v1598, %v1617
  %v1622 = vmul.f32 %v1600, %v1618
  %v1623 = vmul.f32 %v1602, %v1619
  %v1624 = vmul.f32 %v1604, %v1620
  %v1625 = vpack.c.bf16 %v1621, %v1621
  %v1626 = vpack.c.bf16 %v1622, %v1622
  %v1627 = vpack.c.bf16 %v1623, %v1623
  %v1628 = vpack.c.bf16 %v1624, %v1624
  %v1630 = vsel %vm1580, %v1625, 0
  %vm1632 = vcmask 1043456
  %v1634 = vsel %vm1632, %v1391, 0
  %1636 = vmatprep.subr.bf16.mxu0 0
  %1637 = vmatpush1.bf16.msra.mxu0 0
  %1638 = vmatprep.subr.bf16.mxu0 0
  %1639 = vmatpush1.bf16.msra.mxu0 0
  %1640 = vmatprep.subr.bf16.mxu0 0
  %1641 = vmatpush1.bf16.msra.mxu0 0
  %1642 = vmatprep.subr.bf16.mxu0 0
  %1643 = vmatpush1.bf16.msra.mxu0 0
  %1644 = vmatprep.subr.bf16.mxu0 0
  %1645 = vmatpush1.bf16.msra.mxu0 0
  %1646 = vmatprep.subr.bf16.mxu0 0
  %1647 = vmatpush1.bf16.msra.mxu0 0
  %1648 = vmatprep.subr.bf16.mxu0 0
  %1649 = vmatpush1.bf16.msra.mxu0 0
  %1650 = vmatprep.subr.bf16.mxu0 0
  %1651 = vmatpush1.bf16.msra.mxu0 %v1634
  %1652 = vmatprep.subr.bf16.mxu0 0
  %1653 = vmatpush2.bf16.msra.mxu0 0
  %1654 = vmatprep.subr.bf16.mxu0 0
  %1655 = vmatpush2.bf16.msra.mxu0 0
  %1656 = vmatprep.subr.bf16.mxu0 0
  %1657 = vmatpush2.bf16.msra.mxu0 0
  %1658 = vmatprep.subr.bf16.mxu0 0
  %1659 = vmatpush2.bf16.msra.mxu0 0
  %1660 = vmatprep.subr.bf16.mxu0 0
  %1661 = vmatpush2.bf16.msra.mxu0 0
  %1662 = vmatprep.subr.bf16.mxu0 0
  %1663 = vmatpush2.bf16.msra.mxu0 0
  %1664 = vmatprep.subr.bf16.mxu0 0
  %1665 = vmatpush2.bf16.msra.mxu0 0
  %1666 = vmatprep.subr.bf16.mxu0 0
  %1667 = vmatpush2.bf16.msra.mxu0 0
  %1668 = vmatprep.mubr.bf16.mxu0 0
  %1669 = vmatmul.mubr.bf16.gmra.mxu0 %v1630
  %v1670 = vpop.f32.mrf.mxu0
  %v1671 = vadd.f32 0.0, %v1670
  %v1672 = vpop.f32.mrf.mxu0
  %v1673 = vpop.f32.mrf.mxu0
  %v1674 = vpop.f32.mrf.mxu0
  %1675 = vdwg.mxu0
  %v1677 = vsel %vm1580, %v1626, 0
  %v1680 = vsel %vm1632, %v1392, 0
  %1682 = vmatprep.subr.bf16.mxu0 0
  %1683 = vmatpush1.bf16.msra.mxu0 0
  %1684 = vmatprep.subr.bf16.mxu0 0
  %1685 = vmatpush1.bf16.msra.mxu0 0
  %1686 = vmatprep.subr.bf16.mxu0 0
  %1687 = vmatpush1.bf16.msra.mxu0 0
  %1688 = vmatprep.subr.bf16.mxu0 0
  %1689 = vmatpush1.bf16.msra.mxu0 0
  %1690 = vmatprep.subr.bf16.mxu0 0
  %1691 = vmatpush1.bf16.msra.mxu0 0
  %1692 = vmatprep.subr.bf16.mxu0 0
  %1693 = vmatpush1.bf16.msra.mxu0 0
  %1694 = vmatprep.subr.bf16.mxu0 0
  %1695 = vmatpush1.bf16.msra.mxu0 0
  %1696 = vmatprep.subr.bf16.mxu0 0
  %1697 = vmatpush1.bf16.msra.mxu0 %v1680
  %1698 = vmatprep.subr.bf16.mxu0 0
  %1699 = vmatpush2.bf16.msra.mxu0 0
  %1700 = vmatprep.subr.bf16.mxu0 0
  %1701 = vmatpush2.bf16.msra.mxu0 0
  %1702 = vmatprep.subr.bf16.mxu0 0
  %1703 = vmatpush2.bf16.msra.mxu0 0
  %1704 = vmatprep.subr.bf16.mxu0 0
  %1705 = vmatpush2.bf16.msra.mxu0 0
  %1706 = vmatprep.subr.bf16.mxu0 0
  %1707 = vmatpush2.bf16.msra.mxu0 0
  %1708 = vmatprep.subr.bf16.mxu0 0
  %1709 = vmatpush2.bf16.msra.mxu0 0
  %1710 = vmatprep.subr.bf16.mxu0 0
  %1711 = vmatpush2.bf16.msra.mxu0 0
  %1712 = vmatprep.subr.bf16.mxu0 0
  %1713 = vmatpush2.bf16.msra.mxu0 0
  %1714 = vmatprep.mubr.bf16.mxu0 0
  %1715 = vmatmul.mubr.bf16.gmra.mxu0 %v1677
  %v1716 = vpop.f32.mrf.mxu0
  %v1717 = vadd.f32 0.0, %v1716
  %v1718 = vpop.f32.mrf.mxu0
  %v1719 = vpop.f32.mrf.mxu0
  %v1720 = vpop.f32.mrf.mxu0
  %1721 = vdwg.mxu0
  %v1723 = vsel %vm1580, %v1627, 0
  %v1726 = vsel %vm1632, %v1393, 0
  %1728 = vmatprep.subr.bf16.mxu0 0
  %1729 = vmatpush1.bf16.msra.mxu0 0
  %1730 = vmatprep.subr.bf16.mxu0 0
  %1731 = vmatpush1.bf16.msra.mxu0 0
  %1732 = vmatprep.subr.bf16.mxu0 0
  %1733 = vmatpush1.bf16.msra.mxu0 0
  %1734 = vmatprep.subr.bf16.mxu0 0
  %1735 = vmatpush1.bf16.msra.mxu0 0
  %1736 = vmatprep.subr.bf16.mxu0 0
  %1737 = vmatpush1.bf16.msra.mxu0 0
  %1738 = vmatprep.subr.bf16.mxu0 0
  %1739 = vmatpush1.bf16.msra.mxu0 0
  %1740 = vmatprep.subr.bf16.mxu0 0
  %1741 = vmatpush1.bf16.msra.mxu0 0
  %1742 = vmatprep.subr.bf16.mxu0 0
  %1743 = vmatpush1.bf16.msra.mxu0 %v1726
  %1744 = vmatprep.subr.bf16.mxu0 0
  %1745 = vmatpush2.bf16.msra.mxu0 0
  %1746 = vmatprep.subr.bf16.mxu0 0
  %1747 = vmatpush2.bf16.msra.mxu0 0
  %1748 = vmatprep.subr.bf16.mxu0 0
  %1749 = vmatpush2.bf16.msra.mxu0 0
  %1750 = vmatprep.subr.bf16.mxu0 0
  %1751 = vmatpush2.bf16.msra.mxu0 0
  %1752 = vmatprep.subr.bf16.mxu0 0
  %1753 = vmatpush2.bf16.msra.mxu0 0
  %1754 = vmatprep.subr.bf16.mxu0 0
  %1755 = vmatpush2.bf16.msra.mxu0 0
  %1756 = vmatprep.subr.bf16.mxu0 0
  %1757 = vmatpush2.bf16.msra.mxu0 0
  %1758 = vmatprep.subr.bf16.mxu0 0
  %1759 = vmatpush2.bf16.msra.mxu0 0
  %1760 = vmatprep.mubr.bf16.mxu0 0
  %1761 = vmatmul.mubr.bf16.gmra.mxu0 %v1723
  %v1762 = vpop.f32.mrf.mxu0
  %v1763 = vadd.f32 0.0, %v1762
  %v1764 = vpop.f32.mrf.mxu0
  %v1765 = vpop.f32.mrf.mxu0
  %v1766 = vpop.f32.mrf.mxu0
  %1767 = vdwg.mxu0
  %v1769 = vsel %vm1580, %v1628, 0
  %v1772 = vsel %vm1632, %v1394, 0
  %1774 = vmatprep.subr.bf16.mxu0 0
  %1775 = vmatpush1.bf16.msra.mxu0 0
  %1776 = vmatprep.subr.bf16.mxu0 0
  %1777 = vmatpush1.bf16.msra.mxu0 0
  %1778 = vmatprep.subr.bf16.mxu0 0
  %1779 = vmatpush1.bf16.msra.mxu0 0
  %1780 = vmatprep.subr.bf16.mxu0 0
  %1781 = vmatpush1.bf16.msra.mxu0 0
  %1782 = vmatprep.subr.bf16.mxu0 0
  %1783 = vmatpush1.bf16.msra.mxu0 0
  %1784 = vmatprep.subr.bf16.mxu0 0
  %1785 = vmatpush1.bf16.msra.mxu0 0
  %1786 = vmatprep.subr.bf16.mxu0 0
  %1787 = vmatpush1.bf16.msra.mxu0 0
  %1788 = vmatprep.subr.bf16.mxu0 0
  %1789 = vmatpush1.bf16.msra.mxu0 %v1772
  %1790 = vmatprep.subr.bf16.mxu0 0
  %1791 = vmatpush2.bf16.msra.mxu0 0
  %1792 = vmatprep.subr.bf16.mxu0 0
  %1793 = vmatpush2.bf16.msra.mxu0 0
  %1794 = vmatprep.subr.bf16.mxu0 0
  %1795 = vmatpush2.bf16.msra.mxu0 0
  %1796 = vmatprep.subr.bf16.mxu0 0
  %1797 = vmatpush2.bf16.msra.mxu0 0
  %1798 = vmatprep.subr.bf16.mxu0 0
  %1799 = vmatpush2.bf16.msra.mxu0 0
  %1800 = vmatprep.subr.bf16.mxu0 0
  %1801 = vmatpush2.bf16.msra.mxu0 0
  %1802 = vmatprep.subr.bf16.mxu0 0
  %1803 = vmatpush2.bf16.msra.mxu0 0
  %1804 = vmatprep.subr.bf16.mxu0 0
  %1805 = vmatpush2.bf16.msra.mxu0 0
  %1806 = vmatprep.mubr.bf16.mxu0 0
  %1807 = vmatmul.mubr.bf16.gmra.mxu0 %v1769
  %v1808 = vpop.f32.mrf.mxu0
  %v1809 = vadd.f32 0.0, %v1808
  %v1810 = vpop.f32.mrf.mxu0
  %v1811 = vpop.f32.mrf.mxu0
  %v1812 = vpop.f32.mrf.mxu0
  %1813 = vdwg.mxu0
  %v1815 = vrot.slane %v543, 4
  %v1817 = vrot.slane %v967, 4
  %v1819 = vsel %vm1395, %v1815, 0
  %v1822 = vsel %vm1395, %v1817, 0
  %1824 = vmatprep.subr.bf16.mxu0 0
  %1825 = vmatpush1.bf16.xpose.msra.mxu0 0
  %1826 = vmatprep.subr.bf16.mxu0 0
  %1827 = vmatpush1.bf16.xpose.msra.mxu0 0
  %1828 = vmatprep.subr.bf16.mxu0 0
  %1829 = vmatpush1.bf16.xpose.msra.mxu0 0
  %1830 = vmatprep.subr.bf16.mxu0 0
  %1831 = vmatpush1.bf16.xpose.msra.mxu0 0
  %1832 = vmatprep.subr.bf16.mxu0 0
  %1833 = vmatpush1.bf16.xpose.msra.mxu0 0
  %1834 = vmatprep.subr.bf16.mxu0 0
  %1835 = vmatpush1.bf16.xpose.msra.mxu0 0
  %1836 = vmatprep.subr.bf16.mxu0 0
  %1837 = vmatpush1.bf16.xpose.msra.mxu0 0
  %1838 = vmatprep.subr.bf16.mxu0 0
  %1839 = vmatpush1.bf16.xpose.msra.mxu0 %v1822
  %1840 = vmatprep.subr.bf16.mxu0 0
  %1841 = vmatpush2.bf16.xpose.msra.mxu0 0
  %1842 = vmatprep.subr.bf16.mxu0 0
  %1843 = vmatpush2.bf16.xpose.msra.mxu0 0
  %1844 = vmatprep.subr.bf16.mxu0 0
  %1845 = vmatpush2.bf16.xpose.msra.mxu0 0
  %1846 = vmatprep.subr.bf16.mxu0 0
  %1847 = vmatpush2.bf16.xpose.msra.mxu0 0
  %1848 = vmatprep.subr.bf16.mxu0 0
  %1849 = vmatpush2.bf16.xpose.msra.mxu0 0
  %1850 = vmatprep.subr.bf16.mxu0 0
  %1851 = vmatpush2.bf16.xpose.msra.mxu0 0
  %1852 = vmatprep.subr.bf16.mxu0 0
  %1853 = vmatpush2.bf16.xpose.msra.mxu0 0
  %1854 = vmatprep.subr.bf16.mxu0 0
  %1855 = vmatpush2.bf16.xpose.msra.mxu0 0
  %1856 = vmatprep.mubr.bf16.mxu0 0
  %1857 = vmatmul.mubr.bf16.gmra.mxu0 %v1819
  %v1858 = vpop.f32.mrf.mxu0
  %v1859 = vadd.f32 0.0, %v1858
  %v1860 = vpop.f32.mrf.mxu0
  %v1861 = vpop.f32.mrf.mxu0
  %v1862 = vpop.f32.mrf.mxu0
  %1863 = vdwg.mxu0
  %v1865 = vrot.slane %v544, 4
  %v1867 = vrot.slane %v968, 4
  %v1869 = vsel %vm1395, %v1865, 0
  %v1872 = vsel %vm1395, %v1867, 0
  %1874 = vmatprep.subr.bf16.mxu0 0
  %1875 = vmatpush1.bf16.xpose.msra.mxu0 0
  %1876 = vmatprep.subr.bf16.mxu0 0
  %1877 = vmatpush1.bf16.xpose.msra.mxu0 0
  %1878 = vmatprep.subr.bf16.mxu0 0
  %1879 = vmatpush1.bf16.xpose.msra.mxu0 0
  %1880 = vmatprep.subr.bf16.mxu0 0
  %1881 = vmatpush1.bf16.xpose.msra.mxu0 0
  %1882 = vmatprep.subr.bf16.mxu0 0
  %1883 = vmatpush1.bf16.xpose.msra.mxu0 0
  %1884 = vmatprep.subr.bf16.mxu0 0
  %1885 = vmatpush1.bf16.xpose.msra.mxu0 0
  %1886 = vmatprep.subr.bf16.mxu0 0
  %1887 = vmatpush1.bf16.xpose.msra.mxu0 0
  %1888 = vmatprep.subr.bf16.mxu0 0
  %1889 = vmatpush1.bf16.xpose.msra.mxu0 %v1872
  %1890 = vmatprep.subr.bf16.mxu0 0
  %1891 = vmatpush2.bf16.xpose.msra.mxu0 0
  %1892 = vmatprep.subr.bf16.mxu0 0
  %1893 = vmatpush2.bf16.xpose.msra.mxu0 0
  %1894 = vmatprep.subr.bf16.mxu0 0
  %1895 = vmatpush2.bf16.xpose.msra.mxu0 0
  %1896 = vmatprep.subr.bf16.mxu0 0
  %1897 = vmatpush2.bf16.xpose.msra.mxu0 0
  %1898 = vmatprep.subr.bf16.mxu0 0
  %1899 = vmatpush2.bf16.xpose.msra.mxu0 0
  %1900 = vmatprep.subr.bf16.mxu0 0
  %1901 = vmatpush2.bf16.xpose.msra.mxu0 0
  %1902 = vmatprep.subr.bf16.mxu0 0
  %1903 = vmatpush2.bf16.xpose.msra.mxu0 0
  %1904 = vmatprep.subr.bf16.mxu0 0
  %1905 = vmatpush2.bf16.xpose.msra.mxu0 0
  %1906 = vmatprep.mubr.bf16.mxu0 0
  %1907 = vmatmul.mubr.bf16.gmra.mxu0 %v1869
  %v1908 = vpop.f32.mrf.mxu0
  %v1909 = vadd.f32 0.0, %v1908
  %v1910 = vpop.f32.mrf.mxu0
  %v1911 = vpop.f32.mrf.mxu0
  %v1912 = vpop.f32.mrf.mxu0
  %1913 = vdwg.mxu0
  %v1915 = vrot.slane %v545, 4
  %v1917 = vrot.slane %v969, 4
  %v1919 = vsel %vm1395, %v1915, 0
  %v1922 = vsel %vm1395, %v1917, 0
  %1924 = vmatprep.subr.bf16.mxu0 0
  %1925 = vmatpush1.bf16.xpose.msra.mxu0 0
  %1926 = vmatprep.subr.bf16.mxu0 0
  %1927 = vmatpush1.bf16.xpose.msra.mxu0 0
  %1928 = vmatprep.subr.bf16.mxu0 0
  %1929 = vmatpush1.bf16.xpose.msra.mxu0 0
  %1930 = vmatprep.subr.bf16.mxu0 0
  %1931 = vmatpush1.bf16.xpose.msra.mxu0 0
  %1932 = vmatprep.subr.bf16.mxu0 0
  %1933 = vmatpush1.bf16.xpose.msra.mxu0 0
  %1934 = vmatprep.subr.bf16.mxu0 0
  %1935 = vmatpush1.bf16.xpose.msra.mxu0 0
  %1936 = vmatprep.subr.bf16.mxu0 0
  %1937 = vmatpush1.bf16.xpose.msra.mxu0 0
  %1938 = vmatprep.subr.bf16.mxu0 0
  %1939 = vmatpush1.bf16.xpose.msra.mxu0 %v1922
  %1940 = vmatprep.subr.bf16.mxu0 0
  %1941 = vmatpush2.bf16.xpose.msra.mxu0 0
  %1942 = vmatprep.subr.bf16.mxu0 0
  %1943 = vmatpush2.bf16.xpose.msra.mxu0 0
  %1944 = vmatprep.subr.bf16.mxu0 0
  %1945 = vmatpush2.bf16.xpose.msra.mxu0 0
  %1946 = vmatprep.subr.bf16.mxu0 0
  %1947 = vmatpush2.bf16.xpose.msra.mxu0 0
  %1948 = vmatprep.subr.bf16.mxu0 0
  %1949 = vmatpush2.bf16.xpose.msra.mxu0 0
  %1950 = vmatprep.subr.bf16.mxu0 0
  %1951 = vmatpush2.bf16.xpose.msra.mxu0 0
  %1952 = vmatprep.subr.bf16.mxu0 0
  %1953 = vmatpush2.bf16.xpose.msra.mxu0 0
  %1954 = vmatprep.subr.bf16.mxu0 0
  %1955 = vmatpush2.bf16.xpose.msra.mxu0 0
  %1956 = vmatprep.mubr.bf16.mxu0 0
  %1957 = vmatmul.mubr.bf16.gmra.mxu0 %v1919
  %v1958 = vpop.f32.mrf.mxu0
  %v1959 = vadd.f32 0.0, %v1958
  %v1960 = vpop.f32.mrf.mxu0
  %v1961 = vpop.f32.mrf.mxu0
  %v1962 = vpop.f32.mrf.mxu0
  %1963 = vdwg.mxu0
  %v1965 = vrot.slane %v546, 4
  %v1967 = vrot.slane %v970, 4
  %v1969 = vsel %vm1395, %v1965, 0
  %v1972 = vsel %vm1395, %v1967, 0
  %1974 = vmatprep.subr.bf16.mxu0 0
  %1975 = vmatpush1.bf16.xpose.msra.mxu0 0
  %1976 = vmatprep.subr.bf16.mxu0 0
  %1977 = vmatpush1.bf16.xpose.msra.mxu0 0
  %1978 = vmatprep.subr.bf16.mxu0 0
  %1979 = vmatpush1.bf16.xpose.msra.mxu0 0
  %1980 = vmatprep.subr.bf16.mxu0 0
  %1981 = vmatpush1.bf16.xpose.msra.mxu0 0
  %1982 = vmatprep.subr.bf16.mxu0 0
  %1983 = vmatpush1.bf16.xpose.msra.mxu0 0
  %1984 = vmatprep.subr.bf16.mxu0 0
  %1985 = vmatpush1.bf16.xpose.msra.mxu0 0
  %1986 = vmatprep.subr.bf16.mxu0 0
  %1987 = vmatpush1.bf16.xpose.msra.mxu0 0
  %1988 = vmatprep.subr.bf16.mxu0 0
  %1989 = vmatpush1.bf16.xpose.msra.mxu0 %v1972
  %1990 = vmatprep.subr.bf16.mxu0 0
  %1991 = vmatpush2.bf16.xpose.msra.mxu0 0
  %1992 = vmatprep.subr.bf16.mxu0 0
  %1993 = vmatpush2.bf16.xpose.msra.mxu0 0
  %1994 = vmatprep.subr.bf16.mxu0 0
  %1995 = vmatpush2.bf16.xpose.msra.mxu0 0
  %1996 = vmatprep.subr.bf16.mxu0 0
  %1997 = vmatpush2.bf16.xpose.msra.mxu0 0
  %1998 = vmatprep.subr.bf16.mxu0 0
  %1999 = vmatpush2.bf16.xpose.msra.mxu0 0
  %2000 = vmatprep.subr.bf16.mxu0 0
  %2001 = vmatpush2.bf16.xpose.msra.mxu0 0
  %2002 = vmatprep.subr.bf16.mxu0 0
  %2003 = vmatpush2.bf16.xpose.msra.mxu0 0
  %2004 = vmatprep.subr.bf16.mxu0 0
  %2005 = vmatpush2.bf16.xpose.msra.mxu0 0
  %2006 = vmatprep.mubr.bf16.mxu0 0
  %2007 = vmatmul.mubr.bf16.gmra.mxu0 %v1969
  %v2008 = vpop.f32.mrf.mxu0
  %v2009 = vadd.f32 0.0, %v2008
  %v2010 = vpop.f32.mrf.mxu0
  %v2011 = vpop.f32.mrf.mxu0
  %v2012 = vpop.f32.mrf.mxu0
  %2013 = vdwg.mxu0
  %v2014 = vsel %vm1580, %v1859, -inf
  %2015 = vmax.xlane.f32.xlu0 %v2014
  %v2016 = vpop.xlane.xlu0 %2015
  %v2017 = vsel %vm1580, %v1909, -inf
  %2018 = vmax.xlane.f32.xlu0 %v2017
  %v2019 = vpop.xlane.xlu0 %2018
  %v2020 = vsel %vm1580, %v1959, -inf
  %2021 = vmax.xlane.f32.xlu0 %v2020
  %v2022 = vpop.xlane.xlu0 %2021
  %v2023 = vsel %vm1580, %v2009, -inf
  %2024 = vmax.xlane.f32.xlu0 %v2023
  %v2025 = vpop.xlane.xlu0 %2024
  %v2026 = vsub.f32 %v1859, %v2016
  %v2027 = vsub.f32 %v1909, %v2019
  %v2028 = vsub.f32 %v1959, %v2022
  %v2029 = vsub.f32 %v2009, %v2025
  %v2030 = vmul.f32 %v2026, 1.442695
  %v2031 = vpow.pop %v2030
  %v2032 = vmul.f32 %v2027, 1.442695
  %v2033 = vpow.pop %v2032
  %v2034 = vmul.f32 %v2028, 1.442695
  %v2035 = vpow.pop %v2034
  %v2036 = vmul.f32 %v2029, 1.442695
  %v2037 = vpow.pop %v2036
  %v2038 = vsel %vm1580, %v2031, 0.0
  %2039 = vadd.xlane.f32.xlu0 %v2038
  %v2040 = vpop.xlane.xlu0 %2039
  %v2041 = vsel %vm1580, %v2033, 0.0
  %2042 = vadd.xlane.f32.xlu0 %v2041
  %v2043 = vpop.xlane.xlu0 %2042
  %v2044 = vsel %vm1580, %v2035, 0.0
  %2045 = vadd.xlane.f32.xlu0 %v2044
  %v2046 = vpop.xlane.xlu0 %2045
  %v2047 = vsel %vm1580, %v2037, 0.0
  %2048 = vadd.xlane.f32.xlu0 %v2047
  %v2049 = vpop.xlane.xlu0 %2048
  %v2050 = vrcp.pop %v2040
  %v2051 = vrcp.pop %v2043
  %v2052 = vrcp.pop %v2046
  %v2053 = vrcp.pop %v2049
  %v2054 = vmul.f32 %v2031, %v2050
  %v2055 = vmul.f32 %v2033, %v2051
  %v2056 = vmul.f32 %v2035, %v2052
  %v2057 = vmul.f32 %v2037, %v2053
  %v2058 = vpack.c.bf16 %v2054, %v2054
  %v2059 = vpack.c.bf16 %v2055, %v2055
  %v2060 = vpack.c.bf16 %v2056, %v2056
  %v2061 = vpack.c.bf16 %v2057, %v2057
  %v2063 = vrot.slane %v1391, 4
  %v2065 = vsel %vm1580, %v2058, 0
  %v2068 = vsel %vm1632, %v2063, 0
  %2070 = vmatprep.subr.bf16.mxu0 0
  %2071 = vmatpush1.bf16.msra.mxu0 0
  %2072 = vmatprep.subr.bf16.mxu0 0
  %2073 = vmatpush1.bf16.msra.mxu0 0
  %2074 = vmatprep.subr.bf16.mxu0 0
  %2075 = vmatpush1.bf16.msra.mxu0 0
  %2076 = vmatprep.subr.bf16.mxu0 0
  %2077 = vmatpush1.bf16.msra.mxu0 0
  %2078 = vmatprep.subr.bf16.mxu0 0
  %2079 = vmatpush1.bf16.msra.mxu0 0
  %2080 = vmatprep.subr.bf16.mxu0 0
  %2081 = vmatpush1.bf16.msra.mxu0 0
  %2082 = vmatprep.subr.bf16.mxu0 0
  %2083 = vmatpush1.bf16.msra.mxu0 0
  %2084 = vmatprep.subr.bf16.mxu0 0
  %2085 = vmatpush1.bf16.msra.mxu0 %v2068
  %2086 = vmatprep.subr.bf16.mxu0 0
  %2087 = vmatpush2.bf16.msra.mxu0 0
  %2088 = vmatprep.subr.bf16.mxu0 0
  %2089 = vmatpush2.bf16.msra.mxu0 0
  %2090 = vmatprep.subr.bf16.mxu0 0
  %2091 = vmatpush2.bf16.msra.mxu0 0
  %2092 = vmatprep.subr.bf16.mxu0 0
  %2093 = vmatpush2.bf16.msra.mxu0 0
  %2094 = vmatprep.subr.bf16.mxu0 0
  %2095 = vmatpush2.bf16.msra.mxu0 0
  %2096 = vmatprep.subr.bf16.mxu0 0
  %2097 = vmatpush2.bf16.msra.mxu0 0
  %2098 = vmatprep.subr.bf16.mxu0 0
  %2099 = vmatpush2.bf16.msra.mxu0 0
  %2100 = vmatprep.subr.bf16.mxu0 0
  %2101 = vmatpush2.bf16.msra.mxu0 0
  %2102 = vmatprep.mubr.bf16.mxu0 0
  %2103 = vmatmul.mubr.bf16.gmra.mxu0 %v2065
  %v2104 = vpop.f32.mrf.mxu0
  %v2105 = vadd.f32 0.0, %v2104
  %v2106 = vpop.f32.mrf.mxu0
  %v2107 = vpop.f32.mrf.mxu0
  %v2108 = vpop.f32.mrf.mxu0
  %2109 = vdwg.mxu0
  %v2111 = vrot.slane %v1392, 4
  %v2113 = vsel %vm1580, %v2059, 0
  %v2116 = vsel %vm1632, %v2111, 0
  %2118 = vmatprep.subr.bf16.mxu0 0
  %2119 = vmatpush1.bf16.msra.mxu0 0
  %2120 = vmatprep.subr.bf16.mxu0 0
  %2121 = vmatpush1.bf16.msra.mxu0 0
  %2122 = vmatprep.subr.bf16.mxu0 0
  %2123 = vmatpush1.bf16.msra.mxu0 0
  %2124 = vmatprep.subr.bf16.mxu0 0
  %2125 = vmatpush1.bf16.msra.mxu0 0
  %2126 = vmatprep.subr.bf16.mxu0 0
  %2127 = vmatpush1.bf16.msra.mxu0 0
  %2128 = vmatprep.subr.bf16.mxu0 0
  %2129 = vmatpush1.bf16.msra.mxu0 0
  %2130 = vmatprep.subr.bf16.mxu0 0
  %2131 = vmatpush1.bf16.msra.mxu0 0
  %2132 = vmatprep.subr.bf16.mxu0 0
  %2133 = vmatpush1.bf16.msra.mxu0 %v2116
  %2134 = vmatprep.subr.bf16.mxu0 0
  %2135 = vmatpush2.bf16.msra.mxu0 0
  %2136 = vmatprep.subr.bf16.mxu0 0
  %2137 = vmatpush2.bf16.msra.mxu0 0
  %2138 = vmatprep.subr.bf16.mxu0 0
  %2139 = vmatpush2.bf16.msra.mxu0 0
  %2140 = vmatprep.subr.bf16.mxu0 0
  %2141 = vmatpush2.bf16.msra.mxu0 0
  %2142 = vmatprep.subr.bf16.mxu0 0
  %2143 = vmatpush2.bf16.msra.mxu0 0
  %2144 = vmatprep.subr.bf16.mxu0 0
  %2145 = vmatpush2.bf16.msra.mxu0 0
  %2146 = vmatprep.subr.bf16.mxu0 0
  %2147 = vmatpush2.bf16.msra.mxu0 0
  %2148 = vmatprep.subr.bf16.mxu0 0
  %2149 = vmatpush2.bf16.msra.mxu0 0
  %2150 = vmatprep.mubr.bf16.mxu0 0
  %2151 = vmatmul.mubr.bf16.gmra.mxu0 %v2113
  %v2152 = vpop.f32.mrf.mxu0
  %v2153 = vadd.f32 0.0, %v2152
  %v2154 = vpop.f32.mrf.mxu0
  %v2155 = vpop.f32.mrf.mxu0
  %v2156 = vpop.f32.mrf.mxu0
  %2157 = vdwg.mxu0
  %v2159 = vrot.slane %v1393, 4
  %v2161 = vsel %vm1580, %v2060, 0
  %v2164 = vsel %vm1632, %v2159, 0
  %2166 = vmatprep.subr.bf16.mxu0 0
  %2167 = vmatpush1.bf16.msra.mxu0 0
  %2168 = vmatprep.subr.bf16.mxu0 0
  %2169 = vmatpush1.bf16.msra.mxu0 0
  %2170 = vmatprep.subr.bf16.mxu0 0
  %2171 = vmatpush1.bf16.msra.mxu0 0
  %2172 = vmatprep.subr.bf16.mxu0 0
  %2173 = vmatpush1.bf16.msra.mxu0 0
  %2174 = vmatprep.subr.bf16.mxu0 0
  %2175 = vmatpush1.bf16.msra.mxu0 0
  %2176 = vmatprep.subr.bf16.mxu0 0
  %2177 = vmatpush1.bf16.msra.mxu0 0
  %2178 = vmatprep.subr.bf16.mxu0 0
  %2179 = vmatpush1.bf16.msra.mxu0 0
  %2180 = vmatprep.subr.bf16.mxu0 0
  %2181 = vmatpush1.bf16.msra.mxu0 %v2164
  %2182 = vmatprep.subr.bf16.mxu0 0
  %2183 = vmatpush2.bf16.msra.mxu0 0
  %2184 = vmatprep.subr.bf16.mxu0 0
  %2185 = vmatpush2.bf16.msra.mxu0 0
  %2186 = vmatprep.subr.bf16.mxu0 0
  %2187 = vmatpush2.bf16.msra.mxu0 0
  %2188 = vmatprep.subr.bf16.mxu0 0
  %2189 = vmatpush2.bf16.msra.mxu0 0
  %2190 = vmatprep.subr.bf16.mxu0 0
  %2191 = vmatpush2.bf16.msra.mxu0 0
  %2192 = vmatprep.subr.bf16.mxu0 0
  %2193 = vmatpush2.bf16.msra.mxu0 0
  %2194 = vmatprep.subr.bf16.mxu0 0
  %2195 = vmatpush2.bf16.msra.mxu0 0
  %2196 = vmatprep.subr.bf16.mxu0 0
  %2197 = vmatpush2.bf16.msra.mxu0 0
  %2198 = vmatprep.mubr.bf16.mxu0 0
  %2199 = vmatmul.mubr.bf16.gmra.mxu0 %v2161
  %v2200 = vpop.f32.mrf.mxu0
  %v2201 = vadd.f32 0.0, %v2200
  %v2202 = vpop.f32.mrf.mxu0
  %v2203 = vpop.f32.mrf.mxu0
  %v2204 = vpop.f32.mrf.mxu0
  %2205 = vdwg.mxu0
  %v2207 = vrot.slane %v1394, 4
  %v2209 = vsel %vm1580, %v2061, 0
  %v2212 = vsel %vm1632, %v2207, 0
  %2214 = vmatprep.subr.bf16.mxu0 0
  %2215 = vmatpush1.bf16.msra.mxu0 0
  %2216 = vmatprep.subr.bf16.mxu0 0
  %2217 = vmatpush1.bf16.msra.mxu0 0
  %2218 = vmatprep.subr.bf16.mxu0 0
  %2219 = vmatpush1.bf16.msra.mxu0 0
  %2220 = vmatprep.subr.bf16.mxu0 0
  %2221 = vmatpush1.bf16.msra.mxu0 0
  %2222 = vmatprep.subr.bf16.mxu0 0
  %2223 = vmatpush1.bf16.msra.mxu0 0
  %2224 = vmatprep.subr.bf16.mxu0 0
  %2225 = vmatpush1.bf16.msra.mxu0 0
  %2226 = vmatprep.subr.bf16.mxu0 0
  %2227 = vmatpush1.bf16.msra.mxu0 0
  %2228 = vmatprep.subr.bf16.mxu0 0
  %2229 = vmatpush1.bf16.msra.mxu0 %v2212
  %2230 = vmatprep.subr.bf16.mxu0 0
  %2231 = vmatpush2.bf16.msra.mxu0 0
  %2232 = vmatprep.subr.bf16.mxu0 0
  %2233 = vmatpush2.bf16.msra.mxu0 0
  %2234 = vmatprep.subr.bf16.mxu0 0
  %2235 = vmatpush2.bf16.msra.mxu0 0
  %2236 = vmatprep.subr.bf16.mxu0 0
  %2237 = vmatpush2.bf16.msra.mxu0 0
  %2238 = vmatprep.subr.bf16.mxu0 0
  %2239 = vmatpush2.bf16.msra.mxu0 0
  %2240 = vmatprep.subr.bf16.mxu0 0
  %2241 = vmatpush2.bf16.msra.mxu0 0
  %2242 = vmatprep.subr.bf16.mxu0 0
  %2243 = vmatpush2.bf16.msra.mxu0 0
  %2244 = vmatprep.subr.bf16.mxu0 0
  %2245 = vmatpush2.bf16.msra.mxu0 0
  %2246 = vmatprep.mubr.bf16.mxu0 0
  %2247 = vmatmul.mubr.bf16.gmra.mxu0 %v2209
  %v2248 = vpop.f32.mrf.mxu0
  %v2249 = vadd.f32 0.0, %v2248
  %v2250 = vpop.f32.mrf.mxu0
  %v2251 = vpop.f32.mrf.mxu0
  %v2252 = vpop.f32.mrf.mxu0
  %2253 = vdwg.mxu0
  %v2254 = vpack.c.bf16 %v2105, %v1671
  %v2255 = vpack.c.bf16 %v2153, %v1717
  %v2256 = vpack.c.bf16 %v2201, %v1763
  %v2257 = vpack.c.bf16 %v2249, %v1809
  %v2258 = vld [vmem:[%s6] sm:$0xf]
  %v2259 = vld [vmem:[%s6 + $0x4] sm:$0xf]
  %v2260 = vld [vmem:[%s6 + $0x8] sm:$0xf]
  %v2261 = vld [vmem:[%s6 + $0xc] sm:$0xf]
  %v2262 = vld [vmem:[%s6 + $0x10] sm:$0xf]
  %v2263 = vld [vmem:[%s6 + $0x14] sm:$0xf]
  %v2264 = vld [vmem:[%s6 + $0x18] sm:$0xf]
  %v2265 = vld [vmem:[%s6 + $0x1c] sm:$0xf]
  %v2268 = vunpack.c.l.b16 %v2258
  %v2269 = vunpack.c.l.b16 %v2259
  %v2270 = vpack.c.b16 %v2269, %v2268
  %v2273 = vsel %vm1395, %v2254, 0
  %2275 = vmatprep.subr.bf16.mxu0 0
  %2276 = vmatpush1.bf16.msra.mxu0 0
  %2277 = vmatprep.subr.bf16.mxu0 0
  %2278 = vmatpush1.bf16.msra.mxu0 0
  %2279 = vmatprep.subr.bf16.mxu0 0
  %2280 = vmatpush1.bf16.msra.mxu0 0
  %2281 = vmatprep.subr.bf16.mxu0 0
  %2282 = vmatpush1.bf16.msra.mxu0 0
  %2283 = vmatprep.subr.bf16.mxu0 0
  %2284 = vmatpush1.bf16.msra.mxu0 0
  %2285 = vmatprep.subr.bf16.mxu0 0
  %2286 = vmatpush1.bf16.msra.mxu0 0
  %2287 = vmatprep.subr.bf16.mxu0 0
  %2288 = vmatpush1.bf16.msra.mxu0 0
  %2289 = vmatprep.subr.bf16.mxu0 0
  %2290 = vmatpush1.bf16.msra.mxu0 %v2270
  %2291 = vmatprep.subr.bf16.mxu0 0
  %2292 = vmatpush2.bf16.msra.mxu0 0
  %2293 = vmatprep.subr.bf16.mxu0 0
  %2294 = vmatpush2.bf16.msra.mxu0 0
  %2295 = vmatprep.subr.bf16.mxu0 0
  %2296 = vmatpush2.bf16.msra.mxu0 0
  %2297 = vmatprep.subr.bf16.mxu0 0
  %2298 = vmatpush2.bf16.msra.mxu0 0
  %2299 = vmatprep.subr.bf16.mxu0 0
  %2300 = vmatpush2.bf16.msra.mxu0 0
  %2301 = vmatprep.subr.bf16.mxu0 0
  %2302 = vmatpush2.bf16.msra.mxu0 0
  %2303 = vmatprep.subr.bf16.mxu0 0
  %2304 = vmatpush2.bf16.msra.mxu0 0
  %2305 = vmatprep.subr.bf16.mxu0 0
  %2306 = vmatpush2.bf16.msra.mxu0 0
  %2307 = vmatprep.mubr.bf16.mxu0 0
  %2308 = vmatmul.mubr.bf16.gmra.mxu0 %v2273
  %v2309 = vpop.f32.mrf.mxu0
  %v2310 = vadd.f32 0.0, %v2309
  %v2311 = vpop.f32.mrf.mxu0
  %v2312 = vpop.f32.mrf.mxu0
  %v2313 = vadd.f32 0.0, %v2312
  %v2314 = vpop.f32.mrf.mxu0
  %2315 = vdwg.mxu0
  %v2318 = vunpack.c.l.b16 %v2260
  %v2319 = vunpack.c.l.b16 %v2261
  %v2320 = vpack.c.b16 %v2319, %v2318
  %v2323 = vsel %vm1395, %v2255, 0
  %2325 = vmatprep.subr.bf16.mxu0 0
  %2326 = vmatpush1.bf16.msra.mxu0 0
  %2327 = vmatprep.subr.bf16.mxu0 0
  %2328 = vmatpush1.bf16.msra.mxu0 0
  %2329 = vmatprep.subr.bf16.mxu0 0
  %2330 = vmatpush1.bf16.msra.mxu0 0
  %2331 = vmatprep.subr.bf16.mxu0 0
  %2332 = vmatpush1.bf16.msra.mxu0 0
  %2333 = vmatprep.subr.bf16.mxu0 0
  %2334 = vmatpush1.bf16.msra.mxu0 0
  %2335 = vmatprep.subr.bf16.mxu0 0
  %2336 = vmatpush1.bf16.msra.mxu0 0
  %2337 = vmatprep.subr.bf16.mxu0 0
  %2338 = vmatpush1.bf16.msra.mxu0 0
  %2339 = vmatprep.subr.bf16.mxu0 0
  %2340 = vmatpush1.bf16.msra.mxu0 %v2320
  %2341 = vmatprep.subr.bf16.mxu0 0
  %2342 = vmatpush2.bf16.msra.mxu0 0
  %2343 = vmatprep.subr.bf16.mxu0 0
  %2344 = vmatpush2.bf16.msra.mxu0 0
  %2345 = vmatprep.subr.bf16.mxu0 0
  %2346 = vmatpush2.bf16.msra.mxu0 0
  %2347 = vmatprep.subr.bf16.mxu0 0
  %2348 = vmatpush2.bf16.msra.mxu0 0
  %2349 = vmatprep.subr.bf16.mxu0 0
  %2350 = vmatpush2.bf16.msra.mxu0 0
  %2351 = vmatprep.subr.bf16.mxu0 0
  %2352 = vmatpush2.bf16.msra.mxu0 0
  %2353 = vmatprep.subr.bf16.mxu0 0
  %2354 = vmatpush2.bf16.msra.mxu0 0
  %2355 = vmatprep.subr.bf16.mxu0 0
  %2356 = vmatpush2.bf16.msra.mxu0 0
  %2357 = vmatprep.mubr.bf16.mxu0 0
  %2358 = vmatmul.mubr.bf16.gmra.mxu0 %v2323
  %v2359 = vpop.f32.mrf.mxu0
  %v2360 = vadd.f32 0.0, %v2359
  %v2361 = vpop.f32.mrf.mxu0
  %v2362 = vpop.f32.mrf.mxu0
  %v2363 = vadd.f32 0.0, %v2362
  %v2364 = vpop.f32.mrf.mxu0
  %2365 = vdwg.mxu0
  %v2368 = vunpack.c.l.b16 %v2262
  %v2369 = vunpack.c.l.b16 %v2263
  %v2370 = vpack.c.b16 %v2369, %v2368
  %v2373 = vsel %vm1395, %v2256, 0
  %2375 = vmatprep.subr.bf16.mxu0 0
  %2376 = vmatpush1.bf16.msra.mxu0 0
  %2377 = vmatprep.subr.bf16.mxu0 0
  %2378 = vmatpush1.bf16.msra.mxu0 0
  %2379 = vmatprep.subr.bf16.mxu0 0
  %2380 = vmatpush1.bf16.msra.mxu0 0
  %2381 = vmatprep.subr.bf16.mxu0 0
  %2382 = vmatpush1.bf16.msra.mxu0 0
  %2383 = vmatprep.subr.bf16.mxu0 0
  %2384 = vmatpush1.bf16.msra.mxu0 0
  %2385 = vmatprep.subr.bf16.mxu0 0
  %2386 = vmatpush1.bf16.msra.mxu0 0
  %2387 = vmatprep.subr.bf16.mxu0 0
  %2388 = vmatpush1.bf16.msra.mxu0 0
  %2389 = vmatprep.subr.bf16.mxu0 0
  %2390 = vmatpush1.bf16.msra.mxu0 %v2370
  %2391 = vmatprep.subr.bf16.mxu0 0
  %2392 = vmatpush2.bf16.msra.mxu0 0
  %2393 = vmatprep.subr.bf16.mxu0 0
  %2394 = vmatpush2.bf16.msra.mxu0 0
  %2395 = vmatprep.subr.bf16.mxu0 0
  %2396 = vmatpush2.bf16.msra.mxu0 0
  %2397 = vmatprep.subr.bf16.mxu0 0
  %2398 = vmatpush2.bf16.msra.mxu0 0
  %2399 = vmatprep.subr.bf16.mxu0 0
  %2400 = vmatpush2.bf16.msra.mxu0 0
  %2401 = vmatprep.subr.bf16.mxu0 0
  %2402 = vmatpush2.bf16.msra.mxu0 0
  %2403 = vmatprep.subr.bf16.mxu0 0
  %2404 = vmatpush2.bf16.msra.mxu0 0
  %2405 = vmatprep.subr.bf16.mxu0 0
  %2406 = vmatpush2.bf16.msra.mxu0 0
  %2407 = vmatprep.mubr.bf16.mxu0 0
  %2408 = vmatmul.mubr.bf16.gmra.mxu0 %v2373
  %v2409 = vpop.f32.mrf.mxu0
  %v2410 = vadd.f32 0.0, %v2409
  %v2411 = vpop.f32.mrf.mxu0
  %v2412 = vpop.f32.mrf.mxu0
  %v2413 = vadd.f32 0.0, %v2412
  %v2414 = vpop.f32.mrf.mxu0
  %2415 = vdwg.mxu0
  %v2418 = vunpack.c.l.b16 %v2264
  %v2419 = vunpack.c.l.b16 %v2265
  %v2420 = vpack.c.b16 %v2419, %v2418
  %v2423 = vsel %vm1395, %v2257, 0
  %2425 = vmatprep.subr.bf16.mxu0 0
  %2426 = vmatpush1.bf16.msra.mxu0 0
  %2427 = vmatprep.subr.bf16.mxu0 0
  %2428 = vmatpush1.bf16.msra.mxu0 0
  %2429 = vmatprep.subr.bf16.mxu0 0
  %2430 = vmatpush1.bf16.msra.mxu0 0
  %2431 = vmatprep.subr.bf16.mxu0 0
  %2432 = vmatpush1.bf16.msra.mxu0 0
  %2433 = vmatprep.subr.bf16.mxu0 0
  %2434 = vmatpush1.bf16.msra.mxu0 0
  %2435 = vmatprep.subr.bf16.mxu0 0
  %2436 = vmatpush1.bf16.msra.mxu0 0
  %2437 = vmatprep.subr.bf16.mxu0 0
  %2438 = vmatpush1.bf16.msra.mxu0 0
  %2439 = vmatprep.subr.bf16.mxu0 0
  %2440 = vmatpush1.bf16.msra.mxu0 %v2420
  %2441 = vmatprep.subr.bf16.mxu0 0
  %2442 = vmatpush2.bf16.msra.mxu0 0
  %2443 = vmatprep.subr.bf16.mxu0 0
  %2444 = vmatpush2.bf16.msra.mxu0 0
  %2445 = vmatprep.subr.bf16.mxu0 0
  %2446 = vmatpush2.bf16.msra.mxu0 0
  %2447 = vmatprep.subr.bf16.mxu0 0
  %2448 = vmatpush2.bf16.msra.mxu0 0
  %2449 = vmatprep.subr.bf16.mxu0 0
  %2450 = vmatpush2.bf16.msra.mxu0 0
  %2451 = vmatprep.subr.bf16.mxu0 0
  %2452 = vmatpush2.bf16.msra.mxu0 0
  %2453 = vmatprep.subr.bf16.mxu0 0
  %2454 = vmatpush2.bf16.msra.mxu0 0
  %2455 = vmatprep.subr.bf16.mxu0 0
  %2456 = vmatpush2.bf16.msra.mxu0 0
  %2457 = vmatprep.mubr.bf16.mxu0 0
  %2458 = vmatmul.mubr.bf16.gmra.mxu0 %v2423
  %v2459 = vpop.f32.mrf.mxu0
  %v2460 = vadd.f32 0.0, %v2459
  %v2461 = vpop.f32.mrf.mxu0
  %v2462 = vpop.f32.mrf.mxu0
  %v2463 = vadd.f32 0.0, %v2462
  %v2464 = vpop.f32.mrf.mxu0
  %2465 = vdwg.mxu0
  %v2466 = vadd.f32 %v2310, %v2360
  %v2467 = vadd.f32 %v2466, %v2410
  %v2468 = vadd.f32 %v2467, %v2460
  %v2469 = vadd.f32 %v2313, %v2363
  %v2470 = vadd.f32 %v2469, %v2413
  %v2471 = vadd.f32 %v2470, %v2463
  %v2472 = vld [vmem:[%s7] sm:$0x1]
  %v2473 = vmul.f32 %v2468, %v49
  %v2474 = vmul.f32 %v2471, %v49
  %2475 = vadd.xlane.f32.xlu0 %v2473
  %v2476 = vpop.xlane.xlu0 %2475
  %2477 = vadd.xlane.f32.xlu0 %v2474
  %v2478 = vpop.xlane.xlu0 %2477
  %v2479 = vmul.f32 %v2476, 0.03125
  %v2480 = vmul.f32 %v2478, 0.03125
  %v2481 = vsub.f32 %v2468, %v2479
  %v2482 = vsub.f32 %v2471, %v2480
  %v2483 = vmul.f32 %v2481, %v49
  %v2484 = vmul.f32 %v2482, %v49
  %v2485 = vmul.f32 %v2483, %v2483
  %v2486 = vmul.f32 %v2484, %v2484
  %2487 = vadd.xlane.f32.xlu0 %v2485
  %v2488 = vpop.xlane.xlu0 %2487
  %2489 = vadd.xlane.f32.xlu0 %v2486
  %v2490 = vpop.xlane.xlu0 %2489
  %v2491 = vmul.f32 %v2488, 0.03125
  %v2492 = vmul.f32 %v2490, 0.03125
  %v2493 = vadd.f32 %v2491, 1e-05
  %v2494 = vadd.f32 %v2492, 1e-05
  %v2495 = vrsqrt.pop %v2493
  %v2496 = vrsqrt.pop %v2494
  %v2497 = vmul.f32 %v2483, %v2495
  %v2498 = vmul.f32 %v2484, %v2496
  %v2500 = vlaneseq
  %v2501 = vshrl.u32 %v2500, 7
  %v2502 = vsub.s32 0, %v2501
  %v2503 = vrot.slane %v2472, %v2502
  %v2505 = vmul.f32 %v2497, %v2503
  %v2506 = vmul.f32 %v2498, %v2503
  %v2507 = vadd.f32 %v85, %v2505
  %v2508 = vadd.f32 %v86, %v2506
  %v2509 = vld [vmem:[%s8] sm:$0x1]
  %v2510 = vmul.f32 %v2507, %v49
  %v2511 = vmul.f32 %v2508, %v49
  %2512 = vadd.xlane.f32.xlu0 %v2510
  %v2513 = vpop.xlane.xlu0 %2512
  %2514 = vadd.xlane.f32.xlu0 %v2511
  %v2515 = vpop.xlane.xlu0 %2514
  %v2516 = vmul.f32 %v2513, 0.03125
  %v2517 = vmul.f32 %v2515, 0.03125
  %v2518 = vsub.f32 %v2507, %v2516
  %v2519 = vsub.f32 %v2508, %v2517
  %v2520 = vmul.f32 %v2518, %v49
  %v2521 = vmul.f32 %v2519, %v49
  %v2522 = vmul.f32 %v2520, %v2520
  %v2523 = vmul.f32 %v2521, %v2521
  %2524 = vadd.xlane.f32.xlu0 %v2522
  %v2525 = vpop.xlane.xlu0 %2524
  %2526 = vadd.xlane.f32.xlu0 %v2523
  %v2527 = vpop.xlane.xlu0 %2526
  %v2528 = vmul.f32 %v2525, 0.03125
  %v2529 = vmul.f32 %v2527, 0.03125
  %v2530 = vadd.f32 %v2528, 1e-05
  %v2531 = vadd.f32 %v2529, 1e-05
  %v2532 = vrsqrt.pop %v2530
  %v2533 = vrsqrt.pop %v2531
  %v2534 = vmul.f32 %v2520, %v2532
  %v2535 = vmul.f32 %v2521, %v2533
  %v2537 = vlaneseq
  %v2538 = vshrl.u32 %v2537, 7
  %v2539 = vsub.s32 0, %v2538
  %v2540 = vrot.slane %v2509, %v2539
  %v2542 = vmul.f32 %v2534, %v2540
  %v2543 = vmul.f32 %v2535, %v2540
  %v2544 = vpack.c.bf16 %v2543, %v2542
  %v2545 = vld [vmem:[%s9] sm:$0xff]
  %v2546 = vld [vmem:[%s9 + $0x8] sm:$0xff]
  %v2547 = vld [vmem:[%s9 + $0x10] sm:$0xff]
  %v2548 = vld [vmem:[%s9 + $0x18] sm:$0xff]
  %v2549 = vld [vmem:[%s9 + $0x20] sm:$0xff]
  %v2550 = vld [vmem:[%s9 + $0x28] sm:$0xff]
  %v2551 = vld [vmem:[%s9 + $0x30] sm:$0xff]
  %v2552 = vld [vmem:[%s9 + $0x38] sm:$0xff]
  %v2553 = vld [vmem:[%s9 + $0x40] sm:$0xff]
  %v2554 = vld [vmem:[%s9 + $0x48] sm:$0xff]
  %v2555 = vld [vmem:[%s9 + $0x50] sm:$0xff]
  %v2556 = vld [vmem:[%s9 + $0x58] sm:$0xff]
  %v2557 = vld [vmem:[%s9 + $0x60] sm:$0xff]
  %v2558 = vld [vmem:[%s9 + $0x68] sm:$0xff]
  %v2559 = vld [vmem:[%s9 + $0x70] sm:$0xff]
  %v2560 = vld [vmem:[%s9 + $0x78] sm:$0xff]
  %v2577 = vunpack.c.l.b16 %v2545
  %v2578 = vunpack.c.h.b16 %v2545
  %v2579 = vunpack.c.l.b16 %v2546
  %v2580 = vunpack.c.h.b16 %v2546
  %v2581 = vunpack.c.l.b16 %v2547
  %v2582 = vunpack.c.h.b16 %v2547
  %v2583 = vunpack.c.l.b16 %v2548
  %v2584 = vunpack.c.h.b16 %v2548
  %v2585 = vunpack.c.l.b16 %v2549
  %v2586 = vunpack.c.h.b16 %v2549
  %v2587 = vunpack.c.l.b16 %v2550
  %v2588 = vunpack.c.h.b16 %v2550
  %v2589 = vunpack.c.l.b16 %v2551
  %v2590 = vunpack.c.h.b16 %v2551
  %v2591 = vunpack.c.l.b16 %v2552
  %v2592 = vunpack.c.h.b16 %v2552
  %v2593 = vunpack.c.l.b16 %v2553
  %v2594 = vunpack.c.h.b16 %v2553
  %v2595 = vunpack.c.l.b16 %v2554
  %v2596 = vunpack.c.h.b16 %v2554
  %v2597 = vunpack.c.l.b16 %v2555
  %v2598 = vunpack.c.h.b16 %v2555
  %v2599 = vunpack.c.l.b16 %v2556
  %v2600 = vunpack.c.h.b16 %v2556
  %v2601 = vunpack.c.l.b16 %v2557
  %v2602 = vunpack.c.h.b16 %v2557
  %v2603 = vunpack.c.l.b16 %v2558
  %v2604 = vunpack.c.h.b16 %v2558
  %v2605 = vunpack.c.l.b16 %v2559
  %v2606 = vunpack.c.h.b16 %v2559
  %v2607 = vunpack.c.l.b16 %v2560
  %v2608 = vunpack.c.h.b16 %v2560
  %v2609 = vpack.c.b16 %v2579, %v2577
  %v2610 = vpack.c.b16 %v2580, %v2578
  %v2611 = vpack.c.b16 %v2583, %v2581
  %v2612 = vpack.c.b16 %v2584, %v2582
  %v2613 = vpack.c.b16 %v2587, %v2585
  %v2614 = vpack.c.b16 %v2588, %v2586
  %v2615 = vpack.c.b16 %v2591, %v2589
  %v2616 = vpack.c.b16 %v2592, %v2590
  %v2617 = vpack.c.b16 %v2595, %v2593
  %v2618 = vpack.c.b16 %v2596, %v2594
  %v2619 = vpack.c.b16 %v2599, %v2597
  %v2620 = vpack.c.b16 %v2600, %v2598
  %v2621 = vpack.c.b16 %v2603, %v2601
  %v2622 = vpack.c.b16 %v2604, %v2602
  %v2623 = vpack.c.b16 %v2607, %v2605
  %v2624 = vpack.c.b16 %v2608, %v2606
  %2641 = vmatprep.subr.bf16.mxu0 %v2624
  %2642 = vmatpush1.bf16.msra.mxu0 %v2623
  %2643 = vmatprep.subr.bf16.mxu0 %v2622
  %2644 = vmatpush1.bf16.msra.mxu0 %v2621
  %2645 = vmatprep.subr.bf16.mxu0 %v2620
  %2646 = vmatpush1.bf16.msra.mxu0 %v2619
  %2647 = vmatprep.subr.bf16.mxu0 %v2618
  %2648 = vmatpush1.bf16.msra.mxu0 %v2617
  %2649 = vmatprep.subr.bf16.mxu0 %v2616
  %2650 = vmatpush1.bf16.msra.mxu0 %v2615
  %2651 = vmatprep.subr.bf16.mxu0 %v2614
  %2652 = vmatpush1.bf16.msra.mxu0 %v2613
  %2653 = vmatprep.subr.bf16.mxu0 %v2612
  %2654 = vmatpush1.bf16.msra.mxu0 %v2611
  %2655 = vmatprep.subr.bf16.mxu0 %v2610
  %2656 = vmatpush1.bf16.msra.mxu0 %v2609
  %2657 = vmatprep.subr.bf16.mxu0 0
  %2658 = vmatpush2.bf16.msra.mxu0 0
  %2659 = vmatprep.subr.bf16.mxu0 0
  %2660 = vmatpush2.bf16.msra.mxu0 0
  %2661 = vmatprep.subr.bf16.mxu0 0
  %2662 = vmatpush2.bf16.msra.mxu0 0
  %2663 = vmatprep.subr.bf16.mxu0 0
  %2664 = vmatpush2.bf16.msra.mxu0 0
  %2665 = vmatprep.subr.bf16.mxu0 0
  %2666 = vmatpush2.bf16.msra.mxu0 0
  %2667 = vmatprep.subr.bf16.mxu0 0
  %2668 = vmatpush2.bf16.msra.mxu0 0
  %2669 = vmatprep.subr.bf16.mxu0 0
  %2670 = vmatpush2.bf16.msra.mxu0 0
  %2671 = vmatprep.subr.bf16.mxu0 0
  %2672 = vmatpush2.bf16.msra.mxu0 0
  %2673 = vmatprep.mubr.bf16.mxu0 0
  %2674 = vmatmul.mubr.bf16.gmra.mxu0 %v2544
  %v2675 = vpop.f32.mrf.mxu0
  %v2676 = vadd.f32 0.0, %v2675
  %v2677 = vpop.f32.mrf.mxu0
  %v2678 = vadd.f32 0.0, %v2677
  %v2679 = vpop.f32.mrf.mxu0
  %v2680 = vadd.f32 0.0, %v2679
  %v2681 = vpop.f32.mrf.mxu0
  %v2682 = vadd.f32 0.0, %v2681
  %2683 = vdwg.mxu0
  %v2684 = vmul.f32 %v2678, 0.5
  %v2685 = vmul.f32 %v2682, 0.5
  %v2686 = vmul.f32 %v2678, 0.70710677
  %v2687 = vmul.f32 %v2682, 0.70710677
  %vm2688 = vcmp.ge.f32.partialorder %v2686, 0.0
  %vm2689 = vcmp.ge.f32.partialorder %v2687, 0.0
  %v2690 = vsel %vm2688, 1.0, -1.0
  %v2691 = vsel %vm2689, 1.0, -1.0
  %v2692 = vand.u32 2147483647, %v2686
  %v2693 = vand.u32 2147483647, %v2687
  %v2694 = vmul.f32 %v2692, 0.3275911
  %v2695 = vmul.f32 %v2693, 0.3275911
  %v2696 = vadd.f32 %v2694, 1.0
  %v2697 = vadd.f32 %v2695, 1.0
  %v2698 = vrcp.pop %v2696
  %v2699 = vmul.f32 1.0, %v2698
  %v2700 = vrcp.pop %v2697
  %v2701 = vmul.f32 1.0, %v2700
  %v2702 = vmul.f32 %v2699, 1.0614054
  %v2703 = vmul.f32 %v2701, 1.0614054
  %v2704 = vadd.f32 %v2702, -1.4531521
  %v2705 = vadd.f32 %v2703, -1.4531521
  %v2706 = vmul.f32 %v2704, %v2699
  %v2707 = vmul.f32 %v2705, %v2701
  %v2708 = vadd.f32 %v2706, 1.4214138
  %v2709 = vadd.f32 %v2707, 1.4214138
  %v2710 = vmul.f32 %v2708, %v2699
  %v2711 = vmul.f32 %v2709, %v2701
  %v2712 = vadd.f32 %v2710, -0.28449672
  %v2713 = vadd.f32 %v2711, -0.28449672
  %v2714 = vmul.f32 %v2712, %v2699
  %v2715 = vmul.f32 %v2713, %v2701
  %v2716 = vadd.f32 %v2714, 0.2548296
  %v2717 = vadd.f32 %v2715, 0.2548296
  %v2718 = vmul.f32 %v2716, %v2699
  %v2719 = vmul.f32 %v2717, %v2701
  %v2720 = vsub.f32 0.0, %v2692
  %v2721 = vsub.f32 0.0, %v2693
  %v2722 = vmul.f32 %v2720, %v2692
  %v2723 = vmul.f32 %v2721, %v2693
  %v2724 = vmul.f32 %v2722, 1.442695
  %v2725 = vpow.pop %v2724
  %v2726 = vmul.f32 %v2723, 1.442695
  %v2727 = vpow.pop %v2726
  %v2728 = vmul.f32 %v2718, %v2725
  %v2729 = vmul.f32 %v2719, %v2727
  %v2730 = vsub.f32 1.0, %v2728
  %v2731 = vsub.f32 1.0, %v2729
  %v2732 = vmul.f32 %v2690, %v2730
  %v2733 = vmul.f32 %v2691, %v2731
  %v2734 = vadd.f32 %v2732, 1.0
  %v2735 = vadd.f32 %v2733, 1.0
  %v2736 = vmul.f32 %v2684, %v2734
  %v2737 = vmul.f32 %v2685, %v2735
  %v2738 = vmul.f32 %v2676, %v2736
  %v2739 = vmul.f32 %v2680, %v2737
  %v2740 = vld [vmem:[%s10] sm:$0x1]
  %2741 = vadd.xlane.f32.xlu0 %v2738
  %v2742 = vpop.xlane.xlu0 %2741
  %2743 = vadd.xlane.f32.xlu0 %v2739
  %v2744 = vpop.xlane.xlu0 %2743
  %v2745 = vrcp.pop 128.0
  %v2746 = vmul.f32 %v2742, %v2745
  %v2747 = vmul.f32 %v2744, %v2745
  %v2748 = vsub.f32 %v2738, %v2746
  %v2749 = vsub.f32 %v2739, %v2747
  %v2750 = vmul.f32 %v2748, %v2748
  %v2751 = vmul.f32 %v2749, %v2749
  %2752 = vadd.xlane.f32.xlu0 %v2750
  %v2753 = vpop.xlane.xlu0 %2752
  %2754 = vadd.xlane.f32.xlu0 %v2751
  %v2755 = vpop.xlane.xlu0 %2754
  %v2756 = vmul.f32 %v2753, %v2745
  %v2757 = vmul.f32 %v2755, %v2745
  %v2758 = vadd.f32 %v2756, 1e-05
  %v2759 = vadd.f32 %v2757, 1e-05
  %v2760 = vrsqrt.pop %v2758
  %v2761 = vrsqrt.pop %v2759
  %v2762 = vmul.f32 %v2748, %v2760
  %v2763 = vmul.f32 %v2749, %v2761
  %v2765 = vlaneseq
  %v2766 = vshrl.u32 %v2765, 7
  %v2767 = vsub.s32 0, %v2766
  %v2768 = vrot.slane %v2740, %v2767
  %v2770 = vmul.f32 %v2762, %v2768
  %v2771 = vmul.f32 %v2763, %v2768
  %v2772 = vpack.c.bf16 %v2771, %v2770
  %v2773 = vld [vmem:[%s11] sm:$0xf]
  %v2774 = vld [vmem:[%s11 + $0x4] sm:$0xf]
  %v2775 = vld [vmem:[%s11 + $0x8] sm:$0xf]
  %v2776 = vld [vmem:[%s11 + $0xc] sm:$0xf]
  %v2777 = vld [vmem:[%s11 + $0x10] sm:$0xf]
  %v2778 = vld [vmem:[%s11 + $0x14] sm:$0xf]
  %v2779 = vld [vmem:[%s11 + $0x18] sm:$0xf]
  %v2780 = vld [vmem:[%s11 + $0x1c] sm:$0xf]
  %v2781 = vld [vmem:[%s11 + $0x20] sm:$0xf]
  %v2782 = vld [vmem:[%s11 + $0x24] sm:$0xf]
  %v2783 = vld [vmem:[%s11 + $0x28] sm:$0xf]
  %v2784 = vld [vmem:[%s11 + $0x2c] sm:$0xf]
  %v2785 = vld [vmem:[%s11 + $0x30] sm:$0xf]
  %v2786 = vld [vmem:[%s11 + $0x34] sm:$0xf]
  %v2787 = vld [vmem:[%s11 + $0x38] sm:$0xf]
  %v2788 = vld [vmem:[%s11 + $0x3c] sm:$0xf]
  %v2805 = vunpack.c.l.b16 %v2773
  %v2806 = vunpack.c.l.b16 %v2774
  %v2807 = vunpack.c.l.b16 %v2775
  %v2808 = vunpack.c.l.b16 %v2776
  %v2809 = vunpack.c.l.b16 %v2777
  %v2810 = vunpack.c.l.b16 %v2778
  %v2811 = vunpack.c.l.b16 %v2779
  %v2812 = vunpack.c.l.b16 %v2780
  %v2813 = vunpack.c.l.b16 %v2781
  %v2814 = vunpack.c.l.b16 %v2782
  %v2815 = vunpack.c.l.b16 %v2783
  %v2816 = vunpack.c.l.b16 %v2784
  %v2817 = vunpack.c.l.b16 %v2785
  %v2818 = vunpack.c.l.b16 %v2786
  %v2819 = vunpack.c.l.b16 %v2787
  %v2820 = vunpack.c.l.b16 %v2788
  %v2821 = vpack.c.b16 %v2806, %v2805
  %v2822 = vpack.c.b16 %v2808, %v2807
  %v2823 = vpack.c.b16 %v2810, %v2809
  %v2824 = vpack.c.b16 %v2812, %v2811
  %v2825 = vpack.c.b16 %v2814, %v2813
  %v2826 = vpack.c.b16 %v2816, %v2815
  %v2827 = vpack.c.b16 %v2818, %v2817
  %v2828 = vpack.c.b16 %v2820, %v2819
  %2837 = vmatprep.subr.bf16.mxu0 0
  %2838 = vmatpush1.bf16.msra.mxu0 %v2828
  %2839 = vmatprep.subr.bf16.mxu0 0
  %2840 = vmatpush1.bf16.msra.mxu0 %v2827
  %2841 = vmatprep.subr.bf16.mxu0 0
  %2842 = vmatpush1.bf16.msra.mxu0 %v2826
  %2843 = vmatprep.subr.bf16.mxu0 0
  %2844 = vmatpush1.bf16.msra.mxu0 %v2825
  %2845 = vmatprep.subr.bf16.mxu0 0
  %2846 = vmatpush1.bf16.msra.mxu0 %v2824
  %2847 = vmatprep.subr.bf16.mxu0 0
  %2848 = vmatpush1.bf16.msra.mxu0 %v2823
  %2849 = vmatprep.subr.bf16.mxu0 0
  %2850 = vmatpush1.bf16.msra.mxu0 %v2822
  %2851 = vmatprep.subr.bf16.mxu0 0
  %2852 = vmatpush1.bf16.msra.mxu0 %v2821
  %2853 = vmatprep.subr.bf16.mxu0 0
  %2854 = vmatpush2.bf16.msra.mxu0 0
  %2855 = vmatprep.subr.bf16.mxu0 0
  %2856 = vmatpush2.bf16.msra.mxu0 0
  %2857 = vmatprep.subr.bf16.mxu0 0
  %2858 = vmatpush2.bf16.msra.mxu0 0
  %2859 = vmatprep.subr.bf16.mxu0 0
  %2860 = vmatpush2.bf16.msra.mxu0 0
  %2861 = vmatprep.subr.bf16.mxu0 0
  %2862 = vmatpush2.bf16.msra.mxu0 0
  %2863 = vmatprep.subr.bf16.mxu0 0
  %2864 = vmatpush2.bf16.msra.mxu0 0
  %2865 = vmatprep.subr.bf16.mxu0 0
  %2866 = vmatpush2.bf16.msra.mxu0 0
  %2867 = vmatprep.subr.bf16.mxu0 0
  %2868 = vmatpush2.bf16.msra.mxu0 0
  %2869 = vmatprep.mubr.bf16.mxu0 0
  %2870 = vmatmul.mubr.bf16.gmra.mxu0 %v2772
  %v2871 = vpop.f32.mrf.mxu0
  %v2872 = vadd.f32 0.0, %v2871
  %v2873 = vpop.f32.mrf.mxu0
  %v2874 = vpop.f32.mrf.mxu0
  %v2875 = vadd.f32 0.0, %v2874
  %v2876 = vpop.f32.mrf.mxu0
  %2877 = vdwg.mxu0
  %v2878 = vadd.f32 %v2507, %v2872
  %v2879 = vadd.f32 %v2508, %v2875
  %2880 = vst [vmem:[%s13] sm:$0xff] %v2878
  %2881 = vst [vmem:[%s13 + $0x8] sm:$0xff] %v2879
  // Predicated region
  $region54: #{text_transformer_forward.2} parent=0 // pred_check
    _
  $region55: #{text_transformer_forward.2} parent=0 // pred_check_branch
    %2883 = sbr.rel (0) target = $region57
  $region56: #{text_transformer_forward.2} parent=0 // pred_region
    _
  $region57: #{text_transformer_forward.2} parent=0 // pred_fallthru
    _
  // Predicated region
  $region58: #{text_transformer_forward.2} parent=0 // pred_check
    _
  $region59: #{text_transformer_forward.2} parent=0 // pred_check_branch
    %2885 = sbr.rel (0) target = $region61
  $region60: #{text_transformer_forward.2} parent=0 // pred_region
    _
  $region61: #{text_transformer_forward.2} parent=0 // pred_fallthru
    _

// kernel: text_transformer_forward.3
$region0: #{text_transformer_forward.3}
  #allocation0 [shape = 'u32[]', space=smem, size = 0x4, offset = 0x4, fixed_abs, tag = 'smem constant byte address 0x4 - core index']
  #allocation1 [shape = 'u32[144,128]{1,0:T(1,128)}', space=vmem, size = 0x12000, scoped, tag = 'internal scratch']
  %s0 = inlined_call_operand.vmem [shape: f32[2,8,128], index: 0, kind: input, shape index: {}]
  %s1 = inlined_call_operand.vmem [shape: f32[1,128], index: 1, kind: input, shape index: {}]
  %s2 = inlined_call_operand.vmem [shape: f32[1,128], index: 2, kind: input, shape index: {}]
  %s3 = inlined_call_operand.vmem [shape: bf16[4,128,16], index: 3, kind: input, shape index: {}]
  %s4 = inlined_call_operand.vmem [shape: bf16[4,128,16], index: 4, kind: input, shape index: {}]
  %s5 = inlined_call_operand.vmem [shape: bf16[4,128,16], index: 5, kind: input, shape index: {}]
  %s6 = inlined_call_operand.vmem [shape: bf16[4,16,128], index: 6, kind: input, shape index: {}]
  %s7 = inlined_call_operand.vmem [shape: f32[1,128], index: 7, kind: input, shape index: {}]
  %s8 = inlined_call_operand.vmem [shape: f32[1,128], index: 8, kind: input, shape index: {}]
  %s9 = inlined_call_operand.vmem [shape: bf16[128,256], index: 9, kind: input, shape index: {}]
  %s10 = inlined_call_operand.vmem [shape: f32[1,128], index: 10, kind: input, shape index: {}]
  %s11 = inlined_call_operand.vmem [shape: bf16[128,128], index: 11, kind: input, shape index: {}]
  %s12 = inlined_call_operand.vmem [shape: f32[1,128], index: 12, kind: input, shape index: {}]
  %s13 = inlined_call_operand.hbm [shape: f32[2,8,128], index: 13, kind: output, shape index: {}]
  %s14 = sld [smem:[#allocation0]]
  $region62: #{text_transformer_forward.3} parent=0
    _
  %s16 = ssub.s32 1, %s14
  %s17 = scalar_select 0, %s16, %s14
  $region1: #{text_transformer_forward.3} parent=0
    #allocation2 [shape = 'u8[8192]{0}', space=vmem, size = 0x2000, scoped, tag = 'output window, operand 0, single buffered']
    #allocation3 [shape = 's32[1]{0}', space=sflag, size = 0x4, scoped, tag = 'scoped memory for text_transformer_forward.3']
    %18 = vsyncpa [#allocation3], 0
    // Predicated region
    $region2: #{text_transformer_forward.3} parent=1 // pred_check
      _
    $region3: #{text_transformer_forward.3} parent=1 // pred_check_branch
      %20 = sbr.rel (0) target = $region5
    $region4: #{text_transformer_forward.3} parent=1 // pred_region
      _
    $region5: #{text_transformer_forward.3} parent=1 // pred_fallthru
      _
    // Predicated region
    $region6: #{text_transformer_forward.3} parent=1 // pred_check
      _
    $region7: #{text_transformer_forward.3} parent=1 // pred_check_branch
      %22 = sbr.rel (0) target = $region9
    $region8: #{text_transformer_forward.3} parent=1 // pred_region
      _
    $region9: #{text_transformer_forward.3} parent=1 // pred_fallthru
      _
    // Predicated region
    $region10: #{text_transformer_forward.3} parent=1 // pred_check
      _
    $region11: #{text_transformer_forward.3} parent=1 // pred_check_branch
      %24 = sbr.rel (0) target = $region13
    $region12: #{text_transformer_forward.3} parent=1 // pred_region
      _
    $region13: #{text_transformer_forward.3} parent=1 // pred_fallthru
      _
    // Predicated region
    $region14: #{text_transformer_forward.3} parent=1 // pred_check
      _
    $region15: #{text_transformer_forward.3} parent=1 // pred_check_branch
      %26 = sbr.rel (0) target = $region17
    $region16: #{text_transformer_forward.3} parent=1 // pred_region
      _
    $region17: #{text_transformer_forward.3} parent=1 // pred_fallthru
      _
    // Predicated region
    $region18: #{text_transformer_forward.3} parent=1 // pred_check
      _
    $region19: #{text_transformer_forward.3} parent=1 // pred_check_branch
      %28 = sbr.rel (0) target = $region21
    $region20: #{text_transformer_forward.3} parent=1 // pred_region
      _
    $region21: #{text_transformer_forward.3} parent=1 // pred_fallthru
      _
    // Predicated region
    $region22: #{text_transformer_forward.3} parent=1 // pred_check
      _
    $region23: #{text_transformer_forward.3} parent=1 // pred_check_branch
      %30 = sbr.rel (0) target = $region25
    $region24: #{text_transformer_forward.3} parent=1 // pred_region
      _
    $region25: #{text_transformer_forward.3} parent=1 // pred_fallthru
      _
    // Predicated region
    $region26: #{text_transformer_forward.3} parent=1 // pred_check
      _
    $region27: #{text_transformer_forward.3} parent=1 // pred_check_branch
      %32 = sbr.rel (0) target = $region29
    $region28: #{text_transformer_forward.3} parent=1 // pred_region
      _
    $region29: #{text_transformer_forward.3} parent=1 // pred_fallthru
      _
    // Predicated region
    $region30: #{text_transformer_forward.3} parent=1 // pred_check
      _
    $region31: #{text_transformer_forward.3} parent=1 // pred_check_branch
      %34 = sbr.rel (0) target = $region33
    $region32: #{text_transformer_forward.3} parent=1 // pred_region
      _
    $region33: #{text_transformer_forward.3} parent=1 // pred_fallthru
      _
    // Predicated region
    $region34: #{text_transformer_forward.3} parent=1 // pred_check
      _
    $region35: #{text_transformer_forward.3} parent=1 // pred_check_branch
      %36 = sbr.rel (0) target = $region37
    $region36: #{text_transformer_forward.3} parent=1 // pred_region
      _
    $region37: #{text_transformer_forward.3} parent=1 // pred_fallthru
      _
    // Predicated region
    $region38: #{text_transformer_forward.3} parent=1 // pred_check
      _
    $region39: #{text_transformer_forward.3} parent=1 // pred_check_branch
      %38 = sbr.rel (0) target = $region41
    $region40: #{text_transformer_forward.3} parent=1 // pred_region
      _
    $region41: #{text_transformer_forward.3} parent=1 // pred_fallthru
      _
    // Predicated region
    $region42: #{text_transformer_forward.3} parent=1 // pred_check
      _
    $region43: #{text_transformer_forward.3} parent=1 // pred_check_branch
      %40 = sbr.rel (0) target = $region45
    $region44: #{text_transformer_forward.3} parent=1 // pred_region
      _
    $region45: #{text_transformer_forward.3} parent=1 // pred_fallthru
      _
    // Predicated region
    $region46: #{text_transformer_forward.3} parent=1 // pred_check
      _
    $region47: #{text_transformer_forward.3} parent=1 // pred_check_branch
      %42 = sbr.rel (0) target = $region49
    $region48: #{text_transformer_forward.3} parent=1 // pred_region
      _
    $region49: #{text_transformer_forward.3} parent=1 // pred_fallthru
      _
    // Predicated region
    $region50: #{text_transformer_forward.3} parent=1 // pred_check
      _
    $region51: #{text_transformer_forward.3} parent=1 // pred_check_branch
      %44 = sbr.rel (0) target = $region53
    $region52: #{text_transformer_forward.3} parent=1 // pred_region
      _
    $region53: #{text_transformer_forward.3} parent=1 // pred_fallthru
      _
    %v46 = vlaneseq
    %v47 = vand.u32 %v46, 127
    %vm48 = vcmp.lt.s32.totalorder %v47, 32
    %v49 = vsel %vm48, 1, 0
    %v50 = vcvt.s32.f32 %v49
    %v51 = vld [vmem:[%s0] sm:$0xff]
    %v52 = vld [vmem:[%s0 + $0x8] sm:$0xff]
    %v53 = vld [vmem:[%s2] sm:$0x1]
    %v54 = vmul.f32 %v51, %v50
    %v55 = vmul.f32 %v52, %v50
    %56 = vadd.xlane.f32.xlu0 %v54
    %v57 = vpop.xlane.xlu0 %56
    %58 = vadd.xlane.f32.xlu0 %v55
    %v59 = vpop.xlane.xlu0 %58
    %v60 = vmul.f32 %v57, 0.03125
    %v61 = vmul.f32 %v59, 0.03125
    %v62 = vsub.f32 %v51, %v60
    %v63 = vsub.f32 %v52, %v61
    %v64 = vmul.f32 %v62, %v50
    %v65 = vmul.f32 %v63, %v50
    %v66 = vmul.f32 %v64, %v64
    %v67 = vmul.f32 %v65, %v65
    %68 = vadd.xlane.f32.xlu0 %v66
    %v69 = vpop.xlane.xlu0 %68
    %70 = vadd.xlane.f32.xlu0 %v67
    %v71 = vpop.xlane.xlu0 %70
    %v72 = vmul.f32 %v69, 0.03125
    %v73 = vmul.f32 %v71, 0.03125
    %v74 = vadd.f32 %v72, 1e-05
    %v75 = vadd.f32 %v73, 1e-05
    %v76 = vrsqrt.pop %v74
    %v77 = vrsqrt.pop %v75
    %v78 = vmul.f32 %v64, %v76
    %v79 = vmul.f32 %v65, %v77
    %v81 = vlaneseq
    %v82 = vshrl.u32 %v81, 7
    %v83 = vsub.s32 0, %v82
    %v84 = vrot.slane %v53, %v83
    %v86 = vmul.f32 %v78, %v84
    %v87 = vmul.f32 %v79, %v84
    %v88 = vpack.c.bf16 %v87, %v86
    %v89 = vld [vmem:[%s3] sm:$0xf]
    %v90 = vld [vmem:[%s3 + $0x4] sm:$0xf]
    %v91 = vld [vmem:[%s3 + $0x8] sm:$0xf]
    %v92 = vld [vmem:[%s3 + $0xc] sm:$0xf]
    %v93 = vld [vmem:[%s3 + $0x10] sm:$0xf]
    %v94 = vld [vmem:[%s3 + $0x14] sm:$0xf]
    %v95 = vld [vmem:[%s3 + $0x18] sm:$0xf]
    %v96 = vld [vmem:[%s3 + $0x1c] sm:$0xf]
    %v97 = vld [vmem:[%s3 + $0x20] sm:$0xf]
    %v98 = vld [vmem:[%s3 + $0x24] sm:$0xf]
    %v99 = vld [vmem:[%s3 + $0x28] sm:$0xf]
    %v100 = vld [vmem:[%s3 + $0x2c] sm:$0xf]
    %v101 = vld [vmem:[%s3 + $0x30] sm:$0xf]
    %v102 = vld [vmem:[%s3 + $0x34] sm:$0xf]
    %v103 = vld [vmem:[%s3 + $0x38] sm:$0xf]
    %v104 = vld [vmem:[%s3 + $0x3c] sm:$0xf]
    %v105 = vld [vmem:[%s3 + $0x40] sm:$0xf]
    %v106 = vld [vmem:[%s3 + $0x44] sm:$0xf]
    %v107 = vld [vmem:[%s3 + $0x48] sm:$0xf]
    %v108 = vld [vmem:[%s3 + $0x4c] sm:$0xf]
    %v109 = vld [vmem:[%s3 + $0x50] sm:$0xf]
    %v110 = vld [vmem:[%s3 + $0x54] sm:$0xf]
    %v111 = vld [vmem:[%s3 + $0x58] sm:$0xf]
    %v112 = vld [vmem:[%s3 + $0x5c] sm:$0xf]
    %v113 = vld [vmem:[%s3 + $0x60] sm:$0xf]
    %v114 = vld [vmem:[%s3 + $0x64] sm:$0xf]
    %v115 = vld [vmem:[%s3 + $0x68] sm:$0xf]
    %v116 = vld [vmem:[%s3 + $0x6c] sm:$0xf]
    %v117 = vld [vmem:[%s3 + $0x70] sm:$0xf]
    %v118 = vld [vmem:[%s3 + $0x74] sm:$0xf]
    %v119 = vld [vmem:[%s3 + $0x78] sm:$0xf]
    %v120 = vld [vmem:[%s3 + $0x7c] sm:$0xf]
    %v121 = vld [vmem:[%s3 + $0x80] sm:$0xf]
    %v122 = vld [vmem:[%s3 + $0x84] sm:$0xf]
    %v123 = vld [vmem:[%s3 + $0x88] sm:$0xf]
    %v124 = vld [vmem:[%s3 + $0x8c] sm:$0xf]
    %v125 = vld [vmem:[%s3 + $0x90] sm:$0xf]
    %v126 = vld [vmem:[%s3 + $0x94] sm:$0xf]
    %v127 = vld [vmem:[%s3 + $0x98] sm:$0xf]
    %v128 = vld [vmem:[%s3 + $0x9c] sm:$0xf]
    %v129 = vld [vmem:[%s3 + $0xa0] sm:$0xf]
    %v130 = vld [vmem:[%s3 + $0xa4] sm:$0xf]
    %v131 = vld [vmem:[%s3 + $0xa8] sm:$0xf]
    %v132 = vld [vmem:[%s3 + $0xac] sm:$0xf]
    %v133 = vld [vmem:[%s3 + $0xb0] sm:$0xf]
    %v134 = vld [vmem:[%s3 + $0xb4] sm:$0xf]
    %v135 = vld [vmem:[%s3 + $0xb8] sm:$0xf]
    %v136 = vld [vmem:[%s3 + $0xbc] sm:$0xf]
    %v137 = vld [vmem:[%s3 + $0xc0] sm:$0xf]
    %v138 = vld [vmem:[%s3 + $0xc4] sm:$0xf]
    %v139 = vld [vmem:[%s3 + $0xc8] sm:$0xf]
    %v140 = vld [vmem:[%s3 + $0xcc] sm:$0xf]
    %v141 = vld [vmem:[%s3 + $0xd0] sm:$0xf]
    %v142 = vld [vmem:[%s3 + $0xd4] sm:$0xf]
    %v143 = vld [vmem:[%s3 + $0xd8] sm:$0xf]
    %v144 = vld [vmem:[%s3 + $0xdc] sm:$0xf]
    %v145 = vld [vmem:[%s3 + $0xe0] sm:$0xf]
    %v146 = vld [vmem:[%s3 + $0xe4] sm:$0xf]
    %v147 = vld [vmem:[%s3 + $0xe8] sm:$0xf]
    %v148 = vld [vmem:[%s3 + $0xec] sm:$0xf]
    %v149 = vld [vmem:[%s3 + $0xf0] sm:$0xf]
    %v150 = vld [vmem:[%s3 + $0xf4] sm:$0xf]
    %v151 = vld [vmem:[%s3 + $0xf8] sm:$0xf]
    %v152 = vld [vmem:[%s3 + $0xfc] sm:$0xf]
    %v169 = vunpack.c.l.b16 %v89
    %v170 = vunpack.c.l.b16 %v90
    %v171 = vunpack.c.l.b16 %v91
    %v172 = vunpack.c.l.b16 %v92
    %v173 = vunpack.c.l.b16 %v93
    %v174 = vunpack.c.l.b16 %v94
    %v175 = vunpack.c.l.b16 %v95
    %v176 = vunpack.c.l.b16 %v96
    %v177 = vunpack.c.l.b16 %v97
    %v178 = vunpack.c.l.b16 %v98
    %v179 = vunpack.c.l.b16 %v99
    %v180 = vunpack.c.l.b16 %v100
    %v181 = vunpack.c.l.b16 %v101
    %v182 = vunpack.c.l.b16 %v102
    %v183 = vunpack.c.l.b16 %v103
    %v184 = vunpack.c.l.b16 %v104
    %v185 = vpack.c.b16 %v170, %v169
    %v186 = vpack.c.b16 %v172, %v171
    %v187 = vpack.c.b16 %v174, %v173
    %v188 = vpack.c.b16 %v176, %v175
    %v189 = vpack.c.b16 %v178, %v177
    %v190 = vpack.c.b16 %v180, %v179
    %v191 = vpack.c.b16 %v182, %v181
    %v192 = vpack.c.b16 %v184, %v183
    %201 = vmatprep.subr.bf16.mxu0 0
    %202 = vmatpush1.bf16.msra.mxu0 %v192
    %203 = vmatprep.subr.bf16.mxu0 0
    %204 = vmatpush1.bf16.msra.mxu0 %v191
    %205 = vmatprep.subr.bf16.mxu0 0
    %206 = vmatpush1.bf16.msra.mxu0 %v190
    %207 = vmatprep.subr.bf16.mxu0 0
    %208 = vmatpush1.bf16.msra.mxu0 %v189
    %209 = vmatprep.subr.bf16.mxu0 0
    %210 = vmatpush1.bf16.msra.mxu0 %v188
    %211 = vmatprep.subr.bf16.mxu0 0
    %212 = vmatpush1.bf16.msra.mxu0 %v187
    %213 = vmatprep.subr.bf16.mxu0 0
    %214 = vmatpush1.bf16.msra.mxu0 %v186
    %215 = vmatprep.subr.bf16.mxu0 0
    %216 = vmatpush1.bf16.msra.mxu0 %v185
    %217 = vmatprep.subr.bf16.mxu0 0
    %218 = vmatpush2.bf16.msra.mxu0 0
    %219 = vmatprep.subr.bf16.mxu0 0
    %220 = vmatpush2.bf16.msra.mxu0 0
    %221 = vmatprep.subr.bf16.mxu0 0
    %222 = vmatpush2.bf16.msra.mxu0 0
    %223 = vmatprep.subr.bf16.mxu0 0
    %224 = vmatpush2.bf16.msra.mxu0 0
    %225 = vmatprep.subr.bf16.mxu0 0
    %226 = vmatpush2.bf16.msra.mxu0 0
    %227 = vmatprep.subr.bf16.mxu0 0
    %228 = vmatpush2.bf16.msra.mxu0 0
    %229 = vmatprep.subr.bf16.mxu0 0
    %230 = vmatpush2.bf16.msra.mxu0 0
    %231 = vmatprep.subr.bf16.mxu0 0
    %232 = vmatpush2.bf16.msra.mxu0 0
    %233 = vmatprep.mubr.bf16.mxu0 0
    %234 = vmatmul.mubr.bf16.gmra.mxu0 %v88
    %v235 = vpop.f32.mrf.mxu0
    %v236 = vadd.f32 0.0, %v235
    %v237 = vpop.f32.mrf.mxu0
    %v238 = vpop.f32.mrf.mxu0
    %v239 = vadd.f32 0.0, %v238
    %v240 = vpop.f32.mrf.mxu0
    %241 = vdwg.mxu0
    %v258 = vunpack.c.l.b16 %v105
    %v259 = vunpack.c.l.b16 %v106
    %v260 = vunpack.c.l.b16 %v107
    %v261 = vunpack.c.l.b16 %v108
    %v262 = vunpack.c.l.b16 %v109
    %v263 = vunpack.c.l.b16 %v110
    %v264 = vunpack.c.l.b16 %v111
    %v265 = vunpack.c.l.b16 %v112
    %v266 = vunpack.c.l.b16 %v113
    %v267 = vunpack.c.l.b16 %v114
    %v268 = vunpack.c.l.b16 %v115
    %v269 = vunpack.c.l.b16 %v116
    %v270 = vunpack.c.l.b16 %v117
    %v271 = vunpack.c.l.b16 %v118
    %v272 = vunpack.c.l.b16 %v119
    %v273 = vunpack.c.l.b16 %v120
    %v274 = vpack.c.b16 %v259, %v258
    %v275 = vpack.c.b16 %v261, %v260
    %v276 = vpack.c.b16 %v263, %v262
    %v277 = vpack.c.b16 %v265, %v264
    %v278 = vpack.c.b16 %v267, %v266
    %v279 = vpack.c.b16 %v269, %v268
    %v280 = vpack.c.b16 %v271, %v270
    %v281 = vpack.c.b16 %v273, %v272
    %290 = vmatprep.subr.bf16.mxu0 0
    %291 = vmatpush1.bf16.msra.mxu0 %v281
    %292 = vmatprep.subr.bf16.mxu0 0
    %293 = vmatpush1.bf16.msra.mxu0 %v280
    %294 = vmatprep.subr.bf16.mxu0 0
    %295 = vmatpush1.bf16.msra.mxu0 %v279
    %296 = vmatprep.subr.bf16.mxu0 0
    %297 = vmatpush1.bf16.msra.mxu0 %v278
    %298 = vmatprep.subr.bf16.mxu0 0
    %299 = vmatpush1.bf16.msra.mxu0 %v277
    %300 = vmatprep.subr.bf16.mxu0 0
    %301 = vmatpush1.bf16.msra.mxu0 %v276
    %302 = vmatprep.subr.bf16.mxu0 0
    %303 = vmatpush1.bf16.msra.mxu0 %v275
    %304 = vmatprep.subr.bf16.mxu0 0
    %305 = vmatpush1.bf16.msra.mxu0 %v274
    %306 = vmatprep.subr.bf16.mxu0 0
    %307 = vmatpush2.bf16.msra.mxu0 0
    %308 = vmatprep.subr.bf16.mxu0 0
    %309 = vmatpush2.bf16.msra.mxu0 0
    %310 = vmatprep.subr.bf16.mxu0 0
    %311 = vmatpush2.bf16.msra.mxu0 0
    %312 = vmatprep.subr.bf16.mxu0 0
    %313 = vmatpush2.bf16.msra.mxu0 0
    %314 = vmatprep.subr.bf16.mxu0 0
    %315 = vmatpush2.bf16.msra.mxu0 0
    %316 = vmatprep.subr.bf16.mxu0 0
    %317 = vmatpush2.bf16.msra.mxu0 0
    %318 = vmatprep.subr.bf16.mxu0 0
    %319 = vmatpush2.bf16.msra.mxu0 0
    %320 = vmatprep.subr.bf16.mxu0 0
    %321 = vmatpush2.bf16.msra.mxu0 0
    %322 = vmatprep.mubr.bf16.mxu0 0
    %323 = vmatmul.mubr.bf16.gmra.mxu0 %v88
    %v324 = vpop.f32.mrf.mxu0
    %v325 = vadd.f32 0.0, %v324
    %v326 = vpop.f32.mrf.mxu0
    %v327 = vpop.f32.mrf.mxu0
    %v328 = vadd.f32 0.0, %v327
    %v329 = vpop.f32.mrf.mxu0
    %330 = vdwg.mxu0
    %v347 = vunpack.c.l.b16 %v121
    %v348 = vunpack.c.l.b16 %v122
    %v349 = vunpack.c.l.b16 %v123
    %v350 = vunpack.c.l.b16 %v124
    %v351 = vunpack.c.l.b16 %v125
    %v352 = vunpack.c.l.b16 %v126
    %v353 = vunpack.c.l.b16 %v127
    %v354 = vunpack.c.l.b16 %v128
    %v355 = vunpack.c.l.b16 %v129
    %v356 = vunpack.c.l.b16 %v130
    %v357 = vunpack.c.l.b16 %v131
    %v358 = vunpack.c.l.b16 %v132
    %v359 = vunpack.c.l.b16 %v133
    %v360 = vunpack.c.l.b16 %v134
    %v361 = vunpack.c.l.b16 %v135
    %v362 = vunpack.c.l.b16 %v136
    %v363 = vpack.c.b16 %v348, %v347
    %v364 = vpack.c.b16 %v350, %v349
    %v365 = vpack.c.b16 %v352, %v351
    %v366 = vpack.c.b16 %v354, %v353
    %v367 = vpack.c.b16 %v356, %v355
    %v368 = vpack.c.b16 %v358, %v357
    %v369 = vpack.c.b16 %v360, %v359
    %v370 = vpack.c.b16 %v362, %v361
    %379 = vmatprep.subr.bf16.mxu0 0
    %380 = vmatpush1.bf16.msra.mxu0 %v370
    %381 = vmatprep.subr.bf16.mxu0 0
    %382 = vmatpush1.bf16.msra.mxu0 %v369
    %383 = vmatprep.subr.bf16.mxu0 0
    %384 = vmatpush1.bf16.msra.mxu0 %v368
    %385 = vmatprep.subr.bf16.mxu0 0
    %386 = vmatpush1.bf16.msra.mxu0 %v367
    %387 = vmatprep.subr.bf16.mxu0 0
    %388 = vmatpush1.bf16.msra.mxu0 %v366
    %389 = vmatprep.subr.bf16.mxu0 0
    %390 = vmatpush1.bf16.msra.mxu0 %v365
    %391 = vmatprep.subr.bf16.mxu0 0
    %392 = vmatpush1.bf16.msra.mxu0 %v364
    %393 = vmatprep.subr.bf16.mxu0 0
    %394 = vmatpush1.bf16.msra.mxu0 %v363
    %395 = vmatprep.subr.bf16.mxu0 0
    %396 = vmatpush2.bf16.msra.mxu0 0
    %397 = vmatprep.subr.bf16.mxu0 0
    %398 = vmatpush2.bf16.msra.mxu0 0
    %399 = vmatprep.subr.bf16.mxu0 0
    %400 = vmatpush2.bf16.msra.mxu0 0
    %401 = vmatprep.subr.bf16.mxu0 0
    %402 = vmatpush2.bf16.msra.mxu0 0
    %403 = vmatprep.subr.bf16.mxu0 0
    %404 = vmatpush2.bf16.msra.mxu0 0
    %405 = vmatprep.subr.bf16.mxu0 0
    %406 = vmatpush2.bf16.msra.mxu0 0
    %407 = vmatprep.subr.bf16.mxu0 0
    %408 = vmatpush2.bf16.msra.mxu0 0
    %409 = vmatprep.subr.bf16.mxu0 0
    %410 = vmatpush2.bf16.msra.mxu0 0
    %411 = vmatprep.mubr.bf16.mxu0 0
    %412 = vmatmul.mubr.bf16.gmra.mxu0 %v88
    %v413 = vpop.f32.mrf.mxu0
    %v414 = vadd.f32 0.0, %v413
    %v415 = vpop.f32.mrf.mxu0
    %v416 = vpop.f32.mrf.mxu0
    %v417 = vadd.f32 0.0, %v416
    %v418 = vpop.f32.mrf.mxu0
    %419 = vdwg.mxu0
    %v436 = vunpack.c.l.b16 %v137
    %v437 = vunpack.c.l.b16 %v138
    %v438 = vunpack.c.l.b16 %v139
    %v439 = vunpack.c.l.b16 %v140
    %v440 = vunpack.c.l.b16 %v141
    %v441 = vunpack.c.l.b16 %v142
    %v442 = vunpack.c.l.b16 %v143
    %v443 = vunpack.c.l.b16 %v144
    %v444 = vunpack.c.l.b16 %v145
    %v445 = vunpack.c.l.b16 %v146
    %v446 = vunpack.c.l.b16 %v147
    %v447 = vunpack.c.l.b16 %v148
    %v448 = vunpack.c.l.b16 %v149
    %v449 = vunpack.c.l.b16 %v150
    %v450 = vunpack.c.l.b16 %v151
    %v451 = vunpack.c.l.b16 %v152
    %v452 = vpack.c.b16 %v437, %v436
    %v453 = vpack.c.b16 %v439, %v438
    %v454 = vpack.c.b16 %v441, %v440
    %v455 = vpack.c.b16 %v443, %v442
    %v456 = vpack.c.b16 %v445, %v444
    %v457 = vpack.c.b16 %v447, %v446
    %v458 = vpack.c.b16 %v449, %v448
    %v459 = vpack.c.b16 %v451, %v450
    %468 = vmatprep.subr.bf16.mxu0 0
    %469 = vmatpush1.bf16.msra.mxu0 %v459
    %470 = vmatprep.subr.bf16.mxu0 0
    %471 = vmatpush1.bf16.msra.mxu0 %v458
    %472 = vmatprep.subr.bf16.mxu0 0
    %473 = vmatpush1.bf16.msra.mxu0 %v457
    %474 = vmatprep.subr.bf16.mxu0 0
    %475 = vmatpush1.bf16.msra.mxu0 %v456
    %476 = vmatprep.subr.bf16.mxu0 0
    %477 = vmatpush1.bf16.msra.mxu0 %v455
    %478 = vmatprep.subr.bf16.mxu0 0
    %479 = vmatpush1.bf16.msra.mxu0 %v454
    %480 = vmatprep.subr.bf16.mxu0 0
    %481 = vmatpush1.bf16.msra.mxu0 %v453
    %482 = vmatprep.subr.bf16.mxu0 0
    %483 = vmatpush1.bf16.msra.mxu0 %v452
    %484 = vmatprep.subr.bf16.mxu0 0
    %485 = vmatpush2.bf16.msra.mxu0 0
    %486 = vmatprep.subr.bf16.mxu0 0
    %487 = vmatpush2.bf16.msra.mxu0 0
    %488 = vmatprep.subr.bf16.mxu0 0
    %489 = vmatpush2.bf16.msra.mxu0 0
    %490 = vmatprep.subr.bf16.mxu0 0
    %491 = vmatpush2.bf16.msra.mxu0 0
    %492 = vmatprep.subr.bf16.mxu0 0
    %493 = vmatpush2.bf16.msra.mxu0 0
    %494 = vmatprep.subr.bf16.mxu0 0
    %495 = vmatpush2.bf16.msra.mxu0 0
    %496 = vmatprep.subr.bf16.mxu0 0
    %497 = vmatpush2.bf16.msra.mxu0 0
    %498 = vmatprep.subr.bf16.mxu0 0
    %499 = vmatpush2.bf16.msra.mxu0 0
    %500 = vmatprep.mubr.bf16.mxu0 0
    %501 = vmatmul.mubr.bf16.gmra.mxu0 %v88
    %v502 = vpop.f32.mrf.mxu0
    %v503 = vadd.f32 0.0, %v502
    %v504 = vpop.f32.mrf.mxu0
    %v505 = vpop.f32.mrf.mxu0
    %v506 = vadd.f32 0.0, %v505
    %v507 = vpop.f32.mrf.mxu0
    %508 = vdwg.mxu0
    %v509 = vpack.c.bf16 %v239, %v236
    %v510 = vpack.c.bf16 %v328, %v325
    %v511 = vpack.c.bf16 %v417, %v414
    %v512 = vpack.c.bf16 %v506, %v503
    %v513 = vld [vmem:[%s4] sm:$0xf]
    %v514 = vld [vmem:[%s4 + $0x4] sm:$0xf]
    %v515 = vld [vmem:[%s4 + $0x8] sm:$0xf]
    %v516 = vld [vmem:[%s4 + $0xc] sm:$0xf]
    %v517 = vld [vmem:[%s4 + $0x10] sm:$0xf]
    %v518 = vld [vmem:[%s4 + $0x14] sm:$0xf]
    %v519 = vld [vmem:[%s4 + $0x18] sm:$0xf]
    %v520 = vld [vmem:[%s4 + $0x1c] sm:$0xf]
    %v521 = vld [vmem:[%s4 + $0x20] sm:$0xf]
    %v522 = vld [vmem:[%s4 + $0x24] sm:$0xf]
    %v523 = vld [vmem:[%s4 + $0x28] sm:$0xf]
    %v524 = vld [vmem:[%s4 + $0x2c] sm:$0xf]
    %v525 = vld [vmem:[%s4 + $0x30] sm:$0xf]
    %v526 = vld [vmem:[%s4 + $0x34] sm:$0xf]
    %v527 = vld [vmem:[%s4 + $0x38] sm:$0xf]
    %v528 = vld [vmem:[%s4 + $0x3c] sm:$0xf]
    %v529 = vld [vmem:[%s4 + $0x40] sm:$0xf]
    %v530 = vld [vmem:[%s4 + $0x44] sm:$0xf]
    %v531 = vld [vmem:[%s4 + $0x48] sm:$0xf]
    %v532 = vld [vmem:[%s4 + $0x4c] sm:$0xf]
    %v533 = vld [vmem:[%s4 + $0x50] sm:$0xf]
    %v534 = vld [vmem:[%s4 + $0x54] sm:$0xf]
    %v535 = vld [vmem:[%s4 + $0x58] sm:$0xf]
    %v536 = vld [vmem:[%s4 + $0x5c] sm:$0xf]
    %v537 = vld [vmem:[%s4 + $0x60] sm:$0xf]
    %v538 = vld [vmem:[%s4 + $0x64] sm:$0xf]
    %v539 = vld [vmem:[%s4 + $0x68] sm:$0xf]
    %v540 = vld [vmem:[%s4 + $0x6c] sm:$0xf]
    %v541 = vld [vmem:[%s4 + $0x70] sm:$0xf]
    %v542 = vld [vmem:[%s4 + $0x74] sm:$0xf]
    %v543 = vld [vmem:[%s4 + $0x78] sm:$0xf]
    %v544 = vld [vmem:[%s4 + $0x7c] sm:$0xf]
    %v545 = vld [vmem:[%s4 + $0x80] sm:$0xf]
    %v546 = vld [vmem:[%s4 + $0x84] sm:$0xf]
    %v547 = vld [vmem:[%s4 + $0x88] sm:$0xf]
    %v548 = vld [vmem:[%s4 + $0x8c] sm:$0xf]
    %v549 = vld [vmem:[%s4 + $0x90] sm:$0xf]
    %v550 = vld [vmem:[%s4 + $0x94] sm:$0xf]
    %v551 = vld [vmem:[%s4 + $0x98] sm:$0xf]
    %v552 = vld [vmem:[%s4 + $0x9c] sm:$0xf]
    %v553 = vld [vmem:[%s4 + $0xa0] sm:$0xf]
    %v554 = vld [vmem:[%s4 + $0xa4] sm:$0xf]
    %v555 = vld [vmem:[%s4 + $0xa8] sm:$0xf]
    %v556 = vld [vmem:[%s4 + $0xac] sm:$0xf]
    %v557 = vld [vmem:[%s4 + $0xb0] sm:$0xf]
    %v558 = vld [vmem:[%s4 + $0xb4] sm:$0xf]
    %v559 = vld [vmem:[%s4 + $0xb8] sm:$0xf]
    %v560 = vld [vmem:[%s4 + $0xbc] sm:$0xf]
    %v561 = vld [vmem:[%s4 + $0xc0] sm:$0xf]
    %v562 = vld [vmem:[%s4 + $0xc4] sm:$0xf]
    %v563 = vld [vmem:[%s4 + $0xc8] sm:$0xf]
    %v564 = vld [vmem:[%s4 + $0xcc] sm:$0xf]
    %v565 = vld [vmem:[%s4 + $0xd0] sm:$0xf]
    %v566 = vld [vmem:[%s4 + $0xd4] sm:$0xf]
    %v567 = vld [vmem:[%s4 + $0xd8] sm:$0xf]
    %v568 = vld [vmem:[%s4 + $0xdc] sm:$0xf]
    %v569 = vld [vmem:[%s4 + $0xe0] sm:$0xf]
    %v570 = vld [vmem:[%s4 + $0xe4] sm:$0xf]
    %v571 = vld [vmem:[%s4 + $0xe8] sm:$0xf]
    %v572 = vld [vmem:[%s4 + $0xec] sm:$0xf]
    %v573 = vld [vmem:[%s4 + $0xf0] sm:$0xf]
    %v574 = vld [vmem:[%s4 + $0xf4] sm:$0xf]
    %v575 = vld [vmem:[%s4 + $0xf8] sm:$0xf]
    %v576 = vld [vmem:[%s4 + $0xfc] sm:$0xf]
    %v593 = vunpack.c.l.b16 %v513
    %v594 = vunpack.c.l.b16 %v514
    %v595 = vunpack.c.l.b16 %v515
    %v596 = vunpack.c.l.b16 %v516
    %v597 = vunpack.c.l.b16 %v517
    %v598 = vunpack.c.l.b16 %v518
    %v599 = vunpack.c.l.b16 %v519
    %v600 = vunpack.c.l.b16 %v520
    %v601 = vunpack.c.l.b16 %v521
    %v602 = vunpack.c.l.b16 %v522
    %v603 = vunpack.c.l.b16 %v523
    %v604 = vunpack.c.l.b16 %v524
    %v605 = vunpack.c.l.b16 %v525
    %v606 = vunpack.c.l.b16 %v526
    %v607 = vunpack.c.l.b16 %v527
    %v608 = vunpack.c.l.b16 %v528
    %v609 = vpack.c.b16 %v594, %v593
    %v610 = vpack.c.b16 %v596, %v595
    %v611 = vpack.c.b16 %v598, %v597
    %v612 = vpack.c.b16 %v600, %v599
    %v613 = vpack.c.b16 %v602, %v601
    %v614 = vpack.c.b16 %v604, %v603
    %v615 = vpack.c.b16 %v606, %v605
    %v616 = vpack.c.b16 %v608, %v607
    %625 = vmatprep.subr.bf16.mxu0 0
    %626 = vmatpush1.bf16.msra.mxu0 %v616
    %627 = vmatprep.subr.bf16.mxu0 0
    %628 = vmatpush1.bf16.msra.mxu0 %v615
    %629 = vmatprep.subr.bf16.mxu0 0
    %630 = vmatpush1.bf16.msra.mxu0 %v614
    %631 = vmatprep.subr.bf16.mxu0 0
    %632 = vmatpush1.bf16.msra.mxu0 %v613
    %633 = vmatprep.subr.bf16.mxu0 0
    %634 = vmatpush1.bf16.msra.mxu0 %v612
    %635 = vmatprep.subr.bf16.mxu0 0
    %636 = vmatpush1.bf16.msra.mxu0 %v611
    %637 = vmatprep.subr.bf16.mxu0 0
    %638 = vmatpush1.bf16.msra.mxu0 %v610
    %639 = vmatprep.subr.bf16.mxu0 0
    %640 = vmatpush1.bf16.msra.mxu0 %v609
    %641 = vmatprep.subr.bf16.mxu0 0
    %642 = vmatpush2.bf16.msra.mxu0 0
    %643 = vmatprep.subr.bf16.mxu0 0
    %644 = vmatpush2.bf16.msra.mxu0 0
    %645 = vmatprep.subr.bf16.mxu0 0
    %646 = vmatpush2.bf16.msra.mxu0 0
    %647 = vmatprep.subr.bf16.mxu0 0
    %648 = vmatpush2.bf16.msra.mxu0 0
    %649 = vmatprep.subr.bf16.mxu0 0
    %650 = vmatpush2.bf16.msra.mxu0 0
    %651 = vmatprep.subr.bf16.mxu0 0
    %652 = vmatpush2.bf16.msra.mxu0 0
    %653 = vmatprep.subr.bf16.mxu0 0
    %654 = vmatpush2.bf16.msra.mxu0 0
    %655 = vmatprep.subr.bf16.mxu0 0
    %656 = vmatpush2.bf16.msra.mxu0 0
    %657 = vmatprep.mubr.bf16.mxu0 0
    %658 = vmatmul.mubr.bf16.gmra.mxu0 %v88
    %v659 = vpop.f32.mrf.mxu0
    %v660 = vadd.f32 0.0, %v659
    %v661 = vpop.f32.mrf.mxu0
    %v662 = vpop.f32.mrf.mxu0
    %v663 = vadd.f32 0.0, %v662
    %v664 = vpop.f32.mrf.mxu0
    %665 = vdwg.mxu0
    %v682 = vunpack.c.l.b16 %v529
    %v683 = vunpack.c.l.b16 %v530
    %v684 = vunpack.c.l.b16 %v531
    %v685 = vunpack.c.l.b16 %v532
    %v686 = vunpack.c.l.b16 %v533
    %v687 = vunpack.c.l.b16 %v534
    %v688 = vunpack.c.l.b16 %v535
    %v689 = vunpack.c.l.b16 %v536
    %v690 = vunpack.c.l.b16 %v537
    %v691 = vunpack.c.l.b16 %v538
    %v692 = vunpack.c.l.b16 %v539
    %v693 = vunpack.c.l.b16 %v540
    %v694 = vunpack.c.l.b16 %v541
    %v695 = vunpack.c.l.b16 %v542
    %v696 = vunpack.c.l.b16 %v543
    %v697 = vunpack.c.l.b16 %v544
    %v698 = vpack.c.b16 %v683, %v682
    %v699 = vpack.c.b16 %v685, %v684
    %v700 = vpack.c.b16 %v687, %v686
    %v701 = vpack.c.b16 %v689, %v688
    %v702 = vpack.c.b16 %v691, %v690
    %v703 = vpack.c.b16 %v693, %v692
    %v704 = vpack.c.b16 %v695, %v694
    %v705 = vpack.c.b16 %v697, %v696
    %714 = vmatprep.subr.bf16.mxu0 0
    %715 = vmatpush1.bf16.msra.mxu0 %v705
    %716 = vmatprep.subr.bf16.mxu0 0
    %717 = vmatpush1.bf16.msra.mxu0 %v704
    %718 = vmatprep.subr.bf16.mxu0 0
    %719 = vmatpush1.bf16.msra.mxu0 %v703
    %720 = vmatprep.subr.bf16.mxu0 0
    %721 = vmatpush1.bf16.msra.mxu0 %v702
    %722 = vmatprep.subr.bf16.mxu0 0
    %723 = vmatpush1.bf16.msra.mxu0 %v701
    %724 = vmatprep.subr.bf16.mxu0 0
    %725 = vmatpush1.bf16.msra.mxu0 %v700
    %726 = vmatprep.subr.bf16.mxu0 0
    %727 = vmatpush1.bf16.msra.mxu0 %v699
    %728 = vmatprep.subr.bf16.mxu0 0
    %729 = vmatpush1.bf16.msra.mxu0 %v698
    %730 = vmatprep.subr.bf16.mxu0 0
    %731 = vmatpush2.bf16.msra.mxu0 0
    %732 = vmatprep.subr.bf16.mxu0 0
    %733 = vmatpush2.bf16.msra.mxu0 0
    %734 = vmatprep.subr.bf16.mxu0 0
    %735 = vmatpush2.bf16.msra.mxu0 0
    %736 = vmatprep.subr.bf16.mxu0 0
    %737 = vmatpush2.bf16.msra.mxu0 0
    %738 = vmatprep.subr.bf16.mxu0 0
    %739 = vmatpush2.bf16.msra.mxu0 0
    %740 = vmatprep.subr.bf16.mxu0 0
    %741 = vmatpush2.bf16.msra.mxu0 0
    %742 = vmatprep.subr.bf16.mxu0 0
    %743 = vmatpush2.bf16.msra.mxu0 0
    %744 = vmatprep.subr.bf16.mxu0 0
    %745 = vmatpush2.bf16.msra.mxu0 0
    %746 = vmatprep.mubr.bf16.mxu0 0
    %747 = vmatmul.mubr.bf16.gmra.mxu0 %v88
    %v748 = vpop.f32.mrf.mxu0
    %v749 = vadd.f32 0.0, %v748
    %v750 = vpop.f32.mrf.mxu0
    %v751 = vpop.f32.mrf.mxu0
    %v752 = vadd.f32 0.0, %v751
    %v753 = vpop.f32.mrf.mxu0
    %754 = vdwg.mxu0
    %v771 = vunpack.c.l.b16 %v545
    %v772 = vunpack.c.l.b16 %v546
    %v773 = vunpack.c.l.b16 %v547
    %v774 = vunpack.c.l.b16 %v548
    %v775 = vunpack.c.l.b16 %v549
    %v776 = vunpack.c.l.b16 %v550
    %v777 = vunpack.c.l.b16 %v551
    %v778 = vunpack.c.l.b16 %v552
    %v779 = vunpack.c.l.b16 %v553
    %v780 = vunpack.c.l.b16 %v554
    %v781 = vunpack.c.l.b16 %v555
    %v782 = vunpack.c.l.b16 %v556
    %v783 = vunpack.c.l.b16 %v557
    %v784 = vunpack.c.l.b16 %v558
    %v785 = vunpack.c.l.b16 %v559
    %v786 = vunpack.c.l.b16 %v560
    %v787 = vpack.c.b16 %v772, %v771
    %v788 = vpack.c.b16 %v774, %v773
    %v789 = vpack.c.b16 %v776, %v775
    %v790 = vpack.c.b16 %v778, %v777
    %v791 = vpack.c.b16 %v780, %v779
    %v792 = vpack.c.b16 %v782, %v781
    %v793 = vpack.c.b16 %v784, %v783
    %v794 = vpack.c.b16 %v786, %v785
    %803 = vmatprep.subr.bf16.mxu0 0
    %804 = vmatpush1.bf16.msra.mxu0 %v794
    %805 = vmatprep.subr.bf16.mxu0 0
    %806 = vmatpush1.bf16.msra.mxu0 %v793
    %807 = vmatprep.subr.bf16.mxu0 0
    %808 = vmatpush1.bf16.msra.mxu0 %v792
    %809 = vmatprep.subr.bf16.mxu0 0
    %810 = vmatpush1.bf16.msra.mxu0 %v791
    %811 = vmatprep.subr.bf16.mxu0 0
    %812 = vmatpush1.bf16.msra.mxu0 %v790
    %813 = vmatprep.subr.bf16.mxu0 0
    %814 = vmatpush1.bf16.msra.mxu0 %v789
    %815 = vmatprep.subr.bf16.mxu0 0
    %816 = vmatpush1.bf16.msra.mxu0 %v788
    %817 = vmatprep.subr.bf16.mxu0 0
    %818 = vmatpush1.bf16.msra.mxu0 %v787
    %819 = vmatprep.subr.bf16.mxu0 0
    %820 = vmatpush2.bf16.msra.mxu0 0
    %821 = vmatprep.subr.bf16.mxu0 0
    %822 = vmatpush2.bf16.msra.mxu0 0
    %823 = vmatprep.subr.bf16.mxu0 0
    %824 = vmatpush2.bf16.msra.mxu0 0
    %825 = vmatprep.subr.bf16.mxu0 0
    %826 = vmatpush2.bf16.msra.mxu0 0
    %827 = vmatprep.subr.bf16.mxu0 0
    %828 = vmatpush2.bf16.msra.mxu0 0
    %829 = vmatprep.subr.bf16.mxu0 0
    %830 = vmatpush2.bf16.msra.mxu0 0
    %831 = vmatprep.subr.bf16.mxu0 0
    %832 = vmatpush2.bf16.msra.mxu0 0
    %833 = vmatprep.subr.bf16.mxu0 0
    %834 = vmatpush2.bf16.msra.mxu0 0
    %835 = vmatprep.mubr.bf16.mxu0 0
    %836 = vmatmul.mubr.bf16.gmra.mxu0 %v88
    %v837 = vpop.f32.mrf.mxu0
    %v838 = vadd.f32 0.0, %v837
    %v839 = vpop.f32.mrf.mxu0
    %v840 = vpop.f32.mrf.mxu0
    %v841 = vadd.f32 0.0, %v840
    %v842 = vpop.f32.mrf.mxu0
    %843 = vdwg.mxu0
    %v860 = vunpack.c.l.b16 %v561
    %v861 = vunpack.c.l.b16 %v562
    %v862 = vunpack.c.l.b16 %v563
    %v863 = vunpack.c.l.b16 %v564
    %v864 = vunpack.c.l.b16 %v565
    %v865 = vunpack.c.l.b16 %v566
    %v866 = vunpack.c.l.b16 %v567
    %v867 = vunpack.c.l.b16 %v568
    %v868 = vunpack.c.l.b16 %v569
    %v869 = vunpack.c.l.b16 %v570
    %v870 = vunpack.c.l.b16 %v571
    %v871 = vunpack.c.l.b16 %v572
    %v872 = vunpack.c.l.b16 %v573
    %v873 = vunpack.c.l.b16 %v574
    %v874 = vunpack.c.l.b16 %v575
    %v875 = vunpack.c.l.b16 %v576
    %v876 = vpack.c.b16 %v861, %v860
    %v877 = vpack.c.b16 %v863, %v862
    %v878 = vpack.c.b16 %v865, %v864
    %v879 = vpack.c.b16 %v867, %v866
    %v880 = vpack.c.b16 %v869, %v868
    %v881 = vpack.c.b16 %v871, %v870
    %v882 = vpack.c.b16 %v873, %v872
    %v883 = vpack.c.b16 %v875, %v874
    %892 = vmatprep.subr.bf16.mxu0 0
    %893 = vmatpush1.bf16.msra.mxu0 %v883
    %894 = vmatprep.subr.bf16.mxu0 0
    %895 = vmatpush1.bf16.msra.mxu0 %v882
    %896 = vmatprep.subr.bf16.mxu0 0
    %897 = vmatpush1.bf16.msra.mxu0 %v881
    %898 = vmatprep.subr.bf16.mxu0 0
    %899 = vmatpush1.bf16.msra.mxu0 %v880
    %900 = vmatprep.subr.bf16.mxu0 0
    %901 = vmatpush1.bf16.msra.mxu0 %v879
    %902 = vmatprep.subr.bf16.mxu0 0
    %903 = vmatpush1.bf16.msra.mxu0 %v878
    %904 = vmatprep.subr.bf16.mxu0 0
    %905 = vmatpush1.bf16.msra.mxu0 %v877
    %906 = vmatprep.subr.bf16.mxu0 0
    %907 = vmatpush1.bf16.msra.mxu0 %v876
    %908 = vmatprep.subr.bf16.mxu0 0
    %909 = vmatpush2.bf16.msra.mxu0 0
    %910 = vmatprep.subr.bf16.mxu0 0
    %911 = vmatpush2.bf16.msra.mxu0 0
    %912 = vmatprep.subr.bf16.mxu0 0
    %913 = vmatpush2.bf16.msra.mxu0 0
    %914 = vmatprep.subr.bf16.mxu0 0
    %915 = vmatpush2.bf16.msra.mxu0 0
    %916 = vmatprep.subr.bf16.mxu0 0
    %917 = vmatpush2.bf16.msra.mxu0 0
    %918 = vmatprep.subr.bf16.mxu0 0
    %919 = vmatpush2.bf16.msra.mxu0 0
    %920 = vmatprep.subr.bf16.mxu0 0
    %921 = vmatpush2.bf16.msra.mxu0 0
    %922 = vmatprep.subr.bf16.mxu0 0
    %923 = vmatpush2.bf16.msra.mxu0 0
    %924 = vmatprep.mubr.bf16.mxu0 0
    %925 = vmatmul.mubr.bf16.gmra.mxu0 %v88
    %v926 = vpop.f32.mrf.mxu0
    %v927 = vadd.f32 0.0, %v926
    %v928 = vpop.f32.mrf.mxu0
    %v929 = vpop.f32.mrf.mxu0
    %v930 = vadd.f32 0.0, %v929
    %v931 = vpop.f32.mrf.mxu0
    %932 = vdwg.mxu0
    %v933 = vpack.c.bf16 %v663, %v660
    %v934 = vpack.c.bf16 %v752, %v749
    %v935 = vpack.c.bf16 %v841, %v838
    %v936 = vpack.c.bf16 %v930, %v927
    %v937 = vld [vmem:[%s5] sm:$0xf]
    %v938 = vld [vmem:[%s5 + $0x4] sm:$0xf]
    %v939 = vld [vmem:[%s5 + $0x8] sm:$0xf]
    %v940 = vld [vmem:[%s5 + $0xc] sm:$0xf]
    %v941 = vld [vmem:[%s5 + $0x10] sm:$0xf]
    %v942 = vld [vmem:[%s5 + $0x14] sm:$0xf]
    %v943 = vld [vmem:[%s5 + $0x18] sm:$0xf]
    %v944 = vld [vmem:[%s5 + $0x1c] sm:$0xf]
    %v945 = vld [vmem:[%s5 + $0x20] sm:$0xf]
    %v946 = vld [vmem:[%s5 + $0x24] sm:$0xf]
    %v947 = vld [vmem:[%s5 + $0x28] sm:$0xf]
    %v948 = vld [vmem:[%s5 + $0x2c] sm:$0xf]
    %v949 = vld [vmem:[%s5 + $0x30] sm:$0xf]
    %v950 = vld [vmem:[%s5 + $0x34] sm:$0xf]
    %v951 = vld [vmem:[%s5 + $0x38] sm:$0xf]
    %v952 = vld [vmem:[%s5 + $0x3c] sm:$0xf]
    %v953 = vld [vmem:[%s5 + $0x40] sm:$0xf]
    %v954 = vld [vmem:[%s5 + $0x44] sm:$0xf]
    %v955 = vld [vmem:[%s5 + $0x48] sm:$0xf]
    %v956 = vld [vmem:[%s5 + $0x4c] sm:$0xf]
    %v957 = vld [vmem:[%s5 + $0x50] sm:$0xf]
    %v958 = vld [vmem:[%s5 + $0x54] sm:$0xf]
    %v959 = vld [vmem:[%s5 + $0x58] sm:$0xf]
    %v960 = vld [vmem:[%s5 + $0x5c] sm:$0xf]
    %v961 = vld [vmem:[%s5 + $0x60] sm:$0xf]
    %v962 = vld [vmem:[%s5 + $0x64] sm:$0xf]
    %v963 = vld [vmem:[%s5 + $0x68] sm:$0xf]
    %v964 = vld [vmem:[%s5 + $0x6c] sm:$0xf]
    %v965 = vld [vmem:[%s5 + $0x70] sm:$0xf]
    %v966 = vld [vmem:[%s5 + $0x74] sm:$0xf]
    %v967 = vld [vmem:[%s5 + $0x78] sm:$0xf]
    %v968 = vld [vmem:[%s5 + $0x7c] sm:$0xf]
    %v969 = vld [vmem:[%s5 + $0x80] sm:$0xf]
    %v970 = vld [vmem:[%s5 + $0x84] sm:$0xf]
    %v971 = vld [vmem:[%s5 + $0x88] sm:$0xf]
    %v972 = vld [vmem:[%s5 + $0x8c] sm:$0xf]
    %v973 = vld [vmem:[%s5 + $0x90] sm:$0xf]
    %v974 = vld [vmem:[%s5 + $0x94] sm:$0xf]
    %v975 = vld [vmem:[%s5 + $0x98] sm:$0xf]
    %v976 = vld [vmem:[%s5 + $0x9c] sm:$0xf]
    %v977 = vld [vmem:[%s5 + $0xa0] sm:$0xf]
    %v978 = vld [vmem:[%s5 + $0xa4] sm:$0xf]
    %v979 = vld [vmem:[%s5 + $0xa8] sm:$0xf]
    %v980 = vld [vmem:[%s5 + $0xac] sm:$0xf]
    %v981 = vld [vmem:[%s5 + $0xb0] sm:$0xf]
    %v982 = vld [vmem:[%s5 + $0xb4] sm:$0xf]
    %v983 = vld [vmem:[%s5 + $0xb8] sm:$0xf]
    %v984 = vld [vmem:[%s5 + $0xbc] sm:$0xf]
    %v985 = vld [vmem:[%s5 + $0xc0] sm:$0xf]
    %v986 = vld [vmem:[%s5 + $0xc4] sm:$0xf]
    %v987 = vld [vmem:[%s5 + $0xc8] sm:$0xf]
    %v988 = vld [vmem:[%s5 + $0xcc] sm:$0xf]
    %v989 = vld [vmem:[%s5 + $0xd0] sm:$0xf]
    %v990 = vld [vmem:[%s5 + $0xd4] sm:$0xf]
    %v991 = vld [vmem:[%s5 + $0xd8] sm:$0xf]
    %v992 = vld [vmem:[%s5 + $0xdc] sm:$0xf]
    %v993 = vld [vmem:[%s5 + $0xe0] sm:$0xf]
    %v994 = vld [vmem:[%s5 + $0xe4] sm:$0xf]
    %v995 = vld [vmem:[%s5 + $0xe8] sm:$0xf]
    %v996 = vld [vmem:[%s5 + $0xec] sm:$0xf]
    %v997 = vld [vmem:[%s5 + $0xf0] sm:$0xf]
    %v998 = vld [vmem:[%s5 + $0xf4] sm:$0xf]
    %v999 = vld [vmem:[%s5 + $0xf8] sm:$0xf]
    %v1000 = vld [vmem:[%s5 + $0xfc] sm:$0xf]
    %v1017 = vunpack.c.l.b16 %v937
    %v1018 = vunpack.c.l.b16 %v938
    %v1019 = vunpack.c.l.b16 %v939
    %v1020 = vunpack.c.l.b16 %v940
    %v1021 = vunpack.c.l.b16 %v941
    %v1022 = vunpack.c.l.b16 %v942
    %v1023 = vunpack.c.l.b16 %v943
    %v1024 = vunpack.c.l.b16 %v944
    %v1025 = vunpack.c.l.b16 %v945
    %v1026 = vunpack.c.l.b16 %v946
    %v1027 = vunpack.c.l.b16 %v947
    %v1028 = vunpack.c.l.b16 %v948
    %v1029 = vunpack.c.l.b16 %v949
    %v1030 = vunpack.c.l.b16 %v950
    %v1031 = vunpack.c.l.b16 %v951
    %v1032 = vunpack.c.l.b16 %v952
    %v1033 = vpack.c.b16 %v1018, %v1017
    %v1034 = vpack.c.b16 %v1020, %v1019
    %v1035 = vpack.c.b16 %v1022, %v1021
    %v1036 = vpack.c.b16 %v1024, %v1023
    %v1037 = vpack.c.b16 %v1026, %v1025
    %v1038 = vpack.c.b16 %v1028, %v1027
    %v1039 = vpack.c.b16 %v1030, %v1029
    %v1040 = vpack.c.b16 %v1032, %v1031
    %1049 = vmatprep.subr.bf16.mxu0 0
    %1050 = vmatpush1.bf16.msra.mxu0 %v1040
    %1051 = vmatprep.subr.bf16.mxu0 0
    %1052 = vmatpush1.bf16.msra.mxu0 %v1039
    %1053 = vmatprep.subr.bf16.mxu0 0
    %1054 = vmatpush1.bf16.msra.mxu0 %v1038
    %1055 = vmatprep.subr.bf16.mxu0 0
    %1056 = vmatpush1.bf16.msra.mxu0 %v1037
    %1057 = vmatprep.subr.bf16.mxu0 0
    %1058 = vmatpush1.bf16.msra.mxu0 %v1036
    %1059 = vmatprep.subr.bf16.mxu0 0
    %1060 = vmatpush1.bf16.msra.mxu0 %v1035
    %1061 = vmatprep.subr.bf16.mxu0 0
    %1062 = vmatpush1.bf16.msra.mxu0 %v1034
    %1063 = vmatprep.subr.bf16.mxu0 0
    %1064 = vmatpush1.bf16.msra.mxu0 %v1033
    %1065 = vmatprep.subr.bf16.mxu0 0
    %1066 = vmatpush2.bf16.msra.mxu0 0
    %1067 = vmatprep.subr.bf16.mxu0 0
    %1068 = vmatpush2.bf16.msra.mxu0 0
    %1069 = vmatprep.subr.bf16.mxu0 0
    %1070 = vmatpush2.bf16.msra.mxu0 0
    %1071 = vmatprep.subr.bf16.mxu0 0
    %1072 = vmatpush2.bf16.msra.mxu0 0
    %1073 = vmatprep.subr.bf16.mxu0 0
    %1074 = vmatpush2.bf16.msra.mxu0 0
    %1075 = vmatprep.subr.bf16.mxu0 0
    %1076 = vmatpush2.bf16.msra.mxu0 0
    %1077 = vmatprep.subr.bf16.mxu0 0
    %1078 = vmatpush2.bf16.msra.mxu0 0
    %1079 = vmatprep.subr.bf16.mxu0 0
    %1080 = vmatpush2.bf16.msra.mxu0 0
    %1081 = vmatprep.mubr.bf16.mxu0 0
    %1082 = vmatmul.mubr.bf16.gmra.mxu0 %v88
    %v1083 = vpop.f32.mrf.mxu0
    %v1084 = vadd.f32 0.0, %v1083
    %v1085 = vpop.f32.mrf.mxu0
    %v1086 = vpop.f32.mrf.mxu0
    %v1087 = vadd.f32 0.0, %v1086
    %v1088 = vpop.f32.mrf.mxu0
    %1089 = vdwg.mxu0
    %v1106 = vunpack.c.l.b16 %v953
    %v1107 = vunpack.c.l.b16 %v954
    %v1108 = vunpack.c.l.b16 %v955
    %v1109 = vunpack.c.l.b16 %v956
    %v1110 = vunpack.c.l.b16 %v957
    %v1111 = vunpack.c.l.b16 %v958
    %v1112 = vunpack.c.l.b16 %v959
    %v1113 = vunpack.c.l.b16 %v960
    %v1114 = vunpack.c.l.b16 %v961
    %v1115 = vunpack.c.l.b16 %v962
    %v1116 = vunpack.c.l.b16 %v963
    %v1117 = vunpack.c.l.b16 %v964
    %v1118 = vunpack.c.l.b16 %v965
    %v1119 = vunpack.c.l.b16 %v966
    %v1120 = vunpack.c.l.b16 %v967
    %v1121 = vunpack.c.l.b16 %v968
    %v1122 = vpack.c.b16 %v1107, %v1106
    %v1123 = vpack.c.b16 %v1109, %v1108
    %v1124 = vpack.c.b16 %v1111, %v1110
    %v1125 = vpack.c.b16 %v1113, %v1112
    %v1126 = vpack.c.b16 %v1115, %v1114
    %v1127 = vpack.c.b16 %v1117, %v1116
    %v1128 = vpack.c.b16 %v1119, %v1118
    %v1129 = vpack.c.b16 %v1121, %v1120
    %1138 = vmatprep.subr.bf16.mxu0 0
    %1139 = vmatpush1.bf16.msra.mxu0 %v1129
    %1140 = vmatprep.subr.bf16.mxu0 0
    %1141 = vmatpush1.bf16.msra.mxu0 %v1128
    %1142 = vmatprep.subr.bf16.mxu0 0
    %1143 = vmatpush1.bf16.msra.mxu0 %v1127
    %1144 = vmatprep.subr.bf16.mxu0 0
    %1145 = vmatpush1.bf16.msra.mxu0 %v1126
    %1146 = vmatprep.subr.bf16.mxu0 0
    %1147 = vmatpush1.bf16.msra.mxu0 %v1125
    %1148 = vmatprep.subr.bf16.mxu0 0
    %1149 = vmatpush1.bf16.msra.mxu0 %v1124
    %1150 = vmatprep.subr.bf16.mxu0 0
    %1151 = vmatpush1.bf16.msra.mxu0 %v1123
    %1152 = vmatprep.subr.bf16.mxu0 0
    %1153 = vmatpush1.bf16.msra.mxu0 %v1122
    %1154 = vmatprep.subr.bf16.mxu0 0
    %1155 = vmatpush2.bf16.msra.mxu0 0
    %1156 = vmatprep.subr.bf16.mxu0 0
    %1157 = vmatpush2.bf16.msra.mxu0 0
    %1158 = vmatprep.subr.bf16.mxu0 0
    %1159 = vmatpush2.bf16.msra.mxu0 0
    %1160 = vmatprep.subr.bf16.mxu0 0
    %1161 = vmatpush2.bf16.msra.mxu0 0
    %1162 = vmatprep.subr.bf16.mxu0 0
    %1163 = vmatpush2.bf16.msra.mxu0 0
    %1164 = vmatprep.subr.bf16.mxu0 0
    %1165 = vmatpush2.bf16.msra.mxu0 0
    %1166 = vmatprep.subr.bf16.mxu0 0
    %1167 = vmatpush2.bf16.msra.mxu0 0
    %1168 = vmatprep.subr.bf16.mxu0 0
    %1169 = vmatpush2.bf16.msra.mxu0 0
    %1170 = vmatprep.mubr.bf16.mxu0 0
    %1171 = vmatmul.mubr.bf16.gmra.mxu0 %v88
    %v1172 = vpop.f32.mrf.mxu0
    %v1173 = vadd.f32 0.0, %v1172
    %v1174 = vpop.f32.mrf.mxu0
    %v1175 = vpop.f32.mrf.mxu0
    %v1176 = vadd.f32 0.0, %v1175
    %v1177 = vpop.f32.mrf.mxu0
    %1178 = vdwg.mxu0
    %v1195 = vunpack.c.l.b16 %v969
    %v1196 = vunpack.c.l.b16 %v970
    %v1197 = vunpack.c.l.b16 %v971
    %v1198 = vunpack.c.l.b16 %v972
    %v1199 = vunpack.c.l.b16 %v973
    %v1200 = vunpack.c.l.b16 %v974
    %v1201 = vunpack.c.l.b16 %v975
    %v1202 = vunpack.c.l.b16 %v976
    %v1203 = vunpack.c.l.b16 %v977
    %v1204 = vunpack.c.l.b16 %v978
    %v1205 = vunpack.c.l.b16 %v979
    %v1206 = vunpack.c.l.b16 %v980
    %v1207 = vunpack.c.l.b16 %v981
    %v1208 = vunpack.c.l.b16 %v982
    %v1209 = vunpack.c.l.b16 %v983
    %v1210 = vunpack.c.l.b16 %v984
    %v1211 = vpack.c.b16 %v1196, %v1195
    %v1212 = vpack.c.b16 %v1198, %v1197
    %v1213 = vpack.c.b16 %v1200, %v1199
    %v1214 = vpack.c.b16 %v1202, %v1201
    %v1215 = vpack.c.b16 %v1204, %v1203
    %v1216 = vpack.c.b16 %v1206, %v1205
    %v1217 = vpack.c.b16 %v1208, %v1207
    %v1218 = vpack.c.b16 %v1210, %v1209
    %1227 = vmatprep.subr.bf16.mxu0 0
    %1228 = vmatpush1.bf16.msra.mxu0 %v1218
    %1229 = vmatprep.subr.bf16.mxu0 0
    %1230 = vmatpush1.bf16.msra.mxu0 %v1217
    %1231 = vmatprep.subr.bf16.mxu0 0
    %1232 = vmatpush1.bf16.msra.mxu0 %v1216
    %1233 = vmatprep.subr.bf16.mxu0 0
    %1234 = vmatpush1.bf16.msra.mxu0 %v1215
    %1235 = vmatprep.subr.bf16.mxu0 0
    %1236 = vmatpush1.bf16.msra.mxu0 %v1214
    %1237 = vmatprep.subr.bf16.mxu0 0
    %1238 = vmatpush1.bf16.msra.mxu0 %v1213
    %1239 = vmatprep.subr.bf16.mxu0 0
    %1240 = vmatpush1.bf16.msra.mxu0 %v1212
    %1241 = vmatprep.subr.bf16.mxu0 0
    %1242 = vmatpush1.bf16.msra.mxu0 %v1211
    %1243 = vmatprep.subr.bf16.mxu0 0
    %1244 = vmatpush2.bf16.msra.mxu0 0
    %1245 = vmatprep.subr.bf16.mxu0 0
    %1246 = vmatpush2.bf16.msra.mxu0 0
    %1247 = vmatprep.subr.bf16.mxu0 0
    %1248 = vmatpush2.bf16.msra.mxu0 0
    %1249 = vmatprep.subr.bf16.mxu0 0
    %1250 = vmatpush2.bf16.msra.mxu0 0
    %1251 = vmatprep.subr.bf16.mxu0 0
    %1252 = vmatpush2.bf16.msra.mxu0 0
    %1253 = vmatprep.subr.bf16.mxu0 0
    %1254 = vmatpush2.bf16.msra.mxu0 0
    %1255 = vmatprep.subr.bf16.mxu0 0
    %1256 = vmatpush2.bf16.msra.mxu0 0
    %1257 = vmatprep.subr.bf16.mxu0 0
    %1258 = vmatpush2.bf16.msra.mxu0 0
    %1259 = vmatprep.mubr.bf16.mxu0 0
    %1260 = vmatmul.mubr.bf16.gmra.mxu0 %v88
    %v1261 = vpop.f32.mrf.mxu0
    %v1262 = vadd.f32 0.0, %v1261
    %v1263 = vpop.f32.mrf.mxu0
    %v1264 = vpop.f32.mrf.mxu0
    %v1265 = vadd.f32 0.0, %v1264
    %v1266 = vpop.f32.mrf.mxu0
    %1267 = vdwg.mxu0
    %v1284 = vunpack.c.l.b16 %v985
    %v1285 = vunpack.c.l.b16 %v986
    %v1286 = vunpack.c.l.b16 %v987
    %v1287 = vunpack.c.l.b16 %v988
    %v1288 = vunpack.c.l.b16 %v989
    %v1289 = vunpack.c.l.b16 %v990
    %v1290 = vunpack.c.l.b16 %v991
    %v1291 = vunpack.c.l.b16 %v992
    %v1292 = vunpack.c.l.b16 %v993
    %v1293 = vunpack.c.l.b16 %v994
    %v1294 = vunpack.c.l.b16 %v995
    %v1295 = vunpack.c.l.b16 %v996
    %v1296 = vunpack.c.l.b16 %v997
    %v1297 = vunpack.c.l.b16 %v998
    %v1298 = vunpack.c.l.b16 %v999
    %v1299 = vunpack.c.l.b16 %v1000
    %v1300 = vpack.c.b16 %v1285, %v1284
    %v1301 = vpack.c.b16 %v1287, %v1286
    %v1302 = vpack.c.b16 %v1289, %v1288
    %v1303 = vpack.c.b16 %v1291, %v1290
    %v1304 = vpack.c.b16 %v1293, %v1292
    %v1305 = vpack.c.b16 %v1295, %v1294
    %v1306 = vpack.c.b16 %v1297, %v1296
    %v1307 = vpack.c.b16 %v1299, %v1298
    %1316 = vmatprep.subr.bf16.mxu0 0
    %1317 = vmatpush1.bf16.msra.mxu0 %v1307
    %1318 = vmatprep.subr.bf16.mxu0 0
    %1319 = vmatpush1.bf16.msra.mxu0 %v1306
    %1320 = vmatprep.subr.bf16.mxu0 0
    %1321 = vmatpush1.bf16.msra.mxu0 %v1305
    %1322 = vmatprep.subr.bf16.mxu0 0
    %1323 = vmatpush1.bf16.msra.mxu0 %v1304
    %1324 = vmatprep.subr.bf16.mxu0 0
    %1325 = vmatpush1.bf16.msra.mxu0 %v1303
    %1326 = vmatprep.subr.bf16.mxu0 0
    %1327 = vmatpush1.bf16.msra.mxu0 %v1302
    %1328 = vmatprep.subr.bf16.mxu0 0
    %1329 = vmatpush1.bf16.msra.mxu0 %v1301
    %1330 = vmatprep.subr.bf16.mxu0 0
    %1331 = vmatpush1.bf16.msra.mxu0 %v1300
    %1332 = vmatprep.subr.bf16.mxu0 0
    %1333 = vmatpush2.bf16.msra.mxu0 0
    %1334 = vmatprep.subr.bf16.mxu0 0
    %1335 = vmatpush2.bf16.msra.mxu0 0
    %1336 = vmatprep.subr.bf16.mxu0 0
    %1337 = vmatpush2.bf16.msra.mxu0 0
    %1338 = vmatprep.subr.bf16.mxu0 0
    %1339 = vmatpush2.bf16.msra.mxu0 0
    %1340 = vmatprep.subr.bf16.mxu0 0
    %1341 = vmatpush2.bf16.msra.mxu0 0
    %1342 = vmatprep.subr.bf16.mxu0 0
    %1343 = vmatpush2.bf16.msra.mxu0 0
    %1344 = vmatprep.subr.bf16.mxu0 0
    %1345 = vmatpush2.bf16.msra.mxu0 0
    %1346 = vmatprep.subr.bf16.mxu0 0
    %1347 = vmatpush2.bf16.msra.mxu0 0
    %1348 = vmatprep.mubr.bf16.mxu0 0
    %1349 = vmatmul.mubr.bf16.gmra.mxu0 %v88
    %v1350 = vpop.f32.mrf.mxu0
    %v1351 = vadd.f32 0.0, %v1350
    %v1352 = vpop.f32.mrf.mxu0
    %v1353 = vpop.f32.mrf.mxu0
    %v1354 = vadd.f32 0.0, %v1353
    %v1355 = vpop.f32.mrf.mxu0
    %1356 = vdwg.mxu0
    %v1357 = vpack.c.bf16 %v1087, %v1084
    %v1358 = vpack.c.bf16 %v1176, %v1173
    %v1359 = vpack.c.bf16 %v1265, %v1262
    %v1360 = vpack.c.bf16 %v1354, %v1351
    %vm1361 = vcmask 130048
    %v1363 = vsel %vm1361, %v509, 0
    %v1366 = vsel %vm1361, %v933, 0
    %1368 = vmatprep.subr.bf16.mxu0 0
    %1369 = vmatpush1.bf16.xpose.msra.mxu0 0
    %1370 = vmatprep.subr.bf16.mxu0 0
    %1371 = vmatpush1.bf16.xpose.msra.mxu0 0
    %1372 = vmatprep.subr.bf16.mxu0 0
    %1373 = vmatpush1.bf16.xpose.msra.mxu0 0
    %1374 = vmatprep.subr.bf16.mxu0 0
    %1375 = vmatpush1.bf16.xpose.msra.mxu0 0
    %1376 = vmatprep.subr.bf16.mxu0 0
    %1377 = vmatpush1.bf16.xpose.msra.mxu0 0
    %1378 = vmatprep.subr.bf16.mxu0 0
    %1379 = vmatpush1.bf16.xpose.msra.mxu0 0
    %1380 = vmatprep.subr.bf16.mxu0 0
    %1381 = vmatpush1.bf16.xpose.msra.mxu0 0
    %1382 = vmatprep.subr.bf16.mxu0 0
    %1383 = vmatpush1.bf16.xpose.msra.mxu0 %v1366
    %1384 = vmatprep.subr.bf16.mxu0 0
    %1385 = vmatpush2.bf16.xpose.msra.mxu0 0
    %1386 = vmatprep.subr.bf16.mxu0 0
    %1387 = vmatpush2.bf16.xpose.msra.mxu0 0
    %1388 = vmatprep.subr.bf16.mxu0 0
    %1389 = vmatpush2.bf16.xpose.msra.mxu0 0
    %1390 = vmatprep.subr.bf16.mxu0 0
    %1391 = vmatpush2.bf16.xpose.msra.mxu0 0
    %1392 = vmatprep.subr.bf16.mxu0 0
    %1393 = vmatpush2.bf16.xpose.msra.mxu0 0
    %1394 = vmatprep.subr.bf16.mxu0 0
    %1395 = vmatpush2.bf16.xpose.msra.mxu0 0
    %1396 = vmatprep.subr.bf16.mxu0 0
    %1397 = vmatpush2.bf16.xpose.msra.mxu0 0
    %1398 = vmatprep.subr.bf16.mxu0 0
    %1399 = vmatpush2.bf16.xpose.msra.mxu0 0
    %1400 = vmatprep.mubr.bf16.mxu0 0
    %1401 = vmatmul.mubr.bf16.gmra.mxu0 %v1363
    %v1402 = vpop.f32.mrf.mxu0
    %v1403 = vadd.f32 0.0, %v1402
    %v1404 = vpop.f32.mrf.mxu0
    %v1405 = vpop.f32.mrf.mxu0
    %v1406 = vpop.f32.mrf.mxu0
    %1407 = vdwg.mxu0
    %v1409 = vsel %vm1361, %v510, 0
    %v1412 = vsel %vm1361, %v934, 0
    %1414 = vmatprep.subr.bf16.mxu0 0
    %1415 = vmatpush1.bf16.xpose.msra.mxu0 0
    %1416 = vmatprep.subr.bf16.mxu0 0
    %1417 = vmatpush1.bf16.xpose.msra.mxu0 0
    %1418 = vmatprep.subr.bf16.mxu0 0
    %1419 = vmatpush1.bf16.xpose.msra.mxu0 0
    %1420 = vmatprep.subr.bf16.mxu0 0
    %1421 = vmatpush1.bf16.xpose.msra.mxu0 0
    %1422 = vmatprep.subr.bf16.mxu0 0
    %1423 = vmatpush1.bf16.xpose.msra.mxu0 0
    %1424 = vmatprep.subr.bf16.mxu0 0
    %1425 = vmatpush1.bf16.xpose.msra.mxu0 0
    %1426 = vmatprep.subr.bf16.mxu0 0
    %1427 = vmatpush1.bf16.xpose.msra.mxu0 0
    %1428 = vmatprep.subr.bf16.mxu0 0
    %1429 = vmatpush1.bf16.xpose.msra.mxu0 %v1412
    %1430 = vmatprep.subr.bf16.mxu0 0
    %1431 = vmatpush2.bf16.xpose.msra.mxu0 0
    %1432 = vmatprep.subr.bf16.mxu0 0
    %1433 = vmatpush2.bf16.xpose.msra.mxu0 0
    %1434 = vmatprep.subr.bf16.mxu0 0
    %1435 = vmatpush2.bf16.xpose.msra.mxu0 0
    %1436 = vmatprep.subr.bf16.mxu0 0
    %1437 = vmatpush2.bf16.xpose.msra.mxu0 0
    %1438 = vmatprep.subr.bf16.mxu0 0
    %1439 = vmatpush2.bf16.xpose.msra.mxu0 0
    %1440 = vmatprep.subr.bf16.mxu0 0
    %1441 = vmatpush2.bf16.xpose.msra.mxu0 0
    %1442 = vmatprep.subr.bf16.mxu0 0
    %1443 = vmatpush2.bf16.xpose.msra.mxu0 0
    %1444 = vmatprep.subr.bf16.mxu0 0
    %1445 = vmatpush2.bf16.xpose.msra.mxu0 0
    %1446 = vmatprep.mubr.bf16.mxu0 0
    %1447 = vmatmul.mubr.bf16.gmra.mxu0 %v1409
    %v1448 = vpop.f32.mrf.mxu0
    %v1449 = vadd.f32 0.0, %v1448
    %v1450 = vpop.f32.mrf.mxu0
    %v1451 = vpop.f32.mrf.mxu0
    %v1452 = vpop.f32.mrf.mxu0
    %1453 = vdwg.mxu0
    %v1455 = vsel %vm1361, %v511, 0
    %v1458 = vsel %vm1361, %v935, 0
    %1460 = vmatprep.subr.bf16.mxu0 0
    %1461 = vmatpush1.bf16.xpose.msra.mxu0 0
    %1462 = vmatprep.subr.bf16.mxu0 0
    %1463 = vmatpush1.bf16.xpose.msra.mxu0 0
    %1464 = vmatprep.subr.bf16.mxu0 0
    %1465 = vmatpush1.bf16.xpose.msra.mxu0 0
    %1466 = vmatprep.subr.bf16.mxu0 0
    %1467 = vmatpush1.bf16.xpose.msra.mxu0 0
    %1468 = vmatprep.subr.bf16.mxu0 0
    %1469 = vmatpush1.bf16.xpose.msra.mxu0 0
    %1470 = vmatprep.subr.bf16.mxu0 0
    %1471 = vmatpush1.bf16.xpose.msra.mxu0 0
    %1472 = vmatprep.subr.bf16.mxu0 0
    %1473 = vmatpush1.bf16.xpose.msra.mxu0 0
    %1474 = vmatprep.subr.bf16.mxu0 0
    %1475 = vmatpush1.bf16.xpose.msra.mxu0 %v1458
    %1476 = vmatprep.subr.bf16.mxu0 0
    %1477 = vmatpush2.bf16.xpose.msra.mxu0 0
    %1478 = vmatprep.subr.bf16.mxu0 0
    %1479 = vmatpush2.bf16.xpose.msra.mxu0 0
    %1480 = vmatprep.subr.bf16.mxu0 0
    %1481 = vmatpush2.bf16.xpose.msra.mxu0 0
    %1482 = vmatprep.subr.bf16.mxu0 0
    %1483 = vmatpush2.bf16.xpose.msra.mxu0 0
    %1484 = vmatprep.subr.bf16.mxu0 0
    %1485 = vmatpush2.bf16.xpose.msra.mxu0 0
    %1486 = vmatprep.subr.bf16.mxu0 0
    %1487 = vmatpush2.bf16.xpose.msra.mxu0 0
    %1488 = vmatprep.subr.bf16.mxu0 0
    %1489 = vmatpush2.bf16.xpose.msra.mxu0 0
    %1490 = vmatprep.subr.bf16.mxu0 0
    %1491 = vmatpush2.bf16.xpose.msra.mxu0 0
    %1492 = vmatprep.mubr.bf16.mxu0 0
    %1493 = vmatmul.mubr.bf16.gmra.mxu0 %v1455
    %v1494 = vpop.f32.mrf.mxu0
    %v1495 = vadd.f32 0.0, %v1494
    %v1496 = vpop.f32.mrf.mxu0
    %v1497 = vpop.f32.mrf.mxu0
    %v1498 = vpop.f32.mrf.mxu0
    %1499 = vdwg.mxu0
    %v1501 = vsel %vm1361, %v512, 0
    %v1504 = vsel %vm1361, %v936, 0
    %1506 = vmatprep.subr.bf16.mxu0 0
    %1507 = vmatpush1.bf16.xpose.msra.mxu0 0
    %1508 = vmatprep.subr.bf16.mxu0 0
    %1509 = vmatpush1.bf16.xpose.msra.mxu0 0
    %1510 = vmatprep.subr.bf16.mxu0 0
    %1511 = vmatpush1.bf16.xpose.msra.mxu0 0
    %1512 = vmatprep.subr.bf16.mxu0 0
    %1513 = vmatpush1.bf16.xpose.msra.mxu0 0
    %1514 = vmatprep.subr.bf16.mxu0 0
    %1515 = vmatpush1.bf16.xpose.msra.mxu0 0
    %1516 = vmatprep.subr.bf16.mxu0 0
    %1517 = vmatpush1.bf16.xpose.msra.mxu0 0
    %1518 = vmatprep.subr.bf16.mxu0 0
    %1519 = vmatpush1.bf16.xpose.msra.mxu0 0
    %1520 = vmatprep.subr.bf16.mxu0 0
    %1521 = vmatpush1.bf16.xpose.msra.mxu0 %v1504
    %1522 = vmatprep.subr.bf16.mxu0 0
    %1523 = vmatpush2.bf16.xpose.msra.mxu0 0
    %1524 = vmatprep.subr.bf16.mxu0 0
    %1525 = vmatpush2.bf16.xpose.msra.mxu0 0
    %1526 = vmatprep.subr.bf16.mxu0 0
    %1527 = vmatpush2.bf16.xpose.msra.mxu0 0
    %1528 = vmatprep.subr.bf16.mxu0 0
    %1529 = vmatpush2.bf16.xpose.msra.mxu0 0
    %1530 = vmatprep.subr.bf16.mxu0 0
    %1531 = vmatpush2.bf16.xpose.msra.mxu0 0
    %1532 = vmatprep.subr.bf16.mxu0 0
    %1533 = vmatpush2.bf16.xpose.msra.mxu0 0
    %1534 = vmatprep.subr.bf16.mxu0 0
    %1535 = vmatpush2.bf16.xpose.msra.mxu0 0
    %1536 = vmatprep.subr.bf16.mxu0 0
    %1537 = vmatpush2.bf16.xpose.msra.mxu0 0
    %1538 = vmatprep.mubr.bf16.mxu0 0
    %1539 = vmatmul.mubr.bf16.gmra.mxu0 %v1501
    %v1540 = vpop.f32.mrf.mxu0
    %v1541 = vadd.f32 0.0, %v1540
    %v1542 = vpop.f32.mrf.mxu0
    %v1543 = vpop.f32.mrf.mxu0
    %v1544 = vpop.f32.mrf.mxu0
    %1545 = vdwg.mxu0
    %vm1546 = vcmask 64512
    %v1547 = vsel %vm1546, %v1403, -inf
    %1548 = vmax.xlane.f32.xlu0 %v1547
    %v1549 = vpop.xlane.xlu0 %1548
    %v1550 = vsel %vm1546, %v1449, -inf
    %1551 = vmax.xlane.f32.xlu0 %v1550
    %v1552 = vpop.xlane.xlu0 %1551
    %v1553 = vsel %vm1546, %v1495, -inf
    %1554 = vmax.xlane.f32.xlu0 %v1553
    %v1555 = vpop.xlane.xlu0 %1554
    %v1556 = vsel %vm1546, %v1541, -inf
    %1557 = vmax.xlane.f32.xlu0 %v1556
    %v1558 = vpop.xlane.xlu0 %1557
    %v1559 = vsub.f32 %v1403, %v1549
    %v1560 = vsub.f32 %v1449, %v1552
    %v1561 = vsub.f32 %v1495, %v1555
    %v1562 = vsub.f32 %v1541, %v1558
    %v1563 = vmul.f32 %v1559, 1.442695
    %v1564 = vpow.pop %v1563
    %v1565 = vmul.f32 %v1560, 1.442695
    %v1566 = vpow.pop %v1565
    %v1567 = vmul.f32 %v1561, 1.442695
    %v1568 = vpow.pop %v1567
    %v1569 = vmul.f32 %v1562, 1.442695
    %v1570 = vpow.pop %v1569
    %v1571 = vsel %vm1546, %v1564, 0.0
    %1572 = vadd.xlane.f32.xlu0 %v1571
    %v1573 = vpop.xlane.xlu0 %1572
    %v1574 = vsel %vm1546, %v1566, 0.0
    %1575 = vadd.xlane.f32.xlu0 %v1574
    %v1576 = vpop.xlane.xlu0 %1575
    %v1577 = vsel %vm1546, %v1568, 0.0
    %1578 = vadd.xlane.f32.xlu0 %v1577
    %v1579 = vpop.xlane.xlu0 %1578
    %v1580 = vsel %vm1546, %v1570, 0.0
    %1581 = vadd.xlane.f32.xlu0 %v1580
    %v1582 = vpop.xlane.xlu0 %1581
    %v1583 = vrcp.pop %v1573
    %v1584 = vrcp.pop %v1576
    %v1585 = vrcp.pop %v1579
    %v1586 = vrcp.pop %v1582
    %v1587 = vmul.f32 %v1564, %v1583
    %v1588 = vmul.f32 %v1566, %v1584
    %v1589 = vmul.f32 %v1568, %v1585
    %v1590 = vmul.f32 %v1570, %v1586
    %v1591 = vpack.c.bf16 %v1587, %v1587
    %v1592 = vpack.c.bf16 %v1588, %v1588
    %v1593 = vpack.c.bf16 %v1589, %v1589
    %v1594 = vpack.c.bf16 %v1590, %v1590
    %v1596 = vsel %vm1546, %v1591, 0
    %vm1598 = vcmask 1043456
    %v1600 = vsel %vm1598, %v1357, 0
    %1602 = vmatprep.subr.bf16.mxu0 0
    %1603 = vmatpush1.bf16.msra.mxu0 0
    %1604 = vmatprep.subr.bf16.mxu0 0
    %1605 = vmatpush1.bf16.msra.mxu0 0
    %1606 = vmatprep.subr.bf16.mxu0 0
    %1607 = vmatpush1.bf16.msra.mxu0 0
    %1608 = vmatprep.subr.bf16.mxu0 0
    %1609 = vmatpush1.bf16.msra.mxu0 0
    %1610 = vmatprep.subr.bf16.mxu0 0
    %1611 = vmatpush1.bf16.msra.mxu0 0
    %1612 = vmatprep.subr.bf16.mxu0 0
    %1613 = vmatpush1.bf16.msra.mxu0 0
    %1614 = vmatprep.subr.bf16.mxu0 0
    %1615 = vmatpush1.bf16.msra.mxu0 0
    %1616 = vmatprep.subr.bf16.mxu0 0
    %1617 = vmatpush1.bf16.msra.mxu0 %v1600
    %1618 = vmatprep.subr.bf16.mxu0 0
    %1619 = vmatpush2.bf16.msra.mxu0 0
    %1620 = vmatprep.subr.bf16.mxu0 0
    %1621 = vmatpush2.bf16.msra.mxu0 0
    %1622 = vmatprep.subr.bf16.mxu0 0
    %1623 = vmatpush2.bf16.msra.mxu0 0
    %1624 = vmatprep.subr.bf16.mxu0 0
    %1625 = vmatpush2.bf16.msra.mxu0 0
    %1626 = vmatprep.subr.bf16.mxu0 0
    %1627 = vmatpush2.bf16.msra.mxu0 0
    %1628 = vmatprep.subr.bf16.mxu0 0
    %1629 = vmatpush2.bf16.msra.mxu0 0
    %1630 = vmatprep.subr.bf16.mxu0 0
    %1631 = vmatpush2.bf16.msra.mxu0 0
    %1632 = vmatprep.subr.bf16.mxu0 0
    %1633 = vmatpush2.bf16.msra.mxu0 0
    %1634 = vmatprep.mubr.bf16.mxu0 0
    %1635 = vmatmul.mubr.bf16.gmra.mxu0 %v1596
    %v1636 = vpop.f32.mrf.mxu0
    %v1637 = vadd.f32 0.0, %v1636
    %v1638 = vpop.f32.mrf.mxu0
    %v1639 = vpop.f32.mrf.mxu0
    %v1640 = vpop.f32.mrf.mxu0
    %1641 = vdwg.mxu0
    %v1643 = vsel %vm1546, %v1592, 0
    %v1646 = vsel %vm1598, %v1358, 0
    %1648 = vmatprep.subr.bf16.mxu0 0
    %1649 = vmatpush1.bf16.msra.mxu0 0
    %1650 = vmatprep.subr.bf16.mxu0 0
    %1651 = vmatpush1.bf16.msra.mxu0 0
    %1652 = vmatprep.subr.bf16.mxu0 0
    %1653 = vmatpush1.bf16.msra.mxu0 0
    %1654 = vmatprep.subr.bf16.mxu0 0
    %1655 = vmatpush1.bf16.msra.mxu0 0
    %1656 = vmatprep.subr.bf16.mxu0 0
    %1657 = vmatpush1.bf16.msra.mxu0 0
    %1658 = vmatprep.subr.bf16.mxu0 0
    %1659 = vmatpush1.bf16.msra.mxu0 0
    %1660 = vmatprep.subr.bf16.mxu0 0
    %1661 = vmatpush1.bf16.msra.mxu0 0
    %1662 = vmatprep.subr.bf16.mxu0 0
    %1663 = vmatpush1.bf16.msra.mxu0 %v1646
    %1664 = vmatprep.subr.bf16.mxu0 0
    %1665 = vmatpush2.bf16.msra.mxu0 0
    %1666 = vmatprep.subr.bf16.mxu0 0
    %1667 = vmatpush2.bf16.msra.mxu0 0
    %1668 = vmatprep.subr.bf16.mxu0 0
    %1669 = vmatpush2.bf16.msra.mxu0 0
    %1670 = vmatprep.subr.bf16.mxu0 0
    %1671 = vmatpush2.bf16.msra.mxu0 0
    %1672 = vmatprep.subr.bf16.mxu0 0
    %1673 = vmatpush2.bf16.msra.mxu0 0
    %1674 = vmatprep.subr.bf16.mxu0 0
    %1675 = vmatpush2.bf16.msra.mxu0 0
    %1676 = vmatprep.subr.bf16.mxu0 0
    %1677 = vmatpush2.bf16.msra.mxu0 0
    %1678 = vmatprep.subr.bf16.mxu0 0
    %1679 = vmatpush2.bf16.msra.mxu0 0
    %1680 = vmatprep.mubr.bf16.mxu0 0
    %1681 = vmatmul.mubr.bf16.gmra.mxu0 %v1643
    %v1682 = vpop.f32.mrf.mxu0
    %v1683 = vadd.f32 0.0, %v1682
    %v1684 = vpop.f32.mrf.mxu0
    %v1685 = vpop.f32.mrf.mxu0
    %v1686 = vpop.f32.mrf.mxu0
    %1687 = vdwg.mxu0
    %v1689 = vsel %vm1546, %v1593, 0
    %v1692 = vsel %vm1598, %v1359, 0
    %1694 = vmatprep.subr.bf16.mxu0 0
    %1695 = vmatpush1.bf16.msra.mxu0 0
    %1696 = vmatprep.subr.bf16.mxu0 0
    %1697 = vmatpush1.bf16.msra.mxu0 0
    %1698 = vmatprep.subr.bf16.mxu0 0
    %1699 = vmatpush1.bf16.msra.mxu0 0
    %1700 = vmatprep.subr.bf16.mxu0 0
    %1701 = vmatpush1.bf16.msra.mxu0 0
    %1702 = vmatprep.subr.bf16.mxu0 0
    %1703 = vmatpush1.bf16.msra.mxu0 0
    %1704 = vmatprep.subr.bf16.mxu0 0
    %1705 = vmatpush1.bf16.msra.mxu0 0
    %1706 = vmatprep.subr.bf16.mxu0 0
    %1707 = vmatpush1.bf16.msra.mxu0 0
    %1708 = vmatprep.subr.bf16.mxu0 0
    %1709 = vmatpush1.bf16.msra.mxu0 %v1692
    %1710 = vmatprep.subr.bf16.mxu0 0
    %1711 = vmatpush2.bf16.msra.mxu0 0
    %1712 = vmatprep.subr.bf16.mxu0 0
    %1713 = vmatpush2.bf16.msra.mxu0 0
    %1714 = vmatprep.subr.bf16.mxu0 0
    %1715 = vmatpush2.bf16.msra.mxu0 0
    %1716 = vmatprep.subr.bf16.mxu0 0
    %1717 = vmatpush2.bf16.msra.mxu0 0
    %1718 = vmatprep.subr.bf16.mxu0 0
    %1719 = vmatpush2.bf16.msra.mxu0 0
    %1720 = vmatprep.subr.bf16.mxu0 0
    %1721 = vmatpush2.bf16.msra.mxu0 0
    %1722 = vmatprep.subr.bf16.mxu0 0
    %1723 = vmatpush2.bf16.msra.mxu0 0
    %1724 = vmatprep.subr.bf16.mxu0 0
    %1725 = vmatpush2.bf16.msra.mxu0 0
    %1726 = vmatprep.mubr.bf16.mxu0 0
    %1727 = vmatmul.mubr.bf16.gmra.mxu0 %v1689
    %v1728 = vpop.f32.mrf.mxu0
    %v1729 = vadd.f32 0.0, %v1728
    %v1730 = vpop.f32.mrf.mxu0
    %v1731 = vpop.f32.mrf.mxu0
    %v1732 = vpop.f32.mrf.mxu0
    %1733 = vdwg.mxu0
    %v1735 = vsel %vm1546, %v1594, 0
    %v1738 = vsel %vm1598, %v1360, 0
    %1740 = vmatprep.subr.bf16.mxu0 0
    %1741 = vmatpush1.bf16.msra.mxu0 0
    %1742 = vmatprep.subr.bf16.mxu0 0
    %1743 = vmatpush1.bf16.msra.mxu0 0
    %1744 = vmatprep.subr.bf16.mxu0 0
    %1745 = vmatpush1.bf16.msra.mxu0 0
    %1746 = vmatprep.subr.bf16.mxu0 0
    %1747 = vmatpush1.bf16.msra.mxu0 0
    %1748 = vmatprep.subr.bf16.mxu0 0
    %1749 = vmatpush1.bf16.msra.mxu0 0
    %1750 = vmatprep.subr.bf16.mxu0 0
    %1751 = vmatpush1.bf16.msra.mxu0 0
    %1752 = vmatprep.subr.bf16.mxu0 0
    %1753 = vmatpush1.bf16.msra.mxu0 0
    %1754 = vmatprep.subr.bf16.mxu0 0
    %1755 = vmatpush1.bf16.msra.mxu0 %v1738
    %1756 = vmatprep.subr.bf16.mxu0 0
    %1757 = vmatpush2.bf16.msra.mxu0 0
    %1758 = vmatprep.subr.bf16.mxu0 0
    %1759 = vmatpush2.bf16.msra.mxu0 0
    %1760 = vmatprep.subr.bf16.mxu0 0
    %1761 = vmatpush2.bf16.msra.mxu0 0
    %1762 = vmatprep.subr.bf16.mxu0 0
    %1763 = vmatpush2.bf16.msra.mxu0 0
    %1764 = vmatprep.subr.bf16.mxu0 0
    %1765 = vmatpush2.bf16.msra.mxu0 0
    %1766 = vmatprep.subr.bf16.mxu0 0
    %1767 = vmatpush2.bf16.msra.mxu0 0
    %1768 = vmatprep.subr.bf16.mxu0 0
    %1769 = vmatpush2.bf16.msra.mxu0 0
    %1770 = vmatprep.subr.bf16.mxu0 0
    %1771 = vmatpush2.bf16.msra.mxu0 0
    %1772 = vmatprep.mubr.bf16.mxu0 0
    %1773 = vmatmul.mubr.bf16.gmra.mxu0 %v1735
    %v1774 = vpop.f32.mrf.mxu0
    %v1775 = vadd.f32 0.0, %v1774
    %v1776 = vpop.f32.mrf.mxu0
    %v1777 = vpop.f32.mrf.mxu0
    %v1778 = vpop.f32.mrf.mxu0
    %1779 = vdwg.mxu0
    %v1781 = vrot.slane %v509, 4
    %v1783 = vrot.slane %v933, 4
    %v1785 = vsel %vm1361, %v1781, 0
    %v1788 = vsel %vm1361, %v1783, 0
    %1790 = vmatprep.subr.bf16.mxu0 0
    %1791 = vmatpush1.bf16.xpose.msra.mxu0 0
    %1792 = vmatprep.subr.bf16.mxu0 0
    %1793 = vmatpush1.bf16.xpose.msra.mxu0 0
    %1794 = vmatprep.subr.bf16.mxu0 0
    %1795 = vmatpush1.bf16.xpose.msra.mxu0 0
    %1796 = vmatprep.subr.bf16.mxu0 0
    %1797 = vmatpush1.bf16.xpose.msra.mxu0 0
    %1798 = vmatprep.subr.bf16.mxu0 0
    %1799 = vmatpush1.bf16.xpose.msra.mxu0 0
    %1800 = vmatprep.subr.bf16.mxu0 0
    %1801 = vmatpush1.bf16.xpose.msra.mxu0 0
    %1802 = vmatprep.subr.bf16.mxu0 0
    %1803 = vmatpush1.bf16.xpose.msra.mxu0 0
    %1804 = vmatprep.subr.bf16.mxu0 0
    %1805 = vmatpush1.bf16.xpose.msra.mxu0 %v1788
    %1806 = vmatprep.subr.bf16.mxu0 0
    %1807 = vmatpush2.bf16.xpose.msra.mxu0 0
    %1808 = vmatprep.subr.bf16.mxu0 0
    %1809 = vmatpush2.bf16.xpose.msra.mxu0 0
    %1810 = vmatprep.subr.bf16.mxu0 0
    %1811 = vmatpush2.bf16.xpose.msra.mxu0 0
    %1812 = vmatprep.subr.bf16.mxu0 0
    %1813 = vmatpush2.bf16.xpose.msra.mxu0 0
    %1814 = vmatprep.subr.bf16.mxu0 0
    %1815 = vmatpush2.bf16.xpose.msra.mxu0 0
    %1816 = vmatprep.subr.bf16.mxu0 0
    %1817 = vmatpush2.bf16.xpose.msra.mxu0 0
    %1818 = vmatprep.subr.bf16.mxu0 0
    %1819 = vmatpush2.bf16.xpose.msra.mxu0 0
    %1820 = vmatprep.subr.bf16.mxu0 0
    %1821 = vmatpush2.bf16.xpose.msra.mxu0 0
    %1822 = vmatprep.mubr.bf16.mxu0 0
    %1823 = vmatmul.mubr.bf16.gmra.mxu0 %v1785
    %v1824 = vpop.f32.mrf.mxu0
    %v1825 = vadd.f32 0.0, %v1824
    %v1826 = vpop.f32.mrf.mxu0
    %v1827 = vpop.f32.mrf.mxu0
    %v1828 = vpop.f32.mrf.mxu0
    %1829 = vdwg.mxu0
    %v1831 = vrot.slane %v510, 4
    %v1833 = vrot.slane %v934, 4
    %v1835 = vsel %vm1361, %v1831, 0
    %v1838 = vsel %vm1361, %v1833, 0
    %1840 = vmatprep.subr.bf16.mxu0 0
    %1841 = vmatpush1.bf16.xpose.msra.mxu0 0
    %1842 = vmatprep.subr.bf16.mxu0 0
    %1843 = vmatpush1.bf16.xpose.msra.mxu0 0
    %1844 = vmatprep.subr.bf16.mxu0 0
    %1845 = vmatpush1.bf16.xpose.msra.mxu0 0
    %1846 = vmatprep.subr.bf16.mxu0 0
    %1847 = vmatpush1.bf16.xpose.msra.mxu0 0
    %1848 = vmatprep.subr.bf16.mxu0 0
    %1849 = vmatpush1.bf16.xpose.msra.mxu0 0
    %1850 = vmatprep.subr.bf16.mxu0 0
    %1851 = vmatpush1.bf16.xpose.msra.mxu0 0
    %1852 = vmatprep.subr.bf16.mxu0 0
    %1853 = vmatpush1.bf16.xpose.msra.mxu0 0
    %1854 = vmatprep.subr.bf16.mxu0 0
    %1855 = vmatpush1.bf16.xpose.msra.mxu0 %v1838
    %1856 = vmatprep.subr.bf16.mxu0 0
    %1857 = vmatpush2.bf16.xpose.msra.mxu0 0
    %1858 = vmatprep.subr.bf16.mxu0 0
    %1859 = vmatpush2.bf16.xpose.msra.mxu0 0
    %1860 = vmatprep.subr.bf16.mxu0 0
    %1861 = vmatpush2.bf16.xpose.msra.mxu0 0
    %1862 = vmatprep.subr.bf16.mxu0 0
    %1863 = vmatpush2.bf16.xpose.msra.mxu0 0
    %1864 = vmatprep.subr.bf16.mxu0 0
    %1865 = vmatpush2.bf16.xpose.msra.mxu0 0
    %1866 = vmatprep.subr.bf16.mxu0 0
    %1867 = vmatpush2.bf16.xpose.msra.mxu0 0
    %1868 = vmatprep.subr.bf16.mxu0 0
    %1869 = vmatpush2.bf16.xpose.msra.mxu0 0
    %1870 = vmatprep.subr.bf16.mxu0 0
    %1871 = vmatpush2.bf16.xpose.msra.mxu0 0
    %1872 = vmatprep.mubr.bf16.mxu0 0
    %1873 = vmatmul.mubr.bf16.gmra.mxu0 %v1835
    %v1874 = vpop.f32.mrf.mxu0
    %v1875 = vadd.f32 0.0, %v1874
    %v1876 = vpop.f32.mrf.mxu0
    %v1877 = vpop.f32.mrf.mxu0
    %v1878 = vpop.f32.mrf.mxu0
    %1879 = vdwg.mxu0
    %v1881 = vrot.slane %v511, 4
    %v1883 = vrot.slane %v935, 4
    %v1885 = vsel %vm1361, %v1881, 0
    %v1888 = vsel %vm1361, %v1883, 0
    %1890 = vmatprep.subr.bf16.mxu0 0
    %1891 = vmatpush1.bf16.xpose.msra.mxu0 0
    %1892 = vmatprep.subr.bf16.mxu0 0
    %1893 = vmatpush1.bf16.xpose.msra.mxu0 0
    %1894 = vmatprep.subr.bf16.mxu0 0
    %1895 = vmatpush1.bf16.xpose.msra.mxu0 0
    %1896 = vmatprep.subr.bf16.mxu0 0
    %1897 = vmatpush1.bf16.xpose.msra.mxu0 0
    %1898 = vmatprep.subr.bf16.mxu0 0
    %1899 = vmatpush1.bf16.xpose.msra.mxu0 0
    %1900 = vmatprep.subr.bf16.mxu0 0
    %1901 = vmatpush1.bf16.xpose.msra.mxu0 0
    %1902 = vmatprep.subr.bf16.mxu0 0
    %1903 = vmatpush1.bf16.xpose.msra.mxu0 0
    %1904 = vmatprep.subr.bf16.mxu0 0
    %1905 = vmatpush1.bf16.xpose.msra.mxu0 %v1888
    %1906 = vmatprep.subr.bf16.mxu0 0
    %1907 = vmatpush2.bf16.xpose.msra.mxu0 0
    %1908 = vmatprep.subr.bf16.mxu0 0
    %1909 = vmatpush2.bf16.xpose.msra.mxu0 0
    %1910 = vmatprep.subr.bf16.mxu0 0
    %1911 = vmatpush2.bf16.xpose.msra.mxu0 0
    %1912 = vmatprep.subr.bf16.mxu0 0
    %1913 = vmatpush2.bf16.xpose.msra.mxu0 0
    %1914 = vmatprep.subr.bf16.mxu0 0
    %1915 = vmatpush2.bf16.xpose.msra.mxu0 0
    %1916 = vmatprep.subr.bf16.mxu0 0
    %1917 = vmatpush2.bf16.xpose.msra.mxu0 0
    %1918 = vmatprep.subr.bf16.mxu0 0
    %1919 = vmatpush2.bf16.xpose.msra.mxu0 0
    %1920 = vmatprep.subr.bf16.mxu0 0
    %1921 = vmatpush2.bf16.xpose.msra.mxu0 0
    %1922 = vmatprep.mubr.bf16.mxu0 0
    %1923 = vmatmul.mubr.bf16.gmra.mxu0 %v1885
    %v1924 = vpop.f32.mrf.mxu0
    %v1925 = vadd.f32 0.0, %v1924
    %v1926 = vpop.f32.mrf.mxu0
    %v1927 = vpop.f32.mrf.mxu0
    %v1928 = vpop.f32.mrf.mxu0
    %1929 = vdwg.mxu0
    %v1931 = vrot.slane %v512, 4
    %v1933 = vrot.slane %v936, 4
    %v1935 = vsel %vm1361, %v1931, 0
    %v1938 = vsel %vm1361, %v1933, 0
    %1940 = vmatprep.subr.bf16.mxu0 0
    %1941 = vmatpush1.bf16.xpose.msra.mxu0 0
    %1942 = vmatprep.subr.bf16.mxu0 0
    %1943 = vmatpush1.bf16.xpose.msra.mxu0 0
    %1944 = vmatprep.subr.bf16.mxu0 0
    %1945 = vmatpush1.bf16.xpose.msra.mxu0 0
    %1946 = vmatprep.subr.bf16.mxu0 0
    %1947 = vmatpush1.bf16.xpose.msra.mxu0 0
    %1948 = vmatprep.subr.bf16.mxu0 0
    %1949 = vmatpush1.bf16.xpose.msra.mxu0 0
    %1950 = vmatprep.subr.bf16.mxu0 0
    %1951 = vmatpush1.bf16.xpose.msra.mxu0 0
    %1952 = vmatprep.subr.bf16.mxu0 0
    %1953 = vmatpush1.bf16.xpose.msra.mxu0 0
    %1954 = vmatprep.subr.bf16.mxu0 0
    %1955 = vmatpush1.bf16.xpose.msra.mxu0 %v1938
    %1956 = vmatprep.subr.bf16.mxu0 0
    %1957 = vmatpush2.bf16.xpose.msra.mxu0 0
    %1958 = vmatprep.subr.bf16.mxu0 0
    %1959 = vmatpush2.bf16.xpose.msra.mxu0 0
    %1960 = vmatprep.subr.bf16.mxu0 0
    %1961 = vmatpush2.bf16.xpose.msra.mxu0 0
    %1962 = vmatprep.subr.bf16.mxu0 0
    %1963 = vmatpush2.bf16.xpose.msra.mxu0 0
    %1964 = vmatprep.subr.bf16.mxu0 0
    %1965 = vmatpush2.bf16.xpose.msra.mxu0 0
    %1966 = vmatprep.subr.bf16.mxu0 0
    %1967 = vmatpush2.bf16.xpose.msra.mxu0 0
    %1968 = vmatprep.subr.bf16.mxu0 0
    %1969 = vmatpush2.bf16.xpose.msra.mxu0 0
    %1970 = vmatprep.subr.bf16.mxu0 0
    %1971 = vmatpush2.bf16.xpose.msra.mxu0 0
    %1972 = vmatprep.mubr.bf16.mxu0 0
    %1973 = vmatmul.mubr.bf16.gmra.mxu0 %v1935
    %v1974 = vpop.f32.mrf.mxu0
    %v1975 = vadd.f32 0.0, %v1974
    %v1976 = vpop.f32.mrf.mxu0
    %v1977 = vpop.f32.mrf.mxu0
    %v1978 = vpop.f32.mrf.mxu0
    %1979 = vdwg.mxu0
    %v1980 = vsel %vm1546, %v1825, -inf
    %1981 = vmax.xlane.f32.xlu0 %v1980
    %v1982 = vpop.xlane.xlu0 %1981
    %v1983 = vsel %vm1546, %v1875, -inf
    %1984 = vmax.xlane.f32.xlu0 %v1983
    %v1985 = vpop.xlane.xlu0 %1984
    %v1986 = vsel %vm1546, %v1925, -inf
    %1987 = vmax.xlane.f32.xlu0 %v1986
    %v1988 = vpop.xlane.xlu0 %1987
    %v1989 = vsel %vm1546, %v1975, -inf
    %1990 = vmax.xlane.f32.xlu0 %v1989
    %v1991 = vpop.xlane.xlu0 %1990
    %v1992 = vsub.f32 %v1825, %v1982
    %v1993 = vsub.f32 %v1875, %v1985
    %v1994 = vsub.f32 %v1925, %v1988
    %v1995 = vsub.f32 %v1975, %v1991
    %v1996 = vmul.f32 %v1992, 1.442695
    %v1997 = vpow.pop %v1996
    %v1998 = vmul.f32 %v1993, 1.442695
    %v1999 = vpow.pop %v1998
    %v2000 = vmul.f32 %v1994, 1.442695
    %v2001 = vpow.pop %v2000
    %v2002 = vmul.f32 %v1995, 1.442695
    %v2003 = vpow.pop %v2002
    %v2004 = vsel %vm1546, %v1997, 0.0
    %2005 = vadd.xlane.f32.xlu0 %v2004
    %v2006 = vpop.xlane.xlu0 %2005
    %v2007 = vsel %vm1546, %v1999, 0.0
    %2008 = vadd.xlane.f32.xlu0 %v2007
    %v2009 = vpop.xlane.xlu0 %2008
    %v2010 = vsel %vm1546, %v2001, 0.0
    %2011 = vadd.xlane.f32.xlu0 %v2010
    %v2012 = vpop.xlane.xlu0 %2011
    %v2013 = vsel %vm1546, %v2003, 0.0
    %2014 = vadd.xlane.f32.xlu0 %v2013
    %v2015 = vpop.xlane.xlu0 %2014
    %v2016 = vrcp.pop %v2006
    %v2017 = vrcp.pop %v2009
    %v2018 = vrcp.pop %v2012
    %v2019 = vrcp.pop %v2015
    %v2020 = vmul.f32 %v1997, %v2016
    %v2021 = vmul.f32 %v1999, %v2017
    %v2022 = vmul.f32 %v2001, %v2018
    %v2023 = vmul.f32 %v2003, %v2019
    %v2024 = vpack.c.bf16 %v2020, %v2020
    %v2025 = vpack.c.bf16 %v2021, %v2021
    %v2026 = vpack.c.bf16 %v2022, %v2022
    %v2027 = vpack.c.bf16 %v2023, %v2023
    %v2029 = vrot.slane %v1357, 4
    %v2031 = vsel %vm1546, %v2024, 0
    %v2034 = vsel %vm1598, %v2029, 0
    %2036 = vmatprep.subr.bf16.mxu0 0
    %2037 = vmatpush1.bf16.msra.mxu0 0
    %2038 = vmatprep.subr.bf16.mxu0 0
    %2039 = vmatpush1.bf16.msra.mxu0 0
    %2040 = vmatprep.subr.bf16.mxu0 0
    %2041 = vmatpush1.bf16.msra.mxu0 0
    %2042 = vmatprep.subr.bf16.mxu0 0
    %2043 = vmatpush1.bf16.msra.mxu0 0
    %2044 = vmatprep.subr.bf16.mxu0 0
    %2045 = vmatpush1.bf16.msra.mxu0 0
    %2046 = vmatprep.subr.bf16.mxu0 0
    %2047 = vmatpush1.bf16.msra.mxu0 0
    %2048 = vmatprep.subr.bf16.mxu0 0
    %2049 = vmatpush1.bf16.msra.mxu0 0
    %2050 = vmatprep.subr.bf16.mxu0 0
    %2051 = vmatpush1.bf16.msra.mxu0 %v2034
    %2052 = vmatprep.subr.bf16.mxu0 0
    %2053 = vmatpush2.bf16.msra.mxu0 0
    %2054 = vmatprep.subr.bf16.mxu0 0
    %2055 = vmatpush2.bf16.msra.mxu0 0
    %2056 = vmatprep.subr.bf16.mxu0 0
    %2057 = vmatpush2.bf16.msra.mxu0 0
    %2058 = vmatprep.subr.bf16.mxu0 0
    %2059 = vmatpush2.bf16.msra.mxu0 0
    %2060 = vmatprep.subr.bf16.mxu0 0
    %2061 = vmatpush2.bf16.msra.mxu0 0
    %2062 = vmatprep.subr.bf16.mxu0 0
    %2063 = vmatpush2.bf16.msra.mxu0 0
    %2064 = vmatprep.subr.bf16.mxu0 0
    %2065 = vmatpush2.bf16.msra.mxu0 0
    %2066 = vmatprep.subr.bf16.mxu0 0
    %2067 = vmatpush2.bf16.msra.mxu0 0
    %2068 = vmatprep.mubr.bf16.mxu0 0
    %2069 = vmatmul.mubr.bf16.gmra.mxu0 %v2031
    %v2070 = vpop.f32.mrf.mxu0
    %v2071 = vadd.f32 0.0, %v2070
    %v2072 = vpop.f32.mrf.mxu0
    %v2073 = vpop.f32.mrf.mxu0
    %v2074 = vpop.f32.mrf.mxu0
    %2075 = vdwg.mxu0
    %v2077 = vrot.slane %v1358, 4
    %v2079 = vsel %vm1546, %v2025, 0
    %v2082 = vsel %vm1598, %v2077, 0
    %2084 = vmatprep.subr.bf16.mxu0 0
    %2085 = vmatpush1.bf16.msra.mxu0 0
    %2086 = vmatprep.subr.bf16.mxu0 0
    %2087 = vmatpush1.bf16.msra.mxu0 0
    %2088 = vmatprep.subr.bf16.mxu0 0
    %2089 = vmatpush1.bf16.msra.mxu0 0
    %2090 = vmatprep.subr.bf16.mxu0 0
    %2091 = vmatpush1.bf16.msra.mxu0 0
    %2092 = vmatprep.subr.bf16.mxu0 0
    %2093 = vmatpush1.bf16.msra.mxu0 0
    %2094 = vmatprep.subr.bf16.mxu0 0
    %2095 = vmatpush1.bf16.msra.mxu0 0
    %2096 = vmatprep.subr.bf16.mxu0 0
    %2097 = vmatpush1.bf16.msra.mxu0 0
    %2098 = vmatprep.subr.bf16.mxu0 0
    %2099 = vmatpush1.bf16.msra.mxu0 %v2082
    %2100 = vmatprep.subr.bf16.mxu0 0
    %2101 = vmatpush2.bf16.msra.mxu0 0
    %2102 = vmatprep.subr.bf16.mxu0 0
    %2103 = vmatpush2.bf16.msra.mxu0 0
    %2104 = vmatprep.subr.bf16.mxu0 0
    %2105 = vmatpush2.bf16.msra.mxu0 0
    %2106 = vmatprep.subr.bf16.mxu0 0
    %2107 = vmatpush2.bf16.msra.mxu0 0
    %2108 = vmatprep.subr.bf16.mxu0 0
    %2109 = vmatpush2.bf16.msra.mxu0 0
    %2110 = vmatprep.subr.bf16.mxu0 0
    %2111 = vmatpush2.bf16.msra.mxu0 0
    %2112 = vmatprep.subr.bf16.mxu0 0
    %2113 = vmatpush2.bf16.msra.mxu0 0
    %2114 = vmatprep.subr.bf16.mxu0 0
    %2115 = vmatpush2.bf16.msra.mxu0 0
    %2116 = vmatprep.mubr.bf16.mxu0 0
    %2117 = vmatmul.mubr.bf16.gmra.mxu0 %v2079
    %v2118 = vpop.f32.mrf.mxu0
    %v2119 = vadd.f32 0.0, %v2118
    %v2120 = vpop.f32.mrf.mxu0
    %v2121 = vpop.f32.mrf.mxu0
    %v2122 = vpop.f32.mrf.mxu0
    %2123 = vdwg.mxu0
    %v2125 = vrot.slane %v1359, 4
    %v2127 = vsel %vm1546, %v2026, 0
    %v2130 = vsel %vm1598, %v2125, 0
    %2132 = vmatprep.subr.bf16.mxu0 0
    %2133 = vmatpush1.bf16.msra.mxu0 0
    %2134 = vmatprep.subr.bf16.mxu0 0
    %2135 = vmatpush1.bf16.msra.mxu0 0
    %2136 = vmatprep.subr.bf16.mxu0 0
    %2137 = vmatpush1.bf16.msra.mxu0 0
    %2138 = vmatprep.subr.bf16.mxu0 0
    %2139 = vmatpush1.bf16.msra.mxu0 0
    %2140 = vmatprep.subr.bf16.mxu0 0
    %2141 = vmatpush1.bf16.msra.mxu0 0
    %2142 = vmatprep.subr.bf16.mxu0 0
    %2143 = vmatpush1.bf16.msra.mxu0 0
    %2144 = vmatprep.subr.bf16.mxu0 0
    %2145 = vmatpush1.bf16.msra.mxu0 0
    %2146 = vmatprep.subr.bf16.mxu0 0
    %2147 = vmatpush1.bf16.msra.mxu0 %v2130
    %2148 = vmatprep.subr.bf16.mxu0 0
    %2149 = vmatpush2.bf16.msra.mxu0 0
    %2150 = vmatprep.subr.bf16.mxu0 0
    %2151 = vmatpush2.bf16.msra.mxu0 0
    %2152 = vmatprep.subr.bf16.mxu0 0
    %2153 = vmatpush2.bf16.msra.mxu0 0
    %2154 = vmatprep.subr.bf16.mxu0 0
    %2155 = vmatpush2.bf16.msra.mxu0 0
    %2156 = vmatprep.subr.bf16.mxu0 0
    %2157 = vmatpush2.bf16.msra.mxu0 0
    %2158 = vmatprep.subr.bf16.mxu0 0
    %2159 = vmatpush2.bf16.msra.mxu0 0
    %2160 = vmatprep.subr.bf16.mxu0 0
    %2161 = vmatpush2.bf16.msra.mxu0 0
    %2162 = vmatprep.subr.bf16.mxu0 0
    %2163 = vmatpush2.bf16.msra.mxu0 0
    %2164 = vmatprep.mubr.bf16.mxu0 0
    %2165 = vmatmul.mubr.bf16.gmra.mxu0 %v2127
    %v2166 = vpop.f32.mrf.mxu0
    %v2167 = vadd.f32 0.0, %v2166
    %v2168 = vpop.f32.mrf.mxu0
    %v2169 = vpop.f32.mrf.mxu0
    %v2170 = vpop.f32.mrf.mxu0
    %2171 = vdwg.mxu0
    %v2173 = vrot.slane %v1360, 4
    %v2175 = vsel %vm1546, %v2027, 0
    %v2178 = vsel %vm1598, %v2173, 0
    %2180 = vmatprep.subr.bf16.mxu0 0
    %2181 = vmatpush1.bf16.msra.mxu0 0
    %2182 = vmatprep.subr.bf16.mxu0 0
    %2183 = vmatpush1.bf16.msra.mxu0 0
    %2184 = vmatprep.subr.bf16.mxu0 0
    %2185 = vmatpush1.bf16.msra.mxu0 0
    %2186 = vmatprep.subr.bf16.mxu0 0
    %2187 = vmatpush1.bf16.msra.mxu0 0
    %2188 = vmatprep.subr.bf16.mxu0 0
    %2189 = vmatpush1.bf16.msra.mxu0 0
    %2190 = vmatprep.subr.bf16.mxu0 0
    %2191 = vmatpush1.bf16.msra.mxu0 0
    %2192 = vmatprep.subr.bf16.mxu0 0
    %2193 = vmatpush1.bf16.msra.mxu0 0
    %2194 = vmatprep.subr.bf16.mxu0 0
    %2195 = vmatpush1.bf16.msra.mxu0 %v2178
    %2196 = vmatprep.subr.bf16.mxu0 0
    %2197 = vmatpush2.bf16.msra.mxu0 0
    %2198 = vmatprep.subr.bf16.mxu0 0
    %2199 = vmatpush2.bf16.msra.mxu0 0
    %2200 = vmatprep.subr.bf16.mxu0 0
    %2201 = vmatpush2.bf16.msra.mxu0 0
    %2202 = vmatprep.subr.bf16.mxu0 0
    %2203 = vmatpush2.bf16.msra.mxu0 0
    %2204 = vmatprep.subr.bf16.mxu0 0
    %2205 = vmatpush2.bf16.msra.mxu0 0
    %2206 = vmatprep.subr.bf16.mxu0 0
    %2207 = vmatpush2.bf16.msra.mxu0 0
    %2208 = vmatprep.subr.bf16.mxu0 0
    %2209 = vmatpush2.bf16.msra.mxu0 0
    %2210 = vmatprep.subr.bf16.mxu0 0
    %2211 = vmatpush2.bf16.msra.mxu0 0
    %2212 = vmatprep.mubr.bf16.mxu0 0
    %2213 = vmatmul.mubr.bf16.gmra.mxu0 %v2175
    %v2214 = vpop.f32.mrf.mxu0
    %v2215 = vadd.f32 0.0, %v2214
    %v2216 = vpop.f32.mrf.mxu0
    %v2217 = vpop.f32.mrf.mxu0
    %v2218 = vpop.f32.mrf.mxu0
    %2219 = vdwg.mxu0
    %v2220 = vpack.c.bf16 %v2071, %v1637
    %v2221 = vpack.c.bf16 %v2119, %v1683
    %v2222 = vpack.c.bf16 %v2167, %v1729
    %v2223 = vpack.c.bf16 %v2215, %v1775
    %v2224 = vld [vmem:[%s6] sm:$0xf]
    %v2225 = vld [vmem:[%s6 + $0x4] sm:$0xf]
    %v2226 = vld [vmem:[%s6 + $0x8] sm:$0xf]
    %v2227 = vld [vmem:[%s6 + $0xc] sm:$0xf]
    %v2228 = vld [vmem:[%s6 + $0x10] sm:$0xf]
    %v2229 = vld [vmem:[%s6 + $0x14] sm:$0xf]
    %v2230 = vld [vmem:[%s6 + $0x18] sm:$0xf]
    %v2231 = vld [vmem:[%s6 + $0x1c] sm:$0xf]
    %v2234 = vunpack.c.l.b16 %v2224
    %v2235 = vunpack.c.l.b16 %v2225
    %v2236 = vpack.c.b16 %v2235, %v2234
    %v2239 = vsel %vm1361, %v2220, 0
    %2241 = vmatprep.subr.bf16.mxu0 0
    %2242 = vmatpush1.bf16.msra.mxu0 0
    %2243 = vmatprep.subr.bf16.mxu0 0
    %2244 = vmatpush1.bf16.msra.mxu0 0
    %2245 = vmatprep.subr.bf16.mxu0 0
    %2246 = vmatpush1.bf16.msra.mxu0 0
    %2247 = vmatprep.subr.bf16.mxu0 0
    %2248 = vmatpush1.bf16.msra.mxu0 0
    %2249 = vmatprep.subr.bf16.mxu0 0
    %2250 = vmatpush1.bf16.msra.mxu0 0
    %2251 = vmatprep.subr.bf16.mxu0 0
    %2252 = vmatpush1.bf16.msra.mxu0 0
    %2253 = vmatprep.subr.bf16.mxu0 0
    %2254 = vmatpush1.bf16.msra.mxu0 0
    %2255 = vmatprep.subr.bf16.mxu0 0
    %2256 = vmatpush1.bf16.msra.mxu0 %v2236
    %2257 = vmatprep.subr.bf16.mxu0 0
    %2258 = vmatpush2.bf16.msra.mxu0 0
    %2259 = vmatprep.subr.bf16.mxu0 0
    %2260 = vmatpush2.bf16.msra.mxu0 0
    %2261 = vmatprep.subr.bf16.mxu0 0
    %2262 = vmatpush2.bf16.msra.mxu0 0
    %2263 = vmatprep.subr.bf16.mxu0 0
    %2264 = vmatpush2.bf16.msra.mxu0 0
    %2265 = vmatprep.subr.bf16.mxu0 0
    %2266 = vmatpush2.bf16.msra.mxu0 0
    %2267 = vmatprep.subr.bf16.mxu0 0
    %2268 = vmatpush2.bf16.msra.mxu0 0
    %2269 = vmatprep.subr.bf16.mxu0 0
    %2270 = vmatpush2.bf16.msra.mxu0 0
    %2271 = vmatprep.subr.bf16.mxu0 0
    %2272 = vmatpush2.bf16.msra.mxu0 0
    %2273 = vmatprep.mubr.bf16.mxu0 0
    %2274 = vmatmul.mubr.bf16.gmra.mxu0 %v2239
    %v2275 = vpop.f32.mrf.mxu0
    %v2276 = vadd.f32 0.0, %v2275
    %v2277 = vpop.f32.mrf.mxu0
    %v2278 = vpop.f32.mrf.mxu0
    %v2279 = vadd.f32 0.0, %v2278
    %v2280 = vpop.f32.mrf.mxu0
    %2281 = vdwg.mxu0
    %v2284 = vunpack.c.l.b16 %v2226
    %v2285 = vunpack.c.l.b16 %v2227
    %v2286 = vpack.c.b16 %v2285, %v2284
    %v2289 = vsel %vm1361, %v2221, 0
    %2291 = vmatprep.subr.bf16.mxu0 0
    %2292 = vmatpush1.bf16.msra.mxu0 0
    %2293 = vmatprep.subr.bf16.mxu0 0
    %2294 = vmatpush1.bf16.msra.mxu0 0
    %2295 = vmatprep.subr.bf16.mxu0 0
    %2296 = vmatpush1.bf16.msra.mxu0 0
    %2297 = vmatprep.subr.bf16.mxu0 0
    %2298 = vmatpush1.bf16.msra.mxu0 0
    %2299 = vmatprep.subr.bf16.mxu0 0
    %2300 = vmatpush1.bf16.msra.mxu0 0
    %2301 = vmatprep.subr.bf16.mxu0 0
    %2302 = vmatpush1.bf16.msra.mxu0 0
    %2303 = vmatprep.subr.bf16.mxu0 0
    %2304 = vmatpush1.bf16.msra.mxu0 0
    %2305 = vmatprep.subr.bf16.mxu0 0
    %2306 = vmatpush1.bf16.msra.mxu0 %v2286
    %2307 = vmatprep.subr.bf16.mxu0 0
    %2308 = vmatpush2.bf16.msra.mxu0 0
    %2309 = vmatprep.subr.bf16.mxu0 0
    %2310 = vmatpush2.bf16.msra.mxu0 0
    %2311 = vmatprep.subr.bf16.mxu0 0
    %2312 = vmatpush2.bf16.msra.mxu0 0
    %2313 = vmatprep.subr.bf16.mxu0 0
    %2314 = vmatpush2.bf16.msra.mxu0 0
    %2315 = vmatprep.subr.bf16.mxu0 0
    %2316 = vmatpush2.bf16.msra.mxu0 0
    %2317 = vmatprep.subr.bf16.mxu0 0
    %2318 = vmatpush2.bf16.msra.mxu0 0
    %2319 = vmatprep.subr.bf16.mxu0 0
    %2320 = vmatpush2.bf16.msra.mxu0 0
    %2321 = vmatprep.subr.bf16.mxu0 0
    %2322 = vmatpush2.bf16.msra.mxu0 0
    %2323 = vmatprep.mubr.bf16.mxu0 0
    %2324 = vmatmul.mubr.bf16.gmra.mxu0 %v2289
    %v2325 = vpop.f32.mrf.mxu0
    %v2326 = vadd.f32 0.0, %v2325
    %v2327 = vpop.f32.mrf.mxu0
    %v2328 = vpop.f32.mrf.mxu0
    %v2329 = vadd.f32 0.0, %v2328
    %v2330 = vpop.f32.mrf.mxu0
    %2331 = vdwg.mxu0
    %v2334 = vunpack.c.l.b16 %v2228
    %v2335 = vunpack.c.l.b16 %v2229
    %v2336 = vpack.c.b16 %v2335, %v2334
    %v2339 = vsel %vm1361, %v2222, 0
    %2341 = vmatprep.subr.bf16.mxu0 0
    %2342 = vmatpush1.bf16.msra.mxu0 0
    %2343 = vmatprep.subr.bf16.mxu0 0
    %2344 = vmatpush1.bf16.msra.mxu0 0
    %2345 = vmatprep.subr.bf16.mxu0 0
    %2346 = vmatpush1.bf16.msra.mxu0 0
    %2347 = vmatprep.subr.bf16.mxu0 0
    %2348 = vmatpush1.bf16.msra.mxu0 0
    %2349 = vmatprep.subr.bf16.mxu0 0
    %2350 = vmatpush1.bf16.msra.mxu0 0
    %2351 = vmatprep.subr.bf16.mxu0 0
    %2352 = vmatpush1.bf16.msra.mxu0 0
    %2353 = vmatprep.subr.bf16.mxu0 0
    %2354 = vmatpush1.bf16.msra.mxu0 0
    %2355 = vmatprep.subr.bf16.mxu0 0
    %2356 = vmatpush1.bf16.msra.mxu0 %v2336
    %2357 = vmatprep.subr.bf16.mxu0 0
    %2358 = vmatpush2.bf16.msra.mxu0 0
    %2359 = vmatprep.subr.bf16.mxu0 0
    %2360 = vmatpush2.bf16.msra.mxu0 0
    %2361 = vmatprep.subr.bf16.mxu0 0
    %2362 = vmatpush2.bf16.msra.mxu0 0
    %2363 = vmatprep.subr.bf16.mxu0 0
    %2364 = vmatpush2.bf16.msra.mxu0 0
    %2365 = vmatprep.subr.bf16.mxu0 0
    %2366 = vmatpush2.bf16.msra.mxu0 0
    %2367 = vmatprep.subr.bf16.mxu0 0
    %2368 = vmatpush2.bf16.msra.mxu0 0
    %2369 = vmatprep.subr.bf16.mxu0 0
    %2370 = vmatpush2.bf16.msra.mxu0 0
    %2371 = vmatprep.subr.bf16.mxu0 0
    %2372 = vmatpush2.bf16.msra.mxu0 0
    %2373 = vmatprep.mubr.bf16.mxu0 0
    %2374 = vmatmul.mubr.bf16.gmra.mxu0 %v2339
    %v2375 = vpop.f32.mrf.mxu0
    %v2376 = vadd.f32 0.0, %v2375
    %v2377 = vpop.f32.mrf.mxu0
    %v2378 = vpop.f32.mrf.mxu0
    %v2379 = vadd.f32 0.0, %v2378
    %v2380 = vpop.f32.mrf.mxu0
    %2381 = vdwg.mxu0
    %v2384 = vunpack.c.l.b16 %v2230
    %v2385 = vunpack.c.l.b16 %v2231
    %v2386 = vpack.c.b16 %v2385, %v2384
    %v2389 = vsel %vm1361, %v2223, 0
    %2391 = vmatprep.subr.bf16.mxu0 0
    %2392 = vmatpush1.bf16.msra.mxu0 0
    %2393 = vmatprep.subr.bf16.mxu0 0
    %2394 = vmatpush1.bf16.msra.mxu0 0
    %2395 = vmatprep.subr.bf16.mxu0 0
    %2396 = vmatpush1.bf16.msra.mxu0 0
    %2397 = vmatprep.subr.bf16.mxu0 0
    %2398 = vmatpush1.bf16.msra.mxu0 0
    %2399 = vmatprep.subr.bf16.mxu0 0
    %2400 = vmatpush1.bf16.msra.mxu0 0
    %2401 = vmatprep.subr.bf16.mxu0 0
    %2402 = vmatpush1.bf16.msra.mxu0 0
    %2403 = vmatprep.subr.bf16.mxu0 0
    %2404 = vmatpush1.bf16.msra.mxu0 0
    %2405 = vmatprep.subr.bf16.mxu0 0
    %2406 = vmatpush1.bf16.msra.mxu0 %v2386
    %2407 = vmatprep.subr.bf16.mxu0 0
    %2408 = vmatpush2.bf16.msra.mxu0 0
    %2409 = vmatprep.subr.bf16.mxu0 0
    %2410 = vmatpush2.bf16.msra.mxu0 0
    %2411 = vmatprep.subr.bf16.mxu0 0
    %2412 = vmatpush2.bf16.msra.mxu0 0
    %2413 = vmatprep.subr.bf16.mxu0 0
    %2414 = vmatpush2.bf16.msra.mxu0 0
    %2415 = vmatprep.subr.bf16.mxu0 0
    %2416 = vmatpush2.bf16.msra.mxu0 0
    %2417 = vmatprep.subr.bf16.mxu0 0
    %2418 = vmatpush2.bf16.msra.mxu0 0
    %2419 = vmatprep.subr.bf16.mxu0 0
    %2420 = vmatpush2.bf16.msra.mxu0 0
    %2421 = vmatprep.subr.bf16.mxu0 0
    %2422 = vmatpush2.bf16.msra.mxu0 0
    %2423 = vmatprep.mubr.bf16.mxu0 0
    %2424 = vmatmul.mubr.bf16.gmra.mxu0 %v2389
    %v2425 = vpop.f32.mrf.mxu0
    %v2426 = vadd.f32 0.0, %v2425
    %v2427 = vpop.f32.mrf.mxu0
    %v2428 = vpop.f32.mrf.mxu0
    %v2429 = vadd.f32 0.0, %v2428
    %v2430 = vpop.f32.mrf.mxu0
    %2431 = vdwg.mxu0
    %v2432 = vadd.f32 %v2276, %v2326
    %v2433 = vadd.f32 %v2432, %v2376
    %v2434 = vadd.f32 %v2433, %v2426
    %v2435 = vadd.f32 %v2279, %v2329
    %v2436 = vadd.f32 %v2435, %v2379
    %v2437 = vadd.f32 %v2436, %v2429
    %v2438 = vld [vmem:[%s7] sm:$0x1]
    %v2439 = vmul.f32 %v2434, %v50
    %v2440 = vmul.f32 %v2437, %v50
    %2441 = vadd.xlane.f32.xlu0 %v2439
    %v2442 = vpop.xlane.xlu0 %2441
    %2443 = vadd.xlane.f32.xlu0 %v2440
    %v2444 = vpop.xlane.xlu0 %2443
    %v2445 = vmul.f32 %v2442, 0.03125
    %v2446 = vmul.f32 %v2444, 0.03125
    %v2447 = vsub.f32 %v2434, %v2445
    %v2448 = vsub.f32 %v2437, %v2446
    %v2449 = vmul.f32 %v2447, %v50
    %v2450 = vmul.f32 %v2448, %v50
    %v2451 = vmul.f32 %v2449, %v2449
    %v2452 = vmul.f32 %v2450, %v2450
    %2453 = vadd.xlane.f32.xlu0 %v2451
    %v2454 = vpop.xlane.xlu0 %2453
    %2455 = vadd.xlane.f32.xlu0 %v2452
    %v2456 = vpop.xlane.xlu0 %2455
    %v2457 = vmul.f32 %v2454, 0.03125
    %v2458 = vmul.f32 %v2456, 0.03125
    %v2459 = vadd.f32 %v2457, 1e-05
    %v2460 = vadd.f32 %v2458, 1e-05
    %v2461 = vrsqrt.pop %v2459
    %v2462 = vrsqrt.pop %v2460
    %v2463 = vmul.f32 %v2449, %v2461
    %v2464 = vmul.f32 %v2450, %v2462
    %v2466 = vlaneseq
    %v2467 = vshrl.u32 %v2466, 7
    %v2468 = vsub.s32 0, %v2467
    %v2469 = vrot.slane %v2438, %v2468
    %v2471 = vmul.f32 %v2463, %v2469
    %v2472 = vmul.f32 %v2464, %v2469
    %v2473 = vadd.f32 %v51, %v2471
    %v2474 = vadd.f32 %v52, %v2472
    %v2475 = vld [vmem:[%s8] sm:$0x1]
    %v2476 = vmul.f32 %v2473, %v50
    %v2477 = vmul.f32 %v2474, %v50
    %2478 = vadd.xlane.f32.xlu0 %v2476
    %v2479 = vpop.xlane.xlu0 %2478
    %2480 = vadd.xlane.f32.xlu0 %v2477
    %v2481 = vpop.xlane.xlu0 %2480
    %v2482 = vmul.f32 %v2479, 0.03125
    %v2483 = vmul.f32 %v2481, 0.03125
    %v2484 = vsub.f32 %v2473, %v2482
    %v2485 = vsub.f32 %v2474, %v2483
    %v2486 = vmul.f32 %v2484, %v50
    %v2487 = vmul.f32 %v2485, %v50
    %v2488 = vmul.f32 %v2486, %v2486
    %v2489 = vmul.f32 %v2487, %v2487
    %2490 = vadd.xlane.f32.xlu0 %v2488
    %v2491 = vpop.xlane.xlu0 %2490
    %2492 = vadd.xlane.f32.xlu0 %v2489
    %v2493 = vpop.xlane.xlu0 %2492
    %v2494 = vmul.f32 %v2491, 0.03125
    %v2495 = vmul.f32 %v2493, 0.03125
    %v2496 = vadd.f32 %v2494, 1e-05
    %v2497 = vadd.f32 %v2495, 1e-05
    %v2498 = vrsqrt.pop %v2496
    %v2499 = vrsqrt.pop %v2497
    %v2500 = vmul.f32 %v2486, %v2498
    %v2501 = vmul.f32 %v2487, %v2499
    %v2503 = vlaneseq
    %v2504 = vshrl.u32 %v2503, 7
    %v2505 = vsub.s32 0, %v2504
    %v2506 = vrot.slane %v2475, %v2505
    %v2508 = vmul.f32 %v2500, %v2506
    %v2509 = vmul.f32 %v2501, %v2506
    %v2510 = vpack.c.bf16 %v2509, %v2508
    %v2511 = vld [vmem:[%s9] sm:$0xff]
    %v2512 = vld [vmem:[%s9 + $0x8] sm:$0xff]
    %v2513 = vld [vmem:[%s9 + $0x10] sm:$0xff]
    %v2514 = vld [vmem:[%s9 + $0x18] sm:$0xff]
    %v2515 = vld [vmem:[%s9 + $0x20] sm:$0xff]
    %v2516 = vld [vmem:[%s9 + $0x28] sm:$0xff]
    %v2517 = vld [vmem:[%s9 + $0x30] sm:$0xff]
    %v2518 = vld [vmem:[%s9 + $0x38] sm:$0xff]
    %v2519 = vld [vmem:[%s9 + $0x40] sm:$0xff]
    %v2520 = vld [vmem:[%s9 + $0x48] sm:$0xff]
    %v2521 = vld [vmem:[%s9 + $0x50] sm:$0xff]
    %v2522 = vld [vmem:[%s9 + $0x58] sm:$0xff]
    %v2523 = vld [vmem:[%s9 + $0x60] sm:$0xff]
    %v2524 = vld [vmem:[%s9 + $0x68] sm:$0xff]
    %v2525 = vld [vmem:[%s9 + $0x70] sm:$0xff]
    %v2526 = vld [vmem:[%s9 + $0x78] sm:$0xff]
    %v2543 = vunpack.c.l.b16 %v2511
    %v2544 = vunpack.c.h.b16 %v2511
    %v2545 = vunpack.c.l.b16 %v2512
    %v2546 = vunpack.c.h.b16 %v2512
    %v2547 = vunpack.c.l.b16 %v2513
    %v2548 = vunpack.c.h.b16 %v2513
    %v2549 = vunpack.c.l.b16 %v2514
    %v2550 = vunpack.c.h.b16 %v2514
    %v2551 = vunpack.c.l.b16 %v2515
    %v2552 = vunpack.c.h.b16 %v2515
    %v2553 = vunpack.c.l.b16 %v2516
    %v2554 = vunpack.c.h.b16 %v2516
    %v2555 = vunpack.c.l.b16 %v2517
    %v2556 = vunpack.c.h.b16 %v2517
    %v2557 = vunpack.c.l.b16 %v2518
    %v2558 = vunpack.c.h.b16 %v2518
    %v2559 = vunpack.c.l.b16 %v2519
    %v2560 = vunpack.c.h.b16 %v2519
    %v2561 = vunpack.c.l.b16 %v2520
    %v2562 = vunpack.c.h.b16 %v2520
    %v2563 = vunpack.c.l.b16 %v2521
    %v2564 = vunpack.c.h.b16 %v2521
    %v2565 = vunpack.c.l.b16 %v2522
    %v2566 = vunpack.c.h.b16 %v2522
    %v2567 = vunpack.c.l.b16 %v2523
    %v2568 = vunpack.c.h.b16 %v2523
    %v2569 = vunpack.c.l.b16 %v2524
    %v2570 = vunpack.c.h.b16 %v2524
    %v2571 = vunpack.c.l.b16 %v2525
    %v2572 = vunpack.c.h.b16 %v2525
    %v2573 = vunpack.c.l.b16 %v2526
    %v2574 = vunpack.c.h.b16 %v2526
    %v2575 = vpack.c.b16 %v2545, %v2543
    %v2576 = vpack.c.b16 %v2546, %v2544
    %v2577 = vpack.c.b16 %v2549, %v2547
    %v2578 = vpack.c.b16 %v2550, %v2548
    %v2579 = vpack.c.b16 %v2553, %v2551
    %v2580 = vpack.c.b16 %v2554, %v2552
    %v2581 = vpack.c.b16 %v2557, %v2555
    %v2582 = vpack.c.b16 %v2558, %v2556
    %v2583 = vpack.c.b16 %v2561, %v2559
    %v2584 = vpack.c.b16 %v2562, %v2560
    %v2585 = vpack.c.b16 %v2565, %v2563
    %v2586 = vpack.c.b16 %v2566, %v2564
    %v2587 = vpack.c.b16 %v2569, %v2567
    %v2588 = vpack.c.b16 %v2570, %v2568
    %v2589 = vpack.c.b16 %v2573, %v2571
    %v2590 = vpack.c.b16 %v2574, %v2572
    %2607 = vmatprep.subr.bf16.mxu0 %v2590
    %2608 = vmatpush1.bf16.msra.mxu0 %v2589
    %2609 = vmatprep.subr.bf16.mxu0 %v2588
    %2610 = vmatpush1.bf16.msra.mxu0 %v2587
    %2611 = vmatprep.subr.bf16.mxu0 %v2586
    %2612 = vmatpush1.bf16.msra.mxu0 %v2585
    %2613 = vmatprep.subr.bf16.mxu0 %v2584
    %2614 = vmatpush1.bf16.msra.mxu0 %v2583
    %2615 = vmatprep.subr.bf16.mxu0 %v2582
    %2616 = vmatpush1.bf16.msra.mxu0 %v2581
    %2617 = vmatprep.subr.bf16.mxu0 %v2580
    %2618 = vmatpush1.bf16.msra.mxu0 %v2579
    %2619 = vmatprep.subr.bf16.mxu0 %v2578
    %2620 = vmatpush1.bf16.msra.mxu0 %v2577
    %2621 = vmatprep.subr.bf16.mxu0 %v2576
    %2622 = vmatpush1.bf16.msra.mxu0 %v2575
    %2623 = vmatprep.subr.bf16.mxu0 0
    %2624 = vmatpush2.bf16.msra.mxu0 0
    %2625 = vmatprep.subr.bf16.mxu0 0
    %2626 = vmatpush2.bf16.msra.mxu0 0
    %2627 = vmatprep.subr.bf16.mxu0 0
    %2628 = vmatpush2.bf16.msra.mxu0 0
    %2629 = vmatprep.subr.bf16.mxu0 0
    %2630 = vmatpush2.bf16.msra.mxu0 0
    %2631 = vmatprep.subr.bf16.mxu0 0
    %2632 = vmatpush2.bf16.msra.mxu0 0
    %2633 = vmatprep.subr.bf16.mxu0 0
    %2634 = vmatpush2.bf16.msra.mxu0 0
    %2635 = vmatprep.subr.bf16.mxu0 0
    %2636 = vmatpush2.bf16.msra.mxu0 0
    %2637 = vmatprep.subr.bf16.mxu0 0
    %2638 = vmatpush2.bf16.msra.mxu0 0
    %2639 = vmatprep.mubr.bf16.mxu0 0
    %2640 = vmatmul.mubr.bf16.gmra.mxu0 %v2510
    %v2641 = vpop.f32.mrf.mxu0
    %v2642 = vadd.f32 0.0, %v2641
    %v2643 = vpop.f32.mrf.mxu0
    %v2644 = vadd.f32 0.0, %v2643
    %v2645 = vpop.f32.mrf.mxu0
    %v2646 = vadd.f32 0.0, %v2645
    %v2647 = vpop.f32.mrf.mxu0
    %v2648 = vadd.f32 0.0, %v2647
    %2649 = vdwg.mxu0
    %v2650 = vmul.f32 %v2644, 0.5
    %v2651 = vmul.f32 %v2648, 0.5
    %v2652 = vmul.f32 %v2644, 0.70710677
    %v2653 = vmul.f32 %v2648, 0.70710677
    %vm2654 = vcmp.ge.f32.partialorder %v2652, 0.0
    %vm2655 = vcmp.ge.f32.partialorder %v2653, 0.0
    %v2656 = vsel %vm2654, 1.0, -1.0
    %v2657 = vsel %vm2655, 1.0, -1.0
    %v2658 = vand.u32 2147483647, %v2652
    %v2659 = vand.u32 2147483647, %v2653
    %v2660 = vmul.f32 %v2658, 0.3275911
    %v2661 = vmul.f32 %v2659, 0.3275911
    %v2662 = vadd.f32 %v2660, 1.0
    %v2663 = vadd.f32 %v2661, 1.0
    %v2664 = vrcp.pop %v2662
    %v2665 = vmul.f32 1.0, %v2664
    %v2666 = vrcp.pop %v2663
    %v2667 = vmul.f32 1.0, %v2666
    %v2668 = vmul.f32 %v2665, 1.0614054
    %v2669 = vmul.f32 %v2667, 1.0614054
    %v2670 = vadd.f32 %v2668, -1.4531521
    %v2671 = vadd.f32 %v2669, -1.4531521
    %v2672 = vmul.f32 %v2670, %v2665
    %v2673 = vmul.f32 %v2671, %v2667
    %v2674 = vadd.f32 %v2672, 1.4214138
    %v2675 = vadd.f32 %v2673, 1.4214138
    %v2676 = vmul.f32 %v2674, %v2665
    %v2677 = vmul.f32 %v2675, %v2667
    %v2678 = vadd.f32 %v2676, -0.28449672
    %v2679 = vadd.f32 %v2677, -0.28449672
    %v2680 = vmul.f32 %v2678, %v2665
    %v2681 = vmul.f32 %v2679, %v2667
    %v2682 = vadd.f32 %v2680, 0.2548296
    %v2683 = vadd.f32 %v2681, 0.2548296
    %v2684 = vmul.f32 %v2682, %v2665
    %v2685 = vmul.f32 %v2683, %v2667
    %v2686 = vsub.f32 0.0, %v2658
    %v2687 = vsub.f32 0.0, %v2659
    %v2688 = vmul.f32 %v2686, %v2658
    %v2689 = vmul.f32 %v2687, %v2659
    %v2690 = vmul.f32 %v2688, 1.442695
    %v2691 = vpow.pop %v2690
    %v2692 = vmul.f32 %v2689, 1.442695
    %v2693 = vpow.pop %v2692
    %v2694 = vmul.f32 %v2684, %v2691
    %v2695 = vmul.f32 %v2685, %v2693
    %v2696 = vsub.f32 1.0, %v2694
    %v2697 = vsub.f32 1.0, %v2695
    %v2698 = vmul.f32 %v2656, %v2696
    %v2699 = vmul.f32 %v2657, %v2697
    %v2700 = vadd.f32 %v2698, 1.0
    %v2701 = vadd.f32 %v2699, 1.0
    %v2702 = vmul.f32 %v2650, %v2700
    %v2703 = vmul.f32 %v2651, %v2701
    %v2704 = vmul.f32 %v2642, %v2702
    %v2705 = vmul.f32 %v2646, %v2703
    %v2706 = vld [vmem:[%s10] sm:$0x1]
    %2707 = vadd.xlane.f32.xlu0 %v2704
    %v2708 = vpop.xlane.xlu0 %2707
    %2709 = vadd.xlane.f32.xlu0 %v2705
    %v2710 = vpop.xlane.xlu0 %2709
    %v2711 = vrcp.pop 128.0
    %v2712 = vmul.f32 %v2708, %v2711
    %v2713 = vmul.f32 %v2710, %v2711
    %v2714 = vsub.f32 %v2704, %v2712
    %v2715 = vsub.f32 %v2705, %v2713
    %v2716 = vmul.f32 %v2714, %v2714
    %v2717 = vmul.f32 %v2715, %v2715
    %2718 = vadd.xlane.f32.xlu0 %v2716
    %v2719 = vpop.xlane.xlu0 %2718
    %2720 = vadd.xlane.f32.xlu0 %v2717
    %v2721 = vpop.xlane.xlu0 %2720
    %v2722 = vmul.f32 %v2719, %v2711
    %v2723 = vmul.f32 %v2721, %v2711
    %v2724 = vadd.f32 %v2722, 1e-05
    %v2725 = vadd.f32 %v2723, 1e-05
    %v2726 = vrsqrt.pop %v2724
    %v2727 = vrsqrt.pop %v2725
    %v2728 = vmul.f32 %v2714, %v2726
    %v2729 = vmul.f32 %v2715, %v2727
    %v2731 = vlaneseq
    %v2732 = vshrl.u32 %v2731, 7
    %v2733 = vsub.s32 0, %v2732
    %v2734 = vrot.slane %v2706, %v2733
    %v2736 = vmul.f32 %v2728, %v2734
    %v2737 = vmul.f32 %v2729, %v2734
    %v2738 = vpack.c.bf16 %v2737, %v2736
    %v2739 = vld [vmem:[%s11] sm:$0xf]
    %v2740 = vld [vmem:[%s11 + $0x4] sm:$0xf]
    %v2741 = vld [vmem:[%s11 + $0x8] sm:$0xf]
    %v2742 = vld [vmem:[%s11 + $0xc] sm:$0xf]
    %v2743 = vld [vmem:[%s11 + $0x10] sm:$0xf]
    %v2744 = vld [vmem:[%s11 + $0x14] sm:$0xf]
    %v2745 = vld [vmem:[%s11 + $0x18] sm:$0xf]
    %v2746 = vld [vmem:[%s11 + $0x1c] sm:$0xf]
    %v2747 = vld [vmem:[%s11 + $0x20] sm:$0xf]
    %v2748 = vld [vmem:[%s11 + $0x24] sm:$0xf]
    %v2749 = vld [vmem:[%s11 + $0x28] sm:$0xf]
    %v2750 = vld [vmem:[%s11 + $0x2c] sm:$0xf]
    %v2751 = vld [vmem:[%s11 + $0x30] sm:$0xf]
    %v2752 = vld [vmem:[%s11 + $0x34] sm:$0xf]
    %v2753 = vld [vmem:[%s11 + $0x38] sm:$0xf]
    %v2754 = vld [vmem:[%s11 + $0x3c] sm:$0xf]
    %v2771 = vunpack.c.l.b16 %v2739
    %v2772 = vunpack.c.l.b16 %v2740
    %v2773 = vunpack.c.l.b16 %v2741
    %v2774 = vunpack.c.l.b16 %v2742
    %v2775 = vunpack.c.l.b16 %v2743
    %v2776 = vunpack.c.l.b16 %v2744
    %v2777 = vunpack.c.l.b16 %v2745
    %v2778 = vunpack.c.l.b16 %v2746
    %v2779 = vunpack.c.l.b16 %v2747
    %v2780 = vunpack.c.l.b16 %v2748
    %v2781 = vunpack.c.l.b16 %v2749
    %v2782 = vunpack.c.l.b16 %v2750
    %v2783 = vunpack.c.l.b16 %v2751
    %v2784 = vunpack.c.l.b16 %v2752
    %v2785 = vunpack.c.l.b16 %v2753
    %v2786 = vunpack.c.l.b16 %v2754
    %v2787 = vpack.c.b16 %v2772, %v2771
    %v2788 = vpack.c.b16 %v2774, %v2773
    %v2789 = vpack.c.b16 %v2776, %v2775
    %v2790 = vpack.c.b16 %v2778, %v2777
    %v2791 = vpack.c.b16 %v2780, %v2779
    %v2792 = vpack.c.b16 %v2782, %v2781
    %v2793 = vpack.c.b16 %v2784, %v2783
    %v2794 = vpack.c.b16 %v2786, %v2785
    %2803 = vmatprep.subr.bf16.mxu0 0
    %2804 = vmatpush1.bf16.msra.mxu0 %v2794
    %2805 = vmatprep.subr.bf16.mxu0 0
    %2806 = vmatpush1.bf16.msra.mxu0 %v2793
    %2807 = vmatprep.subr.bf16.mxu0 0
    %2808 = vmatpush1.bf16.msra.mxu0 %v2792
    %2809 = vmatprep.subr.bf16.mxu0 0
    %2810 = vmatpush1.bf16.msra.mxu0 %v2791
    %2811 = vmatprep.subr.bf16.mxu0 0
    %2812 = vmatpush1.bf16.msra.mxu0 %v2790
    %2813 = vmatprep.subr.bf16.mxu0 0
    %2814 = vmatpush1.bf16.msra.mxu0 %v2789
    %2815 = vmatprep.subr.bf16.mxu0 0
    %2816 = vmatpush1.bf16.msra.mxu0 %v2788
    %2817 = vmatprep.subr.bf16.mxu0 0
    %2818 = vmatpush1.bf16.msra.mxu0 %v2787
    %2819 = vmatprep.subr.bf16.mxu0 0
    %2820 = vmatpush2.bf16.msra.mxu0 0
    %2821 = vmatprep.subr.bf16.mxu0 0
    %2822 = vmatpush2.bf16.msra.mxu0 0
    %2823 = vmatprep.subr.bf16.mxu0 0
    %2824 = vmatpush2.bf16.msra.mxu0 0
    %2825 = vmatprep.subr.bf16.mxu0 0
    %2826 = vmatpush2.bf16.msra.mxu0 0
    %2827 = vmatprep.subr.bf16.mxu0 0
    %2828 = vmatpush2.bf16.msra.mxu0 0
    %2829 = vmatprep.subr.bf16.mxu0 0
    %2830 = vmatpush2.bf16.msra.mxu0 0
    %2831 = vmatprep.subr.bf16.mxu0 0
    %2832 = vmatpush2.bf16.msra.mxu0 0
    %2833 = vmatprep.subr.bf16.mxu0 0
    %2834 = vmatpush2.bf16.msra.mxu0 0
    %2835 = vmatprep.mubr.bf16.mxu0 0
    %2836 = vmatmul.mubr.bf16.gmra.mxu0 %v2738
    %v2837 = vpop.f32.mrf.mxu0
    %v2838 = vadd.f32 0.0, %v2837
    %v2839 = vpop.f32.mrf.mxu0
    %v2840 = vpop.f32.mrf.mxu0
    %v2841 = vadd.f32 0.0, %v2840
    %v2842 = vpop.f32.mrf.mxu0
    %2843 = vdwg.mxu0
    %v2844 = vadd.f32 %v2473, %v2838
    %v2845 = vadd.f32 %v2474, %v2841
    %v2846 = vld [vmem:[%s12] sm:$0x1]
    %v2847 = vmul.f32 %v2844, %v50
    %v2848 = vmul.f32 %v2845, %v50
    %2849 = vadd.xlane.f32.xlu0 %v2847
    %v2850 = vpop.xlane.xlu0 %2849
    %2851 = vadd.xlane.f32.xlu0 %v2848
    %v2852 = vpop.xlane.xlu0 %2851
    %v2853 = vmul.f32 %v2850, 0.03125
    %v2854 = vmul.f32 %v2852, 0.03125
    %v2855 = vsub.f32 %v2844, %v2853
    %v2856 = vsub.f32 %v2845, %v2854
    %v2857 = vmul.f32 %v2855, %v50
    %v2858 = vmul.f32 %v2856, %v50
    %v2859 = vmul.f32 %v2857, %v2857
    %v2860 = vmul.f32 %v2858, %v2858
    %2861 = vadd.xlane.f32.xlu0 %v2859
    %v2862 = vpop.xlane.xlu0 %2861
    %2863 = vadd.xlane.f32.xlu0 %v2860
    %v2864 = vpop.xlane.xlu0 %2863
    %v2865 = vmul.f32 %v2862, 0.03125
    %v2866 = vmul.f32 %v2864, 0.03125
    %v2867 = vadd.f32 %v2865, 1e-05
    %v2868 = vadd.f32 %v2866, 1e-05
    %v2869 = vrsqrt.pop %v2867
    %v2870 = vrsqrt.pop %v2868
    %v2871 = vmul.f32 %v2857, %v2869
    %v2872 = vmul.f32 %v2858, %v2870
    %v2874 = vlaneseq
    %v2875 = vshrl.u32 %v2874, 7
    %v2876 = vsub.s32 0, %v2875
    %v2877 = vrot.slane %v2846, %v2876
    %v2879 = vmul.f32 %v2871, %v2877
    %v2880 = vmul.f32 %v2872, %v2877
    %2881 = vst [vmem:[#allocation2] sm:$0xff] %v2879
    %2882 = vst [vmem:[#allocation2 + $0x8] sm:$0xff] %v2880
    // Predicated region
    $region54: #{text_transformer_forward.3} parent=1 // pred_check
      _
    $region55: #{text_transformer_forward.3} parent=1 // pred_check_branch
      %2884 = sbr.rel (0) target = $region57
    $region56: #{text_transformer_forward.3} parent=1 // pred_region
      %s2886 = ssub.s32 256, 256
      %2887 = vsyncadd [#allocation3], %s2886
      %s2888 = sshll.u32 [#allocation2], 4
      %s2889 = int_to_ptr.vmem [resolvable:$true] %s2888
      %2894 = dma.vmem_to_hbm [thread:$0]  %s2889, 256, %s13, [#allocation3], 128, 128, 8
    $region57: #{text_transformer_forward.3} parent=1 // pred_fallthru
      _
    // Predicated region
    $region58: #{text_transformer_forward.3} parent=1 // pred_check
      _
    $region59: #{text_transformer_forward.3} parent=1 // pred_check_branch
      %2896 = sbr.rel (0) target = $region61
    $region60: #{text_transformer_forward.3} parent=1 // pred_region
      %2897 = dma.done [#allocation3], 256
    $region61: #{text_transformer_forward.3} parent=1 // pred_fallthru
      _
    %2898 = vsyncpa [#allocation3], 1

</llo_original>
